<compile_context>
chip_gen: v7x
topology: tpu7x:2x2x1
jax: 0.10.0
libtpu: 0.0.40
codegen_flags: <defaults>
</compile_context>

<pallas_src>
import numpy as np
import jax
import jax.numpy as jnp
from jax import lax
from jax.experimental import pallas as pl
from jax.experimental.pallas import tpu as pltpu

BN_EPS = 1e-5
_SQRT_2_OVER_PI = 0.7978845608028654

_PW_CONVS = ("attn_c1", "msca_att", "msca_mix", "attn_c2", "ffn_c1", "ffn_c2")
_DW_CONVS = (("msca_dw5", 5, 5),
             ("msca_dw1x7", 1, 7), ("msca_dw7x1", 7, 1),
             ("msca_dw1x11", 1, 11), ("msca_dw11x1", 11, 1),
             ("msca_dw1x21", 1, 21), ("msca_dw21x1", 21, 1),
             ("ffn_dw3", 3, 3))
_ALL_CONVS = ("attn_c1", "msca_att", "msca_dw5",
              "msca_dw1x7", "msca_dw7x1", "msca_dw1x11", "msca_dw11x1",
              "msca_dw1x21", "msca_dw21x1", "msca_mix", "attn_c2",
              "ffn_c1", "ffn_dw3", "ffn_c2")


def _gelu_tanh(x):
    # tanh-approximate GELU (identical formula in kernel and reference).
    # TODO(synk): exact erf-based nn.GELU is not guaranteed to lower in Mosaic.
    return 0.5 * x * (1.0 + jnp.tanh(_SQRT_2_OVER_PI * (x + 0.044715 * x * x * x)))


def _fold_bn(gamma, beta, mean, var):
    scale = gamma / jnp.sqrt(var + BN_EPS)
    shift = beta - mean * scale
    return scale, shift


def _is_pow2(v):
    return v > 0 and (v & (v - 1)) == 0


def mscan_block_forward(x, params):
    """Pallas TPU forward of MSCANBlock. x: (N, C_in, H, W) float32 (NCHW)."""
    N, Cin, H, W = x.shape
    Cout = params["attn_c1_w"].shape[0]
    HW = H * W
    L = N * HW
    L_pad = ((L + 127) // 128) * 128          # lane-dense (unmasked vst) layout
    Cmax = max(Cin, Cout)
    use_res1 = Cin != Cout                    # residual1 is a 1x1 conv iff C differs
    f32 = jnp.float32

    # ---------------- parameter packing (review item: input plumbing) ----------------
    bn1_scale, bn1_shift = _fold_bn(params["bn1_gamma"], params["bn1_beta"],
                                    params["bn1_mean"], params["bn1_var"])
    bn2_scale, bn2_shift = _fold_bn(params["bn2_gamma"], params["bn2_beta"],
                                    params["bn2_mean"], params["bn2_var"])

    # one (Cout, 112) slab for every depthwise weight
    dw_off, cols, off = {}, [], 0
    for name, kh, kw in _DW_CONVS:
        w = params[name + "_w"].reshape(Cout, kh * kw).astype(f32)
        dw_off[name] = off
        off += kh * kw
        cols.append(w)
    dw_slab = jnp.concatenate(cols, axis=1)

    # one (Cmax, n_vec) slab for BN scale/shift + every conv bias
    conv_names = list(_ALL_CONVS) + (["res1"] if use_res1 else [])
    vec_entries = [("bn1_scale", bn1_scale), ("bn1_shift", bn1_shift),
                   ("bn2_scale", bn2_scale), ("bn2_shift", bn2_shift)]
    vec_entries += [(n + "_b", params[n + "_b"]) for n in conv_names]
    vec_off = {n: j for j, (n, _) in enumerate(vec_entries)}

    def _padrow(v):
        v = jnp.asarray(v, f32).reshape(-1)
        return jnp.pad(v, (0, Cmax - v.shape[0]))

    vec_slab = jnp.stack([_padrow(v) for _, v in vec_entries], axis=1)

    # pointwise (1x1) weights stay separate: they feed the MXU directly
    pw_names = list(_PW_CONVS) + (["res1"] if use_res1 else [])
    pw_arrays = [params[n + "_w"].astype(f32) for n in pw_names]

    # lane-dense, batch-folded input: (Cin, N*H*W), padded to a 128 multiple
    x2 = x.astype(f32).transpose(1, 0, 2, 3).reshape(Cin, L)
    if L_pad != L:
        x2 = jnp.pad(x2, ((0, 0), (0, L_pad - L)))

    # ------------------------------------ kernel ------------------------------------
    def kernel(x_ref, dw_ref, vec_ref, *refs):
        o_ref = refs[-1]
        pw = dict(zip(pw_names, refs[:len(pw_names)]))
        dw = dw_ref[...]                      # (Cout, 112)  all depthwise weights
        vec = vec_ref[...]                    # (Cmax, n_vec) BN + biases

        def vcol(name, rows):
            j = vec_off[name]
            return vec[:rows, j:j + 1]

        def dw_w(name, ntaps):
            o = dw_off[name]
            return dw[:, o:o + ntaps]

        def conv1x1(v, name):
            # pointwise conv on the MXU, lane-dense (C, N*H*W) layout, f32 acc
            return (jnp.dot(pw[name][...], v, preferred_element_type=jnp.float32)
                    + vcol(name + "_b", Cout))

        # ---- per-lane (h, w) coordinates of the batch-folded flat layout ----
        col = lax.broadcasted_iota(jnp.int32, (1, L_pad), 1)
        img_pos = (col & (HW - 1)) if _is_pow2(HW) else (col % HW)   # h*W + w
        w_idx = (col & (W - 1)) if _is_pow2(W) else (col % W)        # w

        mask_cache = {}

        def tap_mask(oy, ox):
            key = (oy, ox)
            if key not in mask_cache:
                conds = []
                if oy > 0:
                    conds.append(img_pos < (H - oy) * W)
                elif oy < 0:
                    conds.append(img_pos >= (-oy) * W)
                if ox > 0:
                    conds.append(w_idx < (W - ox))
                elif ox < 0:
                    conds.append(w_idx >= (-ox))
                if conds:
                    m = conds[0]
                    for c in conds[1:]:
                        m = jnp.logical_and(m, c)
                    mask_cache[key] = m.astype(jnp.float32)
                else:
                    mask_cache[key] = None
            return mask_cache[key]

        def shifted(v, oy, ox):
            # one rolled + edge-masked copy of v for tap offset (oy, ox)
            shift = (-(oy * W + ox)) % L_pad
            t = v if shift == 0 else pltpu.roll(v, shift, 1)
            m = tap_mask(oy, ox)
            return t if m is None else t * m

        def dw_conv(v, name, kh, kw):
            # general depthwise conv (5x5 and 3x3): tap-unrolled roll + mask + FMA
            ph, pwd = kh // 2, kw // 2
            wmat = dw_w(name, kh * kw)
            acc = None
            for dy in range(kh):
                for dx in range(kw):
                    t = shifted(v, dy - ph, dx - pwd)
                    term = t * wmat[:, dy * kw + dx:dy * kw + dx + 1]
                    acc = term if acc is None else acc + term
            return acc + vcol(name + "_b", Cout)

        # ------------------------------- forward -------------------------------
        xin = x_ref[...]                                       # (Cin, L_pad)
        id1 = conv1x1(xin, "res1") if use_res1 else xin        # residual1

        h = xin * vcol("bn1_scale", Cin) + vcol("bn1_shift", Cin)   # bn1 (folded)
        h = _gelu_tanh(conv1x1(h, "attn_c1"))                       # attn_conv1 + GELU

        # --- MSCA ---
        att = jax.nn.sigmoid(conv1x1(h, "msca_att"))
        x5 = dw_conv(h, "msca_dw5", 5, 5)

        # Fused horizontal 1xK branches: 1x7 / 1x11 / 1x21 all read x5 with nested
        # offset ranges, so each rolled+masked tile is built once (21 rolls, not 39)
        # and accumulated into three per-branch accumulators.
        w7 = dw_w("msca_dw1x7", 7)
        w11 = dw_w("msca_dw1x11", 11)
        w21 = dw_w("msca_dw1x21", 21)
        y7 = y11 = y21 = None
        for ox in range(-10, 11):
            t = shifted(x5, 0, ox)
            term = t * w21[:, ox + 10:ox + 11]
            y21 = term if y21 is None else y21 + term
            if abs(ox) <= 5:
                term = t * w11[:, ox + 5:ox + 6]
                y11 = term if y11 is None else y11 + term
            if abs(ox) <= 3:
                term = t * w7[:, ox + 3:ox + 4]
                y7 = term if y7 is None else y7 + term
        y7 = y7 + vcol("msca_dw1x7_b", Cout)
        y11 = y11 + vcol("msca_dw1x11_b", Cout)
        y21 = y21 + vcol("msca_dw1x21_b", Cout)

        # Fused vertical Kx1 branches: per-channel weights commute with the roll,
        # so the three branches are pre-combined per row offset and rolled/masked
        # once (21 rolls, not 39).  Accumulator starts at x5 (the "+ x5" term).
        v7 = dw_w("msca_dw7x1", 7)
        v11 = dw_w("msca_dw11x1", 11)
        v21 = dw_w("msca_dw21x1", 21)
        acc = x5
        for oy in range(-10, 11):
            z = y21 * v21[:, oy + 10:oy + 11]
            if abs(oy) <= 5:
                z = z + y11 * v11[:, oy + 5:oy + 6]
            if abs(oy) <= 3:
                z = z + y7 * v7[:, oy + 3:oy + 4]
            acc = acc + shifted(z, oy, 0)
        acc = (acc + vcol("msca_dw7x1_b", Cout) + vcol("msca_dw11x1_b", Cout)
               + vcol("msca_dw21x1_b", Cout))
        msca = conv1x1(acc, "msca_mix") * att

        h = conv1x1(msca, "attn_c2") + id1                     # attn_conv2 + residual1

        # --- FFN ---
        g = h * vcol("bn2_scale", Cout) + vcol("bn2_shift", Cout)   # bn2 (folded)
        g = conv1x1(g, "ffn_c1")
        g = dw_conv(g, "ffn_dw3", 3, 3)
        g = _gelu_tanh(g)
        g = conv1x1(g, "ffn_c2")

        o_ref[...] = g + h                                     # + residual2 (identity)

    # ------------------------------ pallas_call plumbing ------------------------------
    in_specs = [pl.BlockSpec((Cin, L_pad), lambda i: (0, 0)),
                pl.BlockSpec(dw_slab.shape, lambda i: (0, 0)),
                pl.BlockSpec(vec_slab.shape, lambda i: (0, 0))]
    in_specs += [pl.BlockSpec(a.shape, lambda i: (0, 0)) for a in pw_arrays]

    # VMEM budget sized from the real working set (review item 7)
    tile_bytes = 4 * Cmax * L_pad
    param_bytes = 4 * (int(dw_slab.size) + int(vec_slab.size)
                       + sum(int(a.size) for a in pw_arrays))
    vmem_need = 2 * (4 * (Cin + Cout) * L_pad + param_bytes) + 32 * tile_bytes + (2 << 20)
    vmem_limit = int(min(max(vmem_need, 16 << 20), 48 << 20))

    out = pl.pallas_call(
        kernel,
        out_shape=jax.ShapeDtypeStruct((Cout, L_pad), jnp.float32),
        grid_spec=pltpu.PrefetchScalarGridSpec(
            num_scalar_prefetch=0,
            grid=(1,),                         # whole batch in one step at toy shapes
            in_specs=in_specs,
            out_specs=pl.BlockSpec((Cout, L_pad), lambda i: (0, 0)),
        ),
        compiler_params=pltpu.CompilerParams(
            dimension_semantics=("arbitrary",),
            vmem_limit_bytes=vmem_limit,
        ),
    )(x2, dw_slab, vec_slab, *pw_arrays)

    out = out[:, :L].reshape(Cout, N, H, W).transpose(1, 0, 2, 3)
    return out


def mscan_block_reference(x, params):
    """Pure-JAX reference (matches PyTorch MSCANBlock.forward, BN in eval mode)."""
    N, Cin, H, W = x.shape
    Cout = params["attn_c1_w"].shape[0]
    dn = ("NCHW", "OIHW", "NCHW")
    HI = lax.Precision.HIGHEST

    def conv1x1(v, name):
        w, b = params[name + "_w"], params[name + "_b"]
        out = lax.conv_general_dilated(v, w[:, :, None, None], (1, 1), "VALID",
                                       dimension_numbers=dn, precision=HI)
        return out + b[None, :, None, None]

    def dwconv(v, name, kh, kw):
        C = v.shape[1]
        w = params[name + "_w"].reshape(C, 1, kh, kw)
        b = params[name + "_b"]
        out = lax.conv_general_dilated(
            v, w, (1, 1), ((kh // 2, kh // 2), (kw // 2, kw // 2)),
            dimension_numbers=dn, feature_group_count=C, precision=HI)
        return out + b[None, :, None, None]

    def bn(v, pfx):
        g = params[pfx + "_gamma"][None, :, None, None]
        be = params[pfx + "_beta"][None, :, None, None]
        m = params[pfx + "_mean"][None, :, None, None]
        var = params[pfx + "_var"][None, :, None, None]
        return (v - m) * (g / jnp.sqrt(var + BN_EPS)) + be

    id1 = conv1x1(x, "res1") if Cin != Cout else x
    h = bn(x, "bn1")
    h = _gelu_tanh(conv1x1(h, "attn_c1"))
    att = jax.nn.sigmoid(conv1x1(h, "msca_att"))
    x5 = dwconv(h, "msca_dw5", 5, 5)
    out1 = dwconv(dwconv(x5, "msca_dw1x7", 1, 7), "msca_dw7x1", 7, 1)
    out2 = dwconv(dwconv(x5, "msca_dw1x11", 1, 11), "msca_dw11x1", 11, 1)
    out3 = dwconv(dwconv(x5, "msca_dw1x21", 1, 21), "msca_dw21x1", 21, 1)
    msca = conv1x1(out1 + out2 + out3 + x5, "msca_mix") * att
    h = conv1x1(msca, "attn_c2") + id1
    g = bn(h, "bn2")
    g = conv1x1(g, "ffn_c1")
    g = dwconv(g, "ffn_dw3", 3, 3)
    g = _gelu_tanh(g)
    g = conv1x1(g, "ffn_c2")
    return g + h


if __name__ == "__main__":
    N, C_IN, C_OUT, H, W = 2, 8, 16, 16, 16

    kit = iter(jax.random.split(jax.random.PRNGKey(0), 64))

    def rnd(shape, scale=0.1):
        return scale * jax.random.normal(next(kit), shape, dtype=jnp.float32)

    params = {
        # BatchNorm (inference-mode running statistics)
        "bn1_gamma": 1.0 + rnd((C_IN,)),  "bn1_beta": rnd((C_IN,)),
        "bn1_mean": rnd((C_IN,)),         "bn1_var": 1.0 + jnp.abs(rnd((C_IN,))),
        "bn2_gamma": 1.0 + rnd((C_OUT,)), "bn2_beta": rnd((C_OUT,)),
        "bn2_mean": rnd((C_OUT,)),        "bn2_var": 1.0 + jnp.abs(rnd((C_OUT,))),
    }
    conv_shapes = {
        "attn_c1": (C_OUT, C_IN), "res1": (C_OUT, C_IN),
        "msca_att": (C_OUT, C_OUT),
        "msca_dw5": (C_OUT, 25),
        "msca_dw1x7": (C_OUT, 7),   "msca_dw7x1": (C_OUT, 7),
        "msca_dw1x11": (C_OUT, 11), "msca_dw11x1": (C_OUT, 11),
        "msca_dw1x21": (C_OUT, 21), "msca_dw21x1": (C_OUT, 21),
        "msca_mix": (C_OUT, C_OUT), "attn_c2": (C_OUT, C_OUT),
        "ffn_c1": (C_OUT, C_OUT),   "ffn_dw3": (C_OUT, 9),
        "ffn_c2": (C_OUT, C_OUT),
    }
    for name, shp in conv_shapes.items():
        params[name + "_w"] = rnd(shp)
        params[name + "_b"] = rnd((shp[0],))

    x = jax.random.normal(next(kit), (N, C_IN, H, W), dtype=jnp.float32)

    out = jax.block_until_ready(mscan_block_forward(x, params))
    ref = jax.block_until_ready(mscan_block_reference(x, params))

    assert out.shape == (N, C_OUT, H, W)
    np.testing.assert_allclose(np.asarray(out), np.asarray(ref), rtol=5e-4, atol=1e-4)
    print("KERNEL_OK")
</pallas_src>

<mosaic_0001>
module attributes {stable_mosaic.version = 11 : i64} {
  func.func @kernel(%arg0: i32, %arg1: memref<8x512xf32, #tpu.memory_space<vmem>>, %arg2: memref<16x112xf32, #tpu.memory_space<vmem>>, %arg3: memref<16x19xf32, #tpu.memory_space<vmem>>, %arg4: memref<16x8xf32, #tpu.memory_space<vmem>>, %arg5: memref<16x16xf32, #tpu.memory_space<vmem>>, %arg6: memref<16x16xf32, #tpu.memory_space<vmem>>, %arg7: memref<16x16xf32, #tpu.memory_space<vmem>>, %arg8: memref<16x16xf32, #tpu.memory_space<vmem>>, %arg9: memref<16x16xf32, #tpu.memory_space<vmem>>, %arg10: memref<16x8xf32, #tpu.memory_space<vmem>>, %arg11: memref<16x512xf32, #tpu.memory_space<vmem>>) attributes {dimension_semantics = [#tpu.dimension_semantics<arbitrary>], iteration_bounds = array<i64: 1>, scalar_prefetch = 0 : i64, scratch_operands = 0 : i64, tpu.core_type = #tpu.core_type<tc>, window_params = [{pipeline_mode = #tpu.pipeline_mode<synchronous>, transform_indices = @transform_0, window_bounds = array<i64: 8, 512>}, {pipeline_mode = #tpu.pipeline_mode<synchronous>, transform_indices = @transform_1, window_bounds = array<i64: 16, 112>}, {pipeline_mode = #tpu.pipeline_mode<synchronous>, transform_indices = @transform_2, window_bounds = array<i64: 16, 19>}, {pipeline_mode = #tpu.pipeline_mode<synchronous>, transform_indices = @transform_3, window_bounds = array<i64: 16, 8>}, {pipeline_mode = #tpu.pipeline_mode<synchronous>, transform_indices = @transform_4, window_bounds = array<i64: 16, 16>}, {pipeline_mode = #tpu.pipeline_mode<synchronous>, transform_indices = @transform_5, window_bounds = array<i64: 16, 16>}, {pipeline_mode = #tpu.pipeline_mode<synchronous>, transform_indices = @transform_6, window_bounds = array<i64: 16, 16>}, {pipeline_mode = #tpu.pipeline_mode<synchronous>, transform_indices = @transform_7, window_bounds = array<i64: 16, 16>}, {pipeline_mode = #tpu.pipeline_mode<synchronous>, transform_indices = @transform_8, window_bounds = array<i64: 16, 16>}, {pipeline_mode = #tpu.pipeline_mode<synchronous>, transform_indices = @transform_9, window_bounds = array<i64: 16, 8>}, {pipeline_mode = #tpu.pipeline_mode<synchronous>, transform_indices = @transform_10, window_bounds = array<i64: 16, 512>}]} {
    %c0 = arith.constant 0 : index
    %c0_0 = arith.constant 0 : index
    %0 = vector.load %arg2[%c0, %c0_0] : memref<16x112xf32, #tpu.memory_space<vmem>>, vector<16x112xf32>
    %c0_1 = arith.constant 0 : index
    %c0_2 = arith.constant 0 : index
    %1 = vector.load %arg3[%c0_1, %c0_2] : memref<16x19xf32, #tpu.memory_space<vmem>>, vector<16x19xf32>
    %2 = tpu.iota {dimensions = array<i32: 1>} : vector<1x512xi32>
    %c255_i32 = arith.constant 255 : i32
    %3 = vector.broadcast %c255_i32 : i32 to vector<1x512xi32>
    %4 = arith.andi %2, %3 : vector<1x512xi32>
    %c15_i32 = arith.constant 15 : i32
    %5 = vector.broadcast %c15_i32 : i32 to vector<1x512xi32>
    %6 = arith.andi %2, %5 : vector<1x512xi32>
    %c0_3 = arith.constant 0 : index
    %c0_4 = arith.constant 0 : index
    %7 = vector.load %arg1[%c0_3, %c0_4] : memref<8x512xf32, #tpu.memory_space<vmem>>, vector<8x512xf32>
    %c0_5 = arith.constant 0 : index
    %c0_6 = arith.constant 0 : index
    %8 = vector.load %arg10[%c0_5, %c0_6] : memref<16x8xf32, #tpu.memory_space<vmem>>, vector<16x8xf32>
    %cst = arith.constant dense<0.000000e+00> : vector<16x512xf32>
    %9 = tpu.matmul %8, %7, %cst {dimension_numbers = #tpu.dot_dimension_numbers<[1], [0], [0], [1], [0, 0, 1, 1], [], []>} : vector<16x8xf32>, vector<8x512xf32>, vector<16x512xf32> -> vector<16x512xf32>
    %10 = vector.extract_strided_slice %1 {offsets = [0, 18], sizes = [16, 1], strides = [1, 1]} : vector<16x19xf32> to vector<16x1xf32>
    %11 = vector.broadcast %10 : vector<16x1xf32> to vector<16x512xf32>
    %12 = arith.addf %9, %11 : vector<16x512xf32>
    %13 = vector.extract_strided_slice %1 {offsets = [0, 0], sizes = [8, 1], strides = [1, 1]} : vector<16x19xf32> to vector<8x1xf32>
    %14 = vector.broadcast %13 : vector<8x1xf32> to vector<8x512xf32>
    %15 = arith.mulf %7, %14 : vector<8x512xf32>
    %16 = vector.extract_strided_slice %1 {offsets = [0, 1], sizes = [8, 1], strides = [1, 1]} : vector<16x19xf32> to vector<8x1xf32>
    %17 = vector.broadcast %16 : vector<8x1xf32> to vector<8x512xf32>
    %18 = arith.addf %15, %17 : vector<8x512xf32>
    %c0_7 = arith.constant 0 : index
    %c0_8 = arith.constant 0 : index
    %19 = vector.load %arg4[%c0_7, %c0_8] : memref<16x8xf32, #tpu.memory_space<vmem>>, vector<16x8xf32>
    %cst_9 = arith.constant dense<0.000000e+00> : vector<16x512xf32>
    %20 = tpu.matmul %19, %18, %cst_9 {dimension_numbers = #tpu.dot_dimension_numbers<[1], [0], [0], [1], [0, 0, 1, 1], [], []>} : vector<16x8xf32>, vector<8x512xf32>, vector<16x512xf32> -> vector<16x512xf32>
    %21 = vector.extract_strided_slice %1 {offsets = [0, 4], sizes = [16, 1], strides = [1, 1]} : vector<16x19xf32> to vector<16x1xf32>
    %22 = vector.broadcast %21 : vector<16x1xf32> to vector<16x512xf32>
    %23 = arith.addf %20, %22 : vector<16x512xf32>
    %cst_10 = arith.constant 5.000000e-01 : f32
    %24 = vector.broadcast %cst_10 : f32 to vector<16x512xf32>
    %25 = arith.mulf %24, %23 : vector<16x512xf32>
    %cst_11 = arith.constant 4.471500e-02 : f32
    %26 = vector.broadcast %cst_11 : f32 to vector<16x512xf32>
    %27 = arith.mulf %26, %23 : vector<16x512xf32>
    %28 = arith.mulf %27, %23 : vector<16x512xf32>
    %29 = arith.mulf %28, %23 : vector<16x512xf32>
    %30 = arith.addf %23, %29 : vector<16x512xf32>
    %cst_12 = arith.constant 0.797884583 : f32
    %31 = vector.broadcast %cst_12 : f32 to vector<16x512xf32>
    %32 = arith.mulf %31, %30 : vector<16x512xf32>
    %33 = math.tanh %32 : vector<16x512xf32>
    %cst_13 = arith.constant 1.000000e+00 : f32
    %34 = vector.broadcast %cst_13 : f32 to vector<16x512xf32>
    %35 = arith.addf %34, %33 : vector<16x512xf32>
    %36 = arith.mulf %25, %35 : vector<16x512xf32>
    %c0_14 = arith.constant 0 : index
    %c0_15 = arith.constant 0 : index
    %37 = vector.load %arg5[%c0_14, %c0_15] : memref<16x16xf32, #tpu.memory_space<vmem>>, vector<16x16xf32>
    %cst_16 = arith.constant dense<0.000000e+00> : vector<16x512xf32>
    %38 = tpu.matmul %37, %36, %cst_16 {dimension_numbers = #tpu.dot_dimension_numbers<[1], [0], [0], [1], [0, 0, 1, 1], [], []>} : vector<16x16xf32>, vector<16x512xf32>, vector<16x512xf32> -> vector<16x512xf32>
    %39 = vector.extract_strided_slice %1 {offsets = [0, 5], sizes = [16, 1], strides = [1, 1]} : vector<16x19xf32> to vector<16x1xf32>
    %40 = vector.broadcast %39 : vector<16x1xf32> to vector<16x512xf32>
    %41 = arith.addf %38, %40 : vector<16x512xf32>
    %42 = arith.negf %41 : vector<16x512xf32>
    %43 = math.exp %42 : vector<16x512xf32>
    %cst_17 = arith.constant 1.000000e+00 : f32
    %44 = vector.broadcast %cst_17 : f32 to vector<16x512xf32>
    %45 = arith.addf %44, %43 : vector<16x512xf32>
    %46 = arith.divf %44, %45 : vector<16x512xf32>
    %47 = vector.extract_strided_slice %0 {offsets = [0, 0], sizes = [16, 25], strides = [1, 1]} : vector<16x112xf32> to vector<16x25xf32>
    %c34_i32 = arith.constant 34 : i32
    %48 = tpu.dynamic_rotate %36 by %c34_i32 dim 1 : vector<16x512xf32>, i32 -> vector<16x512xf32>
    %c32_i32 = arith.constant 32 : i32
    %49 = vector.broadcast %c32_i32 : i32 to vector<1x512xi32>
    %50 = arith.cmpi sge, %4, %49 : vector<1x512xi32>
    %c2_i32 = arith.constant 2 : i32
    %51 = vector.broadcast %c2_i32 : i32 to vector<1x512xi32>
    %52 = arith.cmpi sge, %6, %51 : vector<1x512xi32>
    %53 = arith.andi %50, %52 : vector<1x512xi1>
    %54 = arith.extui %53 : vector<1x512xi1> to vector<1x512xi32>
    %55 = arith.sitofp %54 : vector<1x512xi32> to vector<1x512xf32>
    %56 = vector.broadcast %55 : vector<1x512xf32> to vector<16x512xf32>
    %57 = arith.mulf %48, %56 : vector<16x512xf32>
    %58 = vector.extract_strided_slice %47 {offsets = [0, 0], sizes = [16, 1], strides = [1, 1]} : vector<16x25xf32> to vector<16x1xf32>
    %59 = vector.broadcast %58 : vector<16x1xf32> to vector<16x512xf32>
    %60 = arith.mulf %57, %59 : vector<16x512xf32>
    %c33_i32 = arith.constant 33 : i32
    %61 = tpu.dynamic_rotate %36 by %c33_i32 dim 1 : vector<16x512xf32>, i32 -> vector<16x512xf32>
    %c32_i32_18 = arith.constant 32 : i32
    %62 = vector.broadcast %c32_i32_18 : i32 to vector<1x512xi32>
    %63 = arith.cmpi sge, %4, %62 : vector<1x512xi32>
    %c1_i32 = arith.constant 1 : i32
    %64 = vector.broadcast %c1_i32 : i32 to vector<1x512xi32>
    %65 = arith.cmpi sge, %6, %64 : vector<1x512xi32>
    %66 = arith.andi %63, %65 : vector<1x512xi1>
    %67 = arith.extui %66 : vector<1x512xi1> to vector<1x512xi32>
    %68 = arith.sitofp %67 : vector<1x512xi32> to vector<1x512xf32>
    %69 = vector.broadcast %68 : vector<1x512xf32> to vector<16x512xf32>
    %70 = arith.mulf %61, %69 : vector<16x512xf32>
    %71 = vector.extract_strided_slice %47 {offsets = [0, 1], sizes = [16, 1], strides = [1, 1]} : vector<16x25xf32> to vector<16x1xf32>
    %72 = vector.broadcast %71 : vector<16x1xf32> to vector<16x512xf32>
    %73 = arith.mulf %70, %72 : vector<16x512xf32>
    %74 = arith.addf %60, %73 : vector<16x512xf32>
    %c32_i32_19 = arith.constant 32 : i32
    %75 = tpu.dynamic_rotate %36 by %c32_i32_19 dim 1 : vector<16x512xf32>, i32 -> vector<16x512xf32>
    %c32_i32_20 = arith.constant 32 : i32
    %76 = vector.broadcast %c32_i32_20 : i32 to vector<1x512xi32>
    %77 = arith.cmpi sge, %4, %76 : vector<1x512xi32>
    %78 = arith.extui %77 : vector<1x512xi1> to vector<1x512xi32>
    %79 = arith.sitofp %78 : vector<1x512xi32> to vector<1x512xf32>
    %80 = vector.broadcast %79 : vector<1x512xf32> to vector<16x512xf32>
    %81 = arith.mulf %75, %80 : vector<16x512xf32>
    %82 = vector.extract_strided_slice %47 {offsets = [0, 2], sizes = [16, 1], strides = [1, 1]} : vector<16x25xf32> to vector<16x1xf32>
    %83 = vector.broadcast %82 : vector<16x1xf32> to vector<16x512xf32>
    %84 = arith.mulf %81, %83 : vector<16x512xf32>
    %85 = arith.addf %74, %84 : vector<16x512xf32>
    %c31_i32 = arith.constant 31 : i32
    %86 = tpu.dynamic_rotate %36 by %c31_i32 dim 1 : vector<16x512xf32>, i32 -> vector<16x512xf32>
    %c32_i32_21 = arith.constant 32 : i32
    %87 = vector.broadcast %c32_i32_21 : i32 to vector<1x512xi32>
    %88 = arith.cmpi sge, %4, %87 : vector<1x512xi32>
    %c15_i32_22 = arith.constant 15 : i32
    %89 = vector.broadcast %c15_i32_22 : i32 to vector<1x512xi32>
    %90 = arith.cmpi slt, %6, %89 : vector<1x512xi32>
    %91 = arith.andi %88, %90 : vector<1x512xi1>
    %92 = arith.extui %91 : vector<1x512xi1> to vector<1x512xi32>
    %93 = arith.sitofp %92 : vector<1x512xi32> to vector<1x512xf32>
    %94 = vector.broadcast %93 : vector<1x512xf32> to vector<16x512xf32>
    %95 = arith.mulf %86, %94 : vector<16x512xf32>
    %96 = vector.extract_strided_slice %47 {offsets = [0, 3], sizes = [16, 1], strides = [1, 1]} : vector<16x25xf32> to vector<16x1xf32>
    %97 = vector.broadcast %96 : vector<16x1xf32> to vector<16x512xf32>
    %98 = arith.mulf %95, %97 : vector<16x512xf32>
    %99 = arith.addf %85, %98 : vector<16x512xf32>
    %c30_i32 = arith.constant 30 : i32
    %100 = tpu.dynamic_rotate %36 by %c30_i32 dim 1 : vector<16x512xf32>, i32 -> vector<16x512xf32>
    %c32_i32_23 = arith.constant 32 : i32
    %101 = vector.broadcast %c32_i32_23 : i32 to vector<1x512xi32>
    %102 = arith.cmpi sge, %4, %101 : vector<1x512xi32>
    %c14_i32 = arith.constant 14 : i32
    %103 = vector.broadcast %c14_i32 : i32 to vector<1x512xi32>
    %104 = arith.cmpi slt, %6, %103 : vector<1x512xi32>
    %105 = arith.andi %102, %104 : vector<1x512xi1>
    %106 = arith.extui %105 : vector<1x512xi1> to vector<1x512xi32>
    %107 = arith.sitofp %106 : vector<1x512xi32> to vector<1x512xf32>
    %108 = vector.broadcast %107 : vector<1x512xf32> to vector<16x512xf32>
    %109 = arith.mulf %100, %108 : vector<16x512xf32>
    %110 = vector.extract_strided_slice %47 {offsets = [0, 4], sizes = [16, 1], strides = [1, 1]} : vector<16x25xf32> to vector<16x1xf32>
    %111 = vector.broadcast %110 : vector<16x1xf32> to vector<16x512xf32>
    %112 = arith.mulf %109, %111 : vector<16x512xf32>
    %113 = arith.addf %99, %112 : vector<16x512xf32>
    %c18_i32 = arith.constant 18 : i32
    %114 = tpu.dynamic_rotate %36 by %c18_i32 dim 1 : vector<16x512xf32>, i32 -> vector<16x512xf32>
    %c16_i32 = arith.constant 16 : i32
    %115 = vector.broadcast %c16_i32 : i32 to vector<1x512xi32>
    %116 = arith.cmpi sge, %4, %115 : vector<1x512xi32>
    %c2_i32_24 = arith.constant 2 : i32
    %117 = vector.broadcast %c2_i32_24 : i32 to vector<1x512xi32>
    %118 = arith.cmpi sge, %6, %117 : vector<1x512xi32>
    %119 = arith.andi %116, %118 : vector<1x512xi1>
    %120 = arith.extui %119 : vector<1x512xi1> to vector<1x512xi32>
    %121 = arith.sitofp %120 : vector<1x512xi32> to vector<1x512xf32>
    %122 = vector.broadcast %121 : vector<1x512xf32> to vector<16x512xf32>
    %123 = arith.mulf %114, %122 : vector<16x512xf32>
    %124 = vector.extract_strided_slice %47 {offsets = [0, 5], sizes = [16, 1], strides = [1, 1]} : vector<16x25xf32> to vector<16x1xf32>
    %125 = vector.broadcast %124 : vector<16x1xf32> to vector<16x512xf32>
    %126 = arith.mulf %123, %125 : vector<16x512xf32>
    %127 = arith.addf %113, %126 : vector<16x512xf32>
    %c17_i32 = arith.constant 17 : i32
    %128 = tpu.dynamic_rotate %36 by %c17_i32 dim 1 : vector<16x512xf32>, i32 -> vector<16x512xf32>
    %c16_i32_25 = arith.constant 16 : i32
    %129 = vector.broadcast %c16_i32_25 : i32 to vector<1x512xi32>
    %130 = arith.cmpi sge, %4, %129 : vector<1x512xi32>
    %c1_i32_26 = arith.constant 1 : i32
    %131 = vector.broadcast %c1_i32_26 : i32 to vector<1x512xi32>
    %132 = arith.cmpi sge, %6, %131 : vector<1x512xi32>
    %133 = arith.andi %130, %132 : vector<1x512xi1>
    %134 = arith.extui %133 : vector<1x512xi1> to vector<1x512xi32>
    %135 = arith.sitofp %134 : vector<1x512xi32> to vector<1x512xf32>
    %136 = vector.broadcast %135 : vector<1x512xf32> to vector<16x512xf32>
    %137 = arith.mulf %128, %136 : vector<16x512xf32>
    %138 = vector.extract_strided_slice %47 {offsets = [0, 6], sizes = [16, 1], strides = [1, 1]} : vector<16x25xf32> to vector<16x1xf32>
    %139 = vector.broadcast %138 : vector<16x1xf32> to vector<16x512xf32>
    %140 = arith.mulf %137, %139 : vector<16x512xf32>
    %141 = arith.addf %127, %140 : vector<16x512xf32>
    %c16_i32_27 = arith.constant 16 : i32
    %142 = tpu.dynamic_rotate %36 by %c16_i32_27 dim 1 : vector<16x512xf32>, i32 -> vector<16x512xf32>
    %c16_i32_28 = arith.constant 16 : i32
    %143 = vector.broadcast %c16_i32_28 : i32 to vector<1x512xi32>
    %144 = arith.cmpi sge, %4, %143 : vector<1x512xi32>
    %145 = arith.extui %144 : vector<1x512xi1> to vector<1x512xi32>
    %146 = arith.sitofp %145 : vector<1x512xi32> to vector<1x512xf32>
    %147 = vector.broadcast %146 : vector<1x512xf32> to vector<16x512xf32>
    %148 = arith.mulf %142, %147 : vector<16x512xf32>
    %149 = vector.extract_strided_slice %47 {offsets = [0, 7], sizes = [16, 1], strides = [1, 1]} : vector<16x25xf32> to vector<16x1xf32>
    %150 = vector.broadcast %149 : vector<16x1xf32> to vector<16x512xf32>
    %151 = arith.mulf %148, %150 : vector<16x512xf32>
    %152 = arith.addf %141, %151 : vector<16x512xf32>
    %c15_i32_29 = arith.constant 15 : i32
    %153 = tpu.dynamic_rotate %36 by %c15_i32_29 dim 1 : vector<16x512xf32>, i32 -> vector<16x512xf32>
    %c16_i32_30 = arith.constant 16 : i32
    %154 = vector.broadcast %c16_i32_30 : i32 to vector<1x512xi32>
    %155 = arith.cmpi sge, %4, %154 : vector<1x512xi32>
    %c15_i32_31 = arith.constant 15 : i32
    %156 = vector.broadcast %c15_i32_31 : i32 to vector<1x512xi32>
    %157 = arith.cmpi slt, %6, %156 : vector<1x512xi32>
    %158 = arith.andi %155, %157 : vector<1x512xi1>
    %159 = arith.extui %158 : vector<1x512xi1> to vector<1x512xi32>
    %160 = arith.sitofp %159 : vector<1x512xi32> to vector<1x512xf32>
    %161 = vector.broadcast %160 : vector<1x512xf32> to vector<16x512xf32>
    %162 = arith.mulf %153, %161 : vector<16x512xf32>
    %163 = vector.extract_strided_slice %47 {offsets = [0, 8], sizes = [16, 1], strides = [1, 1]} : vector<16x25xf32> to vector<16x1xf32>
    %164 = vector.broadcast %163 : vector<16x1xf32> to vector<16x512xf32>
    %165 = arith.mulf %162, %164 : vector<16x512xf32>
    %166 = arith.addf %152, %165 : vector<16x512xf32>
    %c14_i32_32 = arith.constant 14 : i32
    %167 = tpu.dynamic_rotate %36 by %c14_i32_32 dim 1 : vector<16x512xf32>, i32 -> vector<16x512xf32>
    %c16_i32_33 = arith.constant 16 : i32
    %168 = vector.broadcast %c16_i32_33 : i32 to vector<1x512xi32>
    %169 = arith.cmpi sge, %4, %168 : vector<1x512xi32>
    %c14_i32_34 = arith.constant 14 : i32
    %170 = vector.broadcast %c14_i32_34 : i32 to vector<1x512xi32>
    %171 = arith.cmpi slt, %6, %170 : vector<1x512xi32>
    %172 = arith.andi %169, %171 : vector<1x512xi1>
    %173 = arith.extui %172 : vector<1x512xi1> to vector<1x512xi32>
    %174 = arith.sitofp %173 : vector<1x512xi32> to vector<1x512xf32>
    %175 = vector.broadcast %174 : vector<1x512xf32> to vector<16x512xf32>
    %176 = arith.mulf %167, %175 : vector<16x512xf32>
    %177 = vector.extract_strided_slice %47 {offsets = [0, 9], sizes = [16, 1], strides = [1, 1]} : vector<16x25xf32> to vector<16x1xf32>
    %178 = vector.broadcast %177 : vector<16x1xf32> to vector<16x512xf32>
    %179 = arith.mulf %176, %178 : vector<16x512xf32>
    %180 = arith.addf %166, %179 : vector<16x512xf32>
    %c2_i32_35 = arith.constant 2 : i32
    %181 = tpu.dynamic_rotate %36 by %c2_i32_35 dim 1 : vector<16x512xf32>, i32 -> vector<16x512xf32>
    %c2_i32_36 = arith.constant 2 : i32
    %182 = vector.broadcast %c2_i32_36 : i32 to vector<1x512xi32>
    %183 = arith.cmpi sge, %6, %182 : vector<1x512xi32>
    %184 = arith.extui %183 : vector<1x512xi1> to vector<1x512xi32>
    %185 = arith.sitofp %184 : vector<1x512xi32> to vector<1x512xf32>
    %186 = vector.broadcast %185 : vector<1x512xf32> to vector<16x512xf32>
    %187 = arith.mulf %181, %186 : vector<16x512xf32>
    %188 = vector.extract_strided_slice %47 {offsets = [0, 10], sizes = [16, 1], strides = [1, 1]} : vector<16x25xf32> to vector<16x1xf32>
    %189 = vector.broadcast %188 : vector<16x1xf32> to vector<16x512xf32>
    %190 = arith.mulf %187, %189 : vector<16x512xf32>
    %191 = arith.addf %180, %190 : vector<16x512xf32>
    %c1_i32_37 = arith.constant 1 : i32
    %192 = tpu.dynamic_rotate %36 by %c1_i32_37 dim 1 : vector<16x512xf32>, i32 -> vector<16x512xf32>
    %c1_i32_38 = arith.constant 1 : i32
    %193 = vector.broadcast %c1_i32_38 : i32 to vector<1x512xi32>
    %194 = arith.cmpi sge, %6, %193 : vector<1x512xi32>
    %195 = arith.extui %194 : vector<1x512xi1> to vector<1x512xi32>
    %196 = arith.sitofp %195 : vector<1x512xi32> to vector<1x512xf32>
    %197 = vector.broadcast %196 : vector<1x512xf32> to vector<16x512xf32>
    %198 = arith.mulf %192, %197 : vector<16x512xf32>
    %199 = vector.extract_strided_slice %47 {offsets = [0, 11], sizes = [16, 1], strides = [1, 1]} : vector<16x25xf32> to vector<16x1xf32>
    %200 = vector.broadcast %199 : vector<16x1xf32> to vector<16x512xf32>
    %201 = arith.mulf %198, %200 : vector<16x512xf32>
    %202 = arith.addf %191, %201 : vector<16x512xf32>
    %203 = vector.extract_strided_slice %47 {offsets = [0, 12], sizes = [16, 1], strides = [1, 1]} : vector<16x25xf32> to vector<16x1xf32>
    %204 = vector.broadcast %203 : vector<16x1xf32> to vector<16x512xf32>
    %205 = arith.mulf %36, %204 : vector<16x512xf32>
    %206 = arith.addf %202, %205 : vector<16x512xf32>
    %c511_i32 = arith.constant 511 : i32
    %207 = tpu.dynamic_rotate %36 by %c511_i32 dim 1 : vector<16x512xf32>, i32 -> vector<16x512xf32>
    %c15_i32_39 = arith.constant 15 : i32
    %208 = vector.broadcast %c15_i32_39 : i32 to vector<1x512xi32>
    %209 = arith.cmpi slt, %6, %208 : vector<1x512xi32>
    %210 = arith.extui %209 : vector<1x512xi1> to vector<1x512xi32>
    %211 = arith.sitofp %210 : vector<1x512xi32> to vector<1x512xf32>
    %212 = vector.broadcast %211 : vector<1x512xf32> to vector<16x512xf32>
    %213 = arith.mulf %207, %212 : vector<16x512xf32>
    %214 = vector.extract_strided_slice %47 {offsets = [0, 13], sizes = [16, 1], strides = [1, 1]} : vector<16x25xf32> to vector<16x1xf32>
    %215 = vector.broadcast %214 : vector<16x1xf32> to vector<16x512xf32>
    %216 = arith.mulf %213, %215 : vector<16x512xf32>
    %217 = arith.addf %206, %216 : vector<16x512xf32>
    %c510_i32 = arith.constant 510 : i32
    %218 = tpu.dynamic_rotate %36 by %c510_i32 dim 1 : vector<16x512xf32>, i32 -> vector<16x512xf32>
    %c14_i32_40 = arith.constant 14 : i32
    %219 = vector.broadcast %c14_i32_40 : i32 to vector<1x512xi32>
    %220 = arith.cmpi slt, %6, %219 : vector<1x512xi32>
    %221 = arith.extui %220 : vector<1x512xi1> to vector<1x512xi32>
    %222 = arith.sitofp %221 : vector<1x512xi32> to vector<1x512xf32>
    %223 = vector.broadcast %222 : vector<1x512xf32> to vector<16x512xf32>
    %224 = arith.mulf %218, %223 : vector<16x512xf32>
    %225 = vector.extract_strided_slice %47 {offsets = [0, 14], sizes = [16, 1], strides = [1, 1]} : vector<16x25xf32> to vector<16x1xf32>
    %226 = vector.broadcast %225 : vector<16x1xf32> to vector<16x512xf32>
    %227 = arith.mulf %224, %226 : vector<16x512xf32>
    %228 = arith.addf %217, %227 : vector<16x512xf32>
    %c498_i32 = arith.constant 498 : i32
    %229 = tpu.dynamic_rotate %36 by %c498_i32 dim 1 : vector<16x512xf32>, i32 -> vector<16x512xf32>
    %c240_i32 = arith.constant 240 : i32
    %230 = vector.broadcast %c240_i32 : i32 to vector<1x512xi32>
    %231 = arith.cmpi slt, %4, %230 : vector<1x512xi32>
    %c2_i32_41 = arith.constant 2 : i32
    %232 = vector.broadcast %c2_i32_41 : i32 to vector<1x512xi32>
    %233 = arith.cmpi sge, %6, %232 : vector<1x512xi32>
    %234 = arith.andi %231, %233 : vector<1x512xi1>
    %235 = arith.extui %234 : vector<1x512xi1> to vector<1x512xi32>
    %236 = arith.sitofp %235 : vector<1x512xi32> to vector<1x512xf32>
    %237 = vector.broadcast %236 : vector<1x512xf32> to vector<16x512xf32>
    %238 = arith.mulf %229, %237 : vector<16x512xf32>
    %239 = vector.extract_strided_slice %47 {offsets = [0, 15], sizes = [16, 1], strides = [1, 1]} : vector<16x25xf32> to vector<16x1xf32>
    %240 = vector.broadcast %239 : vector<16x1xf32> to vector<16x512xf32>
    %241 = arith.mulf %238, %240 : vector<16x512xf32>
    %242 = arith.addf %228, %241 : vector<16x512xf32>
    %c497_i32 = arith.constant 497 : i32
    %243 = tpu.dynamic_rotate %36 by %c497_i32 dim 1 : vector<16x512xf32>, i32 -> vector<16x512xf32>
    %c240_i32_42 = arith.constant 240 : i32
    %244 = vector.broadcast %c240_i32_42 : i32 to vector<1x512xi32>
    %245 = arith.cmpi slt, %4, %244 : vector<1x512xi32>
    %c1_i32_43 = arith.constant 1 : i32
    %246 = vector.broadcast %c1_i32_43 : i32 to vector<1x512xi32>
    %247 = arith.cmpi sge, %6, %246 : vector<1x512xi32>
    %248 = arith.andi %245, %247 : vector<1x512xi1>
    %249 = arith.extui %248 : vector<1x512xi1> to vector<1x512xi32>
    %250 = arith.sitofp %249 : vector<1x512xi32> to vector<1x512xf32>
    %251 = vector.broadcast %250 : vector<1x512xf32> to vector<16x512xf32>
    %252 = arith.mulf %243, %251 : vector<16x512xf32>
    %253 = vector.extract_strided_slice %47 {offsets = [0, 16], sizes = [16, 1], strides = [1, 1]} : vector<16x25xf32> to vector<16x1xf32>
    %254 = vector.broadcast %253 : vector<16x1xf32> to vector<16x512xf32>
    %255 = arith.mulf %252, %254 : vector<16x512xf32>
    %256 = arith.addf %242, %255 : vector<16x512xf32>
    %c496_i32 = arith.constant 496 : i32
    %257 = tpu.dynamic_rotate %36 by %c496_i32 dim 1 : vector<16x512xf32>, i32 -> vector<16x512xf32>
    %c240_i32_44 = arith.constant 240 : i32
    %258 = vector.broadcast %c240_i32_44 : i32 to vector<1x512xi32>
    %259 = arith.cmpi slt, %4, %258 : vector<1x512xi32>
    %260 = arith.extui %259 : vector<1x512xi1> to vector<1x512xi32>
    %261 = arith.sitofp %260 : vector<1x512xi32> to vector<1x512xf32>
    %262 = vector.broadcast %261 : vector<1x512xf32> to vector<16x512xf32>
    %263 = arith.mulf %257, %262 : vector<16x512xf32>
    %264 = vector.extract_strided_slice %47 {offsets = [0, 17], sizes = [16, 1], strides = [1, 1]} : vector<16x25xf32> to vector<16x1xf32>
    %265 = vector.broadcast %264 : vector<16x1xf32> to vector<16x512xf32>
    %266 = arith.mulf %263, %265 : vector<16x512xf32>
    %267 = arith.addf %256, %266 : vector<16x512xf32>
    %c495_i32 = arith.constant 495 : i32
    %268 = tpu.dynamic_rotate %36 by %c495_i32 dim 1 : vector<16x512xf32>, i32 -> vector<16x512xf32>
    %c240_i32_45 = arith.constant 240 : i32
    %269 = vector.broadcast %c240_i32_45 : i32 to vector<1x512xi32>
    %270 = arith.cmpi slt, %4, %269 : vector<1x512xi32>
    %c15_i32_46 = arith.constant 15 : i32
    %271 = vector.broadcast %c15_i32_46 : i32 to vector<1x512xi32>
    %272 = arith.cmpi slt, %6, %271 : vector<1x512xi32>
    %273 = arith.andi %270, %272 : vector<1x512xi1>
    %274 = arith.extui %273 : vector<1x512xi1> to vector<1x512xi32>
    %275 = arith.sitofp %274 : vector<1x512xi32> to vector<1x512xf32>
    %276 = vector.broadcast %275 : vector<1x512xf32> to vector<16x512xf32>
    %277 = arith.mulf %268, %276 : vector<16x512xf32>
    %278 = vector.extract_strided_slice %47 {offsets = [0, 18], sizes = [16, 1], strides = [1, 1]} : vector<16x25xf32> to vector<16x1xf32>
    %279 = vector.broadcast %278 : vector<16x1xf32> to vector<16x512xf32>
    %280 = arith.mulf %277, %279 : vector<16x512xf32>
    %281 = arith.addf %267, %280 : vector<16x512xf32>
    %c494_i32 = arith.constant 494 : i32
    %282 = tpu.dynamic_rotate %36 by %c494_i32 dim 1 : vector<16x512xf32>, i32 -> vector<16x512xf32>
    %c240_i32_47 = arith.constant 240 : i32
    %283 = vector.broadcast %c240_i32_47 : i32 to vector<1x512xi32>
    %284 = arith.cmpi slt, %4, %283 : vector<1x512xi32>
    %c14_i32_48 = arith.constant 14 : i32
    %285 = vector.broadcast %c14_i32_48 : i32 to vector<1x512xi32>
    %286 = arith.cmpi slt, %6, %285 : vector<1x512xi32>
    %287 = arith.andi %284, %286 : vector<1x512xi1>
    %288 = arith.extui %287 : vector<1x512xi1> to vector<1x512xi32>
    %289 = arith.sitofp %288 : vector<1x512xi32> to vector<1x512xf32>
    %290 = vector.broadcast %289 : vector<1x512xf32> to vector<16x512xf32>
    %291 = arith.mulf %282, %290 : vector<16x512xf32>
    %292 = vector.extract_strided_slice %47 {offsets = [0, 19], sizes = [16, 1], strides = [1, 1]} : vector<16x25xf32> to vector<16x1xf32>
    %293 = vector.broadcast %292 : vector<16x1xf32> to vector<16x512xf32>
    %294 = arith.mulf %291, %293 : vector<16x512xf32>
    %295 = arith.addf %281, %294 : vector<16x512xf32>
    %c482_i32 = arith.constant 482 : i32
    %296 = tpu.dynamic_rotate %36 by %c482_i32 dim 1 : vector<16x512xf32>, i32 -> vector<16x512xf32>
    %c224_i32 = arith.constant 224 : i32
    %297 = vector.broadcast %c224_i32 : i32 to vector<1x512xi32>
    %298 = arith.cmpi slt, %4, %297 : vector<1x512xi32>
    %c2_i32_49 = arith.constant 2 : i32
    %299 = vector.broadcast %c2_i32_49 : i32 to vector<1x512xi32>
    %300 = arith.cmpi sge, %6, %299 : vector<1x512xi32>
    %301 = arith.andi %298, %300 : vector<1x512xi1>
    %302 = arith.extui %301 : vector<1x512xi1> to vector<1x512xi32>
    %303 = arith.sitofp %302 : vector<1x512xi32> to vector<1x512xf32>
    %304 = vector.broadcast %303 : vector<1x512xf32> to vector<16x512xf32>
    %305 = arith.mulf %296, %304 : vector<16x512xf32>
    %306 = vector.extract_strided_slice %47 {offsets = [0, 20], sizes = [16, 1], strides = [1, 1]} : vector<16x25xf32> to vector<16x1xf32>
    %307 = vector.broadcast %306 : vector<16x1xf32> to vector<16x512xf32>
    %308 = arith.mulf %305, %307 : vector<16x512xf32>
    %309 = arith.addf %295, %308 : vector<16x512xf32>
    %c481_i32 = arith.constant 481 : i32
    %310 = tpu.dynamic_rotate %36 by %c481_i32 dim 1 : vector<16x512xf32>, i32 -> vector<16x512xf32>
    %c224_i32_50 = arith.constant 224 : i32
    %311 = vector.broadcast %c224_i32_50 : i32 to vector<1x512xi32>
    %312 = arith.cmpi slt, %4, %311 : vector<1x512xi32>
    %c1_i32_51 = arith.constant 1 : i32
    %313 = vector.broadcast %c1_i32_51 : i32 to vector<1x512xi32>
    %314 = arith.cmpi sge, %6, %313 : vector<1x512xi32>
    %315 = arith.andi %312, %314 : vector<1x512xi1>
    %316 = arith.extui %315 : vector<1x512xi1> to vector<1x512xi32>
    %317 = arith.sitofp %316 : vector<1x512xi32> to vector<1x512xf32>
    %318 = vector.broadcast %317 : vector<1x512xf32> to vector<16x512xf32>
    %319 = arith.mulf %310, %318 : vector<16x512xf32>
    %320 = vector.extract_strided_slice %47 {offsets = [0, 21], sizes = [16, 1], strides = [1, 1]} : vector<16x25xf32> to vector<16x1xf32>
    %321 = vector.broadcast %320 : vector<16x1xf32> to vector<16x512xf32>
    %322 = arith.mulf %319, %321 : vector<16x512xf32>
    %323 = arith.addf %309, %322 : vector<16x512xf32>
    %c480_i32 = arith.constant 480 : i32
    %324 = tpu.dynamic_rotate %36 by %c480_i32 dim 1 : vector<16x512xf32>, i32 -> vector<16x512xf32>
    %c224_i32_52 = arith.constant 224 : i32
    %325 = vector.broadcast %c224_i32_52 : i32 to vector<1x512xi32>
    %326 = arith.cmpi slt, %4, %325 : vector<1x512xi32>
    %327 = arith.extui %326 : vector<1x512xi1> to vector<1x512xi32>
    %328 = arith.sitofp %327 : vector<1x512xi32> to vector<1x512xf32>
    %329 = vector.broadcast %328 : vector<1x512xf32> to vector<16x512xf32>
    %330 = arith.mulf %324, %329 : vector<16x512xf32>
    %331 = vector.extract_strided_slice %47 {offsets = [0, 22], sizes = [16, 1], strides = [1, 1]} : vector<16x25xf32> to vector<16x1xf32>
    %332 = vector.broadcast %331 : vector<16x1xf32> to vector<16x512xf32>
    %333 = arith.mulf %330, %332 : vector<16x512xf32>
    %334 = arith.addf %323, %333 : vector<16x512xf32>
    %c479_i32 = arith.constant 479 : i32
    %335 = tpu.dynamic_rotate %36 by %c479_i32 dim 1 : vector<16x512xf32>, i32 -> vector<16x512xf32>
    %c224_i32_53 = arith.constant 224 : i32
    %336 = vector.broadcast %c224_i32_53 : i32 to vector<1x512xi32>
    %337 = arith.cmpi slt, %4, %336 : vector<1x512xi32>
    %c15_i32_54 = arith.constant 15 : i32
    %338 = vector.broadcast %c15_i32_54 : i32 to vector<1x512xi32>
    %339 = arith.cmpi slt, %6, %338 : vector<1x512xi32>
    %340 = arith.andi %337, %339 : vector<1x512xi1>
    %341 = arith.extui %340 : vector<1x512xi1> to vector<1x512xi32>
    %342 = arith.sitofp %341 : vector<1x512xi32> to vector<1x512xf32>
    %343 = vector.broadcast %342 : vector<1x512xf32> to vector<16x512xf32>
    %344 = arith.mulf %335, %343 : vector<16x512xf32>
    %345 = vector.extract_strided_slice %47 {offsets = [0, 23], sizes = [16, 1], strides = [1, 1]} : vector<16x25xf32> to vector<16x1xf32>
    %346 = vector.broadcast %345 : vector<16x1xf32> to vector<16x512xf32>
    %347 = arith.mulf %344, %346 : vector<16x512xf32>
    %348 = arith.addf %334, %347 : vector<16x512xf32>
    %c478_i32 = arith.constant 478 : i32
    %349 = tpu.dynamic_rotate %36 by %c478_i32 dim 1 : vector<16x512xf32>, i32 -> vector<16x512xf32>
    %c224_i32_55 = arith.constant 224 : i32
    %350 = vector.broadcast %c224_i32_55 : i32 to vector<1x512xi32>
    %351 = arith.cmpi slt, %4, %350 : vector<1x512xi32>
    %c14_i32_56 = arith.constant 14 : i32
    %352 = vector.broadcast %c14_i32_56 : i32 to vector<1x512xi32>
    %353 = arith.cmpi slt, %6, %352 : vector<1x512xi32>
    %354 = arith.andi %351, %353 : vector<1x512xi1>
    %355 = arith.extui %354 : vector<1x512xi1> to vector<1x512xi32>
    %356 = arith.sitofp %355 : vector<1x512xi32> to vector<1x512xf32>
    %357 = vector.broadcast %356 : vector<1x512xf32> to vector<16x512xf32>
    %358 = arith.mulf %349, %357 : vector<16x512xf32>
    %359 = vector.extract_strided_slice %47 {offsets = [0, 24], sizes = [16, 1], strides = [1, 1]} : vector<16x25xf32> to vector<16x1xf32>
    %360 = vector.broadcast %359 : vector<16x1xf32> to vector<16x512xf32>
    %361 = arith.mulf %358, %360 : vector<16x512xf32>
    %362 = arith.addf %348, %361 : vector<16x512xf32>
    %363 = vector.extract_strided_slice %1 {offsets = [0, 6], sizes = [16, 1], strides = [1, 1]} : vector<16x19xf32> to vector<16x1xf32>
    %364 = vector.broadcast %363 : vector<16x1xf32> to vector<16x512xf32>
    %365 = arith.addf %362, %364 : vector<16x512xf32>
    %366 = vector.extract_strided_slice %0 {offsets = [0, 25], sizes = [16, 7], strides = [1, 1]} : vector<16x112xf32> to vector<16x7xf32>
    %367 = vector.extract_strided_slice %0 {offsets = [0, 39], sizes = [16, 11], strides = [1, 1]} : vector<16x112xf32> to vector<16x11xf32>
    %368 = vector.extract_strided_slice %0 {offsets = [0, 61], sizes = [16, 21], strides = [1, 1]} : vector<16x112xf32> to vector<16x21xf32>
    %c10_i32 = arith.constant 10 : i32
    %369 = tpu.dynamic_rotate %365 by %c10_i32 dim 1 : vector<16x512xf32>, i32 -> vector<16x512xf32>
    %c10_i32_57 = arith.constant 10 : i32
    %370 = vector.broadcast %c10_i32_57 : i32 to vector<1x512xi32>
    %371 = arith.cmpi sge, %6, %370 : vector<1x512xi32>
    %372 = arith.extui %371 : vector<1x512xi1> to vector<1x512xi32>
    %373 = arith.sitofp %372 : vector<1x512xi32> to vector<1x512xf32>
    %374 = vector.broadcast %373 : vector<1x512xf32> to vector<16x512xf32>
    %375 = arith.mulf %369, %374 : vector<16x512xf32>
    %376 = vector.extract_strided_slice %368 {offsets = [0, 0], sizes = [16, 1], strides = [1, 1]} : vector<16x21xf32> to vector<16x1xf32>
    %377 = vector.broadcast %376 : vector<16x1xf32> to vector<16x512xf32>
    %378 = arith.mulf %375, %377 : vector<16x512xf32>
    %c9_i32 = arith.constant 9 : i32
    %379 = tpu.dynamic_rotate %365 by %c9_i32 dim 1 : vector<16x512xf32>, i32 -> vector<16x512xf32>
    %c9_i32_58 = arith.constant 9 : i32
    %380 = vector.broadcast %c9_i32_58 : i32 to vector<1x512xi32>
    %381 = arith.cmpi sge, %6, %380 : vector<1x512xi32>
    %382 = arith.extui %381 : vector<1x512xi1> to vector<1x512xi32>
    %383 = arith.sitofp %382 : vector<1x512xi32> to vector<1x512xf32>
    %384 = vector.broadcast %383 : vector<1x512xf32> to vector<16x512xf32>
    %385 = arith.mulf %379, %384 : vector<16x512xf32>
    %386 = vector.extract_strided_slice %368 {offsets = [0, 1], sizes = [16, 1], strides = [1, 1]} : vector<16x21xf32> to vector<16x1xf32>
    %387 = vector.broadcast %386 : vector<16x1xf32> to vector<16x512xf32>
    %388 = arith.mulf %385, %387 : vector<16x512xf32>
    %389 = arith.addf %378, %388 : vector<16x512xf32>
    %c8_i32 = arith.constant 8 : i32
    %390 = tpu.dynamic_rotate %365 by %c8_i32 dim 1 : vector<16x512xf32>, i32 -> vector<16x512xf32>
    %c8_i32_59 = arith.constant 8 : i32
    %391 = vector.broadcast %c8_i32_59 : i32 to vector<1x512xi32>
    %392 = arith.cmpi sge, %6, %391 : vector<1x512xi32>
    %393 = arith.extui %392 : vector<1x512xi1> to vector<1x512xi32>
    %394 = arith.sitofp %393 : vector<1x512xi32> to vector<1x512xf32>
    %395 = vector.broadcast %394 : vector<1x512xf32> to vector<16x512xf32>
    %396 = arith.mulf %390, %395 : vector<16x512xf32>
    %397 = vector.extract_strided_slice %368 {offsets = [0, 2], sizes = [16, 1], strides = [1, 1]} : vector<16x21xf32> to vector<16x1xf32>
    %398 = vector.broadcast %397 : vector<16x1xf32> to vector<16x512xf32>
    %399 = arith.mulf %396, %398 : vector<16x512xf32>
    %400 = arith.addf %389, %399 : vector<16x512xf32>
    %c7_i32 = arith.constant 7 : i32
    %401 = tpu.dynamic_rotate %365 by %c7_i32 dim 1 : vector<16x512xf32>, i32 -> vector<16x512xf32>
    %c7_i32_60 = arith.constant 7 : i32
    %402 = vector.broadcast %c7_i32_60 : i32 to vector<1x512xi32>
    %403 = arith.cmpi sge, %6, %402 : vector<1x512xi32>
    %404 = arith.extui %403 : vector<1x512xi1> to vector<1x512xi32>
    %405 = arith.sitofp %404 : vector<1x512xi32> to vector<1x512xf32>
    %406 = vector.broadcast %405 : vector<1x512xf32> to vector<16x512xf32>
    %407 = arith.mulf %401, %406 : vector<16x512xf32>
    %408 = vector.extract_strided_slice %368 {offsets = [0, 3], sizes = [16, 1], strides = [1, 1]} : vector<16x21xf32> to vector<16x1xf32>
    %409 = vector.broadcast %408 : vector<16x1xf32> to vector<16x512xf32>
    %410 = arith.mulf %407, %409 : vector<16x512xf32>
    %411 = arith.addf %400, %410 : vector<16x512xf32>
    %c6_i32 = arith.constant 6 : i32
    %412 = tpu.dynamic_rotate %365 by %c6_i32 dim 1 : vector<16x512xf32>, i32 -> vector<16x512xf32>
    %c6_i32_61 = arith.constant 6 : i32
    %413 = vector.broadcast %c6_i32_61 : i32 to vector<1x512xi32>
    %414 = arith.cmpi sge, %6, %413 : vector<1x512xi32>
    %415 = arith.extui %414 : vector<1x512xi1> to vector<1x512xi32>
    %416 = arith.sitofp %415 : vector<1x512xi32> to vector<1x512xf32>
    %417 = vector.broadcast %416 : vector<1x512xf32> to vector<16x512xf32>
    %418 = arith.mulf %412, %417 : vector<16x512xf32>
    %419 = vector.extract_strided_slice %368 {offsets = [0, 4], sizes = [16, 1], strides = [1, 1]} : vector<16x21xf32> to vector<16x1xf32>
    %420 = vector.broadcast %419 : vector<16x1xf32> to vector<16x512xf32>
    %421 = arith.mulf %418, %420 : vector<16x512xf32>
    %422 = arith.addf %411, %421 : vector<16x512xf32>
    %c5_i32 = arith.constant 5 : i32
    %423 = tpu.dynamic_rotate %365 by %c5_i32 dim 1 : vector<16x512xf32>, i32 -> vector<16x512xf32>
    %c5_i32_62 = arith.constant 5 : i32
    %424 = vector.broadcast %c5_i32_62 : i32 to vector<1x512xi32>
    %425 = arith.cmpi sge, %6, %424 : vector<1x512xi32>
    %426 = arith.extui %425 : vector<1x512xi1> to vector<1x512xi32>
    %427 = arith.sitofp %426 : vector<1x512xi32> to vector<1x512xf32>
    %428 = vector.broadcast %427 : vector<1x512xf32> to vector<16x512xf32>
    %429 = arith.mulf %423, %428 : vector<16x512xf32>
    %430 = vector.extract_strided_slice %368 {offsets = [0, 5], sizes = [16, 1], strides = [1, 1]} : vector<16x21xf32> to vector<16x1xf32>
    %431 = vector.broadcast %430 : vector<16x1xf32> to vector<16x512xf32>
    %432 = arith.mulf %429, %431 : vector<16x512xf32>
    %433 = arith.addf %422, %432 : vector<16x512xf32>
    %434 = vector.extract_strided_slice %367 {offsets = [0, 0], sizes = [16, 1], strides = [1, 1]} : vector<16x11xf32> to vector<16x1xf32>
    %435 = vector.broadcast %434 : vector<16x1xf32> to vector<16x512xf32>
    %436 = arith.mulf %429, %435 : vector<16x512xf32>
    %c4_i32 = arith.constant 4 : i32
    %437 = tpu.dynamic_rotate %365 by %c4_i32 dim 1 : vector<16x512xf32>, i32 -> vector<16x512xf32>
    %c4_i32_63 = arith.constant 4 : i32
    %438 = vector.broadcast %c4_i32_63 : i32 to vector<1x512xi32>
    %439 = arith.cmpi sge, %6, %438 : vector<1x512xi32>
    %440 = arith.extui %439 : vector<1x512xi1> to vector<1x512xi32>
    %441 = arith.sitofp %440 : vector<1x512xi32> to vector<1x512xf32>
    %442 = vector.broadcast %441 : vector<1x512xf32> to vector<16x512xf32>
    %443 = arith.mulf %437, %442 : vector<16x512xf32>
    %444 = vector.extract_strided_slice %368 {offsets = [0, 6], sizes = [16, 1], strides = [1, 1]} : vector<16x21xf32> to vector<16x1xf32>
    %445 = vector.broadcast %444 : vector<16x1xf32> to vector<16x512xf32>
    %446 = arith.mulf %443, %445 : vector<16x512xf32>
    %447 = arith.addf %433, %446 : vector<16x512xf32>
    %448 = vector.extract_strided_slice %367 {offsets = [0, 1], sizes = [16, 1], strides = [1, 1]} : vector<16x11xf32> to vector<16x1xf32>
    %449 = vector.broadcast %448 : vector<16x1xf32> to vector<16x512xf32>
    %450 = arith.mulf %443, %449 : vector<16x512xf32>
    %451 = arith.addf %436, %450 : vector<16x512xf32>
    %c3_i32 = arith.constant 3 : i32
    %452 = tpu.dynamic_rotate %365 by %c3_i32 dim 1 : vector<16x512xf32>, i32 -> vector<16x512xf32>
    %c3_i32_64 = arith.constant 3 : i32
    %453 = vector.broadcast %c3_i32_64 : i32 to vector<1x512xi32>
    %454 = arith.cmpi sge, %6, %453 : vector<1x512xi32>
    %455 = arith.extui %454 : vector<1x512xi1> to vector<1x512xi32>
    %456 = arith.sitofp %455 : vector<1x512xi32> to vector<1x512xf32>
    %457 = vector.broadcast %456 : vector<1x512xf32> to vector<16x512xf32>
    %458 = arith.mulf %452, %457 : vector<16x512xf32>
    %459 = vector.extract_strided_slice %368 {offsets = [0, 7], sizes = [16, 1], strides = [1, 1]} : vector<16x21xf32> to vector<16x1xf32>
    %460 = vector.broadcast %459 : vector<16x1xf32> to vector<16x512xf32>
    %461 = arith.mulf %458, %460 : vector<16x512xf32>
    %462 = arith.addf %447, %461 : vector<16x512xf32>
    %463 = vector.extract_strided_slice %367 {offsets = [0, 2], sizes = [16, 1], strides = [1, 1]} : vector<16x11xf32> to vector<16x1xf32>
    %464 = vector.broadcast %463 : vector<16x1xf32> to vector<16x512xf32>
    %465 = arith.mulf %458, %464 : vector<16x512xf32>
    %466 = arith.addf %451, %465 : vector<16x512xf32>
    %467 = vector.extract_strided_slice %366 {offsets = [0, 0], sizes = [16, 1], strides = [1, 1]} : vector<16x7xf32> to vector<16x1xf32>
    %468 = vector.broadcast %467 : vector<16x1xf32> to vector<16x512xf32>
    %469 = arith.mulf %458, %468 : vector<16x512xf32>
    %c2_i32_65 = arith.constant 2 : i32
    %470 = tpu.dynamic_rotate %365 by %c2_i32_65 dim 1 : vector<16x512xf32>, i32 -> vector<16x512xf32>
    %471 = vector.broadcast %185 : vector<1x512xf32> to vector<16x512xf32>
    %472 = arith.mulf %470, %471 : vector<16x512xf32>
    %473 = vector.extract_strided_slice %368 {offsets = [0, 8], sizes = [16, 1], strides = [1, 1]} : vector<16x21xf32> to vector<16x1xf32>
    %474 = vector.broadcast %473 : vector<16x1xf32> to vector<16x512xf32>
    %475 = arith.mulf %472, %474 : vector<16x512xf32>
    %476 = arith.addf %462, %475 : vector<16x512xf32>
    %477 = vector.extract_strided_slice %367 {offsets = [0, 3], sizes = [16, 1], strides = [1, 1]} : vector<16x11xf32> to vector<16x1xf32>
    %478 = vector.broadcast %477 : vector<16x1xf32> to vector<16x512xf32>
    %479 = arith.mulf %472, %478 : vector<16x512xf32>
    %480 = arith.addf %466, %479 : vector<16x512xf32>
    %481 = vector.extract_strided_slice %366 {offsets = [0, 1], sizes = [16, 1], strides = [1, 1]} : vector<16x7xf32> to vector<16x1xf32>
    %482 = vector.broadcast %481 : vector<16x1xf32> to vector<16x512xf32>
    %483 = arith.mulf %472, %482 : vector<16x512xf32>
    %484 = arith.addf %469, %483 : vector<16x512xf32>
    %c1_i32_66 = arith.constant 1 : i32
    %485 = tpu.dynamic_rotate %365 by %c1_i32_66 dim 1 : vector<16x512xf32>, i32 -> vector<16x512xf32>
    %486 = vector.broadcast %196 : vector<1x512xf32> to vector<16x512xf32>
    %487 = arith.mulf %485, %486 : vector<16x512xf32>
    %488 = vector.extract_strided_slice %368 {offsets = [0, 9], sizes = [16, 1], strides = [1, 1]} : vector<16x21xf32> to vector<16x1xf32>
    %489 = vector.broadcast %488 : vector<16x1xf32> to vector<16x512xf32>
    %490 = arith.mulf %487, %489 : vector<16x512xf32>
    %491 = arith.addf %476, %490 : vector<16x512xf32>
    %492 = vector.extract_strided_slice %367 {offsets = [0, 4], sizes = [16, 1], strides = [1, 1]} : vector<16x11xf32> to vector<16x1xf32>
    %493 = vector.broadcast %492 : vector<16x1xf32> to vector<16x512xf32>
    %494 = arith.mulf %487, %493 : vector<16x512xf32>
    %495 = arith.addf %480, %494 : vector<16x512xf32>
    %496 = vector.extract_strided_slice %366 {offsets = [0, 2], sizes = [16, 1], strides = [1, 1]} : vector<16x7xf32> to vector<16x1xf32>
    %497 = vector.broadcast %496 : vector<16x1xf32> to vector<16x512xf32>
    %498 = arith.mulf %487, %497 : vector<16x512xf32>
    %499 = arith.addf %484, %498 : vector<16x512xf32>
    %500 = vector.extract_strided_slice %368 {offsets = [0, 10], sizes = [16, 1], strides = [1, 1]} : vector<16x21xf32> to vector<16x1xf32>
    %501 = vector.broadcast %500 : vector<16x1xf32> to vector<16x512xf32>
    %502 = arith.mulf %365, %501 : vector<16x512xf32>
    %503 = arith.addf %491, %502 : vector<16x512xf32>
    %504 = vector.extract_strided_slice %367 {offsets = [0, 5], sizes = [16, 1], strides = [1, 1]} : vector<16x11xf32> to vector<16x1xf32>
    %505 = vector.broadcast %504 : vector<16x1xf32> to vector<16x512xf32>
    %506 = arith.mulf %365, %505 : vector<16x512xf32>
    %507 = arith.addf %495, %506 : vector<16x512xf32>
    %508 = vector.extract_strided_slice %366 {offsets = [0, 3], sizes = [16, 1], strides = [1, 1]} : vector<16x7xf32> to vector<16x1xf32>
    %509 = vector.broadcast %508 : vector<16x1xf32> to vector<16x512xf32>
    %510 = arith.mulf %365, %509 : vector<16x512xf32>
    %511 = arith.addf %499, %510 : vector<16x512xf32>
    %c511_i32_67 = arith.constant 511 : i32
    %512 = tpu.dynamic_rotate %365 by %c511_i32_67 dim 1 : vector<16x512xf32>, i32 -> vector<16x512xf32>
    %513 = vector.broadcast %211 : vector<1x512xf32> to vector<16x512xf32>
    %514 = arith.mulf %512, %513 : vector<16x512xf32>
    %515 = vector.extract_strided_slice %368 {offsets = [0, 11], sizes = [16, 1], strides = [1, 1]} : vector<16x21xf32> to vector<16x1xf32>
    %516 = vector.broadcast %515 : vector<16x1xf32> to vector<16x512xf32>
    %517 = arith.mulf %514, %516 : vector<16x512xf32>
    %518 = arith.addf %503, %517 : vector<16x512xf32>
    %519 = vector.extract_strided_slice %367 {offsets = [0, 6], sizes = [16, 1], strides = [1, 1]} : vector<16x11xf32> to vector<16x1xf32>
    %520 = vector.broadcast %519 : vector<16x1xf32> to vector<16x512xf32>
    %521 = arith.mulf %514, %520 : vector<16x512xf32>
    %522 = arith.addf %507, %521 : vector<16x512xf32>
    %523 = vector.extract_strided_slice %366 {offsets = [0, 4], sizes = [16, 1], strides = [1, 1]} : vector<16x7xf32> to vector<16x1xf32>
    %524 = vector.broadcast %523 : vector<16x1xf32> to vector<16x512xf32>
    %525 = arith.mulf %514, %524 : vector<16x512xf32>
    %526 = arith.addf %511, %525 : vector<16x512xf32>
    %c510_i32_68 = arith.constant 510 : i32
    %527 = tpu.dynamic_rotate %365 by %c510_i32_68 dim 1 : vector<16x512xf32>, i32 -> vector<16x512xf32>
    %528 = vector.broadcast %222 : vector<1x512xf32> to vector<16x512xf32>
    %529 = arith.mulf %527, %528 : vector<16x512xf32>
    %530 = vector.extract_strided_slice %368 {offsets = [0, 12], sizes = [16, 1], strides = [1, 1]} : vector<16x21xf32> to vector<16x1xf32>
    %531 = vector.broadcast %530 : vector<16x1xf32> to vector<16x512xf32>
    %532 = arith.mulf %529, %531 : vector<16x512xf32>
    %533 = arith.addf %518, %532 : vector<16x512xf32>
    %534 = vector.extract_strided_slice %367 {offsets = [0, 7], sizes = [16, 1], strides = [1, 1]} : vector<16x11xf32> to vector<16x1xf32>
    %535 = vector.broadcast %534 : vector<16x1xf32> to vector<16x512xf32>
    %536 = arith.mulf %529, %535 : vector<16x512xf32>
    %537 = arith.addf %522, %536 : vector<16x512xf32>
    %538 = vector.extract_strided_slice %366 {offsets = [0, 5], sizes = [16, 1], strides = [1, 1]} : vector<16x7xf32> to vector<16x1xf32>
    %539 = vector.broadcast %538 : vector<16x1xf32> to vector<16x512xf32>
    %540 = arith.mulf %529, %539 : vector<16x512xf32>
    %541 = arith.addf %526, %540 : vector<16x512xf32>
    %c509_i32 = arith.constant 509 : i32
    %542 = tpu.dynamic_rotate %365 by %c509_i32 dim 1 : vector<16x512xf32>, i32 -> vector<16x512xf32>
    %c13_i32 = arith.constant 13 : i32
    %543 = vector.broadcast %c13_i32 : i32 to vector<1x512xi32>
    %544 = arith.cmpi slt, %6, %543 : vector<1x512xi32>
    %545 = arith.extui %544 : vector<1x512xi1> to vector<1x512xi32>
    %546 = arith.sitofp %545 : vector<1x512xi32> to vector<1x512xf32>
    %547 = vector.broadcast %546 : vector<1x512xf32> to vector<16x512xf32>
    %548 = arith.mulf %542, %547 : vector<16x512xf32>
    %549 = vector.extract_strided_slice %368 {offsets = [0, 13], sizes = [16, 1], strides = [1, 1]} : vector<16x21xf32> to vector<16x1xf32>
    %550 = vector.broadcast %549 : vector<16x1xf32> to vector<16x512xf32>
    %551 = arith.mulf %548, %550 : vector<16x512xf32>
    %552 = arith.addf %533, %551 : vector<16x512xf32>
    %553 = vector.extract_strided_slice %367 {offsets = [0, 8], sizes = [16, 1], strides = [1, 1]} : vector<16x11xf32> to vector<16x1xf32>
    %554 = vector.broadcast %553 : vector<16x1xf32> to vector<16x512xf32>
    %555 = arith.mulf %548, %554 : vector<16x512xf32>
    %556 = arith.addf %537, %555 : vector<16x512xf32>
    %557 = vector.extract_strided_slice %366 {offsets = [0, 6], sizes = [16, 1], strides = [1, 1]} : vector<16x7xf32> to vector<16x1xf32>
    %558 = vector.broadcast %557 : vector<16x1xf32> to vector<16x512xf32>
    %559 = arith.mulf %548, %558 : vector<16x512xf32>
    %560 = arith.addf %541, %559 : vector<16x512xf32>
    %c508_i32 = arith.constant 508 : i32
    %561 = tpu.dynamic_rotate %365 by %c508_i32 dim 1 : vector<16x512xf32>, i32 -> vector<16x512xf32>
    %c12_i32 = arith.constant 12 : i32
    %562 = vector.broadcast %c12_i32 : i32 to vector<1x512xi32>
    %563 = arith.cmpi slt, %6, %562 : vector<1x512xi32>
    %564 = arith.extui %563 : vector<1x512xi1> to vector<1x512xi32>
    %565 = arith.sitofp %564 : vector<1x512xi32> to vector<1x512xf32>
    %566 = vector.broadcast %565 : vector<1x512xf32> to vector<16x512xf32>
    %567 = arith.mulf %561, %566 : vector<16x512xf32>
    %568 = vector.extract_strided_slice %368 {offsets = [0, 14], sizes = [16, 1], strides = [1, 1]} : vector<16x21xf32> to vector<16x1xf32>
    %569 = vector.broadcast %568 : vector<16x1xf32> to vector<16x512xf32>
    %570 = arith.mulf %567, %569 : vector<16x512xf32>
    %571 = arith.addf %552, %570 : vector<16x512xf32>
    %572 = vector.extract_strided_slice %367 {offsets = [0, 9], sizes = [16, 1], strides = [1, 1]} : vector<16x11xf32> to vector<16x1xf32>
    %573 = vector.broadcast %572 : vector<16x1xf32> to vector<16x512xf32>
    %574 = arith.mulf %567, %573 : vector<16x512xf32>
    %575 = arith.addf %556, %574 : vector<16x512xf32>
    %c507_i32 = arith.constant 507 : i32
    %576 = tpu.dynamic_rotate %365 by %c507_i32 dim 1 : vector<16x512xf32>, i32 -> vector<16x512xf32>
    %c11_i32 = arith.constant 11 : i32
    %577 = vector.broadcast %c11_i32 : i32 to vector<1x512xi32>
    %578 = arith.cmpi slt, %6, %577 : vector<1x512xi32>
    %579 = arith.extui %578 : vector<1x512xi1> to vector<1x512xi32>
    %580 = arith.sitofp %579 : vector<1x512xi32> to vector<1x512xf32>
    %581 = vector.broadcast %580 : vector<1x512xf32> to vector<16x512xf32>
    %582 = arith.mulf %576, %581 : vector<16x512xf32>
    %583 = vector.extract_strided_slice %368 {offsets = [0, 15], sizes = [16, 1], strides = [1, 1]} : vector<16x21xf32> to vector<16x1xf32>
    %584 = vector.broadcast %583 : vector<16x1xf32> to vector<16x512xf32>
    %585 = arith.mulf %582, %584 : vector<16x512xf32>
    %586 = arith.addf %571, %585 : vector<16x512xf32>
    %587 = vector.extract_strided_slice %367 {offsets = [0, 10], sizes = [16, 1], strides = [1, 1]} : vector<16x11xf32> to vector<16x1xf32>
    %588 = vector.broadcast %587 : vector<16x1xf32> to vector<16x512xf32>
    %589 = arith.mulf %582, %588 : vector<16x512xf32>
    %590 = arith.addf %575, %589 : vector<16x512xf32>
    %c506_i32 = arith.constant 506 : i32
    %591 = tpu.dynamic_rotate %365 by %c506_i32 dim 1 : vector<16x512xf32>, i32 -> vector<16x512xf32>
    %c10_i32_69 = arith.constant 10 : i32
    %592 = vector.broadcast %c10_i32_69 : i32 to vector<1x512xi32>
    %593 = arith.cmpi slt, %6, %592 : vector<1x512xi32>
    %594 = arith.extui %593 : vector<1x512xi1> to vector<1x512xi32>
    %595 = arith.sitofp %594 : vector<1x512xi32> to vector<1x512xf32>
    %596 = vector.broadcast %595 : vector<1x512xf32> to vector<16x512xf32>
    %597 = arith.mulf %591, %596 : vector<16x512xf32>
    %598 = vector.extract_strided_slice %368 {offsets = [0, 16], sizes = [16, 1], strides = [1, 1]} : vector<16x21xf32> to vector<16x1xf32>
    %599 = vector.broadcast %598 : vector<16x1xf32> to vector<16x512xf32>
    %600 = arith.mulf %597, %599 : vector<16x512xf32>
    %601 = arith.addf %586, %600 : vector<16x512xf32>
    %c505_i32 = arith.constant 505 : i32
    %602 = tpu.dynamic_rotate %365 by %c505_i32 dim 1 : vector<16x512xf32>, i32 -> vector<16x512xf32>
    %c9_i32_70 = arith.constant 9 : i32
    %603 = vector.broadcast %c9_i32_70 : i32 to vector<1x512xi32>
    %604 = arith.cmpi slt, %6, %603 : vector<1x512xi32>
    %605 = arith.extui %604 : vector<1x512xi1> to vector<1x512xi32>
    %606 = arith.sitofp %605 : vector<1x512xi32> to vector<1x512xf32>
    %607 = vector.broadcast %606 : vector<1x512xf32> to vector<16x512xf32>
    %608 = arith.mulf %602, %607 : vector<16x512xf32>
    %609 = vector.extract_strided_slice %368 {offsets = [0, 17], sizes = [16, 1], strides = [1, 1]} : vector<16x21xf32> to vector<16x1xf32>
    %610 = vector.broadcast %609 : vector<16x1xf32> to vector<16x512xf32>
    %611 = arith.mulf %608, %610 : vector<16x512xf32>
    %612 = arith.addf %601, %611 : vector<16x512xf32>
    %c504_i32 = arith.constant 504 : i32
    %613 = tpu.dynamic_rotate %365 by %c504_i32 dim 1 : vector<16x512xf32>, i32 -> vector<16x512xf32>
    %c8_i32_71 = arith.constant 8 : i32
    %614 = vector.broadcast %c8_i32_71 : i32 to vector<1x512xi32>
    %615 = arith.cmpi slt, %6, %614 : vector<1x512xi32>
    %616 = arith.extui %615 : vector<1x512xi1> to vector<1x512xi32>
    %617 = arith.sitofp %616 : vector<1x512xi32> to vector<1x512xf32>
    %618 = vector.broadcast %617 : vector<1x512xf32> to vector<16x512xf32>
    %619 = arith.mulf %613, %618 : vector<16x512xf32>
    %620 = vector.extract_strided_slice %368 {offsets = [0, 18], sizes = [16, 1], strides = [1, 1]} : vector<16x21xf32> to vector<16x1xf32>
    %621 = vector.broadcast %620 : vector<16x1xf32> to vector<16x512xf32>
    %622 = arith.mulf %619, %621 : vector<16x512xf32>
    %623 = arith.addf %612, %622 : vector<16x512xf32>
    %c503_i32 = arith.constant 503 : i32
    %624 = tpu.dynamic_rotate %365 by %c503_i32 dim 1 : vector<16x512xf32>, i32 -> vector<16x512xf32>
    %c7_i32_72 = arith.constant 7 : i32
    %625 = vector.broadcast %c7_i32_72 : i32 to vector<1x512xi32>
    %626 = arith.cmpi slt, %6, %625 : vector<1x512xi32>
    %627 = arith.extui %626 : vector<1x512xi1> to vector<1x512xi32>
    %628 = arith.sitofp %627 : vector<1x512xi32> to vector<1x512xf32>
    %629 = vector.broadcast %628 : vector<1x512xf32> to vector<16x512xf32>
    %630 = arith.mulf %624, %629 : vector<16x512xf32>
    %631 = vector.extract_strided_slice %368 {offsets = [0, 19], sizes = [16, 1], strides = [1, 1]} : vector<16x21xf32> to vector<16x1xf32>
    %632 = vector.broadcast %631 : vector<16x1xf32> to vector<16x512xf32>
    %633 = arith.mulf %630, %632 : vector<16x512xf32>
    %634 = arith.addf %623, %633 : vector<16x512xf32>
    %c502_i32 = arith.constant 502 : i32
    %635 = tpu.dynamic_rotate %365 by %c502_i32 dim 1 : vector<16x512xf32>, i32 -> vector<16x512xf32>
    %c6_i32_73 = arith.constant 6 : i32
    %636 = vector.broadcast %c6_i32_73 : i32 to vector<1x512xi32>
    %637 = arith.cmpi slt, %6, %636 : vector<1x512xi32>
    %638 = arith.extui %637 : vector<1x512xi1> to vector<1x512xi32>
    %639 = arith.sitofp %638 : vector<1x512xi32> to vector<1x512xf32>
    %640 = vector.broadcast %639 : vector<1x512xf32> to vector<16x512xf32>
    %641 = arith.mulf %635, %640 : vector<16x512xf32>
    %642 = vector.extract_strided_slice %368 {offsets = [0, 20], sizes = [16, 1], strides = [1, 1]} : vector<16x21xf32> to vector<16x1xf32>
    %643 = vector.broadcast %642 : vector<16x1xf32> to vector<16x512xf32>
    %644 = arith.mulf %641, %643 : vector<16x512xf32>
    %645 = arith.addf %634, %644 : vector<16x512xf32>
    %646 = vector.extract_strided_slice %1 {offsets = [0, 7], sizes = [16, 1], strides = [1, 1]} : vector<16x19xf32> to vector<16x1xf32>
    %647 = vector.broadcast %646 : vector<16x1xf32> to vector<16x512xf32>
    %648 = arith.addf %560, %647 : vector<16x512xf32>
    %649 = vector.extract_strided_slice %1 {offsets = [0, 9], sizes = [16, 1], strides = [1, 1]} : vector<16x19xf32> to vector<16x1xf32>
    %650 = vector.broadcast %649 : vector<16x1xf32> to vector<16x512xf32>
    %651 = arith.addf %590, %650 : vector<16x512xf32>
    %652 = vector.extract_strided_slice %1 {offsets = [0, 11], sizes = [16, 1], strides = [1, 1]} : vector<16x19xf32> to vector<16x1xf32>
    %653 = vector.broadcast %652 : vector<16x1xf32> to vector<16x512xf32>
    %654 = arith.addf %645, %653 : vector<16x512xf32>
    %655 = vector.extract_strided_slice %0 {offsets = [0, 32], sizes = [16, 7], strides = [1, 1]} : vector<16x112xf32> to vector<16x7xf32>
    %656 = vector.extract_strided_slice %0 {offsets = [0, 50], sizes = [16, 11], strides = [1, 1]} : vector<16x112xf32> to vector<16x11xf32>
    %657 = vector.extract_strided_slice %0 {offsets = [0, 82], sizes = [16, 21], strides = [1, 1]} : vector<16x112xf32> to vector<16x21xf32>
    %658 = vector.extract_strided_slice %657 {offsets = [0, 0], sizes = [16, 1], strides = [1, 1]} : vector<16x21xf32> to vector<16x1xf32>
    %659 = vector.broadcast %658 : vector<16x1xf32> to vector<16x512xf32>
    %660 = arith.mulf %654, %659 : vector<16x512xf32>
    %c160_i32 = arith.constant 160 : i32
    %661 = tpu.dynamic_rotate %660 by %c160_i32 dim 1 : vector<16x512xf32>, i32 -> vector<16x512xf32>
    %c160_i32_74 = arith.constant 160 : i32
    %662 = vector.broadcast %c160_i32_74 : i32 to vector<1x512xi32>
    %663 = arith.cmpi sge, %4, %662 : vector<1x512xi32>
    %664 = arith.extui %663 : vector<1x512xi1> to vector<1x512xi32>
    %665 = arith.sitofp %664 : vector<1x512xi32> to vector<1x512xf32>
    %666 = vector.broadcast %665 : vector<1x512xf32> to vector<16x512xf32>
    %667 = arith.mulf %661, %666 : vector<16x512xf32>
    %668 = arith.addf %365, %667 : vector<16x512xf32>
    %669 = vector.extract_strided_slice %657 {offsets = [0, 1], sizes = [16, 1], strides = [1, 1]} : vector<16x21xf32> to vector<16x1xf32>
    %670 = vector.broadcast %669 : vector<16x1xf32> to vector<16x512xf32>
    %671 = arith.mulf %654, %670 : vector<16x512xf32>
    %c144_i32 = arith.constant 144 : i32
    %672 = tpu.dynamic_rotate %671 by %c144_i32 dim 1 : vector<16x512xf32>, i32 -> vector<16x512xf32>
    %c144_i32_75 = arith.constant 144 : i32
    %673 = vector.broadcast %c144_i32_75 : i32 to vector<1x512xi32>
    %674 = arith.cmpi sge, %4, %673 : vector<1x512xi32>
    %675 = arith.extui %674 : vector<1x512xi1> to vector<1x512xi32>
    %676 = arith.sitofp %675 : vector<1x512xi32> to vector<1x512xf32>
    %677 = vector.broadcast %676 : vector<1x512xf32> to vector<16x512xf32>
    %678 = arith.mulf %672, %677 : vector<16x512xf32>
    %679 = arith.addf %668, %678 : vector<16x512xf32>
    %680 = vector.extract_strided_slice %657 {offsets = [0, 2], sizes = [16, 1], strides = [1, 1]} : vector<16x21xf32> to vector<16x1xf32>
    %681 = vector.broadcast %680 : vector<16x1xf32> to vector<16x512xf32>
    %682 = arith.mulf %654, %681 : vector<16x512xf32>
    %c128_i32 = arith.constant 128 : i32
    %683 = tpu.dynamic_rotate %682 by %c128_i32 dim 1 : vector<16x512xf32>, i32 -> vector<16x512xf32>
    %c128_i32_76 = arith.constant 128 : i32
    %684 = vector.broadcast %c128_i32_76 : i32 to vector<1x512xi32>
    %685 = arith.cmpi sge, %4, %684 : vector<1x512xi32>
    %686 = arith.extui %685 : vector<1x512xi1> to vector<1x512xi32>
    %687 = arith.sitofp %686 : vector<1x512xi32> to vector<1x512xf32>
    %688 = vector.broadcast %687 : vector<1x512xf32> to vector<16x512xf32>
    %689 = arith.mulf %683, %688 : vector<16x512xf32>
    %690 = arith.addf %679, %689 : vector<16x512xf32>
    %691 = vector.extract_strided_slice %657 {offsets = [0, 3], sizes = [16, 1], strides = [1, 1]} : vector<16x21xf32> to vector<16x1xf32>
    %692 = vector.broadcast %691 : vector<16x1xf32> to vector<16x512xf32>
    %693 = arith.mulf %654, %692 : vector<16x512xf32>
    %c112_i32 = arith.constant 112 : i32
    %694 = tpu.dynamic_rotate %693 by %c112_i32 dim 1 : vector<16x512xf32>, i32 -> vector<16x512xf32>
    %c112_i32_77 = arith.constant 112 : i32
    %695 = vector.broadcast %c112_i32_77 : i32 to vector<1x512xi32>
    %696 = arith.cmpi sge, %4, %695 : vector<1x512xi32>
    %697 = arith.extui %696 : vector<1x512xi1> to vector<1x512xi32>
    %698 = arith.sitofp %697 : vector<1x512xi32> to vector<1x512xf32>
    %699 = vector.broadcast %698 : vector<1x512xf32> to vector<16x512xf32>
    %700 = arith.mulf %694, %699 : vector<16x512xf32>
    %701 = arith.addf %690, %700 : vector<16x512xf32>
    %702 = vector.extract_strided_slice %657 {offsets = [0, 4], sizes = [16, 1], strides = [1, 1]} : vector<16x21xf32> to vector<16x1xf32>
    %703 = vector.broadcast %702 : vector<16x1xf32> to vector<16x512xf32>
    %704 = arith.mulf %654, %703 : vector<16x512xf32>
    %c96_i32 = arith.constant 96 : i32
    %705 = tpu.dynamic_rotate %704 by %c96_i32 dim 1 : vector<16x512xf32>, i32 -> vector<16x512xf32>
    %c96_i32_78 = arith.constant 96 : i32
    %706 = vector.broadcast %c96_i32_78 : i32 to vector<1x512xi32>
    %707 = arith.cmpi sge, %4, %706 : vector<1x512xi32>
    %708 = arith.extui %707 : vector<1x512xi1> to vector<1x512xi32>
    %709 = arith.sitofp %708 : vector<1x512xi32> to vector<1x512xf32>
    %710 = vector.broadcast %709 : vector<1x512xf32> to vector<16x512xf32>
    %711 = arith.mulf %705, %710 : vector<16x512xf32>
    %712 = arith.addf %701, %711 : vector<16x512xf32>
    %713 = vector.extract_strided_slice %657 {offsets = [0, 5], sizes = [16, 1], strides = [1, 1]} : vector<16x21xf32> to vector<16x1xf32>
    %714 = vector.broadcast %713 : vector<16x1xf32> to vector<16x512xf32>
    %715 = arith.mulf %654, %714 : vector<16x512xf32>
    %716 = vector.extract_strided_slice %656 {offsets = [0, 0], sizes = [16, 1], strides = [1, 1]} : vector<16x11xf32> to vector<16x1xf32>
    %717 = vector.broadcast %716 : vector<16x1xf32> to vector<16x512xf32>
    %718 = arith.mulf %651, %717 : vector<16x512xf32>
    %719 = arith.addf %715, %718 : vector<16x512xf32>
    %c80_i32 = arith.constant 80 : i32
    %720 = tpu.dynamic_rotate %719 by %c80_i32 dim 1 : vector<16x512xf32>, i32 -> vector<16x512xf32>
    %c80_i32_79 = arith.constant 80 : i32
    %721 = vector.broadcast %c80_i32_79 : i32 to vector<1x512xi32>
    %722 = arith.cmpi sge, %4, %721 : vector<1x512xi32>
    %723 = arith.extui %722 : vector<1x512xi1> to vector<1x512xi32>
    %724 = arith.sitofp %723 : vector<1x512xi32> to vector<1x512xf32>
    %725 = vector.broadcast %724 : vector<1x512xf32> to vector<16x512xf32>
    %726 = arith.mulf %720, %725 : vector<16x512xf32>
    %727 = arith.addf %712, %726 : vector<16x512xf32>
    %728 = vector.extract_strided_slice %657 {offsets = [0, 6], sizes = [16, 1], strides = [1, 1]} : vector<16x21xf32> to vector<16x1xf32>
    %729 = vector.broadcast %728 : vector<16x1xf32> to vector<16x512xf32>
    %730 = arith.mulf %654, %729 : vector<16x512xf32>
    %731 = vector.extract_strided_slice %656 {offsets = [0, 1], sizes = [16, 1], strides = [1, 1]} : vector<16x11xf32> to vector<16x1xf32>
    %732 = vector.broadcast %731 : vector<16x1xf32> to vector<16x512xf32>
    %733 = arith.mulf %651, %732 : vector<16x512xf32>
    %734 = arith.addf %730, %733 : vector<16x512xf32>
    %c64_i32 = arith.constant 64 : i32
    %735 = tpu.dynamic_rotate %734 by %c64_i32 dim 1 : vector<16x512xf32>, i32 -> vector<16x512xf32>
    %c64_i32_80 = arith.constant 64 : i32
    %736 = vector.broadcast %c64_i32_80 : i32 to vector<1x512xi32>
    %737 = arith.cmpi sge, %4, %736 : vector<1x512xi32>
    %738 = arith.extui %737 : vector<1x512xi1> to vector<1x512xi32>
    %739 = arith.sitofp %738 : vector<1x512xi32> to vector<1x512xf32>
    %740 = vector.broadcast %739 : vector<1x512xf32> to vector<16x512xf32>
    %741 = arith.mulf %735, %740 : vector<16x512xf32>
    %742 = arith.addf %727, %741 : vector<16x512xf32>
    %743 = vector.extract_strided_slice %657 {offsets = [0, 7], sizes = [16, 1], strides = [1, 1]} : vector<16x21xf32> to vector<16x1xf32>
    %744 = vector.broadcast %743 : vector<16x1xf32> to vector<16x512xf32>
    %745 = arith.mulf %654, %744 : vector<16x512xf32>
    %746 = vector.extract_strided_slice %656 {offsets = [0, 2], sizes = [16, 1], strides = [1, 1]} : vector<16x11xf32> to vector<16x1xf32>
    %747 = vector.broadcast %746 : vector<16x1xf32> to vector<16x512xf32>
    %748 = arith.mulf %651, %747 : vector<16x512xf32>
    %749 = arith.addf %745, %748 : vector<16x512xf32>
    %750 = vector.extract_strided_slice %655 {offsets = [0, 0], sizes = [16, 1], strides = [1, 1]} : vector<16x7xf32> to vector<16x1xf32>
    %751 = vector.broadcast %750 : vector<16x1xf32> to vector<16x512xf32>
    %752 = arith.mulf %648, %751 : vector<16x512xf32>
    %753 = arith.addf %749, %752 : vector<16x512xf32>
    %c48_i32 = arith.constant 48 : i32
    %754 = tpu.dynamic_rotate %753 by %c48_i32 dim 1 : vector<16x512xf32>, i32 -> vector<16x512xf32>
    %c48_i32_81 = arith.constant 48 : i32
    %755 = vector.broadcast %c48_i32_81 : i32 to vector<1x512xi32>
    %756 = arith.cmpi sge, %4, %755 : vector<1x512xi32>
    %757 = arith.extui %756 : vector<1x512xi1> to vector<1x512xi32>
    %758 = arith.sitofp %757 : vector<1x512xi32> to vector<1x512xf32>
    %759 = vector.broadcast %758 : vector<1x512xf32> to vector<16x512xf32>
    %760 = arith.mulf %754, %759 : vector<16x512xf32>
    %761 = arith.addf %742, %760 : vector<16x512xf32>
    %762 = vector.extract_strided_slice %657 {offsets = [0, 8], sizes = [16, 1], strides = [1, 1]} : vector<16x21xf32> to vector<16x1xf32>
    %763 = vector.broadcast %762 : vector<16x1xf32> to vector<16x512xf32>
    %764 = arith.mulf %654, %763 : vector<16x512xf32>
    %765 = vector.extract_strided_slice %656 {offsets = [0, 3], sizes = [16, 1], strides = [1, 1]} : vector<16x11xf32> to vector<16x1xf32>
    %766 = vector.broadcast %765 : vector<16x1xf32> to vector<16x512xf32>
    %767 = arith.mulf %651, %766 : vector<16x512xf32>
    %768 = arith.addf %764, %767 : vector<16x512xf32>
    %769 = vector.extract_strided_slice %655 {offsets = [0, 1], sizes = [16, 1], strides = [1, 1]} : vector<16x7xf32> to vector<16x1xf32>
    %770 = vector.broadcast %769 : vector<16x1xf32> to vector<16x512xf32>
    %771 = arith.mulf %648, %770 : vector<16x512xf32>
    %772 = arith.addf %768, %771 : vector<16x512xf32>
    %c32_i32_82 = arith.constant 32 : i32
    %773 = tpu.dynamic_rotate %772 by %c32_i32_82 dim 1 : vector<16x512xf32>, i32 -> vector<16x512xf32>
    %774 = vector.broadcast %79 : vector<1x512xf32> to vector<16x512xf32>
    %775 = arith.mulf %773, %774 : vector<16x512xf32>
    %776 = arith.addf %761, %775 : vector<16x512xf32>
    %777 = vector.extract_strided_slice %657 {offsets = [0, 9], sizes = [16, 1], strides = [1, 1]} : vector<16x21xf32> to vector<16x1xf32>
    %778 = vector.broadcast %777 : vector<16x1xf32> to vector<16x512xf32>
    %779 = arith.mulf %654, %778 : vector<16x512xf32>
    %780 = vector.extract_strided_slice %656 {offsets = [0, 4], sizes = [16, 1], strides = [1, 1]} : vector<16x11xf32> to vector<16x1xf32>
    %781 = vector.broadcast %780 : vector<16x1xf32> to vector<16x512xf32>
    %782 = arith.mulf %651, %781 : vector<16x512xf32>
    %783 = arith.addf %779, %782 : vector<16x512xf32>
    %784 = vector.extract_strided_slice %655 {offsets = [0, 2], sizes = [16, 1], strides = [1, 1]} : vector<16x7xf32> to vector<16x1xf32>
    %785 = vector.broadcast %784 : vector<16x1xf32> to vector<16x512xf32>
    %786 = arith.mulf %648, %785 : vector<16x512xf32>
    %787 = arith.addf %783, %786 : vector<16x512xf32>
    %c16_i32_83 = arith.constant 16 : i32
    %788 = tpu.dynamic_rotate %787 by %c16_i32_83 dim 1 : vector<16x512xf32>, i32 -> vector<16x512xf32>
    %789 = vector.broadcast %146 : vector<1x512xf32> to vector<16x512xf32>
    %790 = arith.mulf %788, %789 : vector<16x512xf32>
    %791 = arith.addf %776, %790 : vector<16x512xf32>
    %792 = vector.extract_strided_slice %657 {offsets = [0, 10], sizes = [16, 1], strides = [1, 1]} : vector<16x21xf32> to vector<16x1xf32>
    %793 = vector.broadcast %792 : vector<16x1xf32> to vector<16x512xf32>
    %794 = arith.mulf %654, %793 : vector<16x512xf32>
    %795 = vector.extract_strided_slice %656 {offsets = [0, 5], sizes = [16, 1], strides = [1, 1]} : vector<16x11xf32> to vector<16x1xf32>
    %796 = vector.broadcast %795 : vector<16x1xf32> to vector<16x512xf32>
    %797 = arith.mulf %651, %796 : vector<16x512xf32>
    %798 = arith.addf %794, %797 : vector<16x512xf32>
    %799 = vector.extract_strided_slice %655 {offsets = [0, 3], sizes = [16, 1], strides = [1, 1]} : vector<16x7xf32> to vector<16x1xf32>
    %800 = vector.broadcast %799 : vector<16x1xf32> to vector<16x512xf32>
    %801 = arith.mulf %648, %800 : vector<16x512xf32>
    %802 = arith.addf %798, %801 : vector<16x512xf32>
    %803 = arith.addf %791, %802 : vector<16x512xf32>
    %804 = vector.extract_strided_slice %657 {offsets = [0, 11], sizes = [16, 1], strides = [1, 1]} : vector<16x21xf32> to vector<16x1xf32>
    %805 = vector.broadcast %804 : vector<16x1xf32> to vector<16x512xf32>
    %806 = arith.mulf %654, %805 : vector<16x512xf32>
    %807 = vector.extract_strided_slice %656 {offsets = [0, 6], sizes = [16, 1], strides = [1, 1]} : vector<16x11xf32> to vector<16x1xf32>
    %808 = vector.broadcast %807 : vector<16x1xf32> to vector<16x512xf32>
    %809 = arith.mulf %651, %808 : vector<16x512xf32>
    %810 = arith.addf %806, %809 : vector<16x512xf32>
    %811 = vector.extract_strided_slice %655 {offsets = [0, 4], sizes = [16, 1], strides = [1, 1]} : vector<16x7xf32> to vector<16x1xf32>
    %812 = vector.broadcast %811 : vector<16x1xf32> to vector<16x512xf32>
    %813 = arith.mulf %648, %812 : vector<16x512xf32>
    %814 = arith.addf %810, %813 : vector<16x512xf32>
    %c496_i32_84 = arith.constant 496 : i32
    %815 = tpu.dynamic_rotate %814 by %c496_i32_84 dim 1 : vector<16x512xf32>, i32 -> vector<16x512xf32>
    %816 = vector.broadcast %261 : vector<1x512xf32> to vector<16x512xf32>
    %817 = arith.mulf %815, %816 : vector<16x512xf32>
    %818 = arith.addf %803, %817 : vector<16x512xf32>
    %819 = vector.extract_strided_slice %657 {offsets = [0, 12], sizes = [16, 1], strides = [1, 1]} : vector<16x21xf32> to vector<16x1xf32>
    %820 = vector.broadcast %819 : vector<16x1xf32> to vector<16x512xf32>
    %821 = arith.mulf %654, %820 : vector<16x512xf32>
    %822 = vector.extract_strided_slice %656 {offsets = [0, 7], sizes = [16, 1], strides = [1, 1]} : vector<16x11xf32> to vector<16x1xf32>
    %823 = vector.broadcast %822 : vector<16x1xf32> to vector<16x512xf32>
    %824 = arith.mulf %651, %823 : vector<16x512xf32>
    %825 = arith.addf %821, %824 : vector<16x512xf32>
    %826 = vector.extract_strided_slice %655 {offsets = [0, 5], sizes = [16, 1], strides = [1, 1]} : vector<16x7xf32> to vector<16x1xf32>
    %827 = vector.broadcast %826 : vector<16x1xf32> to vector<16x512xf32>
    %828 = arith.mulf %648, %827 : vector<16x512xf32>
    %829 = arith.addf %825, %828 : vector<16x512xf32>
    %c480_i32_85 = arith.constant 480 : i32
    %830 = tpu.dynamic_rotate %829 by %c480_i32_85 dim 1 : vector<16x512xf32>, i32 -> vector<16x512xf32>
    %831 = vector.broadcast %328 : vector<1x512xf32> to vector<16x512xf32>
    %832 = arith.mulf %830, %831 : vector<16x512xf32>
    %833 = arith.addf %818, %832 : vector<16x512xf32>
    %834 = vector.extract_strided_slice %657 {offsets = [0, 13], sizes = [16, 1], strides = [1, 1]} : vector<16x21xf32> to vector<16x1xf32>
    %835 = vector.broadcast %834 : vector<16x1xf32> to vector<16x512xf32>
    %836 = arith.mulf %654, %835 : vector<16x512xf32>
    %837 = vector.extract_strided_slice %656 {offsets = [0, 8], sizes = [16, 1], strides = [1, 1]} : vector<16x11xf32> to vector<16x1xf32>
    %838 = vector.broadcast %837 : vector<16x1xf32> to vector<16x512xf32>
    %839 = arith.mulf %651, %838 : vector<16x512xf32>
    %840 = arith.addf %836, %839 : vector<16x512xf32>
    %841 = vector.extract_strided_slice %655 {offsets = [0, 6], sizes = [16, 1], strides = [1, 1]} : vector<16x7xf32> to vector<16x1xf32>
    %842 = vector.broadcast %841 : vector<16x1xf32> to vector<16x512xf32>
    %843 = arith.mulf %648, %842 : vector<16x512xf32>
    %844 = arith.addf %840, %843 : vector<16x512xf32>
    %c464_i32 = arith.constant 464 : i32
    %845 = tpu.dynamic_rotate %844 by %c464_i32 dim 1 : vector<16x512xf32>, i32 -> vector<16x512xf32>
    %c208_i32 = arith.constant 208 : i32
    %846 = vector.broadcast %c208_i32 : i32 to vector<1x512xi32>
    %847 = arith.cmpi slt, %4, %846 : vector<1x512xi32>
    %848 = arith.extui %847 : vector<1x512xi1> to vector<1x512xi32>
    %849 = arith.sitofp %848 : vector<1x512xi32> to vector<1x512xf32>
    %850 = vector.broadcast %849 : vector<1x512xf32> to vector<16x512xf32>
    %851 = arith.mulf %845, %850 : vector<16x512xf32>
    %852 = arith.addf %833, %851 : vector<16x512xf32>
    %853 = vector.extract_strided_slice %657 {offsets = [0, 14], sizes = [16, 1], strides = [1, 1]} : vector<16x21xf32> to vector<16x1xf32>
    %854 = vector.broadcast %853 : vector<16x1xf32> to vector<16x512xf32>
    %855 = arith.mulf %654, %854 : vector<16x512xf32>
    %856 = vector.extract_strided_slice %656 {offsets = [0, 9], sizes = [16, 1], strides = [1, 1]} : vector<16x11xf32> to vector<16x1xf32>
    %857 = vector.broadcast %856 : vector<16x1xf32> to vector<16x512xf32>
    %858 = arith.mulf %651, %857 : vector<16x512xf32>
    %859 = arith.addf %855, %858 : vector<16x512xf32>
    %c448_i32 = arith.constant 448 : i32
    %860 = tpu.dynamic_rotate %859 by %c448_i32 dim 1 : vector<16x512xf32>, i32 -> vector<16x512xf32>
    %c192_i32 = arith.constant 192 : i32
    %861 = vector.broadcast %c192_i32 : i32 to vector<1x512xi32>
    %862 = arith.cmpi slt, %4, %861 : vector<1x512xi32>
    %863 = arith.extui %862 : vector<1x512xi1> to vector<1x512xi32>
    %864 = arith.sitofp %863 : vector<1x512xi32> to vector<1x512xf32>
    %865 = vector.broadcast %864 : vector<1x512xf32> to vector<16x512xf32>
    %866 = arith.mulf %860, %865 : vector<16x512xf32>
    %867 = arith.addf %852, %866 : vector<16x512xf32>
    %868 = vector.extract_strided_slice %657 {offsets = [0, 15], sizes = [16, 1], strides = [1, 1]} : vector<16x21xf32> to vector<16x1xf32>
    %869 = vector.broadcast %868 : vector<16x1xf32> to vector<16x512xf32>
    %870 = arith.mulf %654, %869 : vector<16x512xf32>
    %871 = vector.extract_strided_slice %656 {offsets = [0, 10], sizes = [16, 1], strides = [1, 1]} : vector<16x11xf32> to vector<16x1xf32>
    %872 = vector.broadcast %871 : vector<16x1xf32> to vector<16x512xf32>
    %873 = arith.mulf %651, %872 : vector<16x512xf32>
    %874 = arith.addf %870, %873 : vector<16x512xf32>
    %c432_i32 = arith.constant 432 : i32
    %875 = tpu.dynamic_rotate %874 by %c432_i32 dim 1 : vector<16x512xf32>, i32 -> vector<16x512xf32>
    %c176_i32 = arith.constant 176 : i32
    %876 = vector.broadcast %c176_i32 : i32 to vector<1x512xi32>
    %877 = arith.cmpi slt, %4, %876 : vector<1x512xi32>
    %878 = arith.extui %877 : vector<1x512xi1> to vector<1x512xi32>
    %879 = arith.sitofp %878 : vector<1x512xi32> to vector<1x512xf32>
    %880 = vector.broadcast %879 : vector<1x512xf32> to vector<16x512xf32>
    %881 = arith.mulf %875, %880 : vector<16x512xf32>
    %882 = arith.addf %867, %881 : vector<16x512xf32>
    %883 = vector.extract_strided_slice %657 {offsets = [0, 16], sizes = [16, 1], strides = [1, 1]} : vector<16x21xf32> to vector<16x1xf32>
    %884 = vector.broadcast %883 : vector<16x1xf32> to vector<16x512xf32>
    %885 = arith.mulf %654, %884 : vector<16x512xf32>
    %c416_i32 = arith.constant 416 : i32
    %886 = tpu.dynamic_rotate %885 by %c416_i32 dim 1 : vector<16x512xf32>, i32 -> vector<16x512xf32>
    %c160_i32_86 = arith.constant 160 : i32
    %887 = vector.broadcast %c160_i32_86 : i32 to vector<1x512xi32>
    %888 = arith.cmpi slt, %4, %887 : vector<1x512xi32>
    %889 = arith.extui %888 : vector<1x512xi1> to vector<1x512xi32>
    %890 = arith.sitofp %889 : vector<1x512xi32> to vector<1x512xf32>
    %891 = vector.broadcast %890 : vector<1x512xf32> to vector<16x512xf32>
    %892 = arith.mulf %886, %891 : vector<16x512xf32>
    %893 = arith.addf %882, %892 : vector<16x512xf32>
    %894 = vector.extract_strided_slice %657 {offsets = [0, 17], sizes = [16, 1], strides = [1, 1]} : vector<16x21xf32> to vector<16x1xf32>
    %895 = vector.broadcast %894 : vector<16x1xf32> to vector<16x512xf32>
    %896 = arith.mulf %654, %895 : vector<16x512xf32>
    %c400_i32 = arith.constant 400 : i32
    %897 = tpu.dynamic_rotate %896 by %c400_i32 dim 1 : vector<16x512xf32>, i32 -> vector<16x512xf32>
    %c144_i32_87 = arith.constant 144 : i32
    %898 = vector.broadcast %c144_i32_87 : i32 to vector<1x512xi32>
    %899 = arith.cmpi slt, %4, %898 : vector<1x512xi32>
    %900 = arith.extui %899 : vector<1x512xi1> to vector<1x512xi32>
    %901 = arith.sitofp %900 : vector<1x512xi32> to vector<1x512xf32>
    %902 = vector.broadcast %901 : vector<1x512xf32> to vector<16x512xf32>
    %903 = arith.mulf %897, %902 : vector<16x512xf32>
    %904 = arith.addf %893, %903 : vector<16x512xf32>
    %905 = vector.extract_strided_slice %657 {offsets = [0, 18], sizes = [16, 1], strides = [1, 1]} : vector<16x21xf32> to vector<16x1xf32>
    %906 = vector.broadcast %905 : vector<16x1xf32> to vector<16x512xf32>
    %907 = arith.mulf %654, %906 : vector<16x512xf32>
    %c384_i32 = arith.constant 384 : i32
    %908 = tpu.dynamic_rotate %907 by %c384_i32 dim 1 : vector<16x512xf32>, i32 -> vector<16x512xf32>
    %c128_i32_88 = arith.constant 128 : i32
    %909 = vector.broadcast %c128_i32_88 : i32 to vector<1x512xi32>
    %910 = arith.cmpi slt, %4, %909 : vector<1x512xi32>
    %911 = arith.extui %910 : vector<1x512xi1> to vector<1x512xi32>
    %912 = arith.sitofp %911 : vector<1x512xi32> to vector<1x512xf32>
    %913 = vector.broadcast %912 : vector<1x512xf32> to vector<16x512xf32>
    %914 = arith.mulf %908, %913 : vector<16x512xf32>
    %915 = arith.addf %904, %914 : vector<16x512xf32>
    %916 = vector.extract_strided_slice %657 {offsets = [0, 19], sizes = [16, 1], strides = [1, 1]} : vector<16x21xf32> to vector<16x1xf32>
    %917 = vector.broadcast %916 : vector<16x1xf32> to vector<16x512xf32>
    %918 = arith.mulf %654, %917 : vector<16x512xf32>
    %c368_i32 = arith.constant 368 : i32
    %919 = tpu.dynamic_rotate %918 by %c368_i32 dim 1 : vector<16x512xf32>, i32 -> vector<16x512xf32>
    %c112_i32_89 = arith.constant 112 : i32
    %920 = vector.broadcast %c112_i32_89 : i32 to vector<1x512xi32>
    %921 = arith.cmpi slt, %4, %920 : vector<1x512xi32>
    %922 = arith.extui %921 : vector<1x512xi1> to vector<1x512xi32>
    %923 = arith.sitofp %922 : vector<1x512xi32> to vector<1x512xf32>
    %924 = vector.broadcast %923 : vector<1x512xf32> to vector<16x512xf32>
    %925 = arith.mulf %919, %924 : vector<16x512xf32>
    %926 = arith.addf %915, %925 : vector<16x512xf32>
    %927 = vector.extract_strided_slice %657 {offsets = [0, 20], sizes = [16, 1], strides = [1, 1]} : vector<16x21xf32> to vector<16x1xf32>
    %928 = vector.broadcast %927 : vector<16x1xf32> to vector<16x512xf32>
    %929 = arith.mulf %654, %928 : vector<16x512xf32>
    %c352_i32 = arith.constant 352 : i32
    %930 = tpu.dynamic_rotate %929 by %c352_i32 dim 1 : vector<16x512xf32>, i32 -> vector<16x512xf32>
    %c96_i32_90 = arith.constant 96 : i32
    %931 = vector.broadcast %c96_i32_90 : i32 to vector<1x512xi32>
    %932 = arith.cmpi slt, %4, %931 : vector<1x512xi32>
    %933 = arith.extui %932 : vector<1x512xi1> to vector<1x512xi32>
    %934 = arith.sitofp %933 : vector<1x512xi32> to vector<1x512xf32>
    %935 = vector.broadcast %934 : vector<1x512xf32> to vector<16x512xf32>
    %936 = arith.mulf %930, %935 : vector<16x512xf32>
    %937 = arith.addf %926, %936 : vector<16x512xf32>
    %938 = vector.extract_strided_slice %1 {offsets = [0, 8], sizes = [16, 1], strides = [1, 1]} : vector<16x19xf32> to vector<16x1xf32>
    %939 = vector.broadcast %938 : vector<16x1xf32> to vector<16x512xf32>
    %940 = arith.addf %937, %939 : vector<16x512xf32>
    %941 = vector.extract_strided_slice %1 {offsets = [0, 10], sizes = [16, 1], strides = [1, 1]} : vector<16x19xf32> to vector<16x1xf32>
    %942 = vector.broadcast %941 : vector<16x1xf32> to vector<16x512xf32>
    %943 = arith.addf %940, %942 : vector<16x512xf32>
    %944 = vector.extract_strided_slice %1 {offsets = [0, 12], sizes = [16, 1], strides = [1, 1]} : vector<16x19xf32> to vector<16x1xf32>
    %945 = vector.broadcast %944 : vector<16x1xf32> to vector<16x512xf32>
    %946 = arith.addf %943, %945 : vector<16x512xf32>
    %c0_91 = arith.constant 0 : index
    %c0_92 = arith.constant 0 : index
    %947 = vector.load %arg6[%c0_91, %c0_92] : memref<16x16xf32, #tpu.memory_space<vmem>>, vector<16x16xf32>
    %cst_93 = arith.constant dense<0.000000e+00> : vector<16x512xf32>
    %948 = tpu.matmul %947, %946, %cst_93 {dimension_numbers = #tpu.dot_dimension_numbers<[1], [0], [0], [1], [0, 0, 1, 1], [], []>} : vector<16x16xf32>, vector<16x512xf32>, vector<16x512xf32> -> vector<16x512xf32>
    %949 = vector.extract_strided_slice %1 {offsets = [0, 13], sizes = [16, 1], strides = [1, 1]} : vector<16x19xf32> to vector<16x1xf32>
    %950 = vector.broadcast %949 : vector<16x1xf32> to vector<16x512xf32>
    %951 = arith.addf %948, %950 : vector<16x512xf32>
    %952 = arith.mulf %951, %46 : vector<16x512xf32>
    %c0_94 = arith.constant 0 : index
    %c0_95 = arith.constant 0 : index
    %953 = vector.load %arg7[%c0_94, %c0_95] : memref<16x16xf32, #tpu.memory_space<vmem>>, vector<16x16xf32>
    %cst_96 = arith.constant dense<0.000000e+00> : vector<16x512xf32>
    %954 = tpu.matmul %953, %952, %cst_96 {dimension_numbers = #tpu.dot_dimension_numbers<[1], [0], [0], [1], [0, 0, 1, 1], [], []>} : vector<16x16xf32>, vector<16x512xf32>, vector<16x512xf32> -> vector<16x512xf32>
    %955 = vector.extract_strided_slice %1 {offsets = [0, 14], sizes = [16, 1], strides = [1, 1]} : vector<16x19xf32> to vector<16x1xf32>
    %956 = vector.broadcast %955 : vector<16x1xf32> to vector<16x512xf32>
    %957 = arith.addf %954, %956 : vector<16x512xf32>
    %958 = arith.addf %957, %12 : vector<16x512xf32>
    %959 = vector.extract_strided_slice %1 {offsets = [0, 2], sizes = [16, 1], strides = [1, 1]} : vector<16x19xf32> to vector<16x1xf32>
    %960 = vector.broadcast %959 : vector<16x1xf32> to vector<16x512xf32>
    %961 = arith.mulf %958, %960 : vector<16x512xf32>
    %962 = vector.extract_strided_slice %1 {offsets = [0, 3], sizes = [16, 1], strides = [1, 1]} : vector<16x19xf32> to vector<16x1xf32>
    %963 = vector.broadcast %962 : vector<16x1xf32> to vector<16x512xf32>
    %964 = arith.addf %961, %963 : vector<16x512xf32>
    %c0_97 = arith.constant 0 : index
    %c0_98 = arith.constant 0 : index
    %965 = vector.load %arg8[%c0_97, %c0_98] : memref<16x16xf32, #tpu.memory_space<vmem>>, vector<16x16xf32>
    %cst_99 = arith.constant dense<0.000000e+00> : vector<16x512xf32>
    %966 = tpu.matmul %965, %964, %cst_99 {dimension_numbers = #tpu.dot_dimension_numbers<[1], [0], [0], [1], [0, 0, 1, 1], [], []>} : vector<16x16xf32>, vector<16x512xf32>, vector<16x512xf32> -> vector<16x512xf32>
    %967 = vector.extract_strided_slice %1 {offsets = [0, 15], sizes = [16, 1], strides = [1, 1]} : vector<16x19xf32> to vector<16x1xf32>
    %968 = vector.broadcast %967 : vector<16x1xf32> to vector<16x512xf32>
    %969 = arith.addf %966, %968 : vector<16x512xf32>
    %970 = vector.extract_strided_slice %0 {offsets = [0, 103], sizes = [16, 9], strides = [1, 1]} : vector<16x112xf32> to vector<16x9xf32>
    %c17_i32_100 = arith.constant 17 : i32
    %971 = tpu.dynamic_rotate %969 by %c17_i32_100 dim 1 : vector<16x512xf32>, i32 -> vector<16x512xf32>
    %972 = vector.broadcast %135 : vector<1x512xf32> to vector<16x512xf32>
    %973 = arith.mulf %971, %972 : vector<16x512xf32>
    %974 = vector.extract_strided_slice %970 {offsets = [0, 0], sizes = [16, 1], strides = [1, 1]} : vector<16x9xf32> to vector<16x1xf32>
    %975 = vector.broadcast %974 : vector<16x1xf32> to vector<16x512xf32>
    %976 = arith.mulf %973, %975 : vector<16x512xf32>
    %c16_i32_101 = arith.constant 16 : i32
    %977 = tpu.dynamic_rotate %969 by %c16_i32_101 dim 1 : vector<16x512xf32>, i32 -> vector<16x512xf32>
    %978 = vector.broadcast %146 : vector<1x512xf32> to vector<16x512xf32>
    %979 = arith.mulf %977, %978 : vector<16x512xf32>
    %980 = vector.extract_strided_slice %970 {offsets = [0, 1], sizes = [16, 1], strides = [1, 1]} : vector<16x9xf32> to vector<16x1xf32>
    %981 = vector.broadcast %980 : vector<16x1xf32> to vector<16x512xf32>
    %982 = arith.mulf %979, %981 : vector<16x512xf32>
    %983 = arith.addf %976, %982 : vector<16x512xf32>
    %c15_i32_102 = arith.constant 15 : i32
    %984 = tpu.dynamic_rotate %969 by %c15_i32_102 dim 1 : vector<16x512xf32>, i32 -> vector<16x512xf32>
    %985 = vector.broadcast %160 : vector<1x512xf32> to vector<16x512xf32>
    %986 = arith.mulf %984, %985 : vector<16x512xf32>
    %987 = vector.extract_strided_slice %970 {offsets = [0, 2], sizes = [16, 1], strides = [1, 1]} : vector<16x9xf32> to vector<16x1xf32>
    %988 = vector.broadcast %987 : vector<16x1xf32> to vector<16x512xf32>
    %989 = arith.mulf %986, %988 : vector<16x512xf32>
    %990 = arith.addf %983, %989 : vector<16x512xf32>
    %c1_i32_103 = arith.constant 1 : i32
    %991 = tpu.dynamic_rotate %969 by %c1_i32_103 dim 1 : vector<16x512xf32>, i32 -> vector<16x512xf32>
    %992 = vector.broadcast %196 : vector<1x512xf32> to vector<16x512xf32>
    %993 = arith.mulf %991, %992 : vector<16x512xf32>
    %994 = vector.extract_strided_slice %970 {offsets = [0, 3], sizes = [16, 1], strides = [1, 1]} : vector<16x9xf32> to vector<16x1xf32>
    %995 = vector.broadcast %994 : vector<16x1xf32> to vector<16x512xf32>
    %996 = arith.mulf %993, %995 : vector<16x512xf32>
    %997 = arith.addf %990, %996 : vector<16x512xf32>
    %998 = vector.extract_strided_slice %970 {offsets = [0, 4], sizes = [16, 1], strides = [1, 1]} : vector<16x9xf32> to vector<16x1xf32>
    %999 = vector.broadcast %998 : vector<16x1xf32> to vector<16x512xf32>
    %1000 = arith.mulf %969, %999 : vector<16x512xf32>
    %1001 = arith.addf %997, %1000 : vector<16x512xf32>
    %c511_i32_104 = arith.constant 511 : i32
    %1002 = tpu.dynamic_rotate %969 by %c511_i32_104 dim 1 : vector<16x512xf32>, i32 -> vector<16x512xf32>
    %1003 = vector.broadcast %211 : vector<1x512xf32> to vector<16x512xf32>
    %1004 = arith.mulf %1002, %1003 : vector<16x512xf32>
    %1005 = vector.extract_strided_slice %970 {offsets = [0, 5], sizes = [16, 1], strides = [1, 1]} : vector<16x9xf32> to vector<16x1xf32>
    %1006 = vector.broadcast %1005 : vector<16x1xf32> to vector<16x512xf32>
    %1007 = arith.mulf %1004, %1006 : vector<16x512xf32>
    %1008 = arith.addf %1001, %1007 : vector<16x512xf32>
    %c497_i32_105 = arith.constant 497 : i32
    %1009 = tpu.dynamic_rotate %969 by %c497_i32_105 dim 1 : vector<16x512xf32>, i32 -> vector<16x512xf32>
    %1010 = vector.broadcast %250 : vector<1x512xf32> to vector<16x512xf32>
    %1011 = arith.mulf %1009, %1010 : vector<16x512xf32>
    %1012 = vector.extract_strided_slice %970 {offsets = [0, 6], sizes = [16, 1], strides = [1, 1]} : vector<16x9xf32> to vector<16x1xf32>
    %1013 = vector.broadcast %1012 : vector<16x1xf32> to vector<16x512xf32>
    %1014 = arith.mulf %1011, %1013 : vector<16x512xf32>
    %1015 = arith.addf %1008, %1014 : vector<16x512xf32>
    %c496_i32_106 = arith.constant 496 : i32
    %1016 = tpu.dynamic_rotate %969 by %c496_i32_106 dim 1 : vector<16x512xf32>, i32 -> vector<16x512xf32>
    %1017 = vector.broadcast %261 : vector<1x512xf32> to vector<16x512xf32>
    %1018 = arith.mulf %1016, %1017 : vector<16x512xf32>
    %1019 = vector.extract_strided_slice %970 {offsets = [0, 7], sizes = [16, 1], strides = [1, 1]} : vector<16x9xf32> to vector<16x1xf32>
    %1020 = vector.broadcast %1019 : vector<16x1xf32> to vector<16x512xf32>
    %1021 = arith.mulf %1018, %1020 : vector<16x512xf32>
    %1022 = arith.addf %1015, %1021 : vector<16x512xf32>
    %c495_i32_107 = arith.constant 495 : i32
    %1023 = tpu.dynamic_rotate %969 by %c495_i32_107 dim 1 : vector<16x512xf32>, i32 -> vector<16x512xf32>
    %1024 = vector.broadcast %275 : vector<1x512xf32> to vector<16x512xf32>
    %1025 = arith.mulf %1023, %1024 : vector<16x512xf32>
    %1026 = vector.extract_strided_slice %970 {offsets = [0, 8], sizes = [16, 1], strides = [1, 1]} : vector<16x9xf32> to vector<16x1xf32>
    %1027 = vector.broadcast %1026 : vector<16x1xf32> to vector<16x512xf32>
    %1028 = arith.mulf %1025, %1027 : vector<16x512xf32>
    %1029 = arith.addf %1022, %1028 : vector<16x512xf32>
    %1030 = vector.extract_strided_slice %1 {offsets = [0, 16], sizes = [16, 1], strides = [1, 1]} : vector<16x19xf32> to vector<16x1xf32>
    %1031 = vector.broadcast %1030 : vector<16x1xf32> to vector<16x512xf32>
    %1032 = arith.addf %1029, %1031 : vector<16x512xf32>
    %cst_108 = arith.constant 5.000000e-01 : f32
    %1033 = vector.broadcast %cst_108 : f32 to vector<16x512xf32>
    %1034 = arith.mulf %1033, %1032 : vector<16x512xf32>
    %cst_109 = arith.constant 4.471500e-02 : f32
    %1035 = vector.broadcast %cst_109 : f32 to vector<16x512xf32>
    %1036 = arith.mulf %1035, %1032 : vector<16x512xf32>
    %1037 = arith.mulf %1036, %1032 : vector<16x512xf32>
    %1038 = arith.mulf %1037, %1032 : vector<16x512xf32>
    %1039 = arith.addf %1032, %1038 : vector<16x512xf32>
    %cst_110 = arith.constant 0.797884583 : f32
    %1040 = vector.broadcast %cst_110 : f32 to vector<16x512xf32>
    %1041 = arith.mulf %1040, %1039 : vector<16x512xf32>
    %1042 = math.tanh %1041 : vector<16x512xf32>
    %cst_111 = arith.constant 1.000000e+00 : f32
    %1043 = vector.broadcast %cst_111 : f32 to vector<16x512xf32>
    %1044 = arith.addf %1043, %1042 : vector<16x512xf32>
    %1045 = arith.mulf %1034, %1044 : vector<16x512xf32>
    %c0_112 = arith.constant 0 : index
    %c0_113 = arith.constant 0 : index
    %1046 = vector.load %arg9[%c0_112, %c0_113] : memref<16x16xf32, #tpu.memory_space<vmem>>, vector<16x16xf32>
    %cst_114 = arith.constant dense<0.000000e+00> : vector<16x512xf32>
    %1047 = tpu.matmul %1046, %1045, %cst_114 {dimension_numbers = #tpu.dot_dimension_numbers<[1], [0], [0], [1], [0, 0, 1, 1], [], []>} : vector<16x16xf32>, vector<16x512xf32>, vector<16x512xf32> -> vector<16x512xf32>
    %1048 = vector.extract_strided_slice %1 {offsets = [0, 17], sizes = [16, 1], strides = [1, 1]} : vector<16x19xf32> to vector<16x1xf32>
    %1049 = vector.broadcast %1048 : vector<16x1xf32> to vector<16x512xf32>
    %1050 = arith.addf %1047, %1049 : vector<16x512xf32>
    %1051 = arith.addf %1050, %958 : vector<16x512xf32>
    %c0_115 = arith.constant 0 : index
    %c0_116 = arith.constant 0 : index
    %1052 = vector.load %arg11[%c0_115, %c0_116] : memref<16x512xf32, #tpu.memory_space<vmem>>, vector<16x512xf32>
    tpu.vector_store %arg11[%c0_115, %c0_116], %1051 {strides = array<i32>} : memref<16x512xf32, #tpu.memory_space<vmem>>, vector<16x512xf32>,
    return
  }
  func.func @transform_0(%arg0: i32) -> (i32, i32) {
    %c0_i32 = arith.constant 0 : i32
    %c0_i32_0 = arith.constant 0 : i32
    %c0_i32_1 = arith.constant 0 : i32
    return %c0_i32, %c0_i32_0 : i32, i32
  }
  func.func @transform_1(%arg0: i32) -> (i32, i32) {
    %c0_i32 = arith.constant 0 : i32
    %c0_i32_0 = arith.constant 0 : i32
    %c0_i32_1 = arith.constant 0 : i32
    return %c0_i32, %c0_i32_0 : i32, i32
  }
  func.func @transform_2(%arg0: i32) -> (i32, i32) {
    %c0_i32 = arith.constant 0 : i32
    %c0_i32_0 = arith.constant 0 : i32
    %c0_i32_1 = arith.constant 0 : i32
    return %c0_i32, %c0_i32_0 : i32, i32
  }
  func.func @transform_3(%arg0: i32) -> (i32, i32) {
    %c0_i32 = arith.constant 0 : i32
    %c0_i32_0 = arith.constant 0 : i32
    %c0_i32_1 = arith.constant 0 : i32
    return %c0_i32, %c0_i32_0 : i32, i32
  }
  func.func @transform_4(%arg0: i32) -> (i32, i32) {
    %c0_i32 = arith.constant 0 : i32
    %c0_i32_0 = arith.constant 0 : i32
    %c0_i32_1 = arith.constant 0 : i32
    return %c0_i32, %c0_i32_0 : i32, i32
  }
  func.func @transform_5(%arg0: i32) -> (i32, i32) {
    %c0_i32 = arith.constant 0 : i32
    %c0_i32_0 = arith.constant 0 : i32
    %c0_i32_1 = arith.constant 0 : i32
    return %c0_i32, %c0_i32_0 : i32, i32
  }
  func.func @transform_6(%arg0: i32) -> (i32, i32) {
    %c0_i32 = arith.constant 0 : i32
    %c0_i32_0 = arith.constant 0 : i32
    %c0_i32_1 = arith.constant 0 : i32
    return %c0_i32, %c0_i32_0 : i32, i32
  }
  func.func @transform_7(%arg0: i32) -> (i32, i32) {
    %c0_i32 = arith.constant 0 : i32
    %c0_i32_0 = arith.constant 0 : i32
    %c0_i32_1 = arith.constant 0 : i32
    return %c0_i32, %c0_i32_0 : i32, i32
  }
  func.func @transform_8(%arg0: i32) -> (i32, i32) {
    %c0_i32 = arith.constant 0 : i32
    %c0_i32_0 = arith.constant 0 : i32
    %c0_i32_1 = arith.constant 0 : i32
    return %c0_i32, %c0_i32_0 : i32, i32
  }
  func.func @transform_9(%arg0: i32) -> (i32, i32) {
    %c0_i32 = arith.constant 0 : i32
    %c0_i32_0 = arith.constant 0 : i32
    %c0_i32_1 = arith.constant 0 : i32
    return %c0_i32, %c0_i32_0 : i32, i32
  }
  func.func @transform_10(%arg0: i32) -> (i32, i32) {
    %c0_i32 = arith.constant 0 : i32
    %c0_i32_0 = arith.constant 0 : i32
    %c0_i32_1 = arith.constant 0 : i32
    return %c0_i32, %c0_i32_0 : i32, i32
  }
}

</mosaic_0001>

<llo_original>
// kernel: tpu_custom_call.1
$region0: #{tpu_custom_call.1}
  #allocation0 [shape = 'u32[]', space=smem, size = 0x4, offset = 0x4, fixed_abs, tag = 'smem constant byte address 0x4 - core index']
  #allocation1 [shape = 'u32[144,128]{1,0:T(1,128)}', space=vmem, size = 0x12000, scoped, tag = 'internal scratch']
  %s0 = inlined_call_operand.vmem [shape: f32[8,512], index: 0, kind: input, shape index: {}]
  %s1 = inlined_call_operand.vmem [shape: f32[16,112], index: 1, kind: input, shape index: {}]
  %s2 = inlined_call_operand.hbm [shape: f32[16,19], index: 2, kind: input, shape index: {}]
  %s3 = inlined_call_operand.vmem [shape: f32[16,8], index: 3, kind: input, shape index: {}]
  %s4 = inlined_call_operand.hbm [shape: f32[16,16], index: 4, kind: input, shape index: {}]
  %s5 = inlined_call_operand.vmem [shape: f32[16,16], index: 5, kind: input, shape index: {}]
  %s6 = inlined_call_operand.hbm [shape: f32[16,16], index: 6, kind: input, shape index: {}]
  %s7 = inlined_call_operand.hbm [shape: f32[16,16], index: 7, kind: input, shape index: {}]
  %s8 = inlined_call_operand.hbm [shape: f32[16,16], index: 8, kind: input, shape index: {}]
  %s9 = inlined_call_operand.vmem [shape: f32[16,8], index: 9, kind: input, shape index: {}]
  %s10 = inlined_call_operand.hbm [shape: f32[16,512], index: 10, kind: output, shape index: {}]
  %s11 = sld [smem:[#allocation0]]
  $region70: #{tpu_custom_call.1} parent=0
    _
  %s13 = ssub.s32 1, %s11
  %s14 = scalar_select 0, %s13, %s11
  $region1: #{tpu_custom_call.1} parent=0
    #allocation2 [shape = 'u8[8192]{0}', space=vmem, size = 0x2000, scoped, tag = 'input window, operand 2, single buffered']
    #allocation3 [shape = 's32[1]{0}', space=sflag, size = 0x4, scoped, tag = 'scoped memory for tpu_custom_call.1']
    #allocation4 [shape = 's32[1]{0}', space=sflag, size = 0x4, scoped, tag = 'scoped memory for tpu_custom_call.1']
    #allocation5 [shape = 'u8[8192]{0}', space=vmem, size = 0x2000, scoped, tag = 'input window, operand 4, single buffered']
    #allocation6 [shape = 's32[1]{0}', space=sflag, size = 0x4, scoped, tag = 'scoped memory for tpu_custom_call.1']
    #allocation7 [shape = 'u8[8192]{0}', space=vmem, size = 0x2000, scoped, tag = 'input window, operand 6, single buffered']
    #allocation8 [shape = 'u8[8192]{0}', space=vmem, size = 0x2000, scoped, tag = 'input window, operand 7, single buffered']
    #allocation9 [shape = 's32[1]{0}', space=sflag, size = 0x4, scoped, tag = 'scoped memory for tpu_custom_call.1']
    #allocation10 [shape = 'u8[8192]{0}', space=vmem, size = 0x2000, scoped, tag = 'input window, operand 8, single buffered']
    #allocation11 [shape = 'u8[32768]{0}', space=vmem, size = 0x8000, scoped, tag = 'output window, operand 0, single buffered']
    %15 = vsyncpa [#allocation3], 0
    %16 = vsyncpa [#allocation6], 0
    %17 = vsyncpa [#allocation9], 0
    %18 = vsyncpa [#allocation4], 0
    // Predicated region
    $region2: #{tpu_custom_call.1} parent=1 // pred_check
      _
    $region3: #{tpu_custom_call.1} parent=1 // pred_check_branch
      %20 = sbr.rel (0) target = $region5
    $region4: #{tpu_custom_call.1} parent=1 // pred_region
      _
    $region5: #{tpu_custom_call.1} parent=1 // pred_fallthru
      _
    // Predicated region
    $region6: #{tpu_custom_call.1} parent=1 // pred_check
      _
    $region7: #{tpu_custom_call.1} parent=1 // pred_check_branch
      %22 = sbr.rel (0) target = $region9
    $region8: #{tpu_custom_call.1} parent=1 // pred_region
      _
    $region9: #{tpu_custom_call.1} parent=1 // pred_fallthru
      _
    // Predicated region
    $region10: #{tpu_custom_call.1} parent=1 // pred_check
      _
    $region11: #{tpu_custom_call.1} parent=1 // pred_check_branch
      %24 = sbr.rel (0) target = $region13
    $region12: #{tpu_custom_call.1} parent=1 // pred_region
      %s26 = ssub.s32 256, 256
      %27 = vsyncadd [#allocation3], %s26
      %s28 = sshll.u32 [#allocation2], 4
      %s29 = int_to_ptr.vmem [resolvable:$true] %s28
      %34 = dma.hbm_to_vmem [thread:$0]  %s2, 256, %s29, [#allocation3], 128, 128, 8
    $region13: #{tpu_custom_call.1} parent=1 // pred_fallthru
      _
    // Predicated region
    $region14: #{tpu_custom_call.1} parent=1 // pred_check
      _
    $region15: #{tpu_custom_call.1} parent=1 // pred_check_branch
      %36 = sbr.rel (0) target = $region17
    $region16: #{tpu_custom_call.1} parent=1 // pred_region
      _
    $region17: #{tpu_custom_call.1} parent=1 // pred_fallthru
      _
    // Predicated region
    $region18: #{tpu_custom_call.1} parent=1 // pred_check
      _
    $region19: #{tpu_custom_call.1} parent=1 // pred_check_branch
      %38 = sbr.rel (0) target = $region21
    $region20: #{tpu_custom_call.1} parent=1 // pred_region
      %s40 = ssub.s32 256, 256
      %41 = vsyncadd [#allocation6], %s40
      %s42 = sshll.u32 [#allocation5], 4
      %s43 = int_to_ptr.vmem [resolvable:$true] %s42
      %48 = dma.hbm_to_vmem [thread:$0]  %s4, 256, %s43, [#allocation6], 128, 128, 8
    $region21: #{tpu_custom_call.1} parent=1 // pred_fallthru
      _
    // Predicated region
    $region22: #{tpu_custom_call.1} parent=1 // pred_check
      _
    $region23: #{tpu_custom_call.1} parent=1 // pred_check_branch
      %50 = sbr.rel (0) target = $region25
    $region24: #{tpu_custom_call.1} parent=1 // pred_region
      _
    $region25: #{tpu_custom_call.1} parent=1 // pred_fallthru
      _
    // Predicated region
    $region26: #{tpu_custom_call.1} parent=1 // pred_check
      _
    $region27: #{tpu_custom_call.1} parent=1 // pred_check_branch
      %52 = sbr.rel (0) target = $region29
    $region28: #{tpu_custom_call.1} parent=1 // pred_region
      %s54 = ssub.s32 256, 256
      %55 = vsyncadd [#allocation6], %s54
      %s56 = sshll.u32 [#allocation7], 4
      %s57 = int_to_ptr.vmem [resolvable:$true] %s56
      %62 = dma.hbm_to_vmem [thread:$0]  %s6, 256, %s57, [#allocation6], 128, 128, 8
    $region29: #{tpu_custom_call.1} parent=1 // pred_fallthru
      _
    // Predicated region
    $region30: #{tpu_custom_call.1} parent=1 // pred_check
      _
    $region31: #{tpu_custom_call.1} parent=1 // pred_check_branch
      %64 = sbr.rel (0) target = $region33
    $region32: #{tpu_custom_call.1} parent=1 // pred_region
      %s66 = ssub.s32 256, 256
      %67 = vsyncadd [#allocation9], %s66
      %s68 = sshll.u32 [#allocation8], 4
      %s69 = int_to_ptr.vmem [resolvable:$true] %s68
      %74 = dma.hbm_to_vmem [thread:$0]  %s7, 256, %s69, [#allocation9], 128, 128, 8
    $region33: #{tpu_custom_call.1} parent=1 // pred_fallthru
      _
    // Predicated region
    $region34: #{tpu_custom_call.1} parent=1 // pred_check
      _
    $region35: #{tpu_custom_call.1} parent=1 // pred_check_branch
      %76 = sbr.rel (0) target = $region37
    $region36: #{tpu_custom_call.1} parent=1 // pred_region
      %s78 = ssub.s32 256, 256
      %79 = vsyncadd [#allocation9], %s78
      %s80 = sshll.u32 [#allocation10], 4
      %s81 = int_to_ptr.vmem [resolvable:$true] %s80
      %86 = dma.hbm_to_vmem [thread:$0]  %s8, 256, %s81, [#allocation9], 128, 128, 8
    $region37: #{tpu_custom_call.1} parent=1 // pred_fallthru
      _
    // Predicated region
    $region38: #{tpu_custom_call.1} parent=1 // pred_check
      _
    $region39: #{tpu_custom_call.1} parent=1 // pred_check_branch
      %88 = sbr.rel (0) target = $region41
    $region40: #{tpu_custom_call.1} parent=1 // pred_region
      _
    $region41: #{tpu_custom_call.1} parent=1 // pred_fallthru
      _
    // Predicated region
    $region42: #{tpu_custom_call.1} parent=1 // pred_check
      _
    $region43: #{tpu_custom_call.1} parent=1 // pred_check_branch
      %90 = sbr.rel (0) target = $region45
    $region44: #{tpu_custom_call.1} parent=1 // pred_region
      %91 = dma.done [#allocation3], 256
    $region45: #{tpu_custom_call.1} parent=1 // pred_fallthru
      _
    // Predicated region
    $region46: #{tpu_custom_call.1} parent=1 // pred_check
      _
    $region47: #{tpu_custom_call.1} parent=1 // pred_check_branch
      %93 = sbr.rel (0) target = $region49
    $region48: #{tpu_custom_call.1} parent=1 // pred_region
      %94 = dma.done [#allocation6], 256
    $region49: #{tpu_custom_call.1} parent=1 // pred_fallthru
      _
    // Predicated region
    $region50: #{tpu_custom_call.1} parent=1 // pred_check
      _
    $region51: #{tpu_custom_call.1} parent=1 // pred_check_branch
      %96 = sbr.rel (0) target = $region53
    $region52: #{tpu_custom_call.1} parent=1 // pred_region
      %97 = dma.done [#allocation6], 256
    $region53: #{tpu_custom_call.1} parent=1 // pred_fallthru
      _
    // Predicated region
    $region54: #{tpu_custom_call.1} parent=1 // pred_check
      _
    $region55: #{tpu_custom_call.1} parent=1 // pred_check_branch
      %99 = sbr.rel (0) target = $region57
    $region56: #{tpu_custom_call.1} parent=1 // pred_region
      %100 = dma.done [#allocation9], 256
    $region57: #{tpu_custom_call.1} parent=1 // pred_fallthru
      _
    // Predicated region
    $region58: #{tpu_custom_call.1} parent=1 // pred_check
      _
    $region59: #{tpu_custom_call.1} parent=1 // pred_check_branch
      %102 = sbr.rel (0) target = $region61
    $region60: #{tpu_custom_call.1} parent=1 // pred_region
      %103 = dma.done [#allocation9], 256
    $region61: #{tpu_custom_call.1} parent=1 // pred_fallthru
      _
    %v104 = vld [vmem:[%s1] sm:$0xff]
    %v105 = vld [vmem:[%s1 + $0x8] sm:$0xff]
    %v106 = vld [vmem:[#allocation2] sm:$0xff]
    %v107 = vld [vmem:[#allocation2 + $0x8] sm:$0xff]
    %v108 = vlaneseq
    %v109 = vand.u32 %v108, 127
    %v110 = vadd.s32 %v109, 128
    %v111 = vadd.s32 %v109, 256
    %v112 = vadd.s32 %v109, 384
    %v113 = vand.u32 %v109, 255
    %v114 = vand.u32 %v110, 255
    %v115 = vand.u32 %v111, 255
    %v116 = vand.u32 %v112, 255
    %v117 = vand.u32 %v109, 15
    %v118 = vand.u32 %v110, 15
    %v119 = vand.u32 %v111, 15
    %v120 = vand.u32 %v112, 15
    %v121 = vld [vmem:[%s0] sm:$0xff]
    %v122 = vld [vmem:[%s0 + $0x8] sm:$0xff]
    %v123 = vld [vmem:[%s0 + $0x10] sm:$0xff]
    %v124 = vld [vmem:[%s0 + $0x18] sm:$0xff]
    %v125 = vld [vmem:[%s9] sm:$0xff]
    %v126 = vld [vmem:[%s9 + $0x8] sm:$0xff]
    %128 = vset.pattern.permute.xlu0 18
    %129 = vperm.xlu0 %128, %v106
    %v130 = vpop.permute.xlu0 %129
    %133 = vset.pattern.permute.xlu0 18
    %134 = vperm.xlu0 %133, %v107
    %v135 = vpop.permute.xlu0 %134
    %vm137 = vcmask 64512
    %v139 = vsel %vm137, %v125, 0
    %v142 = vsel %vm137, %v126, 0
    %144 = vmatprep.subr.mxu0 %v122
    %145 = vmatpush1.msra.mxu0 %v121
    %146 = vmatprep.subr.mxu0 0.0
    %147 = vmatpush1.msra.mxu0 0.0
    %148 = vmatprep.subr.mxu0 0.0
    %149 = vmatpush1.msra.mxu0 0.0
    %150 = vmatprep.subr.mxu0 0.0
    %151 = vmatpush1.msra.mxu0 0.0
    %152 = vmatprep.subr.mxu0 0.0
    %153 = vmatpush1.msra.mxu0 0.0
    %154 = vmatprep.subr.mxu0 0.0
    %155 = vmatpush1.msra.mxu0 0.0
    %156 = vmatprep.subr.mxu0 0.0
    %157 = vmatpush1.msra.mxu0 0.0
    %158 = vmatprep.subr.mxu0 0.0
    %159 = vmatpush1.msra.mxu0 0.0
    %160 = vmatprep.subr.mxu0 0.0
    %161 = vmatpush1.msra.mxu0 0.0
    %162 = vmatprep.subr.mxu0 0.0
    %163 = vmatpush1.msra.mxu0 0.0
    %164 = vmatprep.subr.mxu0 0.0
    %165 = vmatpush1.msra.mxu0 0.0
    %166 = vmatprep.subr.mxu0 0.0
    %167 = vmatpush1.msra.mxu0 0.0
    %168 = vmatprep.subr.mxu0 0.0
    %169 = vmatpush1.msra.mxu0 0.0
    %170 = vmatprep.subr.mxu0 0.0
    %171 = vmatpush1.msra.mxu0 0.0
    %172 = vmatprep.subr.mxu0 0.0
    %173 = vmatpush1.msra.mxu0 0.0
    %174 = vmatprep.subr.mxu0 0.0
    %175 = vmatpush1.msra.mxu0 0.0
    %176 = vmatprep.subr.mxu0 0.0
    %177 = vmatpush1.msra.mxu0 0.0
    %178 = vmatprep.subr.mxu0 0.0
    %179 = vmatpush1.msra.mxu0 0.0
    %180 = vmatprep.subr.mxu0 0.0
    %181 = vmatpush1.msra.mxu0 0.0
    %182 = vmatprep.subr.mxu0 0.0
    %183 = vmatpush1.msra.mxu0 0.0
    %184 = vmatprep.subr.mxu0 0.0
    %185 = vmatpush1.msra.mxu0 0.0
    %186 = vmatprep.subr.mxu0 0.0
    %187 = vmatpush1.msra.mxu0 0.0
    %188 = vmatprep.subr.mxu0 0.0
    %189 = vmatpush1.msra.mxu0 0.0
    %190 = vmatprep.subr.mxu0 0.0
    %191 = vmatpush1.msra.mxu0 0.0
    %192 = vmatprep.subr.mxu0 0.0
    %193 = vmatpush1.msra.mxu0 0.0
    %194 = vmatprep.subr.mxu0 0.0
    %195 = vmatpush1.msra.mxu0 0.0
    %196 = vmatprep.subr.mxu0 0.0
    %197 = vmatpush1.msra.mxu0 0.0
    %198 = vmatprep.subr.mxu0 0.0
    %199 = vmatpush1.msra.mxu0 0.0
    %200 = vmatprep.subr.mxu0 0.0
    %201 = vmatpush1.msra.mxu0 0.0
    %202 = vmatprep.subr.mxu0 0.0
    %203 = vmatpush1.msra.mxu0 0.0
    %204 = vmatprep.subr.mxu0 0.0
    %205 = vmatpush1.msra.mxu0 0.0
    %206 = vmatprep.subr.mxu0 0.0
    %207 = vmatpush1.msra.mxu0 0.0
    %208 = vmatprep.mubr.f32.mxu0 0.0
    %209 = vmatmul.mubr.f32.gmra.mrb[0].mxu0 %v139
    %v210 = vpop.f32.mrb[0].mxu0
    %v211 = vadd.f32 %v130, %v210
    %v212 = vpop.f32.mrb[0].mxu0
    %v213 = vadd.f32 %v130, %v212
    %214 = vmatprep.mubr.f32.mxu0 0.0
    %215 = vmatmul.mubr.f32.gmra.mrb[0].mxu0 %v142
    %v216 = vpop.f32.mrb[0].mxu0
    %v217 = vadd.f32 %v135, %v216
    %v218 = vpop.f32.mrb[0].mxu0
    %v219 = vadd.f32 %v135, %v218
    %220 = vdwg.mxu0
    %221 = vmatprep.subr.mxu0 %v124
    %222 = vmatpush1.msra.mxu0 %v123
    %223 = vmatprep.subr.mxu0 0.0
    %224 = vmatpush1.msra.mxu0 0.0
    %225 = vmatprep.subr.mxu0 0.0
    %226 = vmatpush1.msra.mxu0 0.0
    %227 = vmatprep.subr.mxu0 0.0
    %228 = vmatpush1.msra.mxu0 0.0
    %229 = vmatprep.subr.mxu0 0.0
    %230 = vmatpush1.msra.mxu0 0.0
    %231 = vmatprep.subr.mxu0 0.0
    %232 = vmatpush1.msra.mxu0 0.0
    %233 = vmatprep.subr.mxu0 0.0
    %234 = vmatpush1.msra.mxu0 0.0
    %235 = vmatprep.subr.mxu0 0.0
    %236 = vmatpush1.msra.mxu0 0.0
    %237 = vmatprep.subr.mxu0 0.0
    %238 = vmatpush1.msra.mxu0 0.0
    %239 = vmatprep.subr.mxu0 0.0
    %240 = vmatpush1.msra.mxu0 0.0
    %241 = vmatprep.subr.mxu0 0.0
    %242 = vmatpush1.msra.mxu0 0.0
    %243 = vmatprep.subr.mxu0 0.0
    %244 = vmatpush1.msra.mxu0 0.0
    %245 = vmatprep.subr.mxu0 0.0
    %246 = vmatpush1.msra.mxu0 0.0
    %247 = vmatprep.subr.mxu0 0.0
    %248 = vmatpush1.msra.mxu0 0.0
    %249 = vmatprep.subr.mxu0 0.0
    %250 = vmatpush1.msra.mxu0 0.0
    %251 = vmatprep.subr.mxu0 0.0
    %252 = vmatpush1.msra.mxu0 0.0
    %253 = vmatprep.subr.mxu0 0.0
    %254 = vmatpush1.msra.mxu0 0.0
    %255 = vmatprep.subr.mxu0 0.0
    %256 = vmatpush1.msra.mxu0 0.0
    %257 = vmatprep.subr.mxu0 0.0
    %258 = vmatpush1.msra.mxu0 0.0
    %259 = vmatprep.subr.mxu0 0.0
    %260 = vmatpush1.msra.mxu0 0.0
    %261 = vmatprep.subr.mxu0 0.0
    %262 = vmatpush1.msra.mxu0 0.0
    %263 = vmatprep.subr.mxu0 0.0
    %264 = vmatpush1.msra.mxu0 0.0
    %265 = vmatprep.subr.mxu0 0.0
    %266 = vmatpush1.msra.mxu0 0.0
    %267 = vmatprep.subr.mxu0 0.0
    %268 = vmatpush1.msra.mxu0 0.0
    %269 = vmatprep.subr.mxu0 0.0
    %270 = vmatpush1.msra.mxu0 0.0
    %271 = vmatprep.subr.mxu0 0.0
    %272 = vmatpush1.msra.mxu0 0.0
    %273 = vmatprep.subr.mxu0 0.0
    %274 = vmatpush1.msra.mxu0 0.0
    %275 = vmatprep.subr.mxu0 0.0
    %276 = vmatpush1.msra.mxu0 0.0
    %277 = vmatprep.subr.mxu0 0.0
    %278 = vmatpush1.msra.mxu0 0.0
    %279 = vmatprep.subr.mxu0 0.0
    %280 = vmatpush1.msra.mxu0 0.0
    %281 = vmatprep.subr.mxu0 0.0
    %282 = vmatpush1.msra.mxu0 0.0
    %283 = vmatprep.subr.mxu0 0.0
    %284 = vmatpush1.msra.mxu0 0.0
    %285 = vmatprep.mubr.f32.mxu0 0.0
    %286 = vmatmul.mubr.f32.gmra.mrb[0].mxu0 %v139
    %v287 = vpop.f32.mrb[0].mxu0
    %v288 = vadd.f32 %v130, %v287
    %v289 = vpop.f32.mrb[0].mxu0
    %v290 = vadd.f32 %v130, %v289
    %291 = vmatprep.mubr.f32.mxu0 0.0
    %292 = vmatmul.mubr.f32.gmra.mrb[0].mxu0 %v142
    %v293 = vpop.f32.mrb[0].mxu0
    %v294 = vadd.f32 %v135, %v293
    %v295 = vpop.f32.mrb[0].mxu0
    %v296 = vadd.f32 %v135, %v295
    %297 = vdwg.mxu0
    %298 = vset.pattern.permute.xlu0 0
    %299 = vperm.xlu0 %298, %v106
    %v300 = vpop.permute.xlu0 %299
    %v302 = vmul.f32 %v121, %v300
    %v303 = vmul.f32 %v122, %v300
    %v304 = vmul.f32 %v123, %v300
    %v305 = vmul.f32 %v124, %v300
    %306 = vset.pattern.permute.xlu0 1
    %307 = vperm.xlu0 %306, %v106
    %v308 = vpop.permute.xlu0 %307
    %v310 = vadd.f32 %v302, %v308
    %v311 = vadd.f32 %v303, %v308
    %v312 = vadd.f32 %v304, %v308
    %v313 = vadd.f32 %v305, %v308
    %v314 = vld [vmem:[%s3] sm:$0xff]
    %v315 = vld [vmem:[%s3 + $0x8] sm:$0xff]
    %316 = vset.pattern.permute.xlu0 4
    %317 = vperm.xlu0 %316, %v106
    %v318 = vpop.permute.xlu0 %317
    %320 = vset.pattern.permute.xlu0 4
    %321 = vperm.xlu0 %320, %v107
    %v322 = vpop.permute.xlu0 %321
    %v325 = vsel %vm137, %v314, 0
    %v328 = vsel %vm137, %v315, 0
    %330 = vmatprep.subr.mxu0 %v311
    %331 = vmatpush1.msra.mxu0 %v310
    %332 = vmatprep.subr.mxu0 0.0
    %333 = vmatpush1.msra.mxu0 0.0
    %334 = vmatprep.subr.mxu0 0.0
    %335 = vmatpush1.msra.mxu0 0.0
    %336 = vmatprep.subr.mxu0 0.0
    %337 = vmatpush1.msra.mxu0 0.0
    %338 = vmatprep.subr.mxu0 0.0
    %339 = vmatpush1.msra.mxu0 0.0
    %340 = vmatprep.subr.mxu0 0.0
    %341 = vmatpush1.msra.mxu0 0.0
    %342 = vmatprep.subr.mxu0 0.0
    %343 = vmatpush1.msra.mxu0 0.0
    %344 = vmatprep.subr.mxu0 0.0
    %345 = vmatpush1.msra.mxu0 0.0
    %346 = vmatprep.subr.mxu0 0.0
    %347 = vmatpush1.msra.mxu0 0.0
    %348 = vmatprep.subr.mxu0 0.0
    %349 = vmatpush1.msra.mxu0 0.0
    %350 = vmatprep.subr.mxu0 0.0
    %351 = vmatpush1.msra.mxu0 0.0
    %352 = vmatprep.subr.mxu0 0.0
    %353 = vmatpush1.msra.mxu0 0.0
    %354 = vmatprep.subr.mxu0 0.0
    %355 = vmatpush1.msra.mxu0 0.0
    %356 = vmatprep.subr.mxu0 0.0
    %357 = vmatpush1.msra.mxu0 0.0
    %358 = vmatprep.subr.mxu0 0.0
    %359 = vmatpush1.msra.mxu0 0.0
    %360 = vmatprep.subr.mxu0 0.0
    %361 = vmatpush1.msra.mxu0 0.0
    %362 = vmatprep.subr.mxu0 0.0
    %363 = vmatpush1.msra.mxu0 0.0
    %364 = vmatprep.subr.mxu0 0.0
    %365 = vmatpush1.msra.mxu0 0.0
    %366 = vmatprep.subr.mxu0 0.0
    %367 = vmatpush1.msra.mxu0 0.0
    %368 = vmatprep.subr.mxu0 0.0
    %369 = vmatpush1.msra.mxu0 0.0
    %370 = vmatprep.subr.mxu0 0.0
    %371 = vmatpush1.msra.mxu0 0.0
    %372 = vmatprep.subr.mxu0 0.0
    %373 = vmatpush1.msra.mxu0 0.0
    %374 = vmatprep.subr.mxu0 0.0
    %375 = vmatpush1.msra.mxu0 0.0
    %376 = vmatprep.subr.mxu0 0.0
    %377 = vmatpush1.msra.mxu0 0.0
    %378 = vmatprep.subr.mxu0 0.0
    %379 = vmatpush1.msra.mxu0 0.0
    %380 = vmatprep.subr.mxu0 0.0
    %381 = vmatpush1.msra.mxu0 0.0
    %382 = vmatprep.subr.mxu0 0.0
    %383 = vmatpush1.msra.mxu0 0.0
    %384 = vmatprep.subr.mxu0 0.0
    %385 = vmatpush1.msra.mxu0 0.0
    %386 = vmatprep.subr.mxu0 0.0
    %387 = vmatpush1.msra.mxu0 0.0
    %388 = vmatprep.subr.mxu0 0.0
    %389 = vmatpush1.msra.mxu0 0.0
    %390 = vmatprep.subr.mxu0 0.0
    %391 = vmatpush1.msra.mxu0 0.0
    %392 = vmatprep.subr.mxu0 0.0
    %393 = vmatpush1.msra.mxu0 0.0
    %394 = vmatprep.mubr.f32.mxu0 0.0
    %395 = vmatmul.mubr.f32.gmra.mrb[0].mxu0 %v325
    %v396 = vpop.f32.mrb[0].mxu0
    %v397 = vadd.f32 %v318, %v396
    %v398 = vpop.f32.mrb[0].mxu0
    %v399 = vadd.f32 %v318, %v398
    %400 = vmatprep.mubr.f32.mxu0 0.0
    %401 = vmatmul.mubr.f32.gmra.mrb[0].mxu0 %v328
    %v402 = vpop.f32.mrb[0].mxu0
    %v403 = vadd.f32 %v322, %v402
    %v404 = vpop.f32.mrb[0].mxu0
    %v405 = vadd.f32 %v322, %v404
    %406 = vdwg.mxu0
    %407 = vmatprep.subr.mxu0 %v313
    %408 = vmatpush1.msra.mxu0 %v312
    %409 = vmatprep.subr.mxu0 0.0
    %410 = vmatpush1.msra.mxu0 0.0
    %411 = vmatprep.subr.mxu0 0.0
    %412 = vmatpush1.msra.mxu0 0.0
    %413 = vmatprep.subr.mxu0 0.0
    %414 = vmatpush1.msra.mxu0 0.0
    %415 = vmatprep.subr.mxu0 0.0
    %416 = vmatpush1.msra.mxu0 0.0
    %417 = vmatprep.subr.mxu0 0.0
    %418 = vmatpush1.msra.mxu0 0.0
    %419 = vmatprep.subr.mxu0 0.0
    %420 = vmatpush1.msra.mxu0 0.0
    %421 = vmatprep.subr.mxu0 0.0
    %422 = vmatpush1.msra.mxu0 0.0
    %423 = vmatprep.subr.mxu0 0.0
    %424 = vmatpush1.msra.mxu0 0.0
    %425 = vmatprep.subr.mxu0 0.0
    %426 = vmatpush1.msra.mxu0 0.0
    %427 = vmatprep.subr.mxu0 0.0
    %428 = vmatpush1.msra.mxu0 0.0
    %429 = vmatprep.subr.mxu0 0.0
    %430 = vmatpush1.msra.mxu0 0.0
    %431 = vmatprep.subr.mxu0 0.0
    %432 = vmatpush1.msra.mxu0 0.0
    %433 = vmatprep.subr.mxu0 0.0
    %434 = vmatpush1.msra.mxu0 0.0
    %435 = vmatprep.subr.mxu0 0.0
    %436 = vmatpush1.msra.mxu0 0.0
    %437 = vmatprep.subr.mxu0 0.0
    %438 = vmatpush1.msra.mxu0 0.0
    %439 = vmatprep.subr.mxu0 0.0
    %440 = vmatpush1.msra.mxu0 0.0
    %441 = vmatprep.subr.mxu0 0.0
    %442 = vmatpush1.msra.mxu0 0.0
    %443 = vmatprep.subr.mxu0 0.0
    %444 = vmatpush1.msra.mxu0 0.0
    %445 = vmatprep.subr.mxu0 0.0
    %446 = vmatpush1.msra.mxu0 0.0
    %447 = vmatprep.subr.mxu0 0.0
    %448 = vmatpush1.msra.mxu0 0.0
    %449 = vmatprep.subr.mxu0 0.0
    %450 = vmatpush1.msra.mxu0 0.0
    %451 = vmatprep.subr.mxu0 0.0
    %452 = vmatpush1.msra.mxu0 0.0
    %453 = vmatprep.subr.mxu0 0.0
    %454 = vmatpush1.msra.mxu0 0.0
    %455 = vmatprep.subr.mxu0 0.0
    %456 = vmatpush1.msra.mxu0 0.0
    %457 = vmatprep.subr.mxu0 0.0
    %458 = vmatpush1.msra.mxu0 0.0
    %459 = vmatprep.subr.mxu0 0.0
    %460 = vmatpush1.msra.mxu0 0.0
    %461 = vmatprep.subr.mxu0 0.0
    %462 = vmatpush1.msra.mxu0 0.0
    %463 = vmatprep.subr.mxu0 0.0
    %464 = vmatpush1.msra.mxu0 0.0
    %465 = vmatprep.subr.mxu0 0.0
    %466 = vmatpush1.msra.mxu0 0.0
    %467 = vmatprep.subr.mxu0 0.0
    %468 = vmatpush1.msra.mxu0 0.0
    %469 = vmatprep.subr.mxu0 0.0
    %470 = vmatpush1.msra.mxu0 0.0
    %471 = vmatprep.mubr.f32.mxu0 0.0
    %472 = vmatmul.mubr.f32.gmra.mrb[0].mxu0 %v325
    %v473 = vpop.f32.mrb[0].mxu0
    %v474 = vadd.f32 %v318, %v473
    %v475 = vpop.f32.mrb[0].mxu0
    %v476 = vadd.f32 %v318, %v475
    %477 = vmatprep.mubr.f32.mxu0 0.0
    %478 = vmatmul.mubr.f32.gmra.mrb[0].mxu0 %v328
    %v479 = vpop.f32.mrb[0].mxu0
    %v480 = vadd.f32 %v322, %v479
    %v481 = vpop.f32.mrb[0].mxu0
    %v482 = vadd.f32 %v322, %v481
    %483 = vdwg.mxu0
    %v484 = vmul.f32 %v397, 0.5
    %v485 = vmul.f32 %v399, 0.5
    %v486 = vmul.f32 %v474, 0.5
    %v487 = vmul.f32 %v476, 0.5
    %v488 = vmul.f32 %v403, 0.5
    %v489 = vmul.f32 %v405, 0.5
    %v490 = vmul.f32 %v480, 0.5
    %v491 = vmul.f32 %v482, 0.5
    %v492 = vmul.f32 %v397, 0.044715
    %v493 = vmul.f32 %v399, 0.044715
    %v494 = vmul.f32 %v474, 0.044715
    %v495 = vmul.f32 %v476, 0.044715
    %v496 = vmul.f32 %v403, 0.044715
    %v497 = vmul.f32 %v405, 0.044715
    %v498 = vmul.f32 %v480, 0.044715
    %v499 = vmul.f32 %v482, 0.044715
    %v500 = vmul.f32 %v492, %v397
    %v501 = vmul.f32 %v493, %v399
    %v502 = vmul.f32 %v494, %v474
    %v503 = vmul.f32 %v495, %v476
    %v504 = vmul.f32 %v496, %v403
    %v505 = vmul.f32 %v497, %v405
    %v506 = vmul.f32 %v498, %v480
    %v507 = vmul.f32 %v499, %v482
    %v508 = vmul.f32 %v500, %v397
    %v509 = vmul.f32 %v501, %v399
    %v510 = vmul.f32 %v502, %v474
    %v511 = vmul.f32 %v503, %v476
    %v512 = vmul.f32 %v504, %v403
    %v513 = vmul.f32 %v505, %v405
    %v514 = vmul.f32 %v506, %v480
    %v515 = vmul.f32 %v507, %v482
    %v516 = vadd.f32 %v397, %v508
    %v517 = vadd.f32 %v399, %v509
    %v518 = vadd.f32 %v474, %v510
    %v519 = vadd.f32 %v476, %v511
    %v520 = vadd.f32 %v403, %v512
    %v521 = vadd.f32 %v405, %v513
    %v522 = vadd.f32 %v480, %v514
    %v523 = vadd.f32 %v482, %v515
    %v524 = vmul.f32 %v516, 0.7978846
    %v525 = vmul.f32 %v517, 0.7978846
    %v526 = vmul.f32 %v518, 0.7978846
    %v527 = vmul.f32 %v519, 0.7978846
    %v528 = vmul.f32 %v520, 0.7978846
    %v529 = vmul.f32 %v521, 0.7978846
    %v530 = vmul.f32 %v522, 0.7978846
    %v531 = vmul.f32 %v523, 0.7978846
    %v532 = vtanh.pop %v524
    %v533 = vtanh.pop %v525
    %v534 = vtanh.pop %v526
    %v535 = vtanh.pop %v527
    %v536 = vtanh.pop %v528
    %v537 = vtanh.pop %v529
    %v538 = vtanh.pop %v530
    %v539 = vtanh.pop %v531
    %v540 = vadd.f32 %v532, 1.0
    %v541 = vadd.f32 %v533, 1.0
    %v542 = vadd.f32 %v534, 1.0
    %v543 = vadd.f32 %v535, 1.0
    %v544 = vadd.f32 %v536, 1.0
    %v545 = vadd.f32 %v537, 1.0
    %v546 = vadd.f32 %v538, 1.0
    %v547 = vadd.f32 %v539, 1.0
    %v548 = vmul.f32 %v484, %v540
    %v549 = vmul.f32 %v485, %v541
    %v550 = vmul.f32 %v486, %v542
    %v551 = vmul.f32 %v487, %v543
    %v552 = vmul.f32 %v488, %v544
    %v553 = vmul.f32 %v489, %v545
    %v554 = vmul.f32 %v490, %v546
    %v555 = vmul.f32 %v491, %v547
    %v556 = vld [vmem:[#allocation5] sm:$0xff]
    %v557 = vld [vmem:[#allocation5 + $0x8] sm:$0xff]
    %558 = vset.pattern.permute.xlu0 5
    %559 = vperm.xlu0 %558, %v106
    %v560 = vpop.permute.xlu0 %559
    %562 = vset.pattern.permute.xlu0 5
    %563 = vperm.xlu0 %562, %v107
    %v564 = vpop.permute.xlu0 %563
    %vm566 = vcmask 130048
    %v568 = vsel %vm566, %v556, 0
    %v571 = vsel %vm566, %v557, 0
    %573 = vmatprep.subr.mxu0 %v549
    %574 = vmatpush1.msra.mxu0 %v548
    %575 = vmatprep.subr.mxu0 %v553
    %576 = vmatpush1.msra.mxu0 %v552
    %577 = vmatprep.subr.mxu0 0.0
    %578 = vmatpush1.msra.mxu0 0.0
    %579 = vmatprep.subr.mxu0 0.0
    %580 = vmatpush1.msra.mxu0 0.0
    %581 = vmatprep.subr.mxu0 0.0
    %582 = vmatpush1.msra.mxu0 0.0
    %583 = vmatprep.subr.mxu0 0.0
    %584 = vmatpush1.msra.mxu0 0.0
    %585 = vmatprep.subr.mxu0 0.0
    %586 = vmatpush1.msra.mxu0 0.0
    %587 = vmatprep.subr.mxu0 0.0
    %588 = vmatpush1.msra.mxu0 0.0
    %589 = vmatprep.subr.mxu0 0.0
    %590 = vmatpush1.msra.mxu0 0.0
    %591 = vmatprep.subr.mxu0 0.0
    %592 = vmatpush1.msra.mxu0 0.0
    %593 = vmatprep.subr.mxu0 0.0
    %594 = vmatpush1.msra.mxu0 0.0
    %595 = vmatprep.subr.mxu0 0.0
    %596 = vmatpush1.msra.mxu0 0.0
    %597 = vmatprep.subr.mxu0 0.0
    %598 = vmatpush1.msra.mxu0 0.0
    %599 = vmatprep.subr.mxu0 0.0
    %600 = vmatpush1.msra.mxu0 0.0
    %601 = vmatprep.subr.mxu0 0.0
    %602 = vmatpush1.msra.mxu0 0.0
    %603 = vmatprep.subr.mxu0 0.0
    %604 = vmatpush1.msra.mxu0 0.0
    %605 = vmatprep.subr.mxu0 0.0
    %606 = vmatpush1.msra.mxu0 0.0
    %607 = vmatprep.subr.mxu0 0.0
    %608 = vmatpush1.msra.mxu0 0.0
    %609 = vmatprep.subr.mxu0 0.0
    %610 = vmatpush1.msra.mxu0 0.0
    %611 = vmatprep.subr.mxu0 0.0
    %612 = vmatpush1.msra.mxu0 0.0
    %613 = vmatprep.subr.mxu0 0.0
    %614 = vmatpush1.msra.mxu0 0.0
    %615 = vmatprep.subr.mxu0 0.0
    %616 = vmatpush1.msra.mxu0 0.0
    %617 = vmatprep.subr.mxu0 0.0
    %618 = vmatpush1.msra.mxu0 0.0
    %619 = vmatprep.subr.mxu0 0.0
    %620 = vmatpush1.msra.mxu0 0.0
    %621 = vmatprep.subr.mxu0 0.0
    %622 = vmatpush1.msra.mxu0 0.0
    %623 = vmatprep.subr.mxu0 0.0
    %624 = vmatpush1.msra.mxu0 0.0
    %625 = vmatprep.subr.mxu0 0.0
    %626 = vmatpush1.msra.mxu0 0.0
    %627 = vmatprep.subr.mxu0 0.0
    %628 = vmatpush1.msra.mxu0 0.0
    %629 = vmatprep.subr.mxu0 0.0
    %630 = vmatpush1.msra.mxu0 0.0
    %631 = vmatprep.subr.mxu0 0.0
    %632 = vmatpush1.msra.mxu0 0.0
    %633 = vmatprep.subr.mxu0 0.0
    %634 = vmatpush1.msra.mxu0 0.0
    %635 = vmatprep.subr.mxu0 0.0
    %636 = vmatpush1.msra.mxu0 0.0
    %637 = vmatprep.mubr.f32.mxu0 0.0
    %638 = vmatmul.mubr.f32.gmra.mrb[0].mxu0 %v568
    %v639 = vpop.f32.mrb[0].mxu0
    %v640 = vadd.f32 %v560, %v639
    %v641 = vpop.f32.mrb[0].mxu0
    %v642 = vadd.f32 %v560, %v641
    %643 = vmatprep.mubr.f32.mxu0 0.0
    %644 = vmatmul.mubr.f32.gmra.mrb[0].mxu0 %v571
    %v645 = vpop.f32.mrb[0].mxu0
    %v646 = vadd.f32 %v564, %v645
    %v647 = vpop.f32.mrb[0].mxu0
    %v648 = vadd.f32 %v564, %v647
    %649 = vdwg.mxu0
    %650 = vmatprep.subr.mxu0 %v551
    %651 = vmatpush1.msra.mxu0 %v550
    %652 = vmatprep.subr.mxu0 %v555
    %653 = vmatpush1.msra.mxu0 %v554
    %654 = vmatprep.subr.mxu0 0.0
    %655 = vmatpush1.msra.mxu0 0.0
    %656 = vmatprep.subr.mxu0 0.0
    %657 = vmatpush1.msra.mxu0 0.0
    %658 = vmatprep.subr.mxu0 0.0
    %659 = vmatpush1.msra.mxu0 0.0
    %660 = vmatprep.subr.mxu0 0.0
    %661 = vmatpush1.msra.mxu0 0.0
    %662 = vmatprep.subr.mxu0 0.0
    %663 = vmatpush1.msra.mxu0 0.0
    %664 = vmatprep.subr.mxu0 0.0
    %665 = vmatpush1.msra.mxu0 0.0
    %666 = vmatprep.subr.mxu0 0.0
    %667 = vmatpush1.msra.mxu0 0.0
    %668 = vmatprep.subr.mxu0 0.0
    %669 = vmatpush1.msra.mxu0 0.0
    %670 = vmatprep.subr.mxu0 0.0
    %671 = vmatpush1.msra.mxu0 0.0
    %672 = vmatprep.subr.mxu0 0.0
    %673 = vmatpush1.msra.mxu0 0.0
    %674 = vmatprep.subr.mxu0 0.0
    %675 = vmatpush1.msra.mxu0 0.0
    %676 = vmatprep.subr.mxu0 0.0
    %677 = vmatpush1.msra.mxu0 0.0
    %678 = vmatprep.subr.mxu0 0.0
    %679 = vmatpush1.msra.mxu0 0.0
    %680 = vmatprep.subr.mxu0 0.0
    %681 = vmatpush1.msra.mxu0 0.0
    %682 = vmatprep.subr.mxu0 0.0
    %683 = vmatpush1.msra.mxu0 0.0
    %684 = vmatprep.subr.mxu0 0.0
    %685 = vmatpush1.msra.mxu0 0.0
    %686 = vmatprep.subr.mxu0 0.0
    %687 = vmatpush1.msra.mxu0 0.0
    %688 = vmatprep.subr.mxu0 0.0
    %689 = vmatpush1.msra.mxu0 0.0
    %690 = vmatprep.subr.mxu0 0.0
    %691 = vmatpush1.msra.mxu0 0.0
    %692 = vmatprep.subr.mxu0 0.0
    %693 = vmatpush1.msra.mxu0 0.0
    %694 = vmatprep.subr.mxu0 0.0
    %695 = vmatpush1.msra.mxu0 0.0
    %696 = vmatprep.subr.mxu0 0.0
    %697 = vmatpush1.msra.mxu0 0.0
    %698 = vmatprep.subr.mxu0 0.0
    %699 = vmatpush1.msra.mxu0 0.0
    %700 = vmatprep.subr.mxu0 0.0
    %701 = vmatpush1.msra.mxu0 0.0
    %702 = vmatprep.subr.mxu0 0.0
    %703 = vmatpush1.msra.mxu0 0.0
    %704 = vmatprep.subr.mxu0 0.0
    %705 = vmatpush1.msra.mxu0 0.0
    %706 = vmatprep.subr.mxu0 0.0
    %707 = vmatpush1.msra.mxu0 0.0
    %708 = vmatprep.subr.mxu0 0.0
    %709 = vmatpush1.msra.mxu0 0.0
    %710 = vmatprep.subr.mxu0 0.0
    %711 = vmatpush1.msra.mxu0 0.0
    %712 = vmatprep.subr.mxu0 0.0
    %713 = vmatpush1.msra.mxu0 0.0
    %714 = vmatprep.mubr.f32.mxu0 0.0
    %715 = vmatmul.mubr.f32.gmra.mrb[0].mxu0 %v568
    %v716 = vpop.f32.mrb[0].mxu0
    %v717 = vadd.f32 %v560, %v716
    %v718 = vpop.f32.mrb[0].mxu0
    %v719 = vadd.f32 %v560, %v718
    %720 = vmatprep.mubr.f32.mxu0 0.0
    %721 = vmatmul.mubr.f32.gmra.mrb[0].mxu0 %v571
    %v722 = vpop.f32.mrb[0].mxu0
    %v723 = vadd.f32 %v564, %v722
    %v724 = vpop.f32.mrb[0].mxu0
    %v725 = vadd.f32 %v564, %v724
    %726 = vdwg.mxu0
    %v727 = vxor.u32 %v640, 2147483648
    %v728 = vxor.u32 %v642, 2147483648
    %v729 = vxor.u32 %v717, 2147483648
    %v730 = vxor.u32 %v719, 2147483648
    %v731 = vxor.u32 %v646, 2147483648
    %v732 = vxor.u32 %v648, 2147483648
    %v733 = vxor.u32 %v723, 2147483648
    %v734 = vxor.u32 %v725, 2147483648
    %v735 = vmul.f32 %v727, 1.442695
    %v736 = vpow.pop %v735
    %v737 = vmul.f32 %v728, 1.442695
    %v738 = vpow.pop %v737
    %v739 = vmul.f32 %v729, 1.442695
    %v740 = vpow.pop %v739
    %v741 = vmul.f32 %v730, 1.442695
    %v742 = vpow.pop %v741
    %v743 = vmul.f32 %v731, 1.442695
    %v744 = vpow.pop %v743
    %v745 = vmul.f32 %v732, 1.442695
    %v746 = vpow.pop %v745
    %v747 = vmul.f32 %v733, 1.442695
    %v748 = vpow.pop %v747
    %v749 = vmul.f32 %v734, 1.442695
    %v750 = vpow.pop %v749
    %v751 = vadd.f32 %v736, 1.0
    %v752 = vadd.f32 %v738, 1.0
    %v753 = vadd.f32 %v740, 1.0
    %v754 = vadd.f32 %v742, 1.0
    %v755 = vadd.f32 %v744, 1.0
    %v756 = vadd.f32 %v746, 1.0
    %v757 = vadd.f32 %v748, 1.0
    %v758 = vadd.f32 %v750, 1.0
    %v759 = vrcp.pop %v751
    %v760 = vmul.f32 1.0, %v759
    %v761 = vrcp.pop %v752
    %v762 = vmul.f32 1.0, %v761
    %v763 = vrcp.pop %v753
    %v764 = vmul.f32 1.0, %v763
    %v765 = vrcp.pop %v754
    %v766 = vmul.f32 1.0, %v765
    %v767 = vrcp.pop %v755
    %v768 = vmul.f32 1.0, %v767
    %v769 = vrcp.pop %v756
    %v770 = vmul.f32 1.0, %v769
    %v771 = vrcp.pop %v757
    %v772 = vmul.f32 1.0, %v771
    %v773 = vrcp.pop %v758
    %v774 = vmul.f32 1.0, %v773
    %775 = vrot.lane.b32.xlu0 %v548, 34
    %v776 = vpop.permute.xlu0 %775
    %777 = vrot.lane.b32.xlu0 %v552, 34
    %v778 = vpop.permute.xlu0 %777
    %779 = vrot.lane.b32.xlu0 %v549, 34
    %v780 = vpop.permute.xlu0 %779
    %781 = vrot.lane.b32.xlu0 %v553, 34
    %v782 = vpop.permute.xlu0 %781
    %783 = vrot.lane.b32.xlu0 %v550, 34
    %v784 = vpop.permute.xlu0 %783
    %785 = vrot.lane.b32.xlu0 %v554, 34
    %v786 = vpop.permute.xlu0 %785
    %787 = vrot.lane.b32.xlu0 %v551, 34
    %v788 = vpop.permute.xlu0 %787
    %789 = vrot.lane.b32.xlu0 %v555, 34
    %v790 = vpop.permute.xlu0 %789
    %vm791 = vcmp.lt.s32.totalorder %v109, 34
    %v792 = vsel %vm791, %v784, %v788
    %v793 = vsel %vm791, %v786, %v790
    %v794 = vsel %vm791, %v780, %v784
    %v795 = vsel %vm791, %v782, %v786
    %v796 = vsel %vm791, %v776, %v780
    %v797 = vsel %vm791, %v778, %v782
    %v798 = vsel %vm791, %v788, %v776
    %v799 = vsel %vm791, %v790, %v778
    %vm800 = vcmp.ge.s32.totalorder %v113, 32
    %vm801 = vcmp.ge.s32.totalorder %v114, 32
    %vm802 = vcmp.ge.s32.totalorder %v115, 32
    %vm803 = vcmp.ge.s32.totalorder %v116, 32
    %vm804 = vcmp.ge.s32.totalorder %v117, 2
    %vm805 = vcmp.ge.s32.totalorder %v118, 2
    %vm806 = vcmp.ge.s32.totalorder %v119, 2
    %vm807 = vcmp.ge.s32.totalorder %v120, 2
    %vm808 = vmand %vm800, %vm804
    %vm809 = vmand %vm801, %vm805
    %vm810 = vmand %vm802, %vm806
    %vm811 = vmand %vm803, %vm807
    %v812 = vsel %vm808, 1, 0
    %v813 = vsel %vm809, 1, 0
    %v814 = vsel %vm810, 1, 0
    %v815 = vsel %vm811, 1, 0
    %v816 = vcvt.s32.f32 %v812
    %v817 = vcvt.s32.f32 %v813
    %v818 = vcvt.s32.f32 %v814
    %v819 = vcvt.s32.f32 %v815
    %v820 = vmul.f32 %v798, %v816
    %v821 = vmul.f32 %v796, %v817
    %v822 = vmul.f32 %v794, %v818
    %v823 = vmul.f32 %v792, %v819
    %v824 = vmul.f32 %v799, %v816
    %v825 = vmul.f32 %v797, %v817
    %v826 = vmul.f32 %v795, %v818
    %v827 = vmul.f32 %v793, %v819
    %829 = vset.pattern.permute.xlu0 0
    %830 = vperm.xlu0 %829, %v104
    %v831 = vpop.permute.xlu0 %830
    %834 = vset.pattern.permute.xlu0 0
    %835 = vperm.xlu0 %834, %v105
    %v836 = vpop.permute.xlu0 %835
    %v838 = vmul.f32 %v820, %v831
    %v839 = vmul.f32 %v821, %v831
    %v840 = vmul.f32 %v822, %v831
    %v841 = vmul.f32 %v823, %v831
    %v842 = vmul.f32 %v824, %v836
    %v843 = vmul.f32 %v825, %v836
    %v844 = vmul.f32 %v826, %v836
    %v845 = vmul.f32 %v827, %v836
    %846 = vrot.lane.b32.xlu0 %v548, 33
    %v847 = vpop.permute.xlu0 %846
    %848 = vrot.lane.b32.xlu0 %v552, 33
    %v849 = vpop.permute.xlu0 %848
    %850 = vrot.lane.b32.xlu0 %v549, 33
    %v851 = vpop.permute.xlu0 %850
    %852 = vrot.lane.b32.xlu0 %v553, 33
    %v853 = vpop.permute.xlu0 %852
    %854 = vrot.lane.b32.xlu0 %v550, 33
    %v855 = vpop.permute.xlu0 %854
    %856 = vrot.lane.b32.xlu0 %v554, 33
    %v857 = vpop.permute.xlu0 %856
    %858 = vrot.lane.b32.xlu0 %v551, 33
    %v859 = vpop.permute.xlu0 %858
    %860 = vrot.lane.b32.xlu0 %v555, 33
    %v861 = vpop.permute.xlu0 %860
    %vm862 = vcmp.lt.s32.totalorder %v109, 33
    %v863 = vsel %vm862, %v855, %v859
    %v864 = vsel %vm862, %v857, %v861
    %v865 = vsel %vm862, %v851, %v855
    %v866 = vsel %vm862, %v853, %v857
    %v867 = vsel %vm862, %v847, %v851
    %v868 = vsel %vm862, %v849, %v853
    %v869 = vsel %vm862, %v859, %v847
    %v870 = vsel %vm862, %v861, %v849
    %vm871 = vcmp.ge.s32.totalorder %v117, 1
    %vm872 = vcmp.ge.s32.totalorder %v118, 1
    %vm873 = vcmp.ge.s32.totalorder %v119, 1
    %vm874 = vcmp.ge.s32.totalorder %v120, 1
    %vm875 = vmand %vm800, %vm871
    %vm876 = vmand %vm801, %vm872
    %vm877 = vmand %vm802, %vm873
    %vm878 = vmand %vm803, %vm874
    %v879 = vsel %vm875, 1, 0
    %v880 = vsel %vm876, 1, 0
    %v881 = vsel %vm877, 1, 0
    %v882 = vsel %vm878, 1, 0
    %v883 = vcvt.s32.f32 %v879
    %v884 = vcvt.s32.f32 %v880
    %v885 = vcvt.s32.f32 %v881
    %v886 = vcvt.s32.f32 %v882
    %v887 = vmul.f32 %v869, %v883
    %v888 = vmul.f32 %v867, %v884
    %v889 = vmul.f32 %v865, %v885
    %v890 = vmul.f32 %v863, %v886
    %v891 = vmul.f32 %v870, %v883
    %v892 = vmul.f32 %v868, %v884
    %v893 = vmul.f32 %v866, %v885
    %v894 = vmul.f32 %v864, %v886
    %895 = vset.pattern.permute.xlu0 1
    %896 = vperm.xlu0 %895, %v104
    %v897 = vpop.permute.xlu0 %896
    %899 = vset.pattern.permute.xlu0 1
    %900 = vperm.xlu0 %899, %v105
    %v901 = vpop.permute.xlu0 %900
    %v903 = vmul.f32 %v887, %v897
    %v904 = vmul.f32 %v888, %v897
    %v905 = vmul.f32 %v889, %v897
    %v906 = vmul.f32 %v890, %v897
    %v907 = vmul.f32 %v891, %v901
    %v908 = vmul.f32 %v892, %v901
    %v909 = vmul.f32 %v893, %v901
    %v910 = vmul.f32 %v894, %v901
    %v911 = vadd.f32 %v838, %v903
    %v912 = vadd.f32 %v839, %v904
    %v913 = vadd.f32 %v840, %v905
    %v914 = vadd.f32 %v841, %v906
    %v915 = vadd.f32 %v842, %v907
    %v916 = vadd.f32 %v843, %v908
    %v917 = vadd.f32 %v844, %v909
    %v918 = vadd.f32 %v845, %v910
    %919 = vrot.lane.b32.xlu0 %v548, 32
    %v920 = vpop.permute.xlu0 %919
    %921 = vrot.lane.b32.xlu0 %v552, 32
    %v922 = vpop.permute.xlu0 %921
    %923 = vrot.lane.b32.xlu0 %v549, 32
    %v924 = vpop.permute.xlu0 %923
    %925 = vrot.lane.b32.xlu0 %v553, 32
    %v926 = vpop.permute.xlu0 %925
    %927 = vrot.lane.b32.xlu0 %v550, 32
    %v928 = vpop.permute.xlu0 %927
    %929 = vrot.lane.b32.xlu0 %v554, 32
    %v930 = vpop.permute.xlu0 %929
    %931 = vrot.lane.b32.xlu0 %v551, 32
    %v932 = vpop.permute.xlu0 %931
    %933 = vrot.lane.b32.xlu0 %v555, 32
    %v934 = vpop.permute.xlu0 %933
    %vm935 = vcmp.lt.s32.totalorder %v109, 32
    %v936 = vsel %vm935, %v928, %v932
    %v937 = vsel %vm935, %v930, %v934
    %v938 = vsel %vm935, %v924, %v928
    %v939 = vsel %vm935, %v926, %v930
    %v940 = vsel %vm935, %v920, %v924
    %v941 = vsel %vm935, %v922, %v926
    %v942 = vsel %vm935, %v932, %v920
    %v943 = vsel %vm935, %v934, %v922
    %v944 = vsel %vm800, 1, 0
    %v945 = vsel %vm801, 1, 0
    %v946 = vsel %vm802, 1, 0
    %v947 = vsel %vm803, 1, 0
    %v948 = vcvt.s32.f32 %v944
    %v949 = vcvt.s32.f32 %v945
    %v950 = vcvt.s32.f32 %v946
    %v951 = vcvt.s32.f32 %v947
    %v952 = vmul.f32 %v942, %v948
    %v953 = vmul.f32 %v940, %v949
    %v954 = vmul.f32 %v938, %v950
    %v955 = vmul.f32 %v936, %v951
    %v956 = vmul.f32 %v943, %v948
    %v957 = vmul.f32 %v941, %v949
    %v958 = vmul.f32 %v939, %v950
    %v959 = vmul.f32 %v937, %v951
    %960 = vset.pattern.permute.xlu0 2
    %961 = vperm.xlu0 %960, %v104
    %v962 = vpop.permute.xlu0 %961
    %964 = vset.pattern.permute.xlu0 2
    %965 = vperm.xlu0 %964, %v105
    %v966 = vpop.permute.xlu0 %965
    %v968 = vmul.f32 %v952, %v962
    %v969 = vmul.f32 %v953, %v962
    %v970 = vmul.f32 %v954, %v962
    %v971 = vmul.f32 %v955, %v962
    %v972 = vmul.f32 %v956, %v966
    %v973 = vmul.f32 %v957, %v966
    %v974 = vmul.f32 %v958, %v966
    %v975 = vmul.f32 %v959, %v966
    %v976 = vadd.f32 %v911, %v968
    %v977 = vadd.f32 %v912, %v969
    %v978 = vadd.f32 %v913, %v970
    %v979 = vadd.f32 %v914, %v971
    %v980 = vadd.f32 %v915, %v972
    %v981 = vadd.f32 %v916, %v973
    %v982 = vadd.f32 %v917, %v974
    %v983 = vadd.f32 %v918, %v975
    %984 = vrot.lane.b32.xlu0 %v548, 31
    %v985 = vpop.permute.xlu0 %984
    %986 = vrot.lane.b32.xlu0 %v552, 31
    %v987 = vpop.permute.xlu0 %986
    %988 = vrot.lane.b32.xlu0 %v549, 31
    %v989 = vpop.permute.xlu0 %988
    %990 = vrot.lane.b32.xlu0 %v553, 31
    %v991 = vpop.permute.xlu0 %990
    %992 = vrot.lane.b32.xlu0 %v550, 31
    %v993 = vpop.permute.xlu0 %992
    %994 = vrot.lane.b32.xlu0 %v554, 31
    %v995 = vpop.permute.xlu0 %994
    %996 = vrot.lane.b32.xlu0 %v551, 31
    %v997 = vpop.permute.xlu0 %996
    %998 = vrot.lane.b32.xlu0 %v555, 31
    %v999 = vpop.permute.xlu0 %998
    %vm1000 = vcmp.lt.s32.totalorder %v109, 31
    %v1001 = vsel %vm1000, %v993, %v997
    %v1002 = vsel %vm1000, %v995, %v999
    %v1003 = vsel %vm1000, %v989, %v993
    %v1004 = vsel %vm1000, %v991, %v995
    %v1005 = vsel %vm1000, %v985, %v989
    %v1006 = vsel %vm1000, %v987, %v991
    %v1007 = vsel %vm1000, %v997, %v985
    %v1008 = vsel %vm1000, %v999, %v987
    %vm1009 = vcmp.lt.s32.totalorder %v117, 15
    %vm1010 = vcmp.lt.s32.totalorder %v118, 15
    %vm1011 = vcmp.lt.s32.totalorder %v119, 15
    %vm1012 = vcmp.lt.s32.totalorder %v120, 15
    %vm1013 = vmand %vm800, %vm1009
    %vm1014 = vmand %vm801, %vm1010
    %vm1015 = vmand %vm802, %vm1011
    %vm1016 = vmand %vm803, %vm1012
    %v1017 = vsel %vm1013, 1, 0
    %v1018 = vsel %vm1014, 1, 0
    %v1019 = vsel %vm1015, 1, 0
    %v1020 = vsel %vm1016, 1, 0
    %v1021 = vcvt.s32.f32 %v1017
    %v1022 = vcvt.s32.f32 %v1018
    %v1023 = vcvt.s32.f32 %v1019
    %v1024 = vcvt.s32.f32 %v1020
    %v1025 = vmul.f32 %v1007, %v1021
    %v1026 = vmul.f32 %v1005, %v1022
    %v1027 = vmul.f32 %v1003, %v1023
    %v1028 = vmul.f32 %v1001, %v1024
    %v1029 = vmul.f32 %v1008, %v1021
    %v1030 = vmul.f32 %v1006, %v1022
    %v1031 = vmul.f32 %v1004, %v1023
    %v1032 = vmul.f32 %v1002, %v1024
    %1033 = vset.pattern.permute.xlu0 3
    %1034 = vperm.xlu0 %1033, %v104
    %v1035 = vpop.permute.xlu0 %1034
    %1037 = vset.pattern.permute.xlu0 3
    %1038 = vperm.xlu0 %1037, %v105
    %v1039 = vpop.permute.xlu0 %1038
    %v1041 = vmul.f32 %v1025, %v1035
    %v1042 = vmul.f32 %v1026, %v1035
    %v1043 = vmul.f32 %v1027, %v1035
    %v1044 = vmul.f32 %v1028, %v1035
    %v1045 = vmul.f32 %v1029, %v1039
    %v1046 = vmul.f32 %v1030, %v1039
    %v1047 = vmul.f32 %v1031, %v1039
    %v1048 = vmul.f32 %v1032, %v1039
    %v1049 = vadd.f32 %v976, %v1041
    %v1050 = vadd.f32 %v977, %v1042
    %v1051 = vadd.f32 %v978, %v1043
    %v1052 = vadd.f32 %v979, %v1044
    %v1053 = vadd.f32 %v980, %v1045
    %v1054 = vadd.f32 %v981, %v1046
    %v1055 = vadd.f32 %v982, %v1047
    %v1056 = vadd.f32 %v983, %v1048
    %1057 = vrot.lane.b32.xlu0 %v548, 30
    %v1058 = vpop.permute.xlu0 %1057
    %1059 = vrot.lane.b32.xlu0 %v552, 30
    %v1060 = vpop.permute.xlu0 %1059
    %1061 = vrot.lane.b32.xlu0 %v549, 30
    %v1062 = vpop.permute.xlu0 %1061
    %1063 = vrot.lane.b32.xlu0 %v553, 30
    %v1064 = vpop.permute.xlu0 %1063
    %1065 = vrot.lane.b32.xlu0 %v550, 30
    %v1066 = vpop.permute.xlu0 %1065
    %1067 = vrot.lane.b32.xlu0 %v554, 30
    %v1068 = vpop.permute.xlu0 %1067
    %1069 = vrot.lane.b32.xlu0 %v551, 30
    %v1070 = vpop.permute.xlu0 %1069
    %1071 = vrot.lane.b32.xlu0 %v555, 30
    %v1072 = vpop.permute.xlu0 %1071
    %vm1073 = vcmp.lt.s32.totalorder %v109, 30
    %v1074 = vsel %vm1073, %v1066, %v1070
    %v1075 = vsel %vm1073, %v1068, %v1072
    %v1076 = vsel %vm1073, %v1062, %v1066
    %v1077 = vsel %vm1073, %v1064, %v1068
    %v1078 = vsel %vm1073, %v1058, %v1062
    %v1079 = vsel %vm1073, %v1060, %v1064
    %v1080 = vsel %vm1073, %v1070, %v1058
    %v1081 = vsel %vm1073, %v1072, %v1060
    %vm1082 = vcmp.lt.s32.totalorder %v117, 14
    %vm1083 = vcmp.lt.s32.totalorder %v118, 14
    %vm1084 = vcmp.lt.s32.totalorder %v119, 14
    %vm1085 = vcmp.lt.s32.totalorder %v120, 14
    %vm1086 = vmand %vm800, %vm1082
    %vm1087 = vmand %vm801, %vm1083
    %vm1088 = vmand %vm802, %vm1084
    %vm1089 = vmand %vm803, %vm1085
    %v1090 = vsel %vm1086, 1, 0
    %v1091 = vsel %vm1087, 1, 0
    %v1092 = vsel %vm1088, 1, 0
    %v1093 = vsel %vm1089, 1, 0
    %v1094 = vcvt.s32.f32 %v1090
    %v1095 = vcvt.s32.f32 %v1091
    %v1096 = vcvt.s32.f32 %v1092
    %v1097 = vcvt.s32.f32 %v1093
    %v1098 = vmul.f32 %v1080, %v1094
    %v1099 = vmul.f32 %v1078, %v1095
    %v1100 = vmul.f32 %v1076, %v1096
    %v1101 = vmul.f32 %v1074, %v1097
    %v1102 = vmul.f32 %v1081, %v1094
    %v1103 = vmul.f32 %v1079, %v1095
    %v1104 = vmul.f32 %v1077, %v1096
    %v1105 = vmul.f32 %v1075, %v1097
    %1106 = vset.pattern.permute.xlu0 4
    %1107 = vperm.xlu0 %1106, %v104
    %v1108 = vpop.permute.xlu0 %1107
    %1110 = vset.pattern.permute.xlu0 4
    %1111 = vperm.xlu0 %1110, %v105
    %v1112 = vpop.permute.xlu0 %1111
    %v1114 = vmul.f32 %v1098, %v1108
    %v1115 = vmul.f32 %v1099, %v1108
    %v1116 = vmul.f32 %v1100, %v1108
    %v1117 = vmul.f32 %v1101, %v1108
    %v1118 = vmul.f32 %v1102, %v1112
    %v1119 = vmul.f32 %v1103, %v1112
    %v1120 = vmul.f32 %v1104, %v1112
    %v1121 = vmul.f32 %v1105, %v1112
    %v1122 = vadd.f32 %v1049, %v1114
    %v1123 = vadd.f32 %v1050, %v1115
    %v1124 = vadd.f32 %v1051, %v1116
    %v1125 = vadd.f32 %v1052, %v1117
    %v1126 = vadd.f32 %v1053, %v1118
    %v1127 = vadd.f32 %v1054, %v1119
    %v1128 = vadd.f32 %v1055, %v1120
    %v1129 = vadd.f32 %v1056, %v1121
    %1130 = vrot.lane.b32.xlu0 %v548, 18
    %v1131 = vpop.permute.xlu0 %1130
    %1132 = vrot.lane.b32.xlu0 %v552, 18
    %v1133 = vpop.permute.xlu0 %1132
    %1134 = vrot.lane.b32.xlu0 %v549, 18
    %v1135 = vpop.permute.xlu0 %1134
    %1136 = vrot.lane.b32.xlu0 %v553, 18
    %v1137 = vpop.permute.xlu0 %1136
    %1138 = vrot.lane.b32.xlu0 %v550, 18
    %v1139 = vpop.permute.xlu0 %1138
    %1140 = vrot.lane.b32.xlu0 %v554, 18
    %v1141 = vpop.permute.xlu0 %1140
    %1142 = vrot.lane.b32.xlu0 %v551, 18
    %v1143 = vpop.permute.xlu0 %1142
    %1144 = vrot.lane.b32.xlu0 %v555, 18
    %v1145 = vpop.permute.xlu0 %1144
    %vm1146 = vcmp.lt.s32.totalorder %v109, 18
    %v1147 = vsel %vm1146, %v1139, %v1143
    %v1148 = vsel %vm1146, %v1141, %v1145
    %v1149 = vsel %vm1146, %v1135, %v1139
    %v1150 = vsel %vm1146, %v1137, %v1141
    %v1151 = vsel %vm1146, %v1131, %v1135
    %v1152 = vsel %vm1146, %v1133, %v1137
    %v1153 = vsel %vm1146, %v1143, %v1131
    %v1154 = vsel %vm1146, %v1145, %v1133
    %vm1155 = vcmp.ge.s32.totalorder %v113, 16
    %vm1156 = vcmp.ge.s32.totalorder %v114, 16
    %vm1157 = vcmp.ge.s32.totalorder %v115, 16
    %vm1158 = vcmp.ge.s32.totalorder %v116, 16
    %vm1159 = vmand %vm1155, %vm804
    %vm1160 = vmand %vm1156, %vm805
    %vm1161 = vmand %vm1157, %vm806
    %vm1162 = vmand %vm1158, %vm807
    %v1163 = vsel %vm1159, 1, 0
    %v1164 = vsel %vm1160, 1, 0
    %v1165 = vsel %vm1161, 1, 0
    %v1166 = vsel %vm1162, 1, 0
    %v1167 = vcvt.s32.f32 %v1163
    %v1168 = vcvt.s32.f32 %v1164
    %v1169 = vcvt.s32.f32 %v1165
    %v1170 = vcvt.s32.f32 %v1166
    %v1171 = vmul.f32 %v1153, %v1167
    %v1172 = vmul.f32 %v1151, %v1168
    %v1173 = vmul.f32 %v1149, %v1169
    %v1174 = vmul.f32 %v1147, %v1170
    %v1175 = vmul.f32 %v1154, %v1167
    %v1176 = vmul.f32 %v1152, %v1168
    %v1177 = vmul.f32 %v1150, %v1169
    %v1178 = vmul.f32 %v1148, %v1170
    %1179 = vset.pattern.permute.xlu0 5
    %1180 = vperm.xlu0 %1179, %v104
    %v1181 = vpop.permute.xlu0 %1180
    %1183 = vset.pattern.permute.xlu0 5
    %1184 = vperm.xlu0 %1183, %v105
    %v1185 = vpop.permute.xlu0 %1184
    %v1187 = vmul.f32 %v1171, %v1181
    %v1188 = vmul.f32 %v1172, %v1181
    %v1189 = vmul.f32 %v1173, %v1181
    %v1190 = vmul.f32 %v1174, %v1181
    %v1191 = vmul.f32 %v1175, %v1185
    %v1192 = vmul.f32 %v1176, %v1185
    %v1193 = vmul.f32 %v1177, %v1185
    %v1194 = vmul.f32 %v1178, %v1185
    %v1195 = vadd.f32 %v1122, %v1187
    %v1196 = vadd.f32 %v1123, %v1188
    %v1197 = vadd.f32 %v1124, %v1189
    %v1198 = vadd.f32 %v1125, %v1190
    %v1199 = vadd.f32 %v1126, %v1191
    %v1200 = vadd.f32 %v1127, %v1192
    %v1201 = vadd.f32 %v1128, %v1193
    %v1202 = vadd.f32 %v1129, %v1194
    %1203 = vrot.lane.b32.xlu0 %v548, 17
    %v1204 = vpop.permute.xlu0 %1203
    %1205 = vrot.lane.b32.xlu0 %v552, 17
    %v1206 = vpop.permute.xlu0 %1205
    %1207 = vrot.lane.b32.xlu0 %v549, 17
    %v1208 = vpop.permute.xlu0 %1207
    %1209 = vrot.lane.b32.xlu0 %v553, 17
    %v1210 = vpop.permute.xlu0 %1209
    %1211 = vrot.lane.b32.xlu0 %v550, 17
    %v1212 = vpop.permute.xlu0 %1211
    %1213 = vrot.lane.b32.xlu0 %v554, 17
    %v1214 = vpop.permute.xlu0 %1213
    %1215 = vrot.lane.b32.xlu0 %v551, 17
    %v1216 = vpop.permute.xlu0 %1215
    %1217 = vrot.lane.b32.xlu0 %v555, 17
    %v1218 = vpop.permute.xlu0 %1217
    %vm1219 = vcmp.lt.s32.totalorder %v109, 17
    %v1220 = vsel %vm1219, %v1212, %v1216
    %v1221 = vsel %vm1219, %v1214, %v1218
    %v1222 = vsel %vm1219, %v1208, %v1212
    %v1223 = vsel %vm1219, %v1210, %v1214
    %v1224 = vsel %vm1219, %v1204, %v1208
    %v1225 = vsel %vm1219, %v1206, %v1210
    %v1226 = vsel %vm1219, %v1216, %v1204
    %v1227 = vsel %vm1219, %v1218, %v1206
    %vm1228 = vmand %vm1155, %vm871
    %vm1229 = vmand %vm1156, %vm872
    %vm1230 = vmand %vm1157, %vm873
    %vm1231 = vmand %vm1158, %vm874
    %v1232 = vsel %vm1228, 1, 0
    %v1233 = vsel %vm1229, 1, 0
    %v1234 = vsel %vm1230, 1, 0
    %v1235 = vsel %vm1231, 1, 0
    %v1236 = vcvt.s32.f32 %v1232
    %v1237 = vcvt.s32.f32 %v1233
    %v1238 = vcvt.s32.f32 %v1234
    %v1239 = vcvt.s32.f32 %v1235
    %v1240 = vmul.f32 %v1226, %v1236
    %v1241 = vmul.f32 %v1224, %v1237
    %v1242 = vmul.f32 %v1222, %v1238
    %v1243 = vmul.f32 %v1220, %v1239
    %v1244 = vmul.f32 %v1227, %v1236
    %v1245 = vmul.f32 %v1225, %v1237
    %v1246 = vmul.f32 %v1223, %v1238
    %v1247 = vmul.f32 %v1221, %v1239
    %1248 = vset.pattern.permute.xlu0 6
    %1249 = vperm.xlu0 %1248, %v104
    %v1250 = vpop.permute.xlu0 %1249
    %1252 = vset.pattern.permute.xlu0 6
    %1253 = vperm.xlu0 %1252, %v105
    %v1254 = vpop.permute.xlu0 %1253
    %v1256 = vmul.f32 %v1240, %v1250
    %v1257 = vmul.f32 %v1241, %v1250
    %v1258 = vmul.f32 %v1242, %v1250
    %v1259 = vmul.f32 %v1243, %v1250
    %v1260 = vmul.f32 %v1244, %v1254
    %v1261 = vmul.f32 %v1245, %v1254
    %v1262 = vmul.f32 %v1246, %v1254
    %v1263 = vmul.f32 %v1247, %v1254
    %v1264 = vadd.f32 %v1195, %v1256
    %v1265 = vadd.f32 %v1196, %v1257
    %v1266 = vadd.f32 %v1197, %v1258
    %v1267 = vadd.f32 %v1198, %v1259
    %v1268 = vadd.f32 %v1199, %v1260
    %v1269 = vadd.f32 %v1200, %v1261
    %v1270 = vadd.f32 %v1201, %v1262
    %v1271 = vadd.f32 %v1202, %v1263
    %1272 = vrot.lane.b32.xlu0 %v548, 16
    %v1273 = vpop.permute.xlu0 %1272
    %1274 = vrot.lane.b32.xlu0 %v552, 16
    %v1275 = vpop.permute.xlu0 %1274
    %1276 = vrot.lane.b32.xlu0 %v549, 16
    %v1277 = vpop.permute.xlu0 %1276
    %1278 = vrot.lane.b32.xlu0 %v553, 16
    %v1279 = vpop.permute.xlu0 %1278
    %1280 = vrot.lane.b32.xlu0 %v550, 16
    %v1281 = vpop.permute.xlu0 %1280
    %1282 = vrot.lane.b32.xlu0 %v554, 16
    %v1283 = vpop.permute.xlu0 %1282
    %1284 = vrot.lane.b32.xlu0 %v551, 16
    %v1285 = vpop.permute.xlu0 %1284
    %1286 = vrot.lane.b32.xlu0 %v555, 16
    %v1287 = vpop.permute.xlu0 %1286
    %vm1288 = vcmp.lt.s32.totalorder %v109, 16
    %v1289 = vsel %vm1288, %v1281, %v1285
    %v1290 = vsel %vm1288, %v1283, %v1287
    %v1291 = vsel %vm1288, %v1277, %v1281
    %v1292 = vsel %vm1288, %v1279, %v1283
    %v1293 = vsel %vm1288, %v1273, %v1277
    %v1294 = vsel %vm1288, %v1275, %v1279
    %v1295 = vsel %vm1288, %v1285, %v1273
    %v1296 = vsel %vm1288, %v1287, %v1275
    %v1297 = vsel %vm1155, 1, 0
    %v1298 = vsel %vm1156, 1, 0
    %v1299 = vsel %vm1157, 1, 0
    %v1300 = vsel %vm1158, 1, 0
    %v1301 = vcvt.s32.f32 %v1297
    %v1302 = vcvt.s32.f32 %v1298
    %v1303 = vcvt.s32.f32 %v1299
    %v1304 = vcvt.s32.f32 %v1300
    %v1305 = vmul.f32 %v1295, %v1301
    %v1306 = vmul.f32 %v1293, %v1302
    %v1307 = vmul.f32 %v1291, %v1303
    %v1308 = vmul.f32 %v1289, %v1304
    %v1309 = vmul.f32 %v1296, %v1301
    %v1310 = vmul.f32 %v1294, %v1302
    %v1311 = vmul.f32 %v1292, %v1303
    %v1312 = vmul.f32 %v1290, %v1304
    %1313 = vset.pattern.permute.xlu0 7
    %1314 = vperm.xlu0 %1313, %v104
    %v1315 = vpop.permute.xlu0 %1314
    %1317 = vset.pattern.permute.xlu0 7
    %1318 = vperm.xlu0 %1317, %v105
    %v1319 = vpop.permute.xlu0 %1318
    %v1321 = vmul.f32 %v1305, %v1315
    %v1322 = vmul.f32 %v1306, %v1315
    %v1323 = vmul.f32 %v1307, %v1315
    %v1324 = vmul.f32 %v1308, %v1315
    %v1325 = vmul.f32 %v1309, %v1319
    %v1326 = vmul.f32 %v1310, %v1319
    %v1327 = vmul.f32 %v1311, %v1319
    %v1328 = vmul.f32 %v1312, %v1319
    %v1329 = vadd.f32 %v1264, %v1321
    %v1330 = vadd.f32 %v1265, %v1322
    %v1331 = vadd.f32 %v1266, %v1323
    %v1332 = vadd.f32 %v1267, %v1324
    %v1333 = vadd.f32 %v1268, %v1325
    %v1334 = vadd.f32 %v1269, %v1326
    %v1335 = vadd.f32 %v1270, %v1327
    %v1336 = vadd.f32 %v1271, %v1328
    %1337 = vrot.lane.b32.xlu0 %v548, 15
    %v1338 = vpop.permute.xlu0 %1337
    %1339 = vrot.lane.b32.xlu0 %v552, 15
    %v1340 = vpop.permute.xlu0 %1339
    %1341 = vrot.lane.b32.xlu0 %v549, 15
    %v1342 = vpop.permute.xlu0 %1341
    %1343 = vrot.lane.b32.xlu0 %v553, 15
    %v1344 = vpop.permute.xlu0 %1343
    %1345 = vrot.lane.b32.xlu0 %v550, 15
    %v1346 = vpop.permute.xlu0 %1345
    %1347 = vrot.lane.b32.xlu0 %v554, 15
    %v1348 = vpop.permute.xlu0 %1347
    %1349 = vrot.lane.b32.xlu0 %v551, 15
    %v1350 = vpop.permute.xlu0 %1349
    %1351 = vrot.lane.b32.xlu0 %v555, 15
    %v1352 = vpop.permute.xlu0 %1351
    %vm1353 = vcmp.lt.s32.totalorder %v109, 15
    %v1354 = vsel %vm1353, %v1346, %v1350
    %v1355 = vsel %vm1353, %v1348, %v1352
    %v1356 = vsel %vm1353, %v1342, %v1346
    %v1357 = vsel %vm1353, %v1344, %v1348
    %v1358 = vsel %vm1353, %v1338, %v1342
    %v1359 = vsel %vm1353, %v1340, %v1344
    %v1360 = vsel %vm1353, %v1350, %v1338
    %v1361 = vsel %vm1353, %v1352, %v1340
    %vm1362 = vmand %vm1155, %vm1009
    %vm1363 = vmand %vm1156, %vm1010
    %vm1364 = vmand %vm1157, %vm1011
    %vm1365 = vmand %vm1158, %vm1012
    %v1366 = vsel %vm1362, 1, 0
    %v1367 = vsel %vm1363, 1, 0
    %v1368 = vsel %vm1364, 1, 0
    %v1369 = vsel %vm1365, 1, 0
    %v1370 = vcvt.s32.f32 %v1366
    %v1371 = vcvt.s32.f32 %v1367
    %v1372 = vcvt.s32.f32 %v1368
    %v1373 = vcvt.s32.f32 %v1369
    %v1374 = vmul.f32 %v1360, %v1370
    %v1375 = vmul.f32 %v1358, %v1371
    %v1376 = vmul.f32 %v1356, %v1372
    %v1377 = vmul.f32 %v1354, %v1373
    %v1378 = vmul.f32 %v1361, %v1370
    %v1379 = vmul.f32 %v1359, %v1371
    %v1380 = vmul.f32 %v1357, %v1372
    %v1381 = vmul.f32 %v1355, %v1373
    %1382 = vset.pattern.permute.xlu0 8
    %1383 = vperm.xlu0 %1382, %v104
    %v1384 = vpop.permute.xlu0 %1383
    %1386 = vset.pattern.permute.xlu0 8
    %1387 = vperm.xlu0 %1386, %v105
    %v1388 = vpop.permute.xlu0 %1387
    %v1390 = vmul.f32 %v1374, %v1384
    %v1391 = vmul.f32 %v1375, %v1384
    %v1392 = vmul.f32 %v1376, %v1384
    %v1393 = vmul.f32 %v1377, %v1384
    %v1394 = vmul.f32 %v1378, %v1388
    %v1395 = vmul.f32 %v1379, %v1388
    %v1396 = vmul.f32 %v1380, %v1388
    %v1397 = vmul.f32 %v1381, %v1388
    %v1398 = vadd.f32 %v1329, %v1390
    %v1399 = vadd.f32 %v1330, %v1391
    %v1400 = vadd.f32 %v1331, %v1392
    %v1401 = vadd.f32 %v1332, %v1393
    %v1402 = vadd.f32 %v1333, %v1394
    %v1403 = vadd.f32 %v1334, %v1395
    %v1404 = vadd.f32 %v1335, %v1396
    %v1405 = vadd.f32 %v1336, %v1397
    %1406 = vrot.lane.b32.xlu0 %v548, 14
    %v1407 = vpop.permute.xlu0 %1406
    %1408 = vrot.lane.b32.xlu0 %v552, 14
    %v1409 = vpop.permute.xlu0 %1408
    %1410 = vrot.lane.b32.xlu0 %v549, 14
    %v1411 = vpop.permute.xlu0 %1410
    %1412 = vrot.lane.b32.xlu0 %v553, 14
    %v1413 = vpop.permute.xlu0 %1412
    %1414 = vrot.lane.b32.xlu0 %v550, 14
    %v1415 = vpop.permute.xlu0 %1414
    %1416 = vrot.lane.b32.xlu0 %v554, 14
    %v1417 = vpop.permute.xlu0 %1416
    %1418 = vrot.lane.b32.xlu0 %v551, 14
    %v1419 = vpop.permute.xlu0 %1418
    %1420 = vrot.lane.b32.xlu0 %v555, 14
    %v1421 = vpop.permute.xlu0 %1420
    %vm1422 = vcmp.lt.s32.totalorder %v109, 14
    %v1423 = vsel %vm1422, %v1415, %v1419
    %v1424 = vsel %vm1422, %v1417, %v1421
    %v1425 = vsel %vm1422, %v1411, %v1415
    %v1426 = vsel %vm1422, %v1413, %v1417
    %v1427 = vsel %vm1422, %v1407, %v1411
    %v1428 = vsel %vm1422, %v1409, %v1413
    %v1429 = vsel %vm1422, %v1419, %v1407
    %v1430 = vsel %vm1422, %v1421, %v1409
    %vm1431 = vmand %vm1155, %vm1082
    %vm1432 = vmand %vm1156, %vm1083
    %vm1433 = vmand %vm1157, %vm1084
    %vm1434 = vmand %vm1158, %vm1085
    %v1435 = vsel %vm1431, 1, 0
    %v1436 = vsel %vm1432, 1, 0
    %v1437 = vsel %vm1433, 1, 0
    %v1438 = vsel %vm1434, 1, 0
    %v1439 = vcvt.s32.f32 %v1435
    %v1440 = vcvt.s32.f32 %v1436
    %v1441 = vcvt.s32.f32 %v1437
    %v1442 = vcvt.s32.f32 %v1438
    %v1443 = vmul.f32 %v1429, %v1439
    %v1444 = vmul.f32 %v1427, %v1440
    %v1445 = vmul.f32 %v1425, %v1441
    %v1446 = vmul.f32 %v1423, %v1442
    %v1447 = vmul.f32 %v1430, %v1439
    %v1448 = vmul.f32 %v1428, %v1440
    %v1449 = vmul.f32 %v1426, %v1441
    %v1450 = vmul.f32 %v1424, %v1442
    %1451 = vset.pattern.permute.xlu0 9
    %1452 = vperm.xlu0 %1451, %v104
    %v1453 = vpop.permute.xlu0 %1452
    %1455 = vset.pattern.permute.xlu0 9
    %1456 = vperm.xlu0 %1455, %v105
    %v1457 = vpop.permute.xlu0 %1456
    %v1459 = vmul.f32 %v1443, %v1453
    %v1460 = vmul.f32 %v1444, %v1453
    %v1461 = vmul.f32 %v1445, %v1453
    %v1462 = vmul.f32 %v1446, %v1453
    %v1463 = vmul.f32 %v1447, %v1457
    %v1464 = vmul.f32 %v1448, %v1457
    %v1465 = vmul.f32 %v1449, %v1457
    %v1466 = vmul.f32 %v1450, %v1457
    %v1467 = vadd.f32 %v1398, %v1459
    %v1468 = vadd.f32 %v1399, %v1460
    %v1469 = vadd.f32 %v1400, %v1461
    %v1470 = vadd.f32 %v1401, %v1462
    %v1471 = vadd.f32 %v1402, %v1463
    %v1472 = vadd.f32 %v1403, %v1464
    %v1473 = vadd.f32 %v1404, %v1465
    %v1474 = vadd.f32 %v1405, %v1466
    %1475 = vrot.lane.b32.xlu0 %v548, 2
    %v1476 = vpop.permute.xlu0 %1475
    %1477 = vrot.lane.b32.xlu0 %v552, 2
    %v1478 = vpop.permute.xlu0 %1477
    %1479 = vrot.lane.b32.xlu0 %v549, 2
    %v1480 = vpop.permute.xlu0 %1479
    %1481 = vrot.lane.b32.xlu0 %v553, 2
    %v1482 = vpop.permute.xlu0 %1481
    %1483 = vrot.lane.b32.xlu0 %v550, 2
    %v1484 = vpop.permute.xlu0 %1483
    %1485 = vrot.lane.b32.xlu0 %v554, 2
    %v1486 = vpop.permute.xlu0 %1485
    %1487 = vrot.lane.b32.xlu0 %v551, 2
    %v1488 = vpop.permute.xlu0 %1487
    %1489 = vrot.lane.b32.xlu0 %v555, 2
    %v1490 = vpop.permute.xlu0 %1489
    %vm1491 = vcmp.lt.s32.totalorder %v109, 2
    %v1492 = vsel %vm1491, %v1484, %v1488
    %v1493 = vsel %vm1491, %v1486, %v1490
    %v1494 = vsel %vm1491, %v1480, %v1484
    %v1495 = vsel %vm1491, %v1482, %v1486
    %v1496 = vsel %vm1491, %v1476, %v1480
    %v1497 = vsel %vm1491, %v1478, %v1482
    %v1498 = vsel %vm1491, %v1488, %v1476
    %v1499 = vsel %vm1491, %v1490, %v1478
    %v1500 = vsel %vm804, 1, 0
    %v1501 = vsel %vm805, 1, 0
    %v1502 = vsel %vm806, 1, 0
    %v1503 = vsel %vm807, 1, 0
    %v1504 = vcvt.s32.f32 %v1500
    %v1505 = vcvt.s32.f32 %v1501
    %v1506 = vcvt.s32.f32 %v1502
    %v1507 = vcvt.s32.f32 %v1503
    %v1508 = vmul.f32 %v1498, %v1504
    %v1509 = vmul.f32 %v1496, %v1505
    %v1510 = vmul.f32 %v1494, %v1506
    %v1511 = vmul.f32 %v1492, %v1507
    %v1512 = vmul.f32 %v1499, %v1504
    %v1513 = vmul.f32 %v1497, %v1505
    %v1514 = vmul.f32 %v1495, %v1506
    %v1515 = vmul.f32 %v1493, %v1507
    %1516 = vset.pattern.permute.xlu0 10
    %1517 = vperm.xlu0 %1516, %v104
    %v1518 = vpop.permute.xlu0 %1517
    %1520 = vset.pattern.permute.xlu0 10
    %1521 = vperm.xlu0 %1520, %v105
    %v1522 = vpop.permute.xlu0 %1521
    %v1524 = vmul.f32 %v1508, %v1518
    %v1525 = vmul.f32 %v1509, %v1518
    %v1526 = vmul.f32 %v1510, %v1518
    %v1527 = vmul.f32 %v1511, %v1518
    %v1528 = vmul.f32 %v1512, %v1522
    %v1529 = vmul.f32 %v1513, %v1522
    %v1530 = vmul.f32 %v1514, %v1522
    %v1531 = vmul.f32 %v1515, %v1522
    %v1532 = vadd.f32 %v1467, %v1524
    %v1533 = vadd.f32 %v1468, %v1525
    %v1534 = vadd.f32 %v1469, %v1526
    %v1535 = vadd.f32 %v1470, %v1527
    %v1536 = vadd.f32 %v1471, %v1528
    %v1537 = vadd.f32 %v1472, %v1529
    %v1538 = vadd.f32 %v1473, %v1530
    %v1539 = vadd.f32 %v1474, %v1531
    %1540 = vrot.lane.b32.xlu0 %v548, 1
    %v1541 = vpop.permute.xlu0 %1540
    %1542 = vrot.lane.b32.xlu0 %v552, 1
    %v1543 = vpop.permute.xlu0 %1542
    %1544 = vrot.lane.b32.xlu0 %v549, 1
    %v1545 = vpop.permute.xlu0 %1544
    %1546 = vrot.lane.b32.xlu0 %v553, 1
    %v1547 = vpop.permute.xlu0 %1546
    %1548 = vrot.lane.b32.xlu0 %v550, 1
    %v1549 = vpop.permute.xlu0 %1548
    %1550 = vrot.lane.b32.xlu0 %v554, 1
    %v1551 = vpop.permute.xlu0 %1550
    %1552 = vrot.lane.b32.xlu0 %v551, 1
    %v1553 = vpop.permute.xlu0 %1552
    %1554 = vrot.lane.b32.xlu0 %v555, 1
    %v1555 = vpop.permute.xlu0 %1554
    %vm1556 = vcmp.lt.s32.totalorder %v109, 1
    %v1557 = vsel %vm1556, %v1549, %v1553
    %v1558 = vsel %vm1556, %v1551, %v1555
    %v1559 = vsel %vm1556, %v1545, %v1549
    %v1560 = vsel %vm1556, %v1547, %v1551
    %v1561 = vsel %vm1556, %v1541, %v1545
    %v1562 = vsel %vm1556, %v1543, %v1547
    %v1563 = vsel %vm1556, %v1553, %v1541
    %v1564 = vsel %vm1556, %v1555, %v1543
    %v1565 = vsel %vm871, 1, 0
    %v1566 = vsel %vm872, 1, 0
    %v1567 = vsel %vm873, 1, 0
    %v1568 = vsel %vm874, 1, 0
    %v1569 = vcvt.s32.f32 %v1565
    %v1570 = vcvt.s32.f32 %v1566
    %v1571 = vcvt.s32.f32 %v1567
    %v1572 = vcvt.s32.f32 %v1568
    %v1573 = vmul.f32 %v1563, %v1569
    %v1574 = vmul.f32 %v1561, %v1570
    %v1575 = vmul.f32 %v1559, %v1571
    %v1576 = vmul.f32 %v1557, %v1572
    %v1577 = vmul.f32 %v1564, %v1569
    %v1578 = vmul.f32 %v1562, %v1570
    %v1579 = vmul.f32 %v1560, %v1571
    %v1580 = vmul.f32 %v1558, %v1572
    %1581 = vset.pattern.permute.xlu0 11
    %1582 = vperm.xlu0 %1581, %v104
    %v1583 = vpop.permute.xlu0 %1582
    %1585 = vset.pattern.permute.xlu0 11
    %1586 = vperm.xlu0 %1585, %v105
    %v1587 = vpop.permute.xlu0 %1586
    %v1589 = vmul.f32 %v1573, %v1583
    %v1590 = vmul.f32 %v1574, %v1583
    %v1591 = vmul.f32 %v1575, %v1583
    %v1592 = vmul.f32 %v1576, %v1583
    %v1593 = vmul.f32 %v1577, %v1587
    %v1594 = vmul.f32 %v1578, %v1587
    %v1595 = vmul.f32 %v1579, %v1587
    %v1596 = vmul.f32 %v1580, %v1587
    %v1597 = vadd.f32 %v1532, %v1589
    %v1598 = vadd.f32 %v1533, %v1590
    %v1599 = vadd.f32 %v1534, %v1591
    %v1600 = vadd.f32 %v1535, %v1592
    %v1601 = vadd.f32 %v1536, %v1593
    %v1602 = vadd.f32 %v1537, %v1594
    %v1603 = vadd.f32 %v1538, %v1595
    %v1604 = vadd.f32 %v1539, %v1596
    %1605 = vset.pattern.permute.xlu0 12
    %1606 = vperm.xlu0 %1605, %v104
    %v1607 = vpop.permute.xlu0 %1606
    %1609 = vset.pattern.permute.xlu0 12
    %1610 = vperm.xlu0 %1609, %v105
    %v1611 = vpop.permute.xlu0 %1610
    %v1613 = vmul.f32 %v548, %v1607
    %v1614 = vmul.f32 %v549, %v1607
    %v1615 = vmul.f32 %v550, %v1607
    %v1616 = vmul.f32 %v551, %v1607
    %v1617 = vmul.f32 %v552, %v1611
    %v1618 = vmul.f32 %v553, %v1611
    %v1619 = vmul.f32 %v554, %v1611
    %v1620 = vmul.f32 %v555, %v1611
    %v1621 = vadd.f32 %v1597, %v1613
    %v1622 = vadd.f32 %v1598, %v1614
    %v1623 = vadd.f32 %v1599, %v1615
    %v1624 = vadd.f32 %v1600, %v1616
    %v1625 = vadd.f32 %v1601, %v1617
    %v1626 = vadd.f32 %v1602, %v1618
    %v1627 = vadd.f32 %v1603, %v1619
    %v1628 = vadd.f32 %v1604, %v1620
    %1629 = vrot.lane.b32.xlu0 %v548, 127
    %v1630 = vpop.permute.xlu0 %1629
    %1631 = vrot.lane.b32.xlu0 %v552, 127
    %v1632 = vpop.permute.xlu0 %1631
    %1633 = vrot.lane.b32.xlu0 %v549, 127
    %v1634 = vpop.permute.xlu0 %1633
    %1635 = vrot.lane.b32.xlu0 %v553, 127
    %v1636 = vpop.permute.xlu0 %1635
    %1637 = vrot.lane.b32.xlu0 %v550, 127
    %v1638 = vpop.permute.xlu0 %1637
    %1639 = vrot.lane.b32.xlu0 %v554, 127
    %v1640 = vpop.permute.xlu0 %1639
    %1641 = vrot.lane.b32.xlu0 %v551, 127
    %v1642 = vpop.permute.xlu0 %1641
    %1643 = vrot.lane.b32.xlu0 %v555, 127
    %v1644 = vpop.permute.xlu0 %1643
    %vm1645 = vcmp.lt.s32.totalorder %v109, 127
    %v1646 = vsel %vm1645, %v1638, %v1642
    %v1647 = vsel %vm1645, %v1640, %v1644
    %v1648 = vsel %vm1645, %v1634, %v1638
    %v1649 = vsel %vm1645, %v1636, %v1640
    %v1650 = vsel %vm1645, %v1630, %v1634
    %v1651 = vsel %vm1645, %v1632, %v1636
    %v1652 = vsel %vm1645, %v1642, %v1630
    %v1653 = vsel %vm1645, %v1644, %v1632
    %v1654 = vsel %vm1009, 1, 0
    %v1655 = vsel %vm1010, 1, 0
    %v1656 = vsel %vm1011, 1, 0
    %v1657 = vsel %vm1012, 1, 0
    %v1658 = vcvt.s32.f32 %v1654
    %v1659 = vcvt.s32.f32 %v1655
    %v1660 = vcvt.s32.f32 %v1656
    %v1661 = vcvt.s32.f32 %v1657
    %v1662 = vmul.f32 %v1650, %v1658
    %v1663 = vmul.f32 %v1648, %v1659
    %v1664 = vmul.f32 %v1646, %v1660
    %v1665 = vmul.f32 %v1652, %v1661
    %v1666 = vmul.f32 %v1651, %v1658
    %v1667 = vmul.f32 %v1649, %v1659
    %v1668 = vmul.f32 %v1647, %v1660
    %v1669 = vmul.f32 %v1653, %v1661
    %1670 = vset.pattern.permute.xlu0 13
    %1671 = vperm.xlu0 %1670, %v104
    %v1672 = vpop.permute.xlu0 %1671
    %1674 = vset.pattern.permute.xlu0 13
    %1675 = vperm.xlu0 %1674, %v105
    %v1676 = vpop.permute.xlu0 %1675
    %v1678 = vmul.f32 %v1662, %v1672
    %v1679 = vmul.f32 %v1663, %v1672
    %v1680 = vmul.f32 %v1664, %v1672
    %v1681 = vmul.f32 %v1665, %v1672
    %v1682 = vmul.f32 %v1666, %v1676
    %v1683 = vmul.f32 %v1667, %v1676
    %v1684 = vmul.f32 %v1668, %v1676
    %v1685 = vmul.f32 %v1669, %v1676
    %v1686 = vadd.f32 %v1621, %v1678
    %v1687 = vadd.f32 %v1622, %v1679
    %v1688 = vadd.f32 %v1623, %v1680
    %v1689 = vadd.f32 %v1624, %v1681
    %v1690 = vadd.f32 %v1625, %v1682
    %v1691 = vadd.f32 %v1626, %v1683
    %v1692 = vadd.f32 %v1627, %v1684
    %v1693 = vadd.f32 %v1628, %v1685
    %1694 = vrot.lane.b32.xlu0 %v548, 126
    %v1695 = vpop.permute.xlu0 %1694
    %1696 = vrot.lane.b32.xlu0 %v552, 126
    %v1697 = vpop.permute.xlu0 %1696
    %1698 = vrot.lane.b32.xlu0 %v549, 126
    %v1699 = vpop.permute.xlu0 %1698
    %1700 = vrot.lane.b32.xlu0 %v553, 126
    %v1701 = vpop.permute.xlu0 %1700
    %1702 = vrot.lane.b32.xlu0 %v550, 126
    %v1703 = vpop.permute.xlu0 %1702
    %1704 = vrot.lane.b32.xlu0 %v554, 126
    %v1705 = vpop.permute.xlu0 %1704
    %1706 = vrot.lane.b32.xlu0 %v551, 126
    %v1707 = vpop.permute.xlu0 %1706
    %1708 = vrot.lane.b32.xlu0 %v555, 126
    %v1709 = vpop.permute.xlu0 %1708
    %vm1710 = vcmp.lt.s32.totalorder %v109, 126
    %v1711 = vsel %vm1710, %v1703, %v1707
    %v1712 = vsel %vm1710, %v1705, %v1709
    %v1713 = vsel %vm1710, %v1699, %v1703
    %v1714 = vsel %vm1710, %v1701, %v1705
    %v1715 = vsel %vm1710, %v1695, %v1699
    %v1716 = vsel %vm1710, %v1697, %v1701
    %v1717 = vsel %vm1710, %v1707, %v1695
    %v1718 = vsel %vm1710, %v1709, %v1697
    %v1719 = vsel %vm1082, 1, 0
    %v1720 = vsel %vm1083, 1, 0
    %v1721 = vsel %vm1084, 1, 0
    %v1722 = vsel %vm1085, 1, 0
    %v1723 = vcvt.s32.f32 %v1719
    %v1724 = vcvt.s32.f32 %v1720
    %v1725 = vcvt.s32.f32 %v1721
    %v1726 = vcvt.s32.f32 %v1722
    %v1727 = vmul.f32 %v1715, %v1723
    %v1728 = vmul.f32 %v1713, %v1724
    %v1729 = vmul.f32 %v1711, %v1725
    %v1730 = vmul.f32 %v1717, %v1726
    %v1731 = vmul.f32 %v1716, %v1723
    %v1732 = vmul.f32 %v1714, %v1724
    %v1733 = vmul.f32 %v1712, %v1725
    %v1734 = vmul.f32 %v1718, %v1726
    %1735 = vset.pattern.permute.xlu0 14
    %1736 = vperm.xlu0 %1735, %v104
    %v1737 = vpop.permute.xlu0 %1736
    %1739 = vset.pattern.permute.xlu0 14
    %1740 = vperm.xlu0 %1739, %v105
    %v1741 = vpop.permute.xlu0 %1740
    %v1743 = vmul.f32 %v1727, %v1737
    %v1744 = vmul.f32 %v1728, %v1737
    %v1745 = vmul.f32 %v1729, %v1737
    %v1746 = vmul.f32 %v1730, %v1737
    %v1747 = vmul.f32 %v1731, %v1741
    %v1748 = vmul.f32 %v1732, %v1741
    %v1749 = vmul.f32 %v1733, %v1741
    %v1750 = vmul.f32 %v1734, %v1741
    %v1751 = vadd.f32 %v1686, %v1743
    %v1752 = vadd.f32 %v1687, %v1744
    %v1753 = vadd.f32 %v1688, %v1745
    %v1754 = vadd.f32 %v1689, %v1746
    %v1755 = vadd.f32 %v1690, %v1747
    %v1756 = vadd.f32 %v1691, %v1748
    %v1757 = vadd.f32 %v1692, %v1749
    %v1758 = vadd.f32 %v1693, %v1750
    %1759 = vrot.lane.b32.xlu0 %v548, 114
    %v1760 = vpop.permute.xlu0 %1759
    %1761 = vrot.lane.b32.xlu0 %v552, 114
    %v1762 = vpop.permute.xlu0 %1761
    %1763 = vrot.lane.b32.xlu0 %v549, 114
    %v1764 = vpop.permute.xlu0 %1763
    %1765 = vrot.lane.b32.xlu0 %v553, 114
    %v1766 = vpop.permute.xlu0 %1765
    %1767 = vrot.lane.b32.xlu0 %v550, 114
    %v1768 = vpop.permute.xlu0 %1767
    %1769 = vrot.lane.b32.xlu0 %v554, 114
    %v1770 = vpop.permute.xlu0 %1769
    %1771 = vrot.lane.b32.xlu0 %v551, 114
    %v1772 = vpop.permute.xlu0 %1771
    %1773 = vrot.lane.b32.xlu0 %v555, 114
    %v1774 = vpop.permute.xlu0 %1773
    %vm1775 = vcmp.lt.s32.totalorder %v109, 114
    %v1776 = vsel %vm1775, %v1768, %v1772
    %v1777 = vsel %vm1775, %v1770, %v1774
    %v1778 = vsel %vm1775, %v1764, %v1768
    %v1779 = vsel %vm1775, %v1766, %v1770
    %v1780 = vsel %vm1775, %v1760, %v1764
    %v1781 = vsel %vm1775, %v1762, %v1766
    %v1782 = vsel %vm1775, %v1772, %v1760
    %v1783 = vsel %vm1775, %v1774, %v1762
    %vm1784 = vcmp.lt.s32.totalorder %v113, 240
    %vm1785 = vcmp.lt.s32.totalorder %v114, 240
    %vm1786 = vcmp.lt.s32.totalorder %v115, 240
    %vm1787 = vcmp.lt.s32.totalorder %v116, 240
    %vm1788 = vmand %vm1784, %vm804
    %vm1789 = vmand %vm1785, %vm805
    %vm1790 = vmand %vm1786, %vm806
    %vm1791 = vmand %vm1787, %vm807
    %v1792 = vsel %vm1788, 1, 0
    %v1793 = vsel %vm1789, 1, 0
    %v1794 = vsel %vm1790, 1, 0
    %v1795 = vsel %vm1791, 1, 0
    %v1796 = vcvt.s32.f32 %v1792
    %v1797 = vcvt.s32.f32 %v1793
    %v1798 = vcvt.s32.f32 %v1794
    %v1799 = vcvt.s32.f32 %v1795
    %v1800 = vmul.f32 %v1780, %v1796
    %v1801 = vmul.f32 %v1778, %v1797
    %v1802 = vmul.f32 %v1776, %v1798
    %v1803 = vmul.f32 %v1782, %v1799
    %v1804 = vmul.f32 %v1781, %v1796
    %v1805 = vmul.f32 %v1779, %v1797
    %v1806 = vmul.f32 %v1777, %v1798
    %v1807 = vmul.f32 %v1783, %v1799
    %1808 = vset.pattern.permute.xlu0 15
    %1809 = vperm.xlu0 %1808, %v104
    %v1810 = vpop.permute.xlu0 %1809
    %1812 = vset.pattern.permute.xlu0 15
    %1813 = vperm.xlu0 %1812, %v105
    %v1814 = vpop.permute.xlu0 %1813
    %v1816 = vmul.f32 %v1800, %v1810
    %v1817 = vmul.f32 %v1801, %v1810
    %v1818 = vmul.f32 %v1802, %v1810
    %v1819 = vmul.f32 %v1803, %v1810
    %v1820 = vmul.f32 %v1804, %v1814
    %v1821 = vmul.f32 %v1805, %v1814
    %v1822 = vmul.f32 %v1806, %v1814
    %v1823 = vmul.f32 %v1807, %v1814
    %v1824 = vadd.f32 %v1751, %v1816
    %v1825 = vadd.f32 %v1752, %v1817
    %v1826 = vadd.f32 %v1753, %v1818
    %v1827 = vadd.f32 %v1754, %v1819
    %v1828 = vadd.f32 %v1755, %v1820
    %v1829 = vadd.f32 %v1756, %v1821
    %v1830 = vadd.f32 %v1757, %v1822
    %v1831 = vadd.f32 %v1758, %v1823
    %1832 = vrot.lane.b32.xlu0 %v548, 113
    %v1833 = vpop.permute.xlu0 %1832
    %1834 = vrot.lane.b32.xlu0 %v552, 113
    %v1835 = vpop.permute.xlu0 %1834
    %1836 = vrot.lane.b32.xlu0 %v549, 113
    %v1837 = vpop.permute.xlu0 %1836
    %1838 = vrot.lane.b32.xlu0 %v553, 113
    %v1839 = vpop.permute.xlu0 %1838
    %1840 = vrot.lane.b32.xlu0 %v550, 113
    %v1841 = vpop.permute.xlu0 %1840
    %1842 = vrot.lane.b32.xlu0 %v554, 113
    %v1843 = vpop.permute.xlu0 %1842
    %1844 = vrot.lane.b32.xlu0 %v551, 113
    %v1845 = vpop.permute.xlu0 %1844
    %1846 = vrot.lane.b32.xlu0 %v555, 113
    %v1847 = vpop.permute.xlu0 %1846
    %vm1848 = vcmp.lt.s32.totalorder %v109, 113
    %v1849 = vsel %vm1848, %v1841, %v1845
    %v1850 = vsel %vm1848, %v1843, %v1847
    %v1851 = vsel %vm1848, %v1837, %v1841
    %v1852 = vsel %vm1848, %v1839, %v1843
    %v1853 = vsel %vm1848, %v1833, %v1837
    %v1854 = vsel %vm1848, %v1835, %v1839
    %v1855 = vsel %vm1848, %v1845, %v1833
    %v1856 = vsel %vm1848, %v1847, %v1835
    %vm1857 = vmand %vm1784, %vm871
    %vm1858 = vmand %vm1785, %vm872
    %vm1859 = vmand %vm1786, %vm873
    %vm1860 = vmand %vm1787, %vm874
    %v1861 = vsel %vm1857, 1, 0
    %v1862 = vsel %vm1858, 1, 0
    %v1863 = vsel %vm1859, 1, 0
    %v1864 = vsel %vm1860, 1, 0
    %v1865 = vcvt.s32.f32 %v1861
    %v1866 = vcvt.s32.f32 %v1862
    %v1867 = vcvt.s32.f32 %v1863
    %v1868 = vcvt.s32.f32 %v1864
    %v1869 = vmul.f32 %v1853, %v1865
    %v1870 = vmul.f32 %v1851, %v1866
    %v1871 = vmul.f32 %v1849, %v1867
    %v1872 = vmul.f32 %v1855, %v1868
    %v1873 = vmul.f32 %v1854, %v1865
    %v1874 = vmul.f32 %v1852, %v1866
    %v1875 = vmul.f32 %v1850, %v1867
    %v1876 = vmul.f32 %v1856, %v1868
    %1877 = vset.pattern.permute.xlu0 16
    %1878 = vperm.xlu0 %1877, %v104
    %v1879 = vpop.permute.xlu0 %1878
    %1881 = vset.pattern.permute.xlu0 16
    %1882 = vperm.xlu0 %1881, %v105
    %v1883 = vpop.permute.xlu0 %1882
    %v1885 = vmul.f32 %v1869, %v1879
    %v1886 = vmul.f32 %v1870, %v1879
    %v1887 = vmul.f32 %v1871, %v1879
    %v1888 = vmul.f32 %v1872, %v1879
    %v1889 = vmul.f32 %v1873, %v1883
    %v1890 = vmul.f32 %v1874, %v1883
    %v1891 = vmul.f32 %v1875, %v1883
    %v1892 = vmul.f32 %v1876, %v1883
    %v1893 = vadd.f32 %v1824, %v1885
    %v1894 = vadd.f32 %v1825, %v1886
    %v1895 = vadd.f32 %v1826, %v1887
    %v1896 = vadd.f32 %v1827, %v1888
    %v1897 = vadd.f32 %v1828, %v1889
    %v1898 = vadd.f32 %v1829, %v1890
    %v1899 = vadd.f32 %v1830, %v1891
    %v1900 = vadd.f32 %v1831, %v1892
    %1901 = vrot.lane.b32.xlu0 %v548, 112
    %v1902 = vpop.permute.xlu0 %1901
    %1903 = vrot.lane.b32.xlu0 %v552, 112
    %v1904 = vpop.permute.xlu0 %1903
    %1905 = vrot.lane.b32.xlu0 %v549, 112
    %v1906 = vpop.permute.xlu0 %1905
    %1907 = vrot.lane.b32.xlu0 %v553, 112
    %v1908 = vpop.permute.xlu0 %1907
    %1909 = vrot.lane.b32.xlu0 %v550, 112
    %v1910 = vpop.permute.xlu0 %1909
    %1911 = vrot.lane.b32.xlu0 %v554, 112
    %v1912 = vpop.permute.xlu0 %1911
    %1913 = vrot.lane.b32.xlu0 %v551, 112
    %v1914 = vpop.permute.xlu0 %1913
    %1915 = vrot.lane.b32.xlu0 %v555, 112
    %v1916 = vpop.permute.xlu0 %1915
    %vm1917 = vcmp.lt.s32.totalorder %v109, 112
    %v1918 = vsel %vm1917, %v1910, %v1914
    %v1919 = vsel %vm1917, %v1912, %v1916
    %v1920 = vsel %vm1917, %v1906, %v1910
    %v1921 = vsel %vm1917, %v1908, %v1912
    %v1922 = vsel %vm1917, %v1902, %v1906
    %v1923 = vsel %vm1917, %v1904, %v1908
    %v1924 = vsel %vm1917, %v1914, %v1902
    %v1925 = vsel %vm1917, %v1916, %v1904
    %v1926 = vsel %vm1784, 1, 0
    %v1927 = vsel %vm1785, 1, 0
    %v1928 = vsel %vm1786, 1, 0
    %v1929 = vsel %vm1787, 1, 0
    %v1930 = vcvt.s32.f32 %v1926
    %v1931 = vcvt.s32.f32 %v1927
    %v1932 = vcvt.s32.f32 %v1928
    %v1933 = vcvt.s32.f32 %v1929
    %v1934 = vmul.f32 %v1922, %v1930
    %v1935 = vmul.f32 %v1920, %v1931
    %v1936 = vmul.f32 %v1918, %v1932
    %v1937 = vmul.f32 %v1924, %v1933
    %v1938 = vmul.f32 %v1923, %v1930
    %v1939 = vmul.f32 %v1921, %v1931
    %v1940 = vmul.f32 %v1919, %v1932
    %v1941 = vmul.f32 %v1925, %v1933
    %1942 = vset.pattern.permute.xlu0 17
    %1943 = vperm.xlu0 %1942, %v104
    %v1944 = vpop.permute.xlu0 %1943
    %1946 = vset.pattern.permute.xlu0 17
    %1947 = vperm.xlu0 %1946, %v105
    %v1948 = vpop.permute.xlu0 %1947
    %v1950 = vmul.f32 %v1934, %v1944
    %v1951 = vmul.f32 %v1935, %v1944
    %v1952 = vmul.f32 %v1936, %v1944
    %v1953 = vmul.f32 %v1937, %v1944
    %v1954 = vmul.f32 %v1938, %v1948
    %v1955 = vmul.f32 %v1939, %v1948
    %v1956 = vmul.f32 %v1940, %v1948
    %v1957 = vmul.f32 %v1941, %v1948
    %v1958 = vadd.f32 %v1893, %v1950
    %v1959 = vadd.f32 %v1894, %v1951
    %v1960 = vadd.f32 %v1895, %v1952
    %v1961 = vadd.f32 %v1896, %v1953
    %v1962 = vadd.f32 %v1897, %v1954
    %v1963 = vadd.f32 %v1898, %v1955
    %v1964 = vadd.f32 %v1899, %v1956
    %v1965 = vadd.f32 %v1900, %v1957
    %1966 = vrot.lane.b32.xlu0 %v548, 111
    %v1967 = vpop.permute.xlu0 %1966
    %1968 = vrot.lane.b32.xlu0 %v552, 111
    %v1969 = vpop.permute.xlu0 %1968
    %1970 = vrot.lane.b32.xlu0 %v549, 111
    %v1971 = vpop.permute.xlu0 %1970
    %1972 = vrot.lane.b32.xlu0 %v553, 111
    %v1973 = vpop.permute.xlu0 %1972
    %1974 = vrot.lane.b32.xlu0 %v550, 111
    %v1975 = vpop.permute.xlu0 %1974
    %1976 = vrot.lane.b32.xlu0 %v554, 111
    %v1977 = vpop.permute.xlu0 %1976
    %1978 = vrot.lane.b32.xlu0 %v551, 111
    %v1979 = vpop.permute.xlu0 %1978
    %1980 = vrot.lane.b32.xlu0 %v555, 111
    %v1981 = vpop.permute.xlu0 %1980
    %vm1982 = vcmp.lt.s32.totalorder %v109, 111
    %v1983 = vsel %vm1982, %v1975, %v1979
    %v1984 = vsel %vm1982, %v1977, %v1981
    %v1985 = vsel %vm1982, %v1971, %v1975
    %v1986 = vsel %vm1982, %v1973, %v1977
    %v1987 = vsel %vm1982, %v1967, %v1971
    %v1988 = vsel %vm1982, %v1969, %v1973
    %v1989 = vsel %vm1982, %v1979, %v1967
    %v1990 = vsel %vm1982, %v1981, %v1969
    %vm1991 = vmand %vm1784, %vm1009
    %vm1992 = vmand %vm1785, %vm1010
    %vm1993 = vmand %vm1786, %vm1011
    %vm1994 = vmand %vm1787, %vm1012
    %v1995 = vsel %vm1991, 1, 0
    %v1996 = vsel %vm1992, 1, 0
    %v1997 = vsel %vm1993, 1, 0
    %v1998 = vsel %vm1994, 1, 0
    %v1999 = vcvt.s32.f32 %v1995
    %v2000 = vcvt.s32.f32 %v1996
    %v2001 = vcvt.s32.f32 %v1997
    %v2002 = vcvt.s32.f32 %v1998
    %v2003 = vmul.f32 %v1987, %v1999
    %v2004 = vmul.f32 %v1985, %v2000
    %v2005 = vmul.f32 %v1983, %v2001
    %v2006 = vmul.f32 %v1989, %v2002
    %v2007 = vmul.f32 %v1988, %v1999
    %v2008 = vmul.f32 %v1986, %v2000
    %v2009 = vmul.f32 %v1984, %v2001
    %v2010 = vmul.f32 %v1990, %v2002
    %2011 = vset.pattern.permute.xlu0 18
    %2012 = vperm.xlu0 %2011, %v104
    %v2013 = vpop.permute.xlu0 %2012
    %2015 = vset.pattern.permute.xlu0 18
    %2016 = vperm.xlu0 %2015, %v105
    %v2017 = vpop.permute.xlu0 %2016
    %v2019 = vmul.f32 %v2003, %v2013
    %v2020 = vmul.f32 %v2004, %v2013
    %v2021 = vmul.f32 %v2005, %v2013
    %v2022 = vmul.f32 %v2006, %v2013
    %v2023 = vmul.f32 %v2007, %v2017
    %v2024 = vmul.f32 %v2008, %v2017
    %v2025 = vmul.f32 %v2009, %v2017
    %v2026 = vmul.f32 %v2010, %v2017
    %v2027 = vadd.f32 %v1958, %v2019
    %v2028 = vadd.f32 %v1959, %v2020
    %v2029 = vadd.f32 %v1960, %v2021
    %v2030 = vadd.f32 %v1961, %v2022
    %v2031 = vadd.f32 %v1962, %v2023
    %v2032 = vadd.f32 %v1963, %v2024
    %v2033 = vadd.f32 %v1964, %v2025
    %v2034 = vadd.f32 %v1965, %v2026
    %2035 = vrot.lane.b32.xlu0 %v548, 110
    %v2036 = vpop.permute.xlu0 %2035
    %2037 = vrot.lane.b32.xlu0 %v552, 110
    %v2038 = vpop.permute.xlu0 %2037
    %2039 = vrot.lane.b32.xlu0 %v549, 110
    %v2040 = vpop.permute.xlu0 %2039
    %2041 = vrot.lane.b32.xlu0 %v553, 110
    %v2042 = vpop.permute.xlu0 %2041
    %2043 = vrot.lane.b32.xlu0 %v550, 110
    %v2044 = vpop.permute.xlu0 %2043
    %2045 = vrot.lane.b32.xlu0 %v554, 110
    %v2046 = vpop.permute.xlu0 %2045
    %2047 = vrot.lane.b32.xlu0 %v551, 110
    %v2048 = vpop.permute.xlu0 %2047
    %2049 = vrot.lane.b32.xlu0 %v555, 110
    %v2050 = vpop.permute.xlu0 %2049
    %vm2051 = vcmp.lt.s32.totalorder %v109, 110
    %v2052 = vsel %vm2051, %v2044, %v2048
    %v2053 = vsel %vm2051, %v2046, %v2050
    %v2054 = vsel %vm2051, %v2040, %v2044
    %v2055 = vsel %vm2051, %v2042, %v2046
    %v2056 = vsel %vm2051, %v2036, %v2040
    %v2057 = vsel %vm2051, %v2038, %v2042
    %v2058 = vsel %vm2051, %v2048, %v2036
    %v2059 = vsel %vm2051, %v2050, %v2038
    %vm2060 = vmand %vm1784, %vm1082
    %vm2061 = vmand %vm1785, %vm1083
    %vm2062 = vmand %vm1786, %vm1084
    %vm2063 = vmand %vm1787, %vm1085
    %v2064 = vsel %vm2060, 1, 0
    %v2065 = vsel %vm2061, 1, 0
    %v2066 = vsel %vm2062, 1, 0
    %v2067 = vsel %vm2063, 1, 0
    %v2068 = vcvt.s32.f32 %v2064
    %v2069 = vcvt.s32.f32 %v2065
    %v2070 = vcvt.s32.f32 %v2066
    %v2071 = vcvt.s32.f32 %v2067
    %v2072 = vmul.f32 %v2056, %v2068
    %v2073 = vmul.f32 %v2054, %v2069
    %v2074 = vmul.f32 %v2052, %v2070
    %v2075 = vmul.f32 %v2058, %v2071
    %v2076 = vmul.f32 %v2057, %v2068
    %v2077 = vmul.f32 %v2055, %v2069
    %v2078 = vmul.f32 %v2053, %v2070
    %v2079 = vmul.f32 %v2059, %v2071
    %2080 = vset.pattern.permute.xlu0 19
    %2081 = vperm.xlu0 %2080, %v104
    %v2082 = vpop.permute.xlu0 %2081
    %2084 = vset.pattern.permute.xlu0 19
    %2085 = vperm.xlu0 %2084, %v105
    %v2086 = vpop.permute.xlu0 %2085
    %v2088 = vmul.f32 %v2072, %v2082
    %v2089 = vmul.f32 %v2073, %v2082
    %v2090 = vmul.f32 %v2074, %v2082
    %v2091 = vmul.f32 %v2075, %v2082
    %v2092 = vmul.f32 %v2076, %v2086
    %v2093 = vmul.f32 %v2077, %v2086
    %v2094 = vmul.f32 %v2078, %v2086
    %v2095 = vmul.f32 %v2079, %v2086
    %v2096 = vadd.f32 %v2027, %v2088
    %v2097 = vadd.f32 %v2028, %v2089
    %v2098 = vadd.f32 %v2029, %v2090
    %v2099 = vadd.f32 %v2030, %v2091
    %v2100 = vadd.f32 %v2031, %v2092
    %v2101 = vadd.f32 %v2032, %v2093
    %v2102 = vadd.f32 %v2033, %v2094
    %v2103 = vadd.f32 %v2034, %v2095
    %2104 = vrot.lane.b32.xlu0 %v548, 98
    %v2105 = vpop.permute.xlu0 %2104
    %2106 = vrot.lane.b32.xlu0 %v552, 98
    %v2107 = vpop.permute.xlu0 %2106
    %2108 = vrot.lane.b32.xlu0 %v549, 98
    %v2109 = vpop.permute.xlu0 %2108
    %2110 = vrot.lane.b32.xlu0 %v553, 98
    %v2111 = vpop.permute.xlu0 %2110
    %2112 = vrot.lane.b32.xlu0 %v550, 98
    %v2113 = vpop.permute.xlu0 %2112
    %2114 = vrot.lane.b32.xlu0 %v554, 98
    %v2115 = vpop.permute.xlu0 %2114
    %2116 = vrot.lane.b32.xlu0 %v551, 98
    %v2117 = vpop.permute.xlu0 %2116
    %2118 = vrot.lane.b32.xlu0 %v555, 98
    %v2119 = vpop.permute.xlu0 %2118
    %vm2120 = vcmp.lt.s32.totalorder %v109, 98
    %v2121 = vsel %vm2120, %v2113, %v2117
    %v2122 = vsel %vm2120, %v2115, %v2119
    %v2123 = vsel %vm2120, %v2109, %v2113
    %v2124 = vsel %vm2120, %v2111, %v2115
    %v2125 = vsel %vm2120, %v2105, %v2109
    %v2126 = vsel %vm2120, %v2107, %v2111
    %v2127 = vsel %vm2120, %v2117, %v2105
    %v2128 = vsel %vm2120, %v2119, %v2107
    %vm2129 = vcmp.lt.s32.totalorder %v113, 224
    %vm2130 = vcmp.lt.s32.totalorder %v114, 224
    %vm2131 = vcmp.lt.s32.totalorder %v115, 224
    %vm2132 = vcmp.lt.s32.totalorder %v116, 224
    %vm2133 = vmand %vm2129, %vm804
    %vm2134 = vmand %vm2130, %vm805
    %vm2135 = vmand %vm2131, %vm806
    %vm2136 = vmand %vm2132, %vm807
    %v2137 = vsel %vm2133, 1, 0
    %v2138 = vsel %vm2134, 1, 0
    %v2139 = vsel %vm2135, 1, 0
    %v2140 = vsel %vm2136, 1, 0
    %v2141 = vcvt.s32.f32 %v2137
    %v2142 = vcvt.s32.f32 %v2138
    %v2143 = vcvt.s32.f32 %v2139
    %v2144 = vcvt.s32.f32 %v2140
    %v2145 = vmul.f32 %v2125, %v2141
    %v2146 = vmul.f32 %v2123, %v2142
    %v2147 = vmul.f32 %v2121, %v2143
    %v2148 = vmul.f32 %v2127, %v2144
    %v2149 = vmul.f32 %v2126, %v2141
    %v2150 = vmul.f32 %v2124, %v2142
    %v2151 = vmul.f32 %v2122, %v2143
    %v2152 = vmul.f32 %v2128, %v2144
    %2153 = vset.pattern.permute.xlu0 20
    %2154 = vperm.xlu0 %2153, %v104
    %v2155 = vpop.permute.xlu0 %2154
    %2157 = vset.pattern.permute.xlu0 20
    %2158 = vperm.xlu0 %2157, %v105
    %v2159 = vpop.permute.xlu0 %2158
    %v2161 = vmul.f32 %v2145, %v2155
    %v2162 = vmul.f32 %v2146, %v2155
    %v2163 = vmul.f32 %v2147, %v2155
    %v2164 = vmul.f32 %v2148, %v2155
    %v2165 = vmul.f32 %v2149, %v2159
    %v2166 = vmul.f32 %v2150, %v2159
    %v2167 = vmul.f32 %v2151, %v2159
    %v2168 = vmul.f32 %v2152, %v2159
    %v2169 = vadd.f32 %v2096, %v2161
    %v2170 = vadd.f32 %v2097, %v2162
    %v2171 = vadd.f32 %v2098, %v2163
    %v2172 = vadd.f32 %v2099, %v2164
    %v2173 = vadd.f32 %v2100, %v2165
    %v2174 = vadd.f32 %v2101, %v2166
    %v2175 = vadd.f32 %v2102, %v2167
    %v2176 = vadd.f32 %v2103, %v2168
    %2177 = vrot.lane.b32.xlu0 %v548, 97
    %v2178 = vpop.permute.xlu0 %2177
    %2179 = vrot.lane.b32.xlu0 %v552, 97
    %v2180 = vpop.permute.xlu0 %2179
    %2181 = vrot.lane.b32.xlu0 %v549, 97
    %v2182 = vpop.permute.xlu0 %2181
    %2183 = vrot.lane.b32.xlu0 %v553, 97
    %v2184 = vpop.permute.xlu0 %2183
    %2185 = vrot.lane.b32.xlu0 %v550, 97
    %v2186 = vpop.permute.xlu0 %2185
    %2187 = vrot.lane.b32.xlu0 %v554, 97
    %v2188 = vpop.permute.xlu0 %2187
    %2189 = vrot.lane.b32.xlu0 %v551, 97
    %v2190 = vpop.permute.xlu0 %2189
    %2191 = vrot.lane.b32.xlu0 %v555, 97
    %v2192 = vpop.permute.xlu0 %2191
    %vm2193 = vcmp.lt.s32.totalorder %v109, 97
    %v2194 = vsel %vm2193, %v2186, %v2190
    %v2195 = vsel %vm2193, %v2188, %v2192
    %v2196 = vsel %vm2193, %v2182, %v2186
    %v2197 = vsel %vm2193, %v2184, %v2188
    %v2198 = vsel %vm2193, %v2178, %v2182
    %v2199 = vsel %vm2193, %v2180, %v2184
    %v2200 = vsel %vm2193, %v2190, %v2178
    %v2201 = vsel %vm2193, %v2192, %v2180
    %vm2202 = vmand %vm2129, %vm871
    %vm2203 = vmand %vm2130, %vm872
    %vm2204 = vmand %vm2131, %vm873
    %vm2205 = vmand %vm2132, %vm874
    %v2206 = vsel %vm2202, 1, 0
    %v2207 = vsel %vm2203, 1, 0
    %v2208 = vsel %vm2204, 1, 0
    %v2209 = vsel %vm2205, 1, 0
    %v2210 = vcvt.s32.f32 %v2206
    %v2211 = vcvt.s32.f32 %v2207
    %v2212 = vcvt.s32.f32 %v2208
    %v2213 = vcvt.s32.f32 %v2209
    %v2214 = vmul.f32 %v2198, %v2210
    %v2215 = vmul.f32 %v2196, %v2211
    %v2216 = vmul.f32 %v2194, %v2212
    %v2217 = vmul.f32 %v2200, %v2213
    %v2218 = vmul.f32 %v2199, %v2210
    %v2219 = vmul.f32 %v2197, %v2211
    %v2220 = vmul.f32 %v2195, %v2212
    %v2221 = vmul.f32 %v2201, %v2213
    %2222 = vset.pattern.permute.xlu0 21
    %2223 = vperm.xlu0 %2222, %v104
    %v2224 = vpop.permute.xlu0 %2223
    %2226 = vset.pattern.permute.xlu0 21
    %2227 = vperm.xlu0 %2226, %v105
    %v2228 = vpop.permute.xlu0 %2227
    %v2230 = vmul.f32 %v2214, %v2224
    %v2231 = vmul.f32 %v2215, %v2224
    %v2232 = vmul.f32 %v2216, %v2224
    %v2233 = vmul.f32 %v2217, %v2224
    %v2234 = vmul.f32 %v2218, %v2228
    %v2235 = vmul.f32 %v2219, %v2228
    %v2236 = vmul.f32 %v2220, %v2228
    %v2237 = vmul.f32 %v2221, %v2228
    %v2238 = vadd.f32 %v2169, %v2230
    %v2239 = vadd.f32 %v2170, %v2231
    %v2240 = vadd.f32 %v2171, %v2232
    %v2241 = vadd.f32 %v2172, %v2233
    %v2242 = vadd.f32 %v2173, %v2234
    %v2243 = vadd.f32 %v2174, %v2235
    %v2244 = vadd.f32 %v2175, %v2236
    %v2245 = vadd.f32 %v2176, %v2237
    %2246 = vrot.lane.b32.xlu0 %v548, 96
    %v2247 = vpop.permute.xlu0 %2246
    %2248 = vrot.lane.b32.xlu0 %v552, 96
    %v2249 = vpop.permute.xlu0 %2248
    %2250 = vrot.lane.b32.xlu0 %v549, 96
    %v2251 = vpop.permute.xlu0 %2250
    %2252 = vrot.lane.b32.xlu0 %v553, 96
    %v2253 = vpop.permute.xlu0 %2252
    %2254 = vrot.lane.b32.xlu0 %v550, 96
    %v2255 = vpop.permute.xlu0 %2254
    %2256 = vrot.lane.b32.xlu0 %v554, 96
    %v2257 = vpop.permute.xlu0 %2256
    %2258 = vrot.lane.b32.xlu0 %v551, 96
    %v2259 = vpop.permute.xlu0 %2258
    %2260 = vrot.lane.b32.xlu0 %v555, 96
    %v2261 = vpop.permute.xlu0 %2260
    %vm2262 = vcmp.lt.s32.totalorder %v109, 96
    %v2263 = vsel %vm2262, %v2255, %v2259
    %v2264 = vsel %vm2262, %v2257, %v2261
    %v2265 = vsel %vm2262, %v2251, %v2255
    %v2266 = vsel %vm2262, %v2253, %v2257
    %v2267 = vsel %vm2262, %v2247, %v2251
    %v2268 = vsel %vm2262, %v2249, %v2253
    %v2269 = vsel %vm2262, %v2259, %v2247
    %v2270 = vsel %vm2262, %v2261, %v2249
    %v2271 = vsel %vm2129, 1, 0
    %v2272 = vsel %vm2130, 1, 0
    %v2273 = vsel %vm2131, 1, 0
    %v2274 = vsel %vm2132, 1, 0
    %v2275 = vcvt.s32.f32 %v2271
    %v2276 = vcvt.s32.f32 %v2272
    %v2277 = vcvt.s32.f32 %v2273
    %v2278 = vcvt.s32.f32 %v2274
    %v2279 = vmul.f32 %v2267, %v2275
    %v2280 = vmul.f32 %v2265, %v2276
    %v2281 = vmul.f32 %v2263, %v2277
    %v2282 = vmul.f32 %v2269, %v2278
    %v2283 = vmul.f32 %v2268, %v2275
    %v2284 = vmul.f32 %v2266, %v2276
    %v2285 = vmul.f32 %v2264, %v2277
    %v2286 = vmul.f32 %v2270, %v2278
    %2287 = vset.pattern.permute.xlu0 22
    %2288 = vperm.xlu0 %2287, %v104
    %v2289 = vpop.permute.xlu0 %2288
    %2291 = vset.pattern.permute.xlu0 22
    %2292 = vperm.xlu0 %2291, %v105
    %v2293 = vpop.permute.xlu0 %2292
    %v2295 = vmul.f32 %v2279, %v2289
    %v2296 = vmul.f32 %v2280, %v2289
    %v2297 = vmul.f32 %v2281, %v2289
    %v2298 = vmul.f32 %v2282, %v2289
    %v2299 = vmul.f32 %v2283, %v2293
    %v2300 = vmul.f32 %v2284, %v2293
    %v2301 = vmul.f32 %v2285, %v2293
    %v2302 = vmul.f32 %v2286, %v2293
    %v2303 = vadd.f32 %v2238, %v2295
    %v2304 = vadd.f32 %v2239, %v2296
    %v2305 = vadd.f32 %v2240, %v2297
    %v2306 = vadd.f32 %v2241, %v2298
    %v2307 = vadd.f32 %v2242, %v2299
    %v2308 = vadd.f32 %v2243, %v2300
    %v2309 = vadd.f32 %v2244, %v2301
    %v2310 = vadd.f32 %v2245, %v2302
    %2311 = vrot.lane.b32.xlu0 %v548, 95
    %v2312 = vpop.permute.xlu0 %2311
    %2313 = vrot.lane.b32.xlu0 %v552, 95
    %v2314 = vpop.permute.xlu0 %2313
    %2315 = vrot.lane.b32.xlu0 %v549, 95
    %v2316 = vpop.permute.xlu0 %2315
    %2317 = vrot.lane.b32.xlu0 %v553, 95
    %v2318 = vpop.permute.xlu0 %2317
    %2319 = vrot.lane.b32.xlu0 %v550, 95
    %v2320 = vpop.permute.xlu0 %2319
    %2321 = vrot.lane.b32.xlu0 %v554, 95
    %v2322 = vpop.permute.xlu0 %2321
    %2323 = vrot.lane.b32.xlu0 %v551, 95
    %v2324 = vpop.permute.xlu0 %2323
    %2325 = vrot.lane.b32.xlu0 %v555, 95
    %v2326 = vpop.permute.xlu0 %2325
    %vm2327 = vcmp.lt.s32.totalorder %v109, 95
    %v2328 = vsel %vm2327, %v2320, %v2324
    %v2329 = vsel %vm2327, %v2322, %v2326
    %v2330 = vsel %vm2327, %v2316, %v2320
    %v2331 = vsel %vm2327, %v2318, %v2322
    %v2332 = vsel %vm2327, %v2312, %v2316
    %v2333 = vsel %vm2327, %v2314, %v2318
    %v2334 = vsel %vm2327, %v2324, %v2312
    %v2335 = vsel %vm2327, %v2326, %v2314
    %vm2336 = vmand %vm2129, %vm1009
    %vm2337 = vmand %vm2130, %vm1010
    %vm2338 = vmand %vm2131, %vm1011
    %vm2339 = vmand %vm2132, %vm1012
    %v2340 = vsel %vm2336, 1, 0
    %v2341 = vsel %vm2337, 1, 0
    %v2342 = vsel %vm2338, 1, 0
    %v2343 = vsel %vm2339, 1, 0
    %v2344 = vcvt.s32.f32 %v2340
    %v2345 = vcvt.s32.f32 %v2341
    %v2346 = vcvt.s32.f32 %v2342
    %v2347 = vcvt.s32.f32 %v2343
    %v2348 = vmul.f32 %v2332, %v2344
    %v2349 = vmul.f32 %v2330, %v2345
    %v2350 = vmul.f32 %v2328, %v2346
    %v2351 = vmul.f32 %v2334, %v2347
    %v2352 = vmul.f32 %v2333, %v2344
    %v2353 = vmul.f32 %v2331, %v2345
    %v2354 = vmul.f32 %v2329, %v2346
    %v2355 = vmul.f32 %v2335, %v2347
    %2356 = vset.pattern.permute.xlu0 23
    %2357 = vperm.xlu0 %2356, %v104
    %v2358 = vpop.permute.xlu0 %2357
    %2360 = vset.pattern.permute.xlu0 23
    %2361 = vperm.xlu0 %2360, %v105
    %v2362 = vpop.permute.xlu0 %2361
    %v2364 = vmul.f32 %v2348, %v2358
    %v2365 = vmul.f32 %v2349, %v2358
    %v2366 = vmul.f32 %v2350, %v2358
    %v2367 = vmul.f32 %v2351, %v2358
    %v2368 = vmul.f32 %v2352, %v2362
    %v2369 = vmul.f32 %v2353, %v2362
    %v2370 = vmul.f32 %v2354, %v2362
    %v2371 = vmul.f32 %v2355, %v2362
    %v2372 = vadd.f32 %v2303, %v2364
    %v2373 = vadd.f32 %v2304, %v2365
    %v2374 = vadd.f32 %v2305, %v2366
    %v2375 = vadd.f32 %v2306, %v2367
    %v2376 = vadd.f32 %v2307, %v2368
    %v2377 = vadd.f32 %v2308, %v2369
    %v2378 = vadd.f32 %v2309, %v2370
    %v2379 = vadd.f32 %v2310, %v2371
    %2380 = vrot.lane.b32.xlu0 %v548, 94
    %v2381 = vpop.permute.xlu0 %2380
    %2382 = vrot.lane.b32.xlu0 %v552, 94
    %v2383 = vpop.permute.xlu0 %2382
    %2384 = vrot.lane.b32.xlu0 %v549, 94
    %v2385 = vpop.permute.xlu0 %2384
    %2386 = vrot.lane.b32.xlu0 %v553, 94
    %v2387 = vpop.permute.xlu0 %2386
    %2388 = vrot.lane.b32.xlu0 %v550, 94
    %v2389 = vpop.permute.xlu0 %2388
    %2390 = vrot.lane.b32.xlu0 %v554, 94
    %v2391 = vpop.permute.xlu0 %2390
    %2392 = vrot.lane.b32.xlu0 %v551, 94
    %v2393 = vpop.permute.xlu0 %2392
    %2394 = vrot.lane.b32.xlu0 %v555, 94
    %v2395 = vpop.permute.xlu0 %2394
    %vm2396 = vcmp.lt.s32.totalorder %v109, 94
    %v2397 = vsel %vm2396, %v2389, %v2393
    %v2398 = vsel %vm2396, %v2391, %v2395
    %v2399 = vsel %vm2396, %v2385, %v2389
    %v2400 = vsel %vm2396, %v2387, %v2391
    %v2401 = vsel %vm2396, %v2381, %v2385
    %v2402 = vsel %vm2396, %v2383, %v2387
    %v2403 = vsel %vm2396, %v2393, %v2381
    %v2404 = vsel %vm2396, %v2395, %v2383
    %vm2405 = vmand %vm2129, %vm1082
    %vm2406 = vmand %vm2130, %vm1083
    %vm2407 = vmand %vm2131, %vm1084
    %vm2408 = vmand %vm2132, %vm1085
    %v2409 = vsel %vm2405, 1, 0
    %v2410 = vsel %vm2406, 1, 0
    %v2411 = vsel %vm2407, 1, 0
    %v2412 = vsel %vm2408, 1, 0
    %v2413 = vcvt.s32.f32 %v2409
    %v2414 = vcvt.s32.f32 %v2410
    %v2415 = vcvt.s32.f32 %v2411
    %v2416 = vcvt.s32.f32 %v2412
    %v2417 = vmul.f32 %v2401, %v2413
    %v2418 = vmul.f32 %v2399, %v2414
    %v2419 = vmul.f32 %v2397, %v2415
    %v2420 = vmul.f32 %v2403, %v2416
    %v2421 = vmul.f32 %v2402, %v2413
    %v2422 = vmul.f32 %v2400, %v2414
    %v2423 = vmul.f32 %v2398, %v2415
    %v2424 = vmul.f32 %v2404, %v2416
    %2425 = vset.pattern.permute.xlu0 24
    %2426 = vperm.xlu0 %2425, %v104
    %v2427 = vpop.permute.xlu0 %2426
    %2429 = vset.pattern.permute.xlu0 24
    %2430 = vperm.xlu0 %2429, %v105
    %v2431 = vpop.permute.xlu0 %2430
    %v2433 = vmul.f32 %v2417, %v2427
    %v2434 = vmul.f32 %v2418, %v2427
    %v2435 = vmul.f32 %v2419, %v2427
    %v2436 = vmul.f32 %v2420, %v2427
    %v2437 = vmul.f32 %v2421, %v2431
    %v2438 = vmul.f32 %v2422, %v2431
    %v2439 = vmul.f32 %v2423, %v2431
    %v2440 = vmul.f32 %v2424, %v2431
    %v2441 = vadd.f32 %v2372, %v2433
    %v2442 = vadd.f32 %v2373, %v2434
    %v2443 = vadd.f32 %v2374, %v2435
    %v2444 = vadd.f32 %v2375, %v2436
    %v2445 = vadd.f32 %v2376, %v2437
    %v2446 = vadd.f32 %v2377, %v2438
    %v2447 = vadd.f32 %v2378, %v2439
    %v2448 = vadd.f32 %v2379, %v2440
    %2449 = vset.pattern.permute.xlu0 6
    %2450 = vperm.xlu0 %2449, %v106
    %v2451 = vpop.permute.xlu0 %2450
    %2453 = vset.pattern.permute.xlu0 6
    %2454 = vperm.xlu0 %2453, %v107
    %v2455 = vpop.permute.xlu0 %2454
    %v2457 = vadd.f32 %v2441, %v2451
    %v2458 = vadd.f32 %v2442, %v2451
    %v2459 = vadd.f32 %v2443, %v2451
    %v2460 = vadd.f32 %v2444, %v2451
    %v2461 = vadd.f32 %v2445, %v2455
    %v2462 = vadd.f32 %v2446, %v2455
    %v2463 = vadd.f32 %v2447, %v2455
    %v2464 = vadd.f32 %v2448, %v2455
    %2465 = vrot.lane.b32.xlu0 %v2457, 10
    %v2466 = vpop.permute.xlu0 %2465
    %2467 = vrot.lane.b32.xlu0 %v2461, 10
    %v2468 = vpop.permute.xlu0 %2467
    %2469 = vrot.lane.b32.xlu0 %v2458, 10
    %v2470 = vpop.permute.xlu0 %2469
    %2471 = vrot.lane.b32.xlu0 %v2462, 10
    %v2472 = vpop.permute.xlu0 %2471
    %2473 = vrot.lane.b32.xlu0 %v2459, 10
    %v2474 = vpop.permute.xlu0 %2473
    %2475 = vrot.lane.b32.xlu0 %v2463, 10
    %v2476 = vpop.permute.xlu0 %2475
    %2477 = vrot.lane.b32.xlu0 %v2460, 10
    %v2478 = vpop.permute.xlu0 %2477
    %2479 = vrot.lane.b32.xlu0 %v2464, 10
    %v2480 = vpop.permute.xlu0 %2479
    %vm2481 = vcmp.lt.s32.totalorder %v109, 10
    %v2482 = vsel %vm2481, %v2474, %v2478
    %v2483 = vsel %vm2481, %v2476, %v2480
    %v2484 = vsel %vm2481, %v2470, %v2474
    %v2485 = vsel %vm2481, %v2472, %v2476
    %v2486 = vsel %vm2481, %v2466, %v2470
    %v2487 = vsel %vm2481, %v2468, %v2472
    %v2488 = vsel %vm2481, %v2478, %v2466
    %v2489 = vsel %vm2481, %v2480, %v2468
    %vm2490 = vcmp.ge.s32.totalorder %v117, 10
    %vm2491 = vcmp.ge.s32.totalorder %v118, 10
    %vm2492 = vcmp.ge.s32.totalorder %v119, 10
    %vm2493 = vcmp.ge.s32.totalorder %v120, 10
    %v2494 = vsel %vm2490, 1, 0
    %v2495 = vsel %vm2491, 1, 0
    %v2496 = vsel %vm2492, 1, 0
    %v2497 = vsel %vm2493, 1, 0
    %v2498 = vcvt.s32.f32 %v2494
    %v2499 = vcvt.s32.f32 %v2495
    %v2500 = vcvt.s32.f32 %v2496
    %v2501 = vcvt.s32.f32 %v2497
    %v2502 = vmul.f32 %v2488, %v2498
    %v2503 = vmul.f32 %v2486, %v2499
    %v2504 = vmul.f32 %v2484, %v2500
    %v2505 = vmul.f32 %v2482, %v2501
    %v2506 = vmul.f32 %v2489, %v2498
    %v2507 = vmul.f32 %v2487, %v2499
    %v2508 = vmul.f32 %v2485, %v2500
    %v2509 = vmul.f32 %v2483, %v2501
    %2510 = vset.pattern.permute.xlu0 61
    %2511 = vperm.xlu0 %2510, %v104
    %v2512 = vpop.permute.xlu0 %2511
    %2514 = vset.pattern.permute.xlu0 61
    %2515 = vperm.xlu0 %2514, %v105
    %v2516 = vpop.permute.xlu0 %2515
    %v2518 = vmul.f32 %v2502, %v2512
    %v2519 = vmul.f32 %v2503, %v2512
    %v2520 = vmul.f32 %v2504, %v2512
    %v2521 = vmul.f32 %v2505, %v2512
    %v2522 = vmul.f32 %v2506, %v2516
    %v2523 = vmul.f32 %v2507, %v2516
    %v2524 = vmul.f32 %v2508, %v2516
    %v2525 = vmul.f32 %v2509, %v2516
    %2526 = vrot.lane.b32.xlu0 %v2457, 9
    %v2527 = vpop.permute.xlu0 %2526
    %2528 = vrot.lane.b32.xlu0 %v2461, 9
    %v2529 = vpop.permute.xlu0 %2528
    %2530 = vrot.lane.b32.xlu0 %v2458, 9
    %v2531 = vpop.permute.xlu0 %2530
    %2532 = vrot.lane.b32.xlu0 %v2462, 9
    %v2533 = vpop.permute.xlu0 %2532
    %2534 = vrot.lane.b32.xlu0 %v2459, 9
    %v2535 = vpop.permute.xlu0 %2534
    %2536 = vrot.lane.b32.xlu0 %v2463, 9
    %v2537 = vpop.permute.xlu0 %2536
    %2538 = vrot.lane.b32.xlu0 %v2460, 9
    %v2539 = vpop.permute.xlu0 %2538
    %2540 = vrot.lane.b32.xlu0 %v2464, 9
    %v2541 = vpop.permute.xlu0 %2540
    %vm2542 = vcmp.lt.s32.totalorder %v109, 9
    %v2543 = vsel %vm2542, %v2535, %v2539
    %v2544 = vsel %vm2542, %v2537, %v2541
    %v2545 = vsel %vm2542, %v2531, %v2535
    %v2546 = vsel %vm2542, %v2533, %v2537
    %v2547 = vsel %vm2542, %v2527, %v2531
    %v2548 = vsel %vm2542, %v2529, %v2533
    %v2549 = vsel %vm2542, %v2539, %v2527
    %v2550 = vsel %vm2542, %v2541, %v2529
    %vm2551 = vcmp.ge.s32.totalorder %v117, 9
    %vm2552 = vcmp.ge.s32.totalorder %v118, 9
    %vm2553 = vcmp.ge.s32.totalorder %v119, 9
    %vm2554 = vcmp.ge.s32.totalorder %v120, 9
    %v2555 = vsel %vm2551, 1, 0
    %v2556 = vsel %vm2552, 1, 0
    %v2557 = vsel %vm2553, 1, 0
    %v2558 = vsel %vm2554, 1, 0
    %v2559 = vcvt.s32.f32 %v2555
    %v2560 = vcvt.s32.f32 %v2556
    %v2561 = vcvt.s32.f32 %v2557
    %v2562 = vcvt.s32.f32 %v2558
    %v2563 = vmul.f32 %v2549, %v2559
    %v2564 = vmul.f32 %v2547, %v2560
    %v2565 = vmul.f32 %v2545, %v2561
    %v2566 = vmul.f32 %v2543, %v2562
    %v2567 = vmul.f32 %v2550, %v2559
    %v2568 = vmul.f32 %v2548, %v2560
    %v2569 = vmul.f32 %v2546, %v2561
    %v2570 = vmul.f32 %v2544, %v2562
    %2571 = vset.pattern.permute.xlu0 62
    %2572 = vperm.xlu0 %2571, %v104
    %v2573 = vpop.permute.xlu0 %2572
    %2575 = vset.pattern.permute.xlu0 62
    %2576 = vperm.xlu0 %2575, %v105
    %v2577 = vpop.permute.xlu0 %2576
    %v2579 = vmul.f32 %v2563, %v2573
    %v2580 = vmul.f32 %v2564, %v2573
    %v2581 = vmul.f32 %v2565, %v2573
    %v2582 = vmul.f32 %v2566, %v2573
    %v2583 = vmul.f32 %v2567, %v2577
    %v2584 = vmul.f32 %v2568, %v2577
    %v2585 = vmul.f32 %v2569, %v2577
    %v2586 = vmul.f32 %v2570, %v2577
    %v2587 = vadd.f32 %v2518, %v2579
    %v2588 = vadd.f32 %v2519, %v2580
    %v2589 = vadd.f32 %v2520, %v2581
    %v2590 = vadd.f32 %v2521, %v2582
    %v2591 = vadd.f32 %v2522, %v2583
    %v2592 = vadd.f32 %v2523, %v2584
    %v2593 = vadd.f32 %v2524, %v2585
    %v2594 = vadd.f32 %v2525, %v2586
    %2595 = vrot.lane.b32.xlu0 %v2457, 8
    %v2596 = vpop.permute.xlu0 %2595
    %2597 = vrot.lane.b32.xlu0 %v2461, 8
    %v2598 = vpop.permute.xlu0 %2597
    %2599 = vrot.lane.b32.xlu0 %v2458, 8
    %v2600 = vpop.permute.xlu0 %2599
    %2601 = vrot.lane.b32.xlu0 %v2462, 8
    %v2602 = vpop.permute.xlu0 %2601
    %2603 = vrot.lane.b32.xlu0 %v2459, 8
    %v2604 = vpop.permute.xlu0 %2603
    %2605 = vrot.lane.b32.xlu0 %v2463, 8
    %v2606 = vpop.permute.xlu0 %2605
    %2607 = vrot.lane.b32.xlu0 %v2460, 8
    %v2608 = vpop.permute.xlu0 %2607
    %2609 = vrot.lane.b32.xlu0 %v2464, 8
    %v2610 = vpop.permute.xlu0 %2609
    %vm2611 = vcmp.lt.s32.totalorder %v109, 8
    %v2612 = vsel %vm2611, %v2604, %v2608
    %v2613 = vsel %vm2611, %v2606, %v2610
    %v2614 = vsel %vm2611, %v2600, %v2604
    %v2615 = vsel %vm2611, %v2602, %v2606
    %v2616 = vsel %vm2611, %v2596, %v2600
    %v2617 = vsel %vm2611, %v2598, %v2602
    %v2618 = vsel %vm2611, %v2608, %v2596
    %v2619 = vsel %vm2611, %v2610, %v2598
    %vm2620 = vcmp.ge.s32.totalorder %v117, 8
    %vm2621 = vcmp.ge.s32.totalorder %v118, 8
    %vm2622 = vcmp.ge.s32.totalorder %v119, 8
    %vm2623 = vcmp.ge.s32.totalorder %v120, 8
    %v2624 = vsel %vm2620, 1, 0
    %v2625 = vsel %vm2621, 1, 0
    %v2626 = vsel %vm2622, 1, 0
    %v2627 = vsel %vm2623, 1, 0
    %v2628 = vcvt.s32.f32 %v2624
    %v2629 = vcvt.s32.f32 %v2625
    %v2630 = vcvt.s32.f32 %v2626
    %v2631 = vcvt.s32.f32 %v2627
    %v2632 = vmul.f32 %v2618, %v2628
    %v2633 = vmul.f32 %v2616, %v2629
    %v2634 = vmul.f32 %v2614, %v2630
    %v2635 = vmul.f32 %v2612, %v2631
    %v2636 = vmul.f32 %v2619, %v2628
    %v2637 = vmul.f32 %v2617, %v2629
    %v2638 = vmul.f32 %v2615, %v2630
    %v2639 = vmul.f32 %v2613, %v2631
    %2640 = vset.pattern.permute.xlu0 63
    %2641 = vperm.xlu0 %2640, %v104
    %v2642 = vpop.permute.xlu0 %2641
    %2644 = vset.pattern.permute.xlu0 63
    %2645 = vperm.xlu0 %2644, %v105
    %v2646 = vpop.permute.xlu0 %2645
    %v2648 = vmul.f32 %v2632, %v2642
    %v2649 = vmul.f32 %v2633, %v2642
    %v2650 = vmul.f32 %v2634, %v2642
    %v2651 = vmul.f32 %v2635, %v2642
    %v2652 = vmul.f32 %v2636, %v2646
    %v2653 = vmul.f32 %v2637, %v2646
    %v2654 = vmul.f32 %v2638, %v2646
    %v2655 = vmul.f32 %v2639, %v2646
    %v2656 = vadd.f32 %v2587, %v2648
    %v2657 = vadd.f32 %v2588, %v2649
    %v2658 = vadd.f32 %v2589, %v2650
    %v2659 = vadd.f32 %v2590, %v2651
    %v2660 = vadd.f32 %v2591, %v2652
    %v2661 = vadd.f32 %v2592, %v2653
    %v2662 = vadd.f32 %v2593, %v2654
    %v2663 = vadd.f32 %v2594, %v2655
    %2664 = vrot.lane.b32.xlu0 %v2457, 7
    %v2665 = vpop.permute.xlu0 %2664
    %2666 = vrot.lane.b32.xlu0 %v2461, 7
    %v2667 = vpop.permute.xlu0 %2666
    %2668 = vrot.lane.b32.xlu0 %v2458, 7
    %v2669 = vpop.permute.xlu0 %2668
    %2670 = vrot.lane.b32.xlu0 %v2462, 7
    %v2671 = vpop.permute.xlu0 %2670
    %2672 = vrot.lane.b32.xlu0 %v2459, 7
    %v2673 = vpop.permute.xlu0 %2672
    %2674 = vrot.lane.b32.xlu0 %v2463, 7
    %v2675 = vpop.permute.xlu0 %2674
    %2676 = vrot.lane.b32.xlu0 %v2460, 7
    %v2677 = vpop.permute.xlu0 %2676
    %2678 = vrot.lane.b32.xlu0 %v2464, 7
    %v2679 = vpop.permute.xlu0 %2678
    %vm2680 = vcmp.lt.s32.totalorder %v109, 7
    %v2681 = vsel %vm2680, %v2673, %v2677
    %v2682 = vsel %vm2680, %v2675, %v2679
    %v2683 = vsel %vm2680, %v2669, %v2673
    %v2684 = vsel %vm2680, %v2671, %v2675
    %v2685 = vsel %vm2680, %v2665, %v2669
    %v2686 = vsel %vm2680, %v2667, %v2671
    %v2687 = vsel %vm2680, %v2677, %v2665
    %v2688 = vsel %vm2680, %v2679, %v2667
    %vm2689 = vcmp.ge.s32.totalorder %v117, 7
    %vm2690 = vcmp.ge.s32.totalorder %v118, 7
    %vm2691 = vcmp.ge.s32.totalorder %v119, 7
    %vm2692 = vcmp.ge.s32.totalorder %v120, 7
    %v2693 = vsel %vm2689, 1, 0
    %v2694 = vsel %vm2690, 1, 0
    %v2695 = vsel %vm2691, 1, 0
    %v2696 = vsel %vm2692, 1, 0
    %v2697 = vcvt.s32.f32 %v2693
    %v2698 = vcvt.s32.f32 %v2694
    %v2699 = vcvt.s32.f32 %v2695
    %v2700 = vcvt.s32.f32 %v2696
    %v2701 = vmul.f32 %v2687, %v2697
    %v2702 = vmul.f32 %v2685, %v2698
    %v2703 = vmul.f32 %v2683, %v2699
    %v2704 = vmul.f32 %v2681, %v2700
    %v2705 = vmul.f32 %v2688, %v2697
    %v2706 = vmul.f32 %v2686, %v2698
    %v2707 = vmul.f32 %v2684, %v2699
    %v2708 = vmul.f32 %v2682, %v2700
    %2709 = vset.pattern.permute.xlu0 64
    %2710 = vperm.xlu0 %2709, %v104
    %v2711 = vpop.permute.xlu0 %2710
    %2713 = vset.pattern.permute.xlu0 64
    %2714 = vperm.xlu0 %2713, %v105
    %v2715 = vpop.permute.xlu0 %2714
    %v2717 = vmul.f32 %v2701, %v2711
    %v2718 = vmul.f32 %v2702, %v2711
    %v2719 = vmul.f32 %v2703, %v2711
    %v2720 = vmul.f32 %v2704, %v2711
    %v2721 = vmul.f32 %v2705, %v2715
    %v2722 = vmul.f32 %v2706, %v2715
    %v2723 = vmul.f32 %v2707, %v2715
    %v2724 = vmul.f32 %v2708, %v2715
    %v2725 = vadd.f32 %v2656, %v2717
    %v2726 = vadd.f32 %v2657, %v2718
    %v2727 = vadd.f32 %v2658, %v2719
    %v2728 = vadd.f32 %v2659, %v2720
    %v2729 = vadd.f32 %v2660, %v2721
    %v2730 = vadd.f32 %v2661, %v2722
    %v2731 = vadd.f32 %v2662, %v2723
    %v2732 = vadd.f32 %v2663, %v2724
    %2733 = vrot.lane.b32.xlu0 %v2457, 6
    %v2734 = vpop.permute.xlu0 %2733
    %2735 = vrot.lane.b32.xlu0 %v2461, 6
    %v2736 = vpop.permute.xlu0 %2735
    %2737 = vrot.lane.b32.xlu0 %v2458, 6
    %v2738 = vpop.permute.xlu0 %2737
    %2739 = vrot.lane.b32.xlu0 %v2462, 6
    %v2740 = vpop.permute.xlu0 %2739
    %2741 = vrot.lane.b32.xlu0 %v2459, 6
    %v2742 = vpop.permute.xlu0 %2741
    %2743 = vrot.lane.b32.xlu0 %v2463, 6
    %v2744 = vpop.permute.xlu0 %2743
    %2745 = vrot.lane.b32.xlu0 %v2460, 6
    %v2746 = vpop.permute.xlu0 %2745
    %2747 = vrot.lane.b32.xlu0 %v2464, 6
    %v2748 = vpop.permute.xlu0 %2747
    %vm2749 = vcmp.lt.s32.totalorder %v109, 6
    %v2750 = vsel %vm2749, %v2742, %v2746
    %v2751 = vsel %vm2749, %v2744, %v2748
    %v2752 = vsel %vm2749, %v2738, %v2742
    %v2753 = vsel %vm2749, %v2740, %v2744
    %v2754 = vsel %vm2749, %v2734, %v2738
    %v2755 = vsel %vm2749, %v2736, %v2740
    %v2756 = vsel %vm2749, %v2746, %v2734
    %v2757 = vsel %vm2749, %v2748, %v2736
    %vm2758 = vcmp.ge.s32.totalorder %v117, 6
    %vm2759 = vcmp.ge.s32.totalorder %v118, 6
    %vm2760 = vcmp.ge.s32.totalorder %v119, 6
    %vm2761 = vcmp.ge.s32.totalorder %v120, 6
    %v2762 = vsel %vm2758, 1, 0
    %v2763 = vsel %vm2759, 1, 0
    %v2764 = vsel %vm2760, 1, 0
    %v2765 = vsel %vm2761, 1, 0
    %v2766 = vcvt.s32.f32 %v2762
    %v2767 = vcvt.s32.f32 %v2763
    %v2768 = vcvt.s32.f32 %v2764
    %v2769 = vcvt.s32.f32 %v2765
    %v2770 = vmul.f32 %v2756, %v2766
    %v2771 = vmul.f32 %v2754, %v2767
    %v2772 = vmul.f32 %v2752, %v2768
    %v2773 = vmul.f32 %v2750, %v2769
    %v2774 = vmul.f32 %v2757, %v2766
    %v2775 = vmul.f32 %v2755, %v2767
    %v2776 = vmul.f32 %v2753, %v2768
    %v2777 = vmul.f32 %v2751, %v2769
    %2778 = vset.pattern.permute.xlu0 65
    %2779 = vperm.xlu0 %2778, %v104
    %v2780 = vpop.permute.xlu0 %2779
    %2782 = vset.pattern.permute.xlu0 65
    %2783 = vperm.xlu0 %2782, %v105
    %v2784 = vpop.permute.xlu0 %2783
    %v2786 = vmul.f32 %v2770, %v2780
    %v2787 = vmul.f32 %v2771, %v2780
    %v2788 = vmul.f32 %v2772, %v2780
    %v2789 = vmul.f32 %v2773, %v2780
    %v2790 = vmul.f32 %v2774, %v2784
    %v2791 = vmul.f32 %v2775, %v2784
    %v2792 = vmul.f32 %v2776, %v2784
    %v2793 = vmul.f32 %v2777, %v2784
    %v2794 = vadd.f32 %v2725, %v2786
    %v2795 = vadd.f32 %v2726, %v2787
    %v2796 = vadd.f32 %v2727, %v2788
    %v2797 = vadd.f32 %v2728, %v2789
    %v2798 = vadd.f32 %v2729, %v2790
    %v2799 = vadd.f32 %v2730, %v2791
    %v2800 = vadd.f32 %v2731, %v2792
    %v2801 = vadd.f32 %v2732, %v2793
    %2802 = vrot.lane.b32.xlu0 %v2457, 5
    %v2803 = vpop.permute.xlu0 %2802
    %2804 = vrot.lane.b32.xlu0 %v2461, 5
    %v2805 = vpop.permute.xlu0 %2804
    %2806 = vrot.lane.b32.xlu0 %v2458, 5
    %v2807 = vpop.permute.xlu0 %2806
    %2808 = vrot.lane.b32.xlu0 %v2462, 5
    %v2809 = vpop.permute.xlu0 %2808
    %2810 = vrot.lane.b32.xlu0 %v2459, 5
    %v2811 = vpop.permute.xlu0 %2810
    %2812 = vrot.lane.b32.xlu0 %v2463, 5
    %v2813 = vpop.permute.xlu0 %2812
    %2814 = vrot.lane.b32.xlu0 %v2460, 5
    %v2815 = vpop.permute.xlu0 %2814
    %2816 = vrot.lane.b32.xlu0 %v2464, 5
    %v2817 = vpop.permute.xlu0 %2816
    %vm2818 = vcmp.lt.s32.totalorder %v109, 5
    %v2819 = vsel %vm2818, %v2811, %v2815
    %v2820 = vsel %vm2818, %v2813, %v2817
    %v2821 = vsel %vm2818, %v2807, %v2811
    %v2822 = vsel %vm2818, %v2809, %v2813
    %v2823 = vsel %vm2818, %v2803, %v2807
    %v2824 = vsel %vm2818, %v2805, %v2809
    %v2825 = vsel %vm2818, %v2815, %v2803
    %v2826 = vsel %vm2818, %v2817, %v2805
    %vm2827 = vcmp.ge.s32.totalorder %v117, 5
    %vm2828 = vcmp.ge.s32.totalorder %v118, 5
    %vm2829 = vcmp.ge.s32.totalorder %v119, 5
    %vm2830 = vcmp.ge.s32.totalorder %v120, 5
    %v2831 = vsel %vm2827, 1, 0
    %v2832 = vsel %vm2828, 1, 0
    %v2833 = vsel %vm2829, 1, 0
    %v2834 = vsel %vm2830, 1, 0
    %v2835 = vcvt.s32.f32 %v2831
    %v2836 = vcvt.s32.f32 %v2832
    %v2837 = vcvt.s32.f32 %v2833
    %v2838 = vcvt.s32.f32 %v2834
    %v2839 = vmul.f32 %v2825, %v2835
    %v2840 = vmul.f32 %v2823, %v2836
    %v2841 = vmul.f32 %v2821, %v2837
    %v2842 = vmul.f32 %v2819, %v2838
    %v2843 = vmul.f32 %v2826, %v2835
    %v2844 = vmul.f32 %v2824, %v2836
    %v2845 = vmul.f32 %v2822, %v2837
    %v2846 = vmul.f32 %v2820, %v2838
    %2847 = vset.pattern.permute.xlu0 66
    %2848 = vperm.xlu0 %2847, %v104
    %v2849 = vpop.permute.xlu0 %2848
    %2851 = vset.pattern.permute.xlu0 66
    %2852 = vperm.xlu0 %2851, %v105
    %v2853 = vpop.permute.xlu0 %2852
    %v2855 = vmul.f32 %v2839, %v2849
    %v2856 = vmul.f32 %v2840, %v2849
    %v2857 = vmul.f32 %v2841, %v2849
    %v2858 = vmul.f32 %v2842, %v2849
    %v2859 = vmul.f32 %v2843, %v2853
    %v2860 = vmul.f32 %v2844, %v2853
    %v2861 = vmul.f32 %v2845, %v2853
    %v2862 = vmul.f32 %v2846, %v2853
    %v2863 = vadd.f32 %v2794, %v2855
    %v2864 = vadd.f32 %v2795, %v2856
    %v2865 = vadd.f32 %v2796, %v2857
    %v2866 = vadd.f32 %v2797, %v2858
    %v2867 = vadd.f32 %v2798, %v2859
    %v2868 = vadd.f32 %v2799, %v2860
    %v2869 = vadd.f32 %v2800, %v2861
    %v2870 = vadd.f32 %v2801, %v2862
    %2871 = vset.pattern.permute.xlu0 39
    %2872 = vperm.xlu0 %2871, %v104
    %v2873 = vpop.permute.xlu0 %2872
    %2875 = vset.pattern.permute.xlu0 39
    %2876 = vperm.xlu0 %2875, %v105
    %v2877 = vpop.permute.xlu0 %2876
    %v2879 = vmul.f32 %v2839, %v2873
    %v2880 = vmul.f32 %v2840, %v2873
    %v2881 = vmul.f32 %v2841, %v2873
    %v2882 = vmul.f32 %v2842, %v2873
    %v2883 = vmul.f32 %v2843, %v2877
    %v2884 = vmul.f32 %v2844, %v2877
    %v2885 = vmul.f32 %v2845, %v2877
    %v2886 = vmul.f32 %v2846, %v2877
    %2887 = vrot.lane.b32.xlu0 %v2457, 4
    %v2888 = vpop.permute.xlu0 %2887
    %2889 = vrot.lane.b32.xlu0 %v2461, 4
    %v2890 = vpop.permute.xlu0 %2889
    %2891 = vrot.lane.b32.xlu0 %v2458, 4
    %v2892 = vpop.permute.xlu0 %2891
    %2893 = vrot.lane.b32.xlu0 %v2462, 4
    %v2894 = vpop.permute.xlu0 %2893
    %2895 = vrot.lane.b32.xlu0 %v2459, 4
    %v2896 = vpop.permute.xlu0 %2895
    %2897 = vrot.lane.b32.xlu0 %v2463, 4
    %v2898 = vpop.permute.xlu0 %2897
    %2899 = vrot.lane.b32.xlu0 %v2460, 4
    %v2900 = vpop.permute.xlu0 %2899
    %2901 = vrot.lane.b32.xlu0 %v2464, 4
    %v2902 = vpop.permute.xlu0 %2901
    %vm2903 = vcmp.lt.s32.totalorder %v109, 4
    %v2904 = vsel %vm2903, %v2896, %v2900
    %v2905 = vsel %vm2903, %v2898, %v2902
    %v2906 = vsel %vm2903, %v2892, %v2896
    %v2907 = vsel %vm2903, %v2894, %v2898
    %v2908 = vsel %vm2903, %v2888, %v2892
    %v2909 = vsel %vm2903, %v2890, %v2894
    %v2910 = vsel %vm2903, %v2900, %v2888
    %v2911 = vsel %vm2903, %v2902, %v2890
    %vm2912 = vcmp.ge.s32.totalorder %v117, 4
    %vm2913 = vcmp.ge.s32.totalorder %v118, 4
    %vm2914 = vcmp.ge.s32.totalorder %v119, 4
    %vm2915 = vcmp.ge.s32.totalorder %v120, 4
    %v2916 = vsel %vm2912, 1, 0
    %v2917 = vsel %vm2913, 1, 0
    %v2918 = vsel %vm2914, 1, 0
    %v2919 = vsel %vm2915, 1, 0
    %v2920 = vcvt.s32.f32 %v2916
    %v2921 = vcvt.s32.f32 %v2917
    %v2922 = vcvt.s32.f32 %v2918
    %v2923 = vcvt.s32.f32 %v2919
    %v2924 = vmul.f32 %v2910, %v2920
    %v2925 = vmul.f32 %v2908, %v2921
    %v2926 = vmul.f32 %v2906, %v2922
    %v2927 = vmul.f32 %v2904, %v2923
    %v2928 = vmul.f32 %v2911, %v2920
    %v2929 = vmul.f32 %v2909, %v2921
    %v2930 = vmul.f32 %v2907, %v2922
    %v2931 = vmul.f32 %v2905, %v2923
    %2932 = vset.pattern.permute.xlu0 67
    %2933 = vperm.xlu0 %2932, %v104
    %v2934 = vpop.permute.xlu0 %2933
    %2936 = vset.pattern.permute.xlu0 67
    %2937 = vperm.xlu0 %2936, %v105
    %v2938 = vpop.permute.xlu0 %2937
    %v2940 = vmul.f32 %v2924, %v2934
    %v2941 = vmul.f32 %v2925, %v2934
    %v2942 = vmul.f32 %v2926, %v2934
    %v2943 = vmul.f32 %v2927, %v2934
    %v2944 = vmul.f32 %v2928, %v2938
    %v2945 = vmul.f32 %v2929, %v2938
    %v2946 = vmul.f32 %v2930, %v2938
    %v2947 = vmul.f32 %v2931, %v2938
    %v2948 = vadd.f32 %v2863, %v2940
    %v2949 = vadd.f32 %v2864, %v2941
    %v2950 = vadd.f32 %v2865, %v2942
    %v2951 = vadd.f32 %v2866, %v2943
    %v2952 = vadd.f32 %v2867, %v2944
    %v2953 = vadd.f32 %v2868, %v2945
    %v2954 = vadd.f32 %v2869, %v2946
    %v2955 = vadd.f32 %v2870, %v2947
    %2956 = vset.pattern.permute.xlu0 40
    %2957 = vperm.xlu0 %2956, %v104
    %v2958 = vpop.permute.xlu0 %2957
    %2960 = vset.pattern.permute.xlu0 40
    %2961 = vperm.xlu0 %2960, %v105
    %v2962 = vpop.permute.xlu0 %2961
    %v2964 = vmul.f32 %v2924, %v2958
    %v2965 = vmul.f32 %v2925, %v2958
    %v2966 = vmul.f32 %v2926, %v2958
    %v2967 = vmul.f32 %v2927, %v2958
    %v2968 = vmul.f32 %v2928, %v2962
    %v2969 = vmul.f32 %v2929, %v2962
    %v2970 = vmul.f32 %v2930, %v2962
    %v2971 = vmul.f32 %v2931, %v2962
    %v2972 = vadd.f32 %v2879, %v2964
    %v2973 = vadd.f32 %v2880, %v2965
    %v2974 = vadd.f32 %v2881, %v2966
    %v2975 = vadd.f32 %v2882, %v2967
    %v2976 = vadd.f32 %v2883, %v2968
    %v2977 = vadd.f32 %v2884, %v2969
    %v2978 = vadd.f32 %v2885, %v2970
    %v2979 = vadd.f32 %v2886, %v2971
    %2980 = vrot.lane.b32.xlu0 %v2457, 3
    %v2981 = vpop.permute.xlu0 %2980
    %2982 = vrot.lane.b32.xlu0 %v2461, 3
    %v2983 = vpop.permute.xlu0 %2982
    %2984 = vrot.lane.b32.xlu0 %v2458, 3
    %v2985 = vpop.permute.xlu0 %2984
    %2986 = vrot.lane.b32.xlu0 %v2462, 3
    %v2987 = vpop.permute.xlu0 %2986
    %2988 = vrot.lane.b32.xlu0 %v2459, 3
    %v2989 = vpop.permute.xlu0 %2988
    %2990 = vrot.lane.b32.xlu0 %v2463, 3
    %v2991 = vpop.permute.xlu0 %2990
    %2992 = vrot.lane.b32.xlu0 %v2460, 3
    %v2993 = vpop.permute.xlu0 %2992
    %2994 = vrot.lane.b32.xlu0 %v2464, 3
    %v2995 = vpop.permute.xlu0 %2994
    %vm2996 = vcmp.lt.s32.totalorder %v109, 3
    %v2997 = vsel %vm2996, %v2989, %v2993
    %v2998 = vsel %vm2996, %v2991, %v2995
    %v2999 = vsel %vm2996, %v2985, %v2989
    %v3000 = vsel %vm2996, %v2987, %v2991
    %v3001 = vsel %vm2996, %v2981, %v2985
    %v3002 = vsel %vm2996, %v2983, %v2987
    %v3003 = vsel %vm2996, %v2993, %v2981
    %v3004 = vsel %vm2996, %v2995, %v2983
    %vm3005 = vcmp.ge.s32.totalorder %v117, 3
    %vm3006 = vcmp.ge.s32.totalorder %v118, 3
    %vm3007 = vcmp.ge.s32.totalorder %v119, 3
    %vm3008 = vcmp.ge.s32.totalorder %v120, 3
    %v3009 = vsel %vm3005, 1, 0
    %v3010 = vsel %vm3006, 1, 0
    %v3011 = vsel %vm3007, 1, 0
    %v3012 = vsel %vm3008, 1, 0
    %v3013 = vcvt.s32.f32 %v3009
    %v3014 = vcvt.s32.f32 %v3010
    %v3015 = vcvt.s32.f32 %v3011
    %v3016 = vcvt.s32.f32 %v3012
    %v3017 = vmul.f32 %v3003, %v3013
    %v3018 = vmul.f32 %v3001, %v3014
    %v3019 = vmul.f32 %v2999, %v3015
    %v3020 = vmul.f32 %v2997, %v3016
    %v3021 = vmul.f32 %v3004, %v3013
    %v3022 = vmul.f32 %v3002, %v3014
    %v3023 = vmul.f32 %v3000, %v3015
    %v3024 = vmul.f32 %v2998, %v3016
    %3025 = vset.pattern.permute.xlu0 68
    %3026 = vperm.xlu0 %3025, %v104
    %v3027 = vpop.permute.xlu0 %3026
    %3029 = vset.pattern.permute.xlu0 68
    %3030 = vperm.xlu0 %3029, %v105
    %v3031 = vpop.permute.xlu0 %3030
    %v3033 = vmul.f32 %v3017, %v3027
    %v3034 = vmul.f32 %v3018, %v3027
    %v3035 = vmul.f32 %v3019, %v3027
    %v3036 = vmul.f32 %v3020, %v3027
    %v3037 = vmul.f32 %v3021, %v3031
    %v3038 = vmul.f32 %v3022, %v3031
    %v3039 = vmul.f32 %v3023, %v3031
    %v3040 = vmul.f32 %v3024, %v3031
    %v3041 = vadd.f32 %v2948, %v3033
    %v3042 = vadd.f32 %v2949, %v3034
    %v3043 = vadd.f32 %v2950, %v3035
    %v3044 = vadd.f32 %v2951, %v3036
    %v3045 = vadd.f32 %v2952, %v3037
    %v3046 = vadd.f32 %v2953, %v3038
    %v3047 = vadd.f32 %v2954, %v3039
    %v3048 = vadd.f32 %v2955, %v3040
    %3049 = vset.pattern.permute.xlu0 41
    %3050 = vperm.xlu0 %3049, %v104
    %v3051 = vpop.permute.xlu0 %3050
    %3053 = vset.pattern.permute.xlu0 41
    %3054 = vperm.xlu0 %3053, %v105
    %v3055 = vpop.permute.xlu0 %3054
    %v3057 = vmul.f32 %v3017, %v3051
    %v3058 = vmul.f32 %v3018, %v3051
    %v3059 = vmul.f32 %v3019, %v3051
    %v3060 = vmul.f32 %v3020, %v3051
    %v3061 = vmul.f32 %v3021, %v3055
    %v3062 = vmul.f32 %v3022, %v3055
    %v3063 = vmul.f32 %v3023, %v3055
    %v3064 = vmul.f32 %v3024, %v3055
    %v3065 = vadd.f32 %v2972, %v3057
    %v3066 = vadd.f32 %v2973, %v3058
    %v3067 = vadd.f32 %v2974, %v3059
    %v3068 = vadd.f32 %v2975, %v3060
    %v3069 = vadd.f32 %v2976, %v3061
    %v3070 = vadd.f32 %v2977, %v3062
    %v3071 = vadd.f32 %v2978, %v3063
    %v3072 = vadd.f32 %v2979, %v3064
    %3073 = vset.pattern.permute.xlu0 25
    %3074 = vperm.xlu0 %3073, %v104
    %v3075 = vpop.permute.xlu0 %3074
    %3077 = vset.pattern.permute.xlu0 25
    %3078 = vperm.xlu0 %3077, %v105
    %v3079 = vpop.permute.xlu0 %3078
    %v3081 = vmul.f32 %v3017, %v3075
    %v3082 = vmul.f32 %v3018, %v3075
    %v3083 = vmul.f32 %v3019, %v3075
    %v3084 = vmul.f32 %v3020, %v3075
    %v3085 = vmul.f32 %v3021, %v3079
    %v3086 = vmul.f32 %v3022, %v3079
    %v3087 = vmul.f32 %v3023, %v3079
    %v3088 = vmul.f32 %v3024, %v3079
    %3089 = vrot.lane.b32.xlu0 %v2457, 2
    %v3090 = vpop.permute.xlu0 %3089
    %3091 = vrot.lane.b32.xlu0 %v2461, 2
    %v3092 = vpop.permute.xlu0 %3091
    %3093 = vrot.lane.b32.xlu0 %v2458, 2
    %v3094 = vpop.permute.xlu0 %3093
    %3095 = vrot.lane.b32.xlu0 %v2462, 2
    %v3096 = vpop.permute.xlu0 %3095
    %3097 = vrot.lane.b32.xlu0 %v2459, 2
    %v3098 = vpop.permute.xlu0 %3097
    %3099 = vrot.lane.b32.xlu0 %v2463, 2
    %v3100 = vpop.permute.xlu0 %3099
    %3101 = vrot.lane.b32.xlu0 %v2460, 2
    %v3102 = vpop.permute.xlu0 %3101
    %3103 = vrot.lane.b32.xlu0 %v2464, 2
    %v3104 = vpop.permute.xlu0 %3103
    %v3105 = vsel %vm1491, %v3098, %v3102
    %v3106 = vsel %vm1491, %v3100, %v3104
    %v3107 = vsel %vm1491, %v3094, %v3098
    %v3108 = vsel %vm1491, %v3096, %v3100
    %v3109 = vsel %vm1491, %v3090, %v3094
    %v3110 = vsel %vm1491, %v3092, %v3096
    %v3111 = vsel %vm1491, %v3102, %v3090
    %v3112 = vsel %vm1491, %v3104, %v3092
    %v3113 = vmul.f32 %v3111, %v1504
    %v3114 = vmul.f32 %v3109, %v1505
    %v3115 = vmul.f32 %v3107, %v1506
    %v3116 = vmul.f32 %v3105, %v1507
    %v3117 = vmul.f32 %v3112, %v1504
    %v3118 = vmul.f32 %v3110, %v1505
    %v3119 = vmul.f32 %v3108, %v1506
    %v3120 = vmul.f32 %v3106, %v1507
    %3121 = vset.pattern.permute.xlu0 69
    %3122 = vperm.xlu0 %3121, %v104
    %v3123 = vpop.permute.xlu0 %3122
    %3125 = vset.pattern.permute.xlu0 69
    %3126 = vperm.xlu0 %3125, %v105
    %v3127 = vpop.permute.xlu0 %3126
    %v3129 = vmul.f32 %v3113, %v3123
    %v3130 = vmul.f32 %v3114, %v3123
    %v3131 = vmul.f32 %v3115, %v3123
    %v3132 = vmul.f32 %v3116, %v3123
    %v3133 = vmul.f32 %v3117, %v3127
    %v3134 = vmul.f32 %v3118, %v3127
    %v3135 = vmul.f32 %v3119, %v3127
    %v3136 = vmul.f32 %v3120, %v3127
    %v3137 = vadd.f32 %v3041, %v3129
    %v3138 = vadd.f32 %v3042, %v3130
    %v3139 = vadd.f32 %v3043, %v3131
    %v3140 = vadd.f32 %v3044, %v3132
    %v3141 = vadd.f32 %v3045, %v3133
    %v3142 = vadd.f32 %v3046, %v3134
    %v3143 = vadd.f32 %v3047, %v3135
    %v3144 = vadd.f32 %v3048, %v3136
    %3145 = vset.pattern.permute.xlu0 42
    %3146 = vperm.xlu0 %3145, %v104
    %v3147 = vpop.permute.xlu0 %3146
    %3149 = vset.pattern.permute.xlu0 42
    %3150 = vperm.xlu0 %3149, %v105
    %v3151 = vpop.permute.xlu0 %3150
    %v3153 = vmul.f32 %v3113, %v3147
    %v3154 = vmul.f32 %v3114, %v3147
    %v3155 = vmul.f32 %v3115, %v3147
    %v3156 = vmul.f32 %v3116, %v3147
    %v3157 = vmul.f32 %v3117, %v3151
    %v3158 = vmul.f32 %v3118, %v3151
    %v3159 = vmul.f32 %v3119, %v3151
    %v3160 = vmul.f32 %v3120, %v3151
    %v3161 = vadd.f32 %v3065, %v3153
    %v3162 = vadd.f32 %v3066, %v3154
    %v3163 = vadd.f32 %v3067, %v3155
    %v3164 = vadd.f32 %v3068, %v3156
    %v3165 = vadd.f32 %v3069, %v3157
    %v3166 = vadd.f32 %v3070, %v3158
    %v3167 = vadd.f32 %v3071, %v3159
    %v3168 = vadd.f32 %v3072, %v3160
    %3169 = vset.pattern.permute.xlu0 26
    %3170 = vperm.xlu0 %3169, %v104
    %v3171 = vpop.permute.xlu0 %3170
    %3173 = vset.pattern.permute.xlu0 26
    %3174 = vperm.xlu0 %3173, %v105
    %v3175 = vpop.permute.xlu0 %3174
    %v3177 = vmul.f32 %v3113, %v3171
    %v3178 = vmul.f32 %v3114, %v3171
    %v3179 = vmul.f32 %v3115, %v3171
    %v3180 = vmul.f32 %v3116, %v3171
    %v3181 = vmul.f32 %v3117, %v3175
    %v3182 = vmul.f32 %v3118, %v3175
    %v3183 = vmul.f32 %v3119, %v3175
    %v3184 = vmul.f32 %v3120, %v3175
    %v3185 = vadd.f32 %v3081, %v3177
    %v3186 = vadd.f32 %v3082, %v3178
    %v3187 = vadd.f32 %v3083, %v3179
    %v3188 = vadd.f32 %v3084, %v3180
    %v3189 = vadd.f32 %v3085, %v3181
    %v3190 = vadd.f32 %v3086, %v3182
    %v3191 = vadd.f32 %v3087, %v3183
    %v3192 = vadd.f32 %v3088, %v3184
    %3193 = vrot.lane.b32.xlu0 %v2457, 1
    %v3194 = vpop.permute.xlu0 %3193
    %3195 = vrot.lane.b32.xlu0 %v2461, 1
    %v3196 = vpop.permute.xlu0 %3195
    %3197 = vrot.lane.b32.xlu0 %v2458, 1
    %v3198 = vpop.permute.xlu0 %3197
    %3199 = vrot.lane.b32.xlu0 %v2462, 1
    %v3200 = vpop.permute.xlu0 %3199
    %3201 = vrot.lane.b32.xlu0 %v2459, 1
    %v3202 = vpop.permute.xlu0 %3201
    %3203 = vrot.lane.b32.xlu0 %v2463, 1
    %v3204 = vpop.permute.xlu0 %3203
    %3205 = vrot.lane.b32.xlu0 %v2460, 1
    %v3206 = vpop.permute.xlu0 %3205
    %3207 = vrot.lane.b32.xlu0 %v2464, 1
    %v3208 = vpop.permute.xlu0 %3207
    %v3209 = vsel %vm1556, %v3202, %v3206
    %v3210 = vsel %vm1556, %v3204, %v3208
    %v3211 = vsel %vm1556, %v3198, %v3202
    %v3212 = vsel %vm1556, %v3200, %v3204
    %v3213 = vsel %vm1556, %v3194, %v3198
    %v3214 = vsel %vm1556, %v3196, %v3200
    %v3215 = vsel %vm1556, %v3206, %v3194
    %v3216 = vsel %vm1556, %v3208, %v3196
    %v3217 = vmul.f32 %v3215, %v1569
    %v3218 = vmul.f32 %v3213, %v1570
    %v3219 = vmul.f32 %v3211, %v1571
    %v3220 = vmul.f32 %v3209, %v1572
    %v3221 = vmul.f32 %v3216, %v1569
    %v3222 = vmul.f32 %v3214, %v1570
    %v3223 = vmul.f32 %v3212, %v1571
    %v3224 = vmul.f32 %v3210, %v1572
    %3225 = vset.pattern.permute.xlu0 70
    %3226 = vperm.xlu0 %3225, %v104
    %v3227 = vpop.permute.xlu0 %3226
    %3229 = vset.pattern.permute.xlu0 70
    %3230 = vperm.xlu0 %3229, %v105
    %v3231 = vpop.permute.xlu0 %3230
    %v3233 = vmul.f32 %v3217, %v3227
    %v3234 = vmul.f32 %v3218, %v3227
    %v3235 = vmul.f32 %v3219, %v3227
    %v3236 = vmul.f32 %v3220, %v3227
    %v3237 = vmul.f32 %v3221, %v3231
    %v3238 = vmul.f32 %v3222, %v3231
    %v3239 = vmul.f32 %v3223, %v3231
    %v3240 = vmul.f32 %v3224, %v3231
    %v3241 = vadd.f32 %v3137, %v3233
    %v3242 = vadd.f32 %v3138, %v3234
    %v3243 = vadd.f32 %v3139, %v3235
    %v3244 = vadd.f32 %v3140, %v3236
    %v3245 = vadd.f32 %v3141, %v3237
    %v3246 = vadd.f32 %v3142, %v3238
    %v3247 = vadd.f32 %v3143, %v3239
    %v3248 = vadd.f32 %v3144, %v3240
    %3249 = vset.pattern.permute.xlu0 43
    %3250 = vperm.xlu0 %3249, %v104
    %v3251 = vpop.permute.xlu0 %3250
    %3253 = vset.pattern.permute.xlu0 43
    %3254 = vperm.xlu0 %3253, %v105
    %v3255 = vpop.permute.xlu0 %3254
    %v3257 = vmul.f32 %v3217, %v3251
    %v3258 = vmul.f32 %v3218, %v3251
    %v3259 = vmul.f32 %v3219, %v3251
    %v3260 = vmul.f32 %v3220, %v3251
    %v3261 = vmul.f32 %v3221, %v3255
    %v3262 = vmul.f32 %v3222, %v3255
    %v3263 = vmul.f32 %v3223, %v3255
    %v3264 = vmul.f32 %v3224, %v3255
    %v3265 = vadd.f32 %v3161, %v3257
    %v3266 = vadd.f32 %v3162, %v3258
    %v3267 = vadd.f32 %v3163, %v3259
    %v3268 = vadd.f32 %v3164, %v3260
    %v3269 = vadd.f32 %v3165, %v3261
    %v3270 = vadd.f32 %v3166, %v3262
    %v3271 = vadd.f32 %v3167, %v3263
    %v3272 = vadd.f32 %v3168, %v3264
    %3273 = vset.pattern.permute.xlu0 27
    %3274 = vperm.xlu0 %3273, %v104
    %v3275 = vpop.permute.xlu0 %3274
    %3277 = vset.pattern.permute.xlu0 27
    %3278 = vperm.xlu0 %3277, %v105
    %v3279 = vpop.permute.xlu0 %3278
    %v3281 = vmul.f32 %v3217, %v3275
    %v3282 = vmul.f32 %v3218, %v3275
    %v3283 = vmul.f32 %v3219, %v3275
    %v3284 = vmul.f32 %v3220, %v3275
    %v3285 = vmul.f32 %v3221, %v3279
    %v3286 = vmul.f32 %v3222, %v3279
    %v3287 = vmul.f32 %v3223, %v3279
    %v3288 = vmul.f32 %v3224, %v3279
    %v3289 = vadd.f32 %v3185, %v3281
    %v3290 = vadd.f32 %v3186, %v3282
    %v3291 = vadd.f32 %v3187, %v3283
    %v3292 = vadd.f32 %v3188, %v3284
    %v3293 = vadd.f32 %v3189, %v3285
    %v3294 = vadd.f32 %v3190, %v3286
    %v3295 = vadd.f32 %v3191, %v3287
    %v3296 = vadd.f32 %v3192, %v3288
    %3297 = vset.pattern.permute.xlu0 71
    %3298 = vperm.xlu0 %3297, %v104
    %v3299 = vpop.permute.xlu0 %3298
    %3301 = vset.pattern.permute.xlu0 71
    %3302 = vperm.xlu0 %3301, %v105
    %v3303 = vpop.permute.xlu0 %3302
    %v3305 = vmul.f32 %v2457, %v3299
    %v3306 = vmul.f32 %v2458, %v3299
    %v3307 = vmul.f32 %v2459, %v3299
    %v3308 = vmul.f32 %v2460, %v3299
    %v3309 = vmul.f32 %v2461, %v3303
    %v3310 = vmul.f32 %v2462, %v3303
    %v3311 = vmul.f32 %v2463, %v3303
    %v3312 = vmul.f32 %v2464, %v3303
    %v3313 = vadd.f32 %v3241, %v3305
    %v3314 = vadd.f32 %v3242, %v3306
    %v3315 = vadd.f32 %v3243, %v3307
    %v3316 = vadd.f32 %v3244, %v3308
    %v3317 = vadd.f32 %v3245, %v3309
    %v3318 = vadd.f32 %v3246, %v3310
    %v3319 = vadd.f32 %v3247, %v3311
    %v3320 = vadd.f32 %v3248, %v3312
    %3321 = vset.pattern.permute.xlu0 44
    %3322 = vperm.xlu0 %3321, %v104
    %v3323 = vpop.permute.xlu0 %3322
    %3325 = vset.pattern.permute.xlu0 44
    %3326 = vperm.xlu0 %3325, %v105
    %v3327 = vpop.permute.xlu0 %3326
    %v3329 = vmul.f32 %v2457, %v3323
    %v3330 = vmul.f32 %v2458, %v3323
    %v3331 = vmul.f32 %v2459, %v3323
    %v3332 = vmul.f32 %v2460, %v3323
    %v3333 = vmul.f32 %v2461, %v3327
    %v3334 = vmul.f32 %v2462, %v3327
    %v3335 = vmul.f32 %v2463, %v3327
    %v3336 = vmul.f32 %v2464, %v3327
    %v3337 = vadd.f32 %v3265, %v3329
    %v3338 = vadd.f32 %v3266, %v3330
    %v3339 = vadd.f32 %v3267, %v3331
    %v3340 = vadd.f32 %v3268, %v3332
    %v3341 = vadd.f32 %v3269, %v3333
    %v3342 = vadd.f32 %v3270, %v3334
    %v3343 = vadd.f32 %v3271, %v3335
    %v3344 = vadd.f32 %v3272, %v3336
    %3345 = vset.pattern.permute.xlu0 28
    %3346 = vperm.xlu0 %3345, %v104
    %v3347 = vpop.permute.xlu0 %3346
    %3349 = vset.pattern.permute.xlu0 28
    %3350 = vperm.xlu0 %3349, %v105
    %v3351 = vpop.permute.xlu0 %3350
    %v3353 = vmul.f32 %v2457, %v3347
    %v3354 = vmul.f32 %v2458, %v3347
    %v3355 = vmul.f32 %v2459, %v3347
    %v3356 = vmul.f32 %v2460, %v3347
    %v3357 = vmul.f32 %v2461, %v3351
    %v3358 = vmul.f32 %v2462, %v3351
    %v3359 = vmul.f32 %v2463, %v3351
    %v3360 = vmul.f32 %v2464, %v3351
    %v3361 = vadd.f32 %v3289, %v3353
    %v3362 = vadd.f32 %v3290, %v3354
    %v3363 = vadd.f32 %v3291, %v3355
    %v3364 = vadd.f32 %v3292, %v3356
    %v3365 = vadd.f32 %v3293, %v3357
    %v3366 = vadd.f32 %v3294, %v3358
    %v3367 = vadd.f32 %v3295, %v3359
    %v3368 = vadd.f32 %v3296, %v3360
    %3369 = vrot.lane.b32.xlu0 %v2457, 127
    %v3370 = vpop.permute.xlu0 %3369
    %3371 = vrot.lane.b32.xlu0 %v2461, 127
    %v3372 = vpop.permute.xlu0 %3371
    %3373 = vrot.lane.b32.xlu0 %v2458, 127
    %v3374 = vpop.permute.xlu0 %3373
    %3375 = vrot.lane.b32.xlu0 %v2462, 127
    %v3376 = vpop.permute.xlu0 %3375
    %3377 = vrot.lane.b32.xlu0 %v2459, 127
    %v3378 = vpop.permute.xlu0 %3377
    %3379 = vrot.lane.b32.xlu0 %v2463, 127
    %v3380 = vpop.permute.xlu0 %3379
    %3381 = vrot.lane.b32.xlu0 %v2460, 127
    %v3382 = vpop.permute.xlu0 %3381
    %3383 = vrot.lane.b32.xlu0 %v2464, 127
    %v3384 = vpop.permute.xlu0 %3383
    %v3385 = vsel %vm1645, %v3378, %v3382
    %v3386 = vsel %vm1645, %v3380, %v3384
    %v3387 = vsel %vm1645, %v3374, %v3378
    %v3388 = vsel %vm1645, %v3376, %v3380
    %v3389 = vsel %vm1645, %v3370, %v3374
    %v3390 = vsel %vm1645, %v3372, %v3376
    %v3391 = vsel %vm1645, %v3382, %v3370
    %v3392 = vsel %vm1645, %v3384, %v3372
    %v3393 = vmul.f32 %v3389, %v1658
    %v3394 = vmul.f32 %v3387, %v1659
    %v3395 = vmul.f32 %v3385, %v1660
    %v3396 = vmul.f32 %v3391, %v1661
    %v3397 = vmul.f32 %v3390, %v1658
    %v3398 = vmul.f32 %v3388, %v1659
    %v3399 = vmul.f32 %v3386, %v1660
    %v3400 = vmul.f32 %v3392, %v1661
    %3401 = vset.pattern.permute.xlu0 72
    %3402 = vperm.xlu0 %3401, %v104
    %v3403 = vpop.permute.xlu0 %3402
    %3405 = vset.pattern.permute.xlu0 72
    %3406 = vperm.xlu0 %3405, %v105
    %v3407 = vpop.permute.xlu0 %3406
    %v3409 = vmul.f32 %v3393, %v3403
    %v3410 = vmul.f32 %v3394, %v3403
    %v3411 = vmul.f32 %v3395, %v3403
    %v3412 = vmul.f32 %v3396, %v3403
    %v3413 = vmul.f32 %v3397, %v3407
    %v3414 = vmul.f32 %v3398, %v3407
    %v3415 = vmul.f32 %v3399, %v3407
    %v3416 = vmul.f32 %v3400, %v3407
    %v3417 = vadd.f32 %v3313, %v3409
    %v3418 = vadd.f32 %v3314, %v3410
    %v3419 = vadd.f32 %v3315, %v3411
    %v3420 = vadd.f32 %v3316, %v3412
    %v3421 = vadd.f32 %v3317, %v3413
    %v3422 = vadd.f32 %v3318, %v3414
    %v3423 = vadd.f32 %v3319, %v3415
    %v3424 = vadd.f32 %v3320, %v3416
    %3425 = vset.pattern.permute.xlu0 45
    %3426 = vperm.xlu0 %3425, %v104
    %v3427 = vpop.permute.xlu0 %3426
    %3429 = vset.pattern.permute.xlu0 45
    %3430 = vperm.xlu0 %3429, %v105
    %v3431 = vpop.permute.xlu0 %3430
    %v3433 = vmul.f32 %v3393, %v3427
    %v3434 = vmul.f32 %v3394, %v3427
    %v3435 = vmul.f32 %v3395, %v3427
    %v3436 = vmul.f32 %v3396, %v3427
    %v3437 = vmul.f32 %v3397, %v3431
    %v3438 = vmul.f32 %v3398, %v3431
    %v3439 = vmul.f32 %v3399, %v3431
    %v3440 = vmul.f32 %v3400, %v3431
    %v3441 = vadd.f32 %v3337, %v3433
    %v3442 = vadd.f32 %v3338, %v3434
    %v3443 = vadd.f32 %v3339, %v3435
    %v3444 = vadd.f32 %v3340, %v3436
    %v3445 = vadd.f32 %v3341, %v3437
    %v3446 = vadd.f32 %v3342, %v3438
    %v3447 = vadd.f32 %v3343, %v3439
    %v3448 = vadd.f32 %v3344, %v3440
    %3449 = vset.pattern.permute.xlu0 29
    %3450 = vperm.xlu0 %3449, %v104
    %v3451 = vpop.permute.xlu0 %3450
    %3453 = vset.pattern.permute.xlu0 29
    %3454 = vperm.xlu0 %3453, %v105
    %v3455 = vpop.permute.xlu0 %3454
    %v3457 = vmul.f32 %v3393, %v3451
    %v3458 = vmul.f32 %v3394, %v3451
    %v3459 = vmul.f32 %v3395, %v3451
    %v3460 = vmul.f32 %v3396, %v3451
    %v3461 = vmul.f32 %v3397, %v3455
    %v3462 = vmul.f32 %v3398, %v3455
    %v3463 = vmul.f32 %v3399, %v3455
    %v3464 = vmul.f32 %v3400, %v3455
    %v3465 = vadd.f32 %v3361, %v3457
    %v3466 = vadd.f32 %v3362, %v3458
    %v3467 = vadd.f32 %v3363, %v3459
    %v3468 = vadd.f32 %v3364, %v3460
    %v3469 = vadd.f32 %v3365, %v3461
    %v3470 = vadd.f32 %v3366, %v3462
    %v3471 = vadd.f32 %v3367, %v3463
    %v3472 = vadd.f32 %v3368, %v3464
    %3473 = vrot.lane.b32.xlu0 %v2457, 126
    %v3474 = vpop.permute.xlu0 %3473
    %3475 = vrot.lane.b32.xlu0 %v2461, 126
    %v3476 = vpop.permute.xlu0 %3475
    %3477 = vrot.lane.b32.xlu0 %v2458, 126
    %v3478 = vpop.permute.xlu0 %3477
    %3479 = vrot.lane.b32.xlu0 %v2462, 126
    %v3480 = vpop.permute.xlu0 %3479
    %3481 = vrot.lane.b32.xlu0 %v2459, 126
    %v3482 = vpop.permute.xlu0 %3481
    %3483 = vrot.lane.b32.xlu0 %v2463, 126
    %v3484 = vpop.permute.xlu0 %3483
    %3485 = vrot.lane.b32.xlu0 %v2460, 126
    %v3486 = vpop.permute.xlu0 %3485
    %3487 = vrot.lane.b32.xlu0 %v2464, 126
    %v3488 = vpop.permute.xlu0 %3487
    %v3489 = vsel %vm1710, %v3482, %v3486
    %v3490 = vsel %vm1710, %v3484, %v3488
    %v3491 = vsel %vm1710, %v3478, %v3482
    %v3492 = vsel %vm1710, %v3480, %v3484
    %v3493 = vsel %vm1710, %v3474, %v3478
    %v3494 = vsel %vm1710, %v3476, %v3480
    %v3495 = vsel %vm1710, %v3486, %v3474
    %v3496 = vsel %vm1710, %v3488, %v3476
    %v3497 = vmul.f32 %v3493, %v1723
    %v3498 = vmul.f32 %v3491, %v1724
    %v3499 = vmul.f32 %v3489, %v1725
    %v3500 = vmul.f32 %v3495, %v1726
    %v3501 = vmul.f32 %v3494, %v1723
    %v3502 = vmul.f32 %v3492, %v1724
    %v3503 = vmul.f32 %v3490, %v1725
    %v3504 = vmul.f32 %v3496, %v1726
    %3505 = vset.pattern.permute.xlu0 73
    %3506 = vperm.xlu0 %3505, %v104
    %v3507 = vpop.permute.xlu0 %3506
    %3509 = vset.pattern.permute.xlu0 73
    %3510 = vperm.xlu0 %3509, %v105
    %v3511 = vpop.permute.xlu0 %3510
    %v3513 = vmul.f32 %v3497, %v3507
    %v3514 = vmul.f32 %v3498, %v3507
    %v3515 = vmul.f32 %v3499, %v3507
    %v3516 = vmul.f32 %v3500, %v3507
    %v3517 = vmul.f32 %v3501, %v3511
    %v3518 = vmul.f32 %v3502, %v3511
    %v3519 = vmul.f32 %v3503, %v3511
    %v3520 = vmul.f32 %v3504, %v3511
    %v3521 = vadd.f32 %v3417, %v3513
    %v3522 = vadd.f32 %v3418, %v3514
    %v3523 = vadd.f32 %v3419, %v3515
    %v3524 = vadd.f32 %v3420, %v3516
    %v3525 = vadd.f32 %v3421, %v3517
    %v3526 = vadd.f32 %v3422, %v3518
    %v3527 = vadd.f32 %v3423, %v3519
    %v3528 = vadd.f32 %v3424, %v3520
    %3529 = vset.pattern.permute.xlu0 46
    %3530 = vperm.xlu0 %3529, %v104
    %v3531 = vpop.permute.xlu0 %3530
    %3533 = vset.pattern.permute.xlu0 46
    %3534 = vperm.xlu0 %3533, %v105
    %v3535 = vpop.permute.xlu0 %3534
    %v3537 = vmul.f32 %v3497, %v3531
    %v3538 = vmul.f32 %v3498, %v3531
    %v3539 = vmul.f32 %v3499, %v3531
    %v3540 = vmul.f32 %v3500, %v3531
    %v3541 = vmul.f32 %v3501, %v3535
    %v3542 = vmul.f32 %v3502, %v3535
    %v3543 = vmul.f32 %v3503, %v3535
    %v3544 = vmul.f32 %v3504, %v3535
    %v3545 = vadd.f32 %v3441, %v3537
    %v3546 = vadd.f32 %v3442, %v3538
    %v3547 = vadd.f32 %v3443, %v3539
    %v3548 = vadd.f32 %v3444, %v3540
    %v3549 = vadd.f32 %v3445, %v3541
    %v3550 = vadd.f32 %v3446, %v3542
    %v3551 = vadd.f32 %v3447, %v3543
    %v3552 = vadd.f32 %v3448, %v3544
    %3553 = vset.pattern.permute.xlu0 30
    %3554 = vperm.xlu0 %3553, %v104
    %v3555 = vpop.permute.xlu0 %3554
    %3557 = vset.pattern.permute.xlu0 30
    %3558 = vperm.xlu0 %3557, %v105
    %v3559 = vpop.permute.xlu0 %3558
    %v3561 = vmul.f32 %v3497, %v3555
    %v3562 = vmul.f32 %v3498, %v3555
    %v3563 = vmul.f32 %v3499, %v3555
    %v3564 = vmul.f32 %v3500, %v3555
    %v3565 = vmul.f32 %v3501, %v3559
    %v3566 = vmul.f32 %v3502, %v3559
    %v3567 = vmul.f32 %v3503, %v3559
    %v3568 = vmul.f32 %v3504, %v3559
    %v3569 = vadd.f32 %v3465, %v3561
    %v3570 = vadd.f32 %v3466, %v3562
    %v3571 = vadd.f32 %v3467, %v3563
    %v3572 = vadd.f32 %v3468, %v3564
    %v3573 = vadd.f32 %v3469, %v3565
    %v3574 = vadd.f32 %v3470, %v3566
    %v3575 = vadd.f32 %v3471, %v3567
    %v3576 = vadd.f32 %v3472, %v3568
    %3577 = vrot.lane.b32.xlu0 %v2457, 125
    %v3578 = vpop.permute.xlu0 %3577
    %3579 = vrot.lane.b32.xlu0 %v2461, 125
    %v3580 = vpop.permute.xlu0 %3579
    %3581 = vrot.lane.b32.xlu0 %v2458, 125
    %v3582 = vpop.permute.xlu0 %3581
    %3583 = vrot.lane.b32.xlu0 %v2462, 125
    %v3584 = vpop.permute.xlu0 %3583
    %3585 = vrot.lane.b32.xlu0 %v2459, 125
    %v3586 = vpop.permute.xlu0 %3585
    %3587 = vrot.lane.b32.xlu0 %v2463, 125
    %v3588 = vpop.permute.xlu0 %3587
    %3589 = vrot.lane.b32.xlu0 %v2460, 125
    %v3590 = vpop.permute.xlu0 %3589
    %3591 = vrot.lane.b32.xlu0 %v2464, 125
    %v3592 = vpop.permute.xlu0 %3591
    %vm3593 = vcmp.lt.s32.totalorder %v109, 125
    %v3594 = vsel %vm3593, %v3586, %v3590
    %v3595 = vsel %vm3593, %v3588, %v3592
    %v3596 = vsel %vm3593, %v3582, %v3586
    %v3597 = vsel %vm3593, %v3584, %v3588
    %v3598 = vsel %vm3593, %v3578, %v3582
    %v3599 = vsel %vm3593, %v3580, %v3584
    %v3600 = vsel %vm3593, %v3590, %v3578
    %v3601 = vsel %vm3593, %v3592, %v3580
    %vm3602 = vcmp.lt.s32.totalorder %v117, 13
    %vm3603 = vcmp.lt.s32.totalorder %v118, 13
    %vm3604 = vcmp.lt.s32.totalorder %v119, 13
    %vm3605 = vcmp.lt.s32.totalorder %v120, 13
    %v3606 = vsel %vm3602, 1, 0
    %v3607 = vsel %vm3603, 1, 0
    %v3608 = vsel %vm3604, 1, 0
    %v3609 = vsel %vm3605, 1, 0
    %v3610 = vcvt.s32.f32 %v3606
    %v3611 = vcvt.s32.f32 %v3607
    %v3612 = vcvt.s32.f32 %v3608
    %v3613 = vcvt.s32.f32 %v3609
    %v3614 = vmul.f32 %v3598, %v3610
    %v3615 = vmul.f32 %v3596, %v3611
    %v3616 = vmul.f32 %v3594, %v3612
    %v3617 = vmul.f32 %v3600, %v3613
    %v3618 = vmul.f32 %v3599, %v3610
    %v3619 = vmul.f32 %v3597, %v3611
    %v3620 = vmul.f32 %v3595, %v3612
    %v3621 = vmul.f32 %v3601, %v3613
    %3622 = vset.pattern.permute.xlu0 74
    %3623 = vperm.xlu0 %3622, %v104
    %v3624 = vpop.permute.xlu0 %3623
    %3626 = vset.pattern.permute.xlu0 74
    %3627 = vperm.xlu0 %3626, %v105
    %v3628 = vpop.permute.xlu0 %3627
    %v3630 = vmul.f32 %v3614, %v3624
    %v3631 = vmul.f32 %v3615, %v3624
    %v3632 = vmul.f32 %v3616, %v3624
    %v3633 = vmul.f32 %v3617, %v3624
    %v3634 = vmul.f32 %v3618, %v3628
    %v3635 = vmul.f32 %v3619, %v3628
    %v3636 = vmul.f32 %v3620, %v3628
    %v3637 = vmul.f32 %v3621, %v3628
    %v3638 = vadd.f32 %v3521, %v3630
    %v3639 = vadd.f32 %v3522, %v3631
    %v3640 = vadd.f32 %v3523, %v3632
    %v3641 = vadd.f32 %v3524, %v3633
    %v3642 = vadd.f32 %v3525, %v3634
    %v3643 = vadd.f32 %v3526, %v3635
    %v3644 = vadd.f32 %v3527, %v3636
    %v3645 = vadd.f32 %v3528, %v3637
    %3646 = vset.pattern.permute.xlu0 47
    %3647 = vperm.xlu0 %3646, %v104
    %v3648 = vpop.permute.xlu0 %3647
    %3650 = vset.pattern.permute.xlu0 47
    %3651 = vperm.xlu0 %3650, %v105
    %v3652 = vpop.permute.xlu0 %3651
    %v3654 = vmul.f32 %v3614, %v3648
    %v3655 = vmul.f32 %v3615, %v3648
    %v3656 = vmul.f32 %v3616, %v3648
    %v3657 = vmul.f32 %v3617, %v3648
    %v3658 = vmul.f32 %v3618, %v3652
    %v3659 = vmul.f32 %v3619, %v3652
    %v3660 = vmul.f32 %v3620, %v3652
    %v3661 = vmul.f32 %v3621, %v3652
    %v3662 = vadd.f32 %v3545, %v3654
    %v3663 = vadd.f32 %v3546, %v3655
    %v3664 = vadd.f32 %v3547, %v3656
    %v3665 = vadd.f32 %v3548, %v3657
    %v3666 = vadd.f32 %v3549, %v3658
    %v3667 = vadd.f32 %v3550, %v3659
    %v3668 = vadd.f32 %v3551, %v3660
    %v3669 = vadd.f32 %v3552, %v3661
    %3670 = vset.pattern.permute.xlu0 31
    %3671 = vperm.xlu0 %3670, %v104
    %v3672 = vpop.permute.xlu0 %3671
    %3674 = vset.pattern.permute.xlu0 31
    %3675 = vperm.xlu0 %3674, %v105
    %v3676 = vpop.permute.xlu0 %3675
    %v3678 = vmul.f32 %v3614, %v3672
    %v3679 = vmul.f32 %v3615, %v3672
    %v3680 = vmul.f32 %v3616, %v3672
    %v3681 = vmul.f32 %v3617, %v3672
    %v3682 = vmul.f32 %v3618, %v3676
    %v3683 = vmul.f32 %v3619, %v3676
    %v3684 = vmul.f32 %v3620, %v3676
    %v3685 = vmul.f32 %v3621, %v3676
    %v3686 = vadd.f32 %v3569, %v3678
    %v3687 = vadd.f32 %v3570, %v3679
    %v3688 = vadd.f32 %v3571, %v3680
    %v3689 = vadd.f32 %v3572, %v3681
    %v3690 = vadd.f32 %v3573, %v3682
    %v3691 = vadd.f32 %v3574, %v3683
    %v3692 = vadd.f32 %v3575, %v3684
    %v3693 = vadd.f32 %v3576, %v3685
    %3694 = vrot.lane.b32.xlu0 %v2457, 124
    %v3695 = vpop.permute.xlu0 %3694
    %3696 = vrot.lane.b32.xlu0 %v2461, 124
    %v3697 = vpop.permute.xlu0 %3696
    %3698 = vrot.lane.b32.xlu0 %v2458, 124
    %v3699 = vpop.permute.xlu0 %3698
    %3700 = vrot.lane.b32.xlu0 %v2462, 124
    %v3701 = vpop.permute.xlu0 %3700
    %3702 = vrot.lane.b32.xlu0 %v2459, 124
    %v3703 = vpop.permute.xlu0 %3702
    %3704 = vrot.lane.b32.xlu0 %v2463, 124
    %v3705 = vpop.permute.xlu0 %3704
    %3706 = vrot.lane.b32.xlu0 %v2460, 124
    %v3707 = vpop.permute.xlu0 %3706
    %3708 = vrot.lane.b32.xlu0 %v2464, 124
    %v3709 = vpop.permute.xlu0 %3708
    %vm3710 = vcmp.lt.s32.totalorder %v109, 124
    %v3711 = vsel %vm3710, %v3703, %v3707
    %v3712 = vsel %vm3710, %v3705, %v3709
    %v3713 = vsel %vm3710, %v3699, %v3703
    %v3714 = vsel %vm3710, %v3701, %v3705
    %v3715 = vsel %vm3710, %v3695, %v3699
    %v3716 = vsel %vm3710, %v3697, %v3701
    %v3717 = vsel %vm3710, %v3707, %v3695
    %v3718 = vsel %vm3710, %v3709, %v3697
    %vm3719 = vcmp.lt.s32.totalorder %v117, 12
    %vm3720 = vcmp.lt.s32.totalorder %v118, 12
    %vm3721 = vcmp.lt.s32.totalorder %v119, 12
    %vm3722 = vcmp.lt.s32.totalorder %v120, 12
    %v3723 = vsel %vm3719, 1, 0
    %v3724 = vsel %vm3720, 1, 0
    %v3725 = vsel %vm3721, 1, 0
    %v3726 = vsel %vm3722, 1, 0
    %v3727 = vcvt.s32.f32 %v3723
    %v3728 = vcvt.s32.f32 %v3724
    %v3729 = vcvt.s32.f32 %v3725
    %v3730 = vcvt.s32.f32 %v3726
    %v3731 = vmul.f32 %v3715, %v3727
    %v3732 = vmul.f32 %v3713, %v3728
    %v3733 = vmul.f32 %v3711, %v3729
    %v3734 = vmul.f32 %v3717, %v3730
    %v3735 = vmul.f32 %v3716, %v3727
    %v3736 = vmul.f32 %v3714, %v3728
    %v3737 = vmul.f32 %v3712, %v3729
    %v3738 = vmul.f32 %v3718, %v3730
    %3739 = vset.pattern.permute.xlu0 75
    %3740 = vperm.xlu0 %3739, %v104
    %v3741 = vpop.permute.xlu0 %3740
    %3743 = vset.pattern.permute.xlu0 75
    %3744 = vperm.xlu0 %3743, %v105
    %v3745 = vpop.permute.xlu0 %3744
    %v3747 = vmul.f32 %v3731, %v3741
    %v3748 = vmul.f32 %v3732, %v3741
    %v3749 = vmul.f32 %v3733, %v3741
    %v3750 = vmul.f32 %v3734, %v3741
    %v3751 = vmul.f32 %v3735, %v3745
    %v3752 = vmul.f32 %v3736, %v3745
    %v3753 = vmul.f32 %v3737, %v3745
    %v3754 = vmul.f32 %v3738, %v3745
    %v3755 = vadd.f32 %v3638, %v3747
    %v3756 = vadd.f32 %v3639, %v3748
    %v3757 = vadd.f32 %v3640, %v3749
    %v3758 = vadd.f32 %v3641, %v3750
    %v3759 = vadd.f32 %v3642, %v3751
    %v3760 = vadd.f32 %v3643, %v3752
    %v3761 = vadd.f32 %v3644, %v3753
    %v3762 = vadd.f32 %v3645, %v3754
    %3763 = vset.pattern.permute.xlu0 48
    %3764 = vperm.xlu0 %3763, %v104
    %v3765 = vpop.permute.xlu0 %3764
    %3767 = vset.pattern.permute.xlu0 48
    %3768 = vperm.xlu0 %3767, %v105
    %v3769 = vpop.permute.xlu0 %3768
    %v3771 = vmul.f32 %v3731, %v3765
    %v3772 = vmul.f32 %v3732, %v3765
    %v3773 = vmul.f32 %v3733, %v3765
    %v3774 = vmul.f32 %v3734, %v3765
    %v3775 = vmul.f32 %v3735, %v3769
    %v3776 = vmul.f32 %v3736, %v3769
    %v3777 = vmul.f32 %v3737, %v3769
    %v3778 = vmul.f32 %v3738, %v3769
    %v3779 = vadd.f32 %v3662, %v3771
    %v3780 = vadd.f32 %v3663, %v3772
    %v3781 = vadd.f32 %v3664, %v3773
    %v3782 = vadd.f32 %v3665, %v3774
    %v3783 = vadd.f32 %v3666, %v3775
    %v3784 = vadd.f32 %v3667, %v3776
    %v3785 = vadd.f32 %v3668, %v3777
    %v3786 = vadd.f32 %v3669, %v3778
    %3787 = vrot.lane.b32.xlu0 %v2457, 123
    %v3788 = vpop.permute.xlu0 %3787
    %3789 = vrot.lane.b32.xlu0 %v2461, 123
    %v3790 = vpop.permute.xlu0 %3789
    %3791 = vrot.lane.b32.xlu0 %v2458, 123
    %v3792 = vpop.permute.xlu0 %3791
    %3793 = vrot.lane.b32.xlu0 %v2462, 123
    %v3794 = vpop.permute.xlu0 %3793
    %3795 = vrot.lane.b32.xlu0 %v2459, 123
    %v3796 = vpop.permute.xlu0 %3795
    %3797 = vrot.lane.b32.xlu0 %v2463, 123
    %v3798 = vpop.permute.xlu0 %3797
    %3799 = vrot.lane.b32.xlu0 %v2460, 123
    %v3800 = vpop.permute.xlu0 %3799
    %3801 = vrot.lane.b32.xlu0 %v2464, 123
    %v3802 = vpop.permute.xlu0 %3801
    %vm3803 = vcmp.lt.s32.totalorder %v109, 123
    %v3804 = vsel %vm3803, %v3796, %v3800
    %v3805 = vsel %vm3803, %v3798, %v3802
    %v3806 = vsel %vm3803, %v3792, %v3796
    %v3807 = vsel %vm3803, %v3794, %v3798
    %v3808 = vsel %vm3803, %v3788, %v3792
    %v3809 = vsel %vm3803, %v3790, %v3794
    %v3810 = vsel %vm3803, %v3800, %v3788
    %v3811 = vsel %vm3803, %v3802, %v3790
    %vm3812 = vcmp.lt.s32.totalorder %v117, 11
    %vm3813 = vcmp.lt.s32.totalorder %v118, 11
    %vm3814 = vcmp.lt.s32.totalorder %v119, 11
    %vm3815 = vcmp.lt.s32.totalorder %v120, 11
    %v3816 = vsel %vm3812, 1, 0
    %v3817 = vsel %vm3813, 1, 0
    %v3818 = vsel %vm3814, 1, 0
    %v3819 = vsel %vm3815, 1, 0
    %v3820 = vcvt.s32.f32 %v3816
    %v3821 = vcvt.s32.f32 %v3817
    %v3822 = vcvt.s32.f32 %v3818
    %v3823 = vcvt.s32.f32 %v3819
    %v3824 = vmul.f32 %v3808, %v3820
    %v3825 = vmul.f32 %v3806, %v3821
    %v3826 = vmul.f32 %v3804, %v3822
    %v3827 = vmul.f32 %v3810, %v3823
    %v3828 = vmul.f32 %v3809, %v3820
    %v3829 = vmul.f32 %v3807, %v3821
    %v3830 = vmul.f32 %v3805, %v3822
    %v3831 = vmul.f32 %v3811, %v3823
    %3832 = vset.pattern.permute.xlu0 76
    %3833 = vperm.xlu0 %3832, %v104
    %v3834 = vpop.permute.xlu0 %3833
    %3836 = vset.pattern.permute.xlu0 76
    %3837 = vperm.xlu0 %3836, %v105
    %v3838 = vpop.permute.xlu0 %3837
    %v3840 = vmul.f32 %v3824, %v3834
    %v3841 = vmul.f32 %v3825, %v3834
    %v3842 = vmul.f32 %v3826, %v3834
    %v3843 = vmul.f32 %v3827, %v3834
    %v3844 = vmul.f32 %v3828, %v3838
    %v3845 = vmul.f32 %v3829, %v3838
    %v3846 = vmul.f32 %v3830, %v3838
    %v3847 = vmul.f32 %v3831, %v3838
    %v3848 = vadd.f32 %v3755, %v3840
    %v3849 = vadd.f32 %v3756, %v3841
    %v3850 = vadd.f32 %v3757, %v3842
    %v3851 = vadd.f32 %v3758, %v3843
    %v3852 = vadd.f32 %v3759, %v3844
    %v3853 = vadd.f32 %v3760, %v3845
    %v3854 = vadd.f32 %v3761, %v3846
    %v3855 = vadd.f32 %v3762, %v3847
    %3856 = vset.pattern.permute.xlu0 49
    %3857 = vperm.xlu0 %3856, %v104
    %v3858 = vpop.permute.xlu0 %3857
    %3860 = vset.pattern.permute.xlu0 49
    %3861 = vperm.xlu0 %3860, %v105
    %v3862 = vpop.permute.xlu0 %3861
    %v3864 = vmul.f32 %v3824, %v3858
    %v3865 = vmul.f32 %v3825, %v3858
    %v3866 = vmul.f32 %v3826, %v3858
    %v3867 = vmul.f32 %v3827, %v3858
    %v3868 = vmul.f32 %v3828, %v3862
    %v3869 = vmul.f32 %v3829, %v3862
    %v3870 = vmul.f32 %v3830, %v3862
    %v3871 = vmul.f32 %v3831, %v3862
    %v3872 = vadd.f32 %v3779, %v3864
    %v3873 = vadd.f32 %v3780, %v3865
    %v3874 = vadd.f32 %v3781, %v3866
    %v3875 = vadd.f32 %v3782, %v3867
    %v3876 = vadd.f32 %v3783, %v3868
    %v3877 = vadd.f32 %v3784, %v3869
    %v3878 = vadd.f32 %v3785, %v3870
    %v3879 = vadd.f32 %v3786, %v3871
    %3880 = vrot.lane.b32.xlu0 %v2457, 122
    %v3881 = vpop.permute.xlu0 %3880
    %3882 = vrot.lane.b32.xlu0 %v2461, 122
    %v3883 = vpop.permute.xlu0 %3882
    %3884 = vrot.lane.b32.xlu0 %v2458, 122
    %v3885 = vpop.permute.xlu0 %3884
    %3886 = vrot.lane.b32.xlu0 %v2462, 122
    %v3887 = vpop.permute.xlu0 %3886
    %3888 = vrot.lane.b32.xlu0 %v2459, 122
    %v3889 = vpop.permute.xlu0 %3888
    %3890 = vrot.lane.b32.xlu0 %v2463, 122
    %v3891 = vpop.permute.xlu0 %3890
    %3892 = vrot.lane.b32.xlu0 %v2460, 122
    %v3893 = vpop.permute.xlu0 %3892
    %3894 = vrot.lane.b32.xlu0 %v2464, 122
    %v3895 = vpop.permute.xlu0 %3894
    %vm3896 = vcmp.lt.s32.totalorder %v109, 122
    %v3897 = vsel %vm3896, %v3889, %v3893
    %v3898 = vsel %vm3896, %v3891, %v3895
    %v3899 = vsel %vm3896, %v3885, %v3889
    %v3900 = vsel %vm3896, %v3887, %v3891
    %v3901 = vsel %vm3896, %v3881, %v3885
    %v3902 = vsel %vm3896, %v3883, %v3887
    %v3903 = vsel %vm3896, %v3893, %v3881
    %v3904 = vsel %vm3896, %v3895, %v3883
    %vm3905 = vcmp.lt.s32.totalorder %v117, 10
    %vm3906 = vcmp.lt.s32.totalorder %v118, 10
    %vm3907 = vcmp.lt.s32.totalorder %v119, 10
    %vm3908 = vcmp.lt.s32.totalorder %v120, 10
    %v3909 = vsel %vm3905, 1, 0
    %v3910 = vsel %vm3906, 1, 0
    %v3911 = vsel %vm3907, 1, 0
    %v3912 = vsel %vm3908, 1, 0
    %v3913 = vcvt.s32.f32 %v3909
    %v3914 = vcvt.s32.f32 %v3910
    %v3915 = vcvt.s32.f32 %v3911
    %v3916 = vcvt.s32.f32 %v3912
    %v3917 = vmul.f32 %v3901, %v3913
    %v3918 = vmul.f32 %v3899, %v3914
    %v3919 = vmul.f32 %v3897, %v3915
    %v3920 = vmul.f32 %v3903, %v3916
    %v3921 = vmul.f32 %v3902, %v3913
    %v3922 = vmul.f32 %v3900, %v3914
    %v3923 = vmul.f32 %v3898, %v3915
    %v3924 = vmul.f32 %v3904, %v3916
    %3925 = vset.pattern.permute.xlu0 77
    %3926 = vperm.xlu0 %3925, %v104
    %v3927 = vpop.permute.xlu0 %3926
    %3929 = vset.pattern.permute.xlu0 77
    %3930 = vperm.xlu0 %3929, %v105
    %v3931 = vpop.permute.xlu0 %3930
    %v3933 = vmul.f32 %v3917, %v3927
    %v3934 = vmul.f32 %v3918, %v3927
    %v3935 = vmul.f32 %v3919, %v3927
    %v3936 = vmul.f32 %v3920, %v3927
    %v3937 = vmul.f32 %v3921, %v3931
    %v3938 = vmul.f32 %v3922, %v3931
    %v3939 = vmul.f32 %v3923, %v3931
    %v3940 = vmul.f32 %v3924, %v3931
    %v3941 = vadd.f32 %v3848, %v3933
    %v3942 = vadd.f32 %v3849, %v3934
    %v3943 = vadd.f32 %v3850, %v3935
    %v3944 = vadd.f32 %v3851, %v3936
    %v3945 = vadd.f32 %v3852, %v3937
    %v3946 = vadd.f32 %v3853, %v3938
    %v3947 = vadd.f32 %v3854, %v3939
    %v3948 = vadd.f32 %v3855, %v3940
    %3949 = vrot.lane.b32.xlu0 %v2457, 121
    %v3950 = vpop.permute.xlu0 %3949
    %3951 = vrot.lane.b32.xlu0 %v2461, 121
    %v3952 = vpop.permute.xlu0 %3951
    %3953 = vrot.lane.b32.xlu0 %v2458, 121
    %v3954 = vpop.permute.xlu0 %3953
    %3955 = vrot.lane.b32.xlu0 %v2462, 121
    %v3956 = vpop.permute.xlu0 %3955
    %3957 = vrot.lane.b32.xlu0 %v2459, 121
    %v3958 = vpop.permute.xlu0 %3957
    %3959 = vrot.lane.b32.xlu0 %v2463, 121
    %v3960 = vpop.permute.xlu0 %3959
    %3961 = vrot.lane.b32.xlu0 %v2460, 121
    %v3962 = vpop.permute.xlu0 %3961
    %3963 = vrot.lane.b32.xlu0 %v2464, 121
    %v3964 = vpop.permute.xlu0 %3963
    %vm3965 = vcmp.lt.s32.totalorder %v109, 121
    %v3966 = vsel %vm3965, %v3958, %v3962
    %v3967 = vsel %vm3965, %v3960, %v3964
    %v3968 = vsel %vm3965, %v3954, %v3958
    %v3969 = vsel %vm3965, %v3956, %v3960
    %v3970 = vsel %vm3965, %v3950, %v3954
    %v3971 = vsel %vm3965, %v3952, %v3956
    %v3972 = vsel %vm3965, %v3962, %v3950
    %v3973 = vsel %vm3965, %v3964, %v3952
    %vm3974 = vcmp.lt.s32.totalorder %v117, 9
    %vm3975 = vcmp.lt.s32.totalorder %v118, 9
    %vm3976 = vcmp.lt.s32.totalorder %v119, 9
    %vm3977 = vcmp.lt.s32.totalorder %v120, 9
    %v3978 = vsel %vm3974, 1, 0
    %v3979 = vsel %vm3975, 1, 0
    %v3980 = vsel %vm3976, 1, 0
    %v3981 = vsel %vm3977, 1, 0
    %v3982 = vcvt.s32.f32 %v3978
    %v3983 = vcvt.s32.f32 %v3979
    %v3984 = vcvt.s32.f32 %v3980
    %v3985 = vcvt.s32.f32 %v3981
    %v3986 = vmul.f32 %v3970, %v3982
    %v3987 = vmul.f32 %v3968, %v3983
    %v3988 = vmul.f32 %v3966, %v3984
    %v3989 = vmul.f32 %v3972, %v3985
    %v3990 = vmul.f32 %v3971, %v3982
    %v3991 = vmul.f32 %v3969, %v3983
    %v3992 = vmul.f32 %v3967, %v3984
    %v3993 = vmul.f32 %v3973, %v3985
    %3994 = vset.pattern.permute.xlu0 78
    %3995 = vperm.xlu0 %3994, %v104
    %v3996 = vpop.permute.xlu0 %3995
    %3998 = vset.pattern.permute.xlu0 78
    %3999 = vperm.xlu0 %3998, %v105
    %v4000 = vpop.permute.xlu0 %3999
    %v4002 = vmul.f32 %v3986, %v3996
    %v4003 = vmul.f32 %v3987, %v3996
    %v4004 = vmul.f32 %v3988, %v3996
    %v4005 = vmul.f32 %v3989, %v3996
    %v4006 = vmul.f32 %v3990, %v4000
    %v4007 = vmul.f32 %v3991, %v4000
    %v4008 = vmul.f32 %v3992, %v4000
    %v4009 = vmul.f32 %v3993, %v4000
    %v4010 = vadd.f32 %v3941, %v4002
    %v4011 = vadd.f32 %v3942, %v4003
    %v4012 = vadd.f32 %v3943, %v4004
    %v4013 = vadd.f32 %v3944, %v4005
    %v4014 = vadd.f32 %v3945, %v4006
    %v4015 = vadd.f32 %v3946, %v4007
    %v4016 = vadd.f32 %v3947, %v4008
    %v4017 = vadd.f32 %v3948, %v4009
    %4018 = vrot.lane.b32.xlu0 %v2457, 120
    %v4019 = vpop.permute.xlu0 %4018
    %4020 = vrot.lane.b32.xlu0 %v2461, 120
    %v4021 = vpop.permute.xlu0 %4020
    %4022 = vrot.lane.b32.xlu0 %v2458, 120
    %v4023 = vpop.permute.xlu0 %4022
    %4024 = vrot.lane.b32.xlu0 %v2462, 120
    %v4025 = vpop.permute.xlu0 %4024
    %4026 = vrot.lane.b32.xlu0 %v2459, 120
    %v4027 = vpop.permute.xlu0 %4026
    %4028 = vrot.lane.b32.xlu0 %v2463, 120
    %v4029 = vpop.permute.xlu0 %4028
    %4030 = vrot.lane.b32.xlu0 %v2460, 120
    %v4031 = vpop.permute.xlu0 %4030
    %4032 = vrot.lane.b32.xlu0 %v2464, 120
    %v4033 = vpop.permute.xlu0 %4032
    %vm4034 = vcmp.lt.s32.totalorder %v109, 120
    %v4035 = vsel %vm4034, %v4027, %v4031
    %v4036 = vsel %vm4034, %v4029, %v4033
    %v4037 = vsel %vm4034, %v4023, %v4027
    %v4038 = vsel %vm4034, %v4025, %v4029
    %v4039 = vsel %vm4034, %v4019, %v4023
    %v4040 = vsel %vm4034, %v4021, %v4025
    %v4041 = vsel %vm4034, %v4031, %v4019
    %v4042 = vsel %vm4034, %v4033, %v4021
    %vm4043 = vcmp.lt.s32.totalorder %v117, 8
    %vm4044 = vcmp.lt.s32.totalorder %v118, 8
    %vm4045 = vcmp.lt.s32.totalorder %v119, 8
    %vm4046 = vcmp.lt.s32.totalorder %v120, 8
    %v4047 = vsel %vm4043, 1, 0
    %v4048 = vsel %vm4044, 1, 0
    %v4049 = vsel %vm4045, 1, 0
    %v4050 = vsel %vm4046, 1, 0
    %v4051 = vcvt.s32.f32 %v4047
    %v4052 = vcvt.s32.f32 %v4048
    %v4053 = vcvt.s32.f32 %v4049
    %v4054 = vcvt.s32.f32 %v4050
    %v4055 = vmul.f32 %v4039, %v4051
    %v4056 = vmul.f32 %v4037, %v4052
    %v4057 = vmul.f32 %v4035, %v4053
    %v4058 = vmul.f32 %v4041, %v4054
    %v4059 = vmul.f32 %v4040, %v4051
    %v4060 = vmul.f32 %v4038, %v4052
    %v4061 = vmul.f32 %v4036, %v4053
    %v4062 = vmul.f32 %v4042, %v4054
    %4063 = vset.pattern.permute.xlu0 79
    %4064 = vperm.xlu0 %4063, %v104
    %v4065 = vpop.permute.xlu0 %4064
    %4067 = vset.pattern.permute.xlu0 79
    %4068 = vperm.xlu0 %4067, %v105
    %v4069 = vpop.permute.xlu0 %4068
    %v4071 = vmul.f32 %v4055, %v4065
    %v4072 = vmul.f32 %v4056, %v4065
    %v4073 = vmul.f32 %v4057, %v4065
    %v4074 = vmul.f32 %v4058, %v4065
    %v4075 = vmul.f32 %v4059, %v4069
    %v4076 = vmul.f32 %v4060, %v4069
    %v4077 = vmul.f32 %v4061, %v4069
    %v4078 = vmul.f32 %v4062, %v4069
    %v4079 = vadd.f32 %v4010, %v4071
    %v4080 = vadd.f32 %v4011, %v4072
    %v4081 = vadd.f32 %v4012, %v4073
    %v4082 = vadd.f32 %v4013, %v4074
    %v4083 = vadd.f32 %v4014, %v4075
    %v4084 = vadd.f32 %v4015, %v4076
    %v4085 = vadd.f32 %v4016, %v4077
    %v4086 = vadd.f32 %v4017, %v4078
    %4087 = vrot.lane.b32.xlu0 %v2457, 119
    %v4088 = vpop.permute.xlu0 %4087
    %4089 = vrot.lane.b32.xlu0 %v2461, 119
    %v4090 = vpop.permute.xlu0 %4089
    %4091 = vrot.lane.b32.xlu0 %v2458, 119
    %v4092 = vpop.permute.xlu0 %4091
    %4093 = vrot.lane.b32.xlu0 %v2462, 119
    %v4094 = vpop.permute.xlu0 %4093
    %4095 = vrot.lane.b32.xlu0 %v2459, 119
    %v4096 = vpop.permute.xlu0 %4095
    %4097 = vrot.lane.b32.xlu0 %v2463, 119
    %v4098 = vpop.permute.xlu0 %4097
    %4099 = vrot.lane.b32.xlu0 %v2460, 119
    %v4100 = vpop.permute.xlu0 %4099
    %4101 = vrot.lane.b32.xlu0 %v2464, 119
    %v4102 = vpop.permute.xlu0 %4101
    %vm4103 = vcmp.lt.s32.totalorder %v109, 119
    %v4104 = vsel %vm4103, %v4096, %v4100
    %v4105 = vsel %vm4103, %v4098, %v4102
    %v4106 = vsel %vm4103, %v4092, %v4096
    %v4107 = vsel %vm4103, %v4094, %v4098
    %v4108 = vsel %vm4103, %v4088, %v4092
    %v4109 = vsel %vm4103, %v4090, %v4094
    %v4110 = vsel %vm4103, %v4100, %v4088
    %v4111 = vsel %vm4103, %v4102, %v4090
    %vm4112 = vcmp.lt.s32.totalorder %v117, 7
    %vm4113 = vcmp.lt.s32.totalorder %v118, 7
    %vm4114 = vcmp.lt.s32.totalorder %v119, 7
    %vm4115 = vcmp.lt.s32.totalorder %v120, 7
    %v4116 = vsel %vm4112, 1, 0
    %v4117 = vsel %vm4113, 1, 0
    %v4118 = vsel %vm4114, 1, 0
    %v4119 = vsel %vm4115, 1, 0
    %v4120 = vcvt.s32.f32 %v4116
    %v4121 = vcvt.s32.f32 %v4117
    %v4122 = vcvt.s32.f32 %v4118
    %v4123 = vcvt.s32.f32 %v4119
    %v4124 = vmul.f32 %v4108, %v4120
    %v4125 = vmul.f32 %v4106, %v4121
    %v4126 = vmul.f32 %v4104, %v4122
    %v4127 = vmul.f32 %v4110, %v4123
    %v4128 = vmul.f32 %v4109, %v4120
    %v4129 = vmul.f32 %v4107, %v4121
    %v4130 = vmul.f32 %v4105, %v4122
    %v4131 = vmul.f32 %v4111, %v4123
    %4132 = vset.pattern.permute.xlu0 80
    %4133 = vperm.xlu0 %4132, %v104
    %v4134 = vpop.permute.xlu0 %4133
    %4136 = vset.pattern.permute.xlu0 80
    %4137 = vperm.xlu0 %4136, %v105
    %v4138 = vpop.permute.xlu0 %4137
    %v4140 = vmul.f32 %v4124, %v4134
    %v4141 = vmul.f32 %v4125, %v4134
    %v4142 = vmul.f32 %v4126, %v4134
    %v4143 = vmul.f32 %v4127, %v4134
    %v4144 = vmul.f32 %v4128, %v4138
    %v4145 = vmul.f32 %v4129, %v4138
    %v4146 = vmul.f32 %v4130, %v4138
    %v4147 = vmul.f32 %v4131, %v4138
    %v4148 = vadd.f32 %v4079, %v4140
    %v4149 = vadd.f32 %v4080, %v4141
    %v4150 = vadd.f32 %v4081, %v4142
    %v4151 = vadd.f32 %v4082, %v4143
    %v4152 = vadd.f32 %v4083, %v4144
    %v4153 = vadd.f32 %v4084, %v4145
    %v4154 = vadd.f32 %v4085, %v4146
    %v4155 = vadd.f32 %v4086, %v4147
    %4156 = vrot.lane.b32.xlu0 %v2457, 118
    %v4157 = vpop.permute.xlu0 %4156
    %4158 = vrot.lane.b32.xlu0 %v2461, 118
    %v4159 = vpop.permute.xlu0 %4158
    %4160 = vrot.lane.b32.xlu0 %v2458, 118
    %v4161 = vpop.permute.xlu0 %4160
    %4162 = vrot.lane.b32.xlu0 %v2462, 118
    %v4163 = vpop.permute.xlu0 %4162
    %4164 = vrot.lane.b32.xlu0 %v2459, 118
    %v4165 = vpop.permute.xlu0 %4164
    %4166 = vrot.lane.b32.xlu0 %v2463, 118
    %v4167 = vpop.permute.xlu0 %4166
    %4168 = vrot.lane.b32.xlu0 %v2460, 118
    %v4169 = vpop.permute.xlu0 %4168
    %4170 = vrot.lane.b32.xlu0 %v2464, 118
    %v4171 = vpop.permute.xlu0 %4170
    %vm4172 = vcmp.lt.s32.totalorder %v109, 118
    %v4173 = vsel %vm4172, %v4165, %v4169
    %v4174 = vsel %vm4172, %v4167, %v4171
    %v4175 = vsel %vm4172, %v4161, %v4165
    %v4176 = vsel %vm4172, %v4163, %v4167
    %v4177 = vsel %vm4172, %v4157, %v4161
    %v4178 = vsel %vm4172, %v4159, %v4163
    %v4179 = vsel %vm4172, %v4169, %v4157
    %v4180 = vsel %vm4172, %v4171, %v4159
    %vm4181 = vcmp.lt.s32.totalorder %v117, 6
    %vm4182 = vcmp.lt.s32.totalorder %v118, 6
    %vm4183 = vcmp.lt.s32.totalorder %v119, 6
    %vm4184 = vcmp.lt.s32.totalorder %v120, 6
    %v4185 = vsel %vm4181, 1, 0
    %v4186 = vsel %vm4182, 1, 0
    %v4187 = vsel %vm4183, 1, 0
    %v4188 = vsel %vm4184, 1, 0
    %v4189 = vcvt.s32.f32 %v4185
    %v4190 = vcvt.s32.f32 %v4186
    %v4191 = vcvt.s32.f32 %v4187
    %v4192 = vcvt.s32.f32 %v4188
    %v4193 = vmul.f32 %v4177, %v4189
    %v4194 = vmul.f32 %v4175, %v4190
    %v4195 = vmul.f32 %v4173, %v4191
    %v4196 = vmul.f32 %v4179, %v4192
    %v4197 = vmul.f32 %v4178, %v4189
    %v4198 = vmul.f32 %v4176, %v4190
    %v4199 = vmul.f32 %v4174, %v4191
    %v4200 = vmul.f32 %v4180, %v4192
    %4201 = vset.pattern.permute.xlu0 81
    %4202 = vperm.xlu0 %4201, %v104
    %v4203 = vpop.permute.xlu0 %4202
    %4205 = vset.pattern.permute.xlu0 81
    %4206 = vperm.xlu0 %4205, %v105
    %v4207 = vpop.permute.xlu0 %4206
    %v4209 = vmul.f32 %v4193, %v4203
    %v4210 = vmul.f32 %v4194, %v4203
    %v4211 = vmul.f32 %v4195, %v4203
    %v4212 = vmul.f32 %v4196, %v4203
    %v4213 = vmul.f32 %v4197, %v4207
    %v4214 = vmul.f32 %v4198, %v4207
    %v4215 = vmul.f32 %v4199, %v4207
    %v4216 = vmul.f32 %v4200, %v4207
    %v4217 = vadd.f32 %v4148, %v4209
    %v4218 = vadd.f32 %v4149, %v4210
    %v4219 = vadd.f32 %v4150, %v4211
    %v4220 = vadd.f32 %v4151, %v4212
    %v4221 = vadd.f32 %v4152, %v4213
    %v4222 = vadd.f32 %v4153, %v4214
    %v4223 = vadd.f32 %v4154, %v4215
    %v4224 = vadd.f32 %v4155, %v4216
    %4225 = vset.pattern.permute.xlu0 7
    %4226 = vperm.xlu0 %4225, %v106
    %v4227 = vpop.permute.xlu0 %4226
    %4229 = vset.pattern.permute.xlu0 7
    %4230 = vperm.xlu0 %4229, %v107
    %v4231 = vpop.permute.xlu0 %4230
    %v4233 = vadd.f32 %v3686, %v4227
    %v4234 = vadd.f32 %v3687, %v4227
    %v4235 = vadd.f32 %v3688, %v4227
    %v4236 = vadd.f32 %v3689, %v4227
    %v4237 = vadd.f32 %v3690, %v4231
    %v4238 = vadd.f32 %v3691, %v4231
    %v4239 = vadd.f32 %v3692, %v4231
    %v4240 = vadd.f32 %v3693, %v4231
    %4241 = vset.pattern.permute.xlu0 9
    %4242 = vperm.xlu0 %4241, %v106
    %v4243 = vpop.permute.xlu0 %4242
    %4245 = vset.pattern.permute.xlu0 9
    %4246 = vperm.xlu0 %4245, %v107
    %v4247 = vpop.permute.xlu0 %4246
    %v4249 = vadd.f32 %v3872, %v4243
    %v4250 = vadd.f32 %v3873, %v4243
    %v4251 = vadd.f32 %v3874, %v4243
    %v4252 = vadd.f32 %v3875, %v4243
    %v4253 = vadd.f32 %v3876, %v4247
    %v4254 = vadd.f32 %v3877, %v4247
    %v4255 = vadd.f32 %v3878, %v4247
    %v4256 = vadd.f32 %v3879, %v4247
    %4257 = vset.pattern.permute.xlu0 11
    %4258 = vperm.xlu0 %4257, %v106
    %v4259 = vpop.permute.xlu0 %4258
    %4261 = vset.pattern.permute.xlu0 11
    %4262 = vperm.xlu0 %4261, %v107
    %v4263 = vpop.permute.xlu0 %4262
    %v4265 = vadd.f32 %v4217, %v4259
    %v4266 = vadd.f32 %v4218, %v4259
    %v4267 = vadd.f32 %v4219, %v4259
    %v4268 = vadd.f32 %v4220, %v4259
    %v4269 = vadd.f32 %v4221, %v4263
    %v4270 = vadd.f32 %v4222, %v4263
    %v4271 = vadd.f32 %v4223, %v4263
    %v4272 = vadd.f32 %v4224, %v4263
    %4273 = vset.pattern.permute.xlu0 82
    %4274 = vperm.xlu0 %4273, %v104
    %v4275 = vpop.permute.xlu0 %4274
    %4277 = vset.pattern.permute.xlu0 82
    %4278 = vperm.xlu0 %4277, %v105
    %v4279 = vpop.permute.xlu0 %4278
    %v4281 = vmul.f32 %v4265, %v4275
    %v4282 = vmul.f32 %v4266, %v4275
    %v4283 = vmul.f32 %v4267, %v4275
    %v4284 = vmul.f32 %v4268, %v4275
    %v4285 = vmul.f32 %v4269, %v4279
    %v4286 = vmul.f32 %v4270, %v4279
    %v4287 = vmul.f32 %v4271, %v4279
    %v4288 = vmul.f32 %v4272, %v4279
    %4289 = vrot.lane.b32.xlu0 %v4281, 32
    %v4290 = vpop.permute.xlu0 %4289
    %4291 = vrot.lane.b32.xlu0 %v4285, 32
    %v4292 = vpop.permute.xlu0 %4291
    %4293 = vrot.lane.b32.xlu0 %v4282, 32
    %v4294 = vpop.permute.xlu0 %4293
    %4295 = vrot.lane.b32.xlu0 %v4286, 32
    %v4296 = vpop.permute.xlu0 %4295
    %4297 = vrot.lane.b32.xlu0 %v4283, 32
    %v4298 = vpop.permute.xlu0 %4297
    %4299 = vrot.lane.b32.xlu0 %v4287, 32
    %v4300 = vpop.permute.xlu0 %4299
    %4301 = vrot.lane.b32.xlu0 %v4284, 32
    %v4302 = vpop.permute.xlu0 %4301
    %4303 = vrot.lane.b32.xlu0 %v4288, 32
    %v4304 = vpop.permute.xlu0 %4303
    %v4305 = vsel %vm935, %v4298, %v4302
    %v4306 = vsel %vm935, %v4300, %v4304
    %v4307 = vsel %vm935, %v4294, %v4298
    %v4308 = vsel %vm935, %v4296, %v4300
    %v4309 = vsel %vm935, %v4290, %v4294
    %v4310 = vsel %vm935, %v4292, %v4296
    %v4311 = vsel %vm935, %v4302, %v4290
    %v4312 = vsel %vm935, %v4304, %v4292
    %vm4313 = vcmp.ge.s32.totalorder %v113, 160
    %vm4314 = vcmp.ge.s32.totalorder %v114, 160
    %vm4315 = vcmp.ge.s32.totalorder %v115, 160
    %vm4316 = vcmp.ge.s32.totalorder %v116, 160
    %v4317 = vsel %vm4313, 1, 0
    %v4318 = vsel %vm4314, 1, 0
    %v4319 = vsel %vm4315, 1, 0
    %v4320 = vsel %vm4316, 1, 0
    %v4321 = vcvt.s32.f32 %v4317
    %v4322 = vcvt.s32.f32 %v4318
    %v4323 = vcvt.s32.f32 %v4319
    %v4324 = vcvt.s32.f32 %v4320
    %v4325 = vmul.f32 %v4305, %v4321
    %v4326 = vmul.f32 %v4311, %v4322
    %v4327 = vmul.f32 %v4309, %v4323
    %v4328 = vmul.f32 %v4307, %v4324
    %v4329 = vmul.f32 %v4306, %v4321
    %v4330 = vmul.f32 %v4312, %v4322
    %v4331 = vmul.f32 %v4310, %v4323
    %v4332 = vmul.f32 %v4308, %v4324
    %v4333 = vadd.f32 %v2457, %v4325
    %v4334 = vadd.f32 %v2458, %v4326
    %v4335 = vadd.f32 %v2459, %v4327
    %v4336 = vadd.f32 %v2460, %v4328
    %v4337 = vadd.f32 %v2461, %v4329
    %v4338 = vadd.f32 %v2462, %v4330
    %v4339 = vadd.f32 %v2463, %v4331
    %v4340 = vadd.f32 %v2464, %v4332
    %4341 = vset.pattern.permute.xlu0 83
    %4342 = vperm.xlu0 %4341, %v104
    %v4343 = vpop.permute.xlu0 %4342
    %4345 = vset.pattern.permute.xlu0 83
    %4346 = vperm.xlu0 %4345, %v105
    %v4347 = vpop.permute.xlu0 %4346
    %v4349 = vmul.f32 %v4265, %v4343
    %v4350 = vmul.f32 %v4266, %v4343
    %v4351 = vmul.f32 %v4267, %v4343
    %v4352 = vmul.f32 %v4268, %v4343
    %v4353 = vmul.f32 %v4269, %v4347
    %v4354 = vmul.f32 %v4270, %v4347
    %v4355 = vmul.f32 %v4271, %v4347
    %v4356 = vmul.f32 %v4272, %v4347
    %4357 = vrot.lane.b32.xlu0 %v4349, 16
    %v4358 = vpop.permute.xlu0 %4357
    %4359 = vrot.lane.b32.xlu0 %v4353, 16
    %v4360 = vpop.permute.xlu0 %4359
    %4361 = vrot.lane.b32.xlu0 %v4350, 16
    %v4362 = vpop.permute.xlu0 %4361
    %4363 = vrot.lane.b32.xlu0 %v4354, 16
    %v4364 = vpop.permute.xlu0 %4363
    %4365 = vrot.lane.b32.xlu0 %v4351, 16
    %v4366 = vpop.permute.xlu0 %4365
    %4367 = vrot.lane.b32.xlu0 %v4355, 16
    %v4368 = vpop.permute.xlu0 %4367
    %4369 = vrot.lane.b32.xlu0 %v4352, 16
    %v4370 = vpop.permute.xlu0 %4369
    %4371 = vrot.lane.b32.xlu0 %v4356, 16
    %v4372 = vpop.permute.xlu0 %4371
    %v4373 = vsel %vm1288, %v4366, %v4370
    %v4374 = vsel %vm1288, %v4368, %v4372
    %v4375 = vsel %vm1288, %v4362, %v4366
    %v4376 = vsel %vm1288, %v4364, %v4368
    %v4377 = vsel %vm1288, %v4358, %v4362
    %v4378 = vsel %vm1288, %v4360, %v4364
    %v4379 = vsel %vm1288, %v4370, %v4358
    %v4380 = vsel %vm1288, %v4372, %v4360
    %vm4381 = vcmp.ge.s32.totalorder %v113, 144
    %vm4382 = vcmp.ge.s32.totalorder %v114, 144
    %vm4383 = vcmp.ge.s32.totalorder %v115, 144
    %vm4384 = vcmp.ge.s32.totalorder %v116, 144
    %v4385 = vsel %vm4381, 1, 0
    %v4386 = vsel %vm4382, 1, 0
    %v4387 = vsel %vm4383, 1, 0
    %v4388 = vsel %vm4384, 1, 0
    %v4389 = vcvt.s32.f32 %v4385
    %v4390 = vcvt.s32.f32 %v4386
    %v4391 = vcvt.s32.f32 %v4387
    %v4392 = vcvt.s32.f32 %v4388
    %v4393 = vmul.f32 %v4373, %v4389
    %v4394 = vmul.f32 %v4379, %v4390
    %v4395 = vmul.f32 %v4377, %v4391
    %v4396 = vmul.f32 %v4375, %v4392
    %v4397 = vmul.f32 %v4374, %v4389
    %v4398 = vmul.f32 %v4380, %v4390
    %v4399 = vmul.f32 %v4378, %v4391
    %v4400 = vmul.f32 %v4376, %v4392
    %v4401 = vadd.f32 %v4333, %v4393
    %v4402 = vadd.f32 %v4334, %v4394
    %v4403 = vadd.f32 %v4335, %v4395
    %v4404 = vadd.f32 %v4336, %v4396
    %v4405 = vadd.f32 %v4337, %v4397
    %v4406 = vadd.f32 %v4338, %v4398
    %v4407 = vadd.f32 %v4339, %v4399
    %v4408 = vadd.f32 %v4340, %v4400
    %4409 = vset.pattern.permute.xlu0 84
    %4410 = vperm.xlu0 %4409, %v104
    %v4411 = vpop.permute.xlu0 %4410
    %4413 = vset.pattern.permute.xlu0 84
    %4414 = vperm.xlu0 %4413, %v105
    %v4415 = vpop.permute.xlu0 %4414
    %v4417 = vmul.f32 %v4265, %v4411
    %v4418 = vmul.f32 %v4266, %v4411
    %v4419 = vmul.f32 %v4267, %v4411
    %v4420 = vmul.f32 %v4268, %v4411
    %v4421 = vmul.f32 %v4269, %v4415
    %v4422 = vmul.f32 %v4270, %v4415
    %v4423 = vmul.f32 %v4271, %v4415
    %v4424 = vmul.f32 %v4272, %v4415
    %vm4425 = vcmp.ge.s32.totalorder %v113, 128
    %vm4426 = vcmp.ge.s32.totalorder %v114, 128
    %vm4427 = vcmp.ge.s32.totalorder %v115, 128
    %vm4428 = vcmp.ge.s32.totalorder %v116, 128
    %v4429 = vsel %vm4425, 1, 0
    %v4430 = vsel %vm4426, 1, 0
    %v4431 = vsel %vm4427, 1, 0
    %v4432 = vsel %vm4428, 1, 0
    %v4433 = vcvt.s32.f32 %v4429
    %v4434 = vcvt.s32.f32 %v4430
    %v4435 = vcvt.s32.f32 %v4431
    %v4436 = vcvt.s32.f32 %v4432
    %v4437 = vmul.f32 %v4420, %v4433
    %v4438 = vmul.f32 %v4417, %v4434
    %v4439 = vmul.f32 %v4418, %v4435
    %v4440 = vmul.f32 %v4419, %v4436
    %v4441 = vmul.f32 %v4424, %v4433
    %v4442 = vmul.f32 %v4421, %v4434
    %v4443 = vmul.f32 %v4422, %v4435
    %v4444 = vmul.f32 %v4423, %v4436
    %v4445 = vadd.f32 %v4401, %v4437
    %v4446 = vadd.f32 %v4402, %v4438
    %v4447 = vadd.f32 %v4403, %v4439
    %v4448 = vadd.f32 %v4404, %v4440
    %v4449 = vadd.f32 %v4405, %v4441
    %v4450 = vadd.f32 %v4406, %v4442
    %v4451 = vadd.f32 %v4407, %v4443
    %v4452 = vadd.f32 %v4408, %v4444
    %4453 = vset.pattern.permute.xlu0 85
    %4454 = vperm.xlu0 %4453, %v104
    %v4455 = vpop.permute.xlu0 %4454
    %4457 = vset.pattern.permute.xlu0 85
    %4458 = vperm.xlu0 %4457, %v105
    %v4459 = vpop.permute.xlu0 %4458
    %v4461 = vmul.f32 %v4265, %v4455
    %v4462 = vmul.f32 %v4266, %v4455
    %v4463 = vmul.f32 %v4267, %v4455
    %v4464 = vmul.f32 %v4268, %v4455
    %v4465 = vmul.f32 %v4269, %v4459
    %v4466 = vmul.f32 %v4270, %v4459
    %v4467 = vmul.f32 %v4271, %v4459
    %v4468 = vmul.f32 %v4272, %v4459
    %4469 = vrot.lane.b32.xlu0 %v4461, 112
    %v4470 = vpop.permute.xlu0 %4469
    %4471 = vrot.lane.b32.xlu0 %v4465, 112
    %v4472 = vpop.permute.xlu0 %4471
    %4473 = vrot.lane.b32.xlu0 %v4462, 112
    %v4474 = vpop.permute.xlu0 %4473
    %4475 = vrot.lane.b32.xlu0 %v4466, 112
    %v4476 = vpop.permute.xlu0 %4475
    %4477 = vrot.lane.b32.xlu0 %v4463, 112
    %v4478 = vpop.permute.xlu0 %4477
    %4479 = vrot.lane.b32.xlu0 %v4467, 112
    %v4480 = vpop.permute.xlu0 %4479
    %4481 = vrot.lane.b32.xlu0 %v4464, 112
    %v4482 = vpop.permute.xlu0 %4481
    %4483 = vrot.lane.b32.xlu0 %v4468, 112
    %v4484 = vpop.permute.xlu0 %4483
    %v4485 = vsel %vm1917, %v4478, %v4482
    %v4486 = vsel %vm1917, %v4480, %v4484
    %v4487 = vsel %vm1917, %v4474, %v4478
    %v4488 = vsel %vm1917, %v4476, %v4480
    %v4489 = vsel %vm1917, %v4470, %v4474
    %v4490 = vsel %vm1917, %v4472, %v4476
    %v4491 = vsel %vm1917, %v4482, %v4470
    %v4492 = vsel %vm1917, %v4484, %v4472
    %vm4493 = vcmp.ge.s32.totalorder %v113, 112
    %vm4494 = vcmp.ge.s32.totalorder %v114, 112
    %vm4495 = vcmp.ge.s32.totalorder %v115, 112
    %vm4496 = vcmp.ge.s32.totalorder %v116, 112
    %v4497 = vsel %vm4493, 1, 0
    %v4498 = vsel %vm4494, 1, 0
    %v4499 = vsel %vm4495, 1, 0
    %v4500 = vsel %vm4496, 1, 0
    %v4501 = vcvt.s32.f32 %v4497
    %v4502 = vcvt.s32.f32 %v4498
    %v4503 = vcvt.s32.f32 %v4499
    %v4504 = vcvt.s32.f32 %v4500
    %v4505 = vmul.f32 %v4491, %v4501
    %v4506 = vmul.f32 %v4489, %v4502
    %v4507 = vmul.f32 %v4487, %v4503
    %v4508 = vmul.f32 %v4485, %v4504
    %v4509 = vmul.f32 %v4492, %v4501
    %v4510 = vmul.f32 %v4490, %v4502
    %v4511 = vmul.f32 %v4488, %v4503
    %v4512 = vmul.f32 %v4486, %v4504
    %v4513 = vadd.f32 %v4445, %v4505
    %v4514 = vadd.f32 %v4446, %v4506
    %v4515 = vadd.f32 %v4447, %v4507
    %v4516 = vadd.f32 %v4448, %v4508
    %v4517 = vadd.f32 %v4449, %v4509
    %v4518 = vadd.f32 %v4450, %v4510
    %v4519 = vadd.f32 %v4451, %v4511
    %v4520 = vadd.f32 %v4452, %v4512
    %4521 = vset.pattern.permute.xlu0 86
    %4522 = vperm.xlu0 %4521, %v104
    %v4523 = vpop.permute.xlu0 %4522
    %4525 = vset.pattern.permute.xlu0 86
    %4526 = vperm.xlu0 %4525, %v105
    %v4527 = vpop.permute.xlu0 %4526
    %v4529 = vmul.f32 %v4265, %v4523
    %v4530 = vmul.f32 %v4266, %v4523
    %v4531 = vmul.f32 %v4267, %v4523
    %v4532 = vmul.f32 %v4268, %v4523
    %v4533 = vmul.f32 %v4269, %v4527
    %v4534 = vmul.f32 %v4270, %v4527
    %v4535 = vmul.f32 %v4271, %v4527
    %v4536 = vmul.f32 %v4272, %v4527
    %4537 = vrot.lane.b32.xlu0 %v4529, 96
    %v4538 = vpop.permute.xlu0 %4537
    %4539 = vrot.lane.b32.xlu0 %v4533, 96
    %v4540 = vpop.permute.xlu0 %4539
    %4541 = vrot.lane.b32.xlu0 %v4530, 96
    %v4542 = vpop.permute.xlu0 %4541
    %4543 = vrot.lane.b32.xlu0 %v4534, 96
    %v4544 = vpop.permute.xlu0 %4543
    %4545 = vrot.lane.b32.xlu0 %v4531, 96
    %v4546 = vpop.permute.xlu0 %4545
    %4547 = vrot.lane.b32.xlu0 %v4535, 96
    %v4548 = vpop.permute.xlu0 %4547
    %4549 = vrot.lane.b32.xlu0 %v4532, 96
    %v4550 = vpop.permute.xlu0 %4549
    %4551 = vrot.lane.b32.xlu0 %v4536, 96
    %v4552 = vpop.permute.xlu0 %4551
    %v4553 = vsel %vm2262, %v4546, %v4550
    %v4554 = vsel %vm2262, %v4548, %v4552
    %v4555 = vsel %vm2262, %v4542, %v4546
    %v4556 = vsel %vm2262, %v4544, %v4548
    %v4557 = vsel %vm2262, %v4538, %v4542
    %v4558 = vsel %vm2262, %v4540, %v4544
    %v4559 = vsel %vm2262, %v4550, %v4538
    %v4560 = vsel %vm2262, %v4552, %v4540
    %vm4561 = vcmp.ge.s32.totalorder %v113, 96
    %vm4562 = vcmp.ge.s32.totalorder %v114, 96
    %vm4563 = vcmp.ge.s32.totalorder %v115, 96
    %vm4564 = vcmp.ge.s32.totalorder %v116, 96
    %v4565 = vsel %vm4561, 1, 0
    %v4566 = vsel %vm4562, 1, 0
    %v4567 = vsel %vm4563, 1, 0
    %v4568 = vsel %vm4564, 1, 0
    %v4569 = vcvt.s32.f32 %v4565
    %v4570 = vcvt.s32.f32 %v4566
    %v4571 = vcvt.s32.f32 %v4567
    %v4572 = vcvt.s32.f32 %v4568
    %v4573 = vmul.f32 %v4559, %v4569
    %v4574 = vmul.f32 %v4557, %v4570
    %v4575 = vmul.f32 %v4555, %v4571
    %v4576 = vmul.f32 %v4553, %v4572
    %v4577 = vmul.f32 %v4560, %v4569
    %v4578 = vmul.f32 %v4558, %v4570
    %v4579 = vmul.f32 %v4556, %v4571
    %v4580 = vmul.f32 %v4554, %v4572
    %v4581 = vadd.f32 %v4513, %v4573
    %v4582 = vadd.f32 %v4514, %v4574
    %v4583 = vadd.f32 %v4515, %v4575
    %v4584 = vadd.f32 %v4516, %v4576
    %v4585 = vadd.f32 %v4517, %v4577
    %v4586 = vadd.f32 %v4518, %v4578
    %v4587 = vadd.f32 %v4519, %v4579
    %v4588 = vadd.f32 %v4520, %v4580
    %4589 = vset.pattern.permute.xlu0 87
    %4590 = vperm.xlu0 %4589, %v104
    %v4591 = vpop.permute.xlu0 %4590
    %4593 = vset.pattern.permute.xlu0 87
    %4594 = vperm.xlu0 %4593, %v105
    %v4595 = vpop.permute.xlu0 %4594
    %v4597 = vmul.f32 %v4265, %v4591
    %v4598 = vmul.f32 %v4266, %v4591
    %v4599 = vmul.f32 %v4267, %v4591
    %v4600 = vmul.f32 %v4268, %v4591
    %v4601 = vmul.f32 %v4269, %v4595
    %v4602 = vmul.f32 %v4270, %v4595
    %v4603 = vmul.f32 %v4271, %v4595
    %v4604 = vmul.f32 %v4272, %v4595
    %4605 = vset.pattern.permute.xlu0 50
    %4606 = vperm.xlu0 %4605, %v104
    %v4607 = vpop.permute.xlu0 %4606
    %4609 = vset.pattern.permute.xlu0 50
    %4610 = vperm.xlu0 %4609, %v105
    %v4611 = vpop.permute.xlu0 %4610
    %v4613 = vmul.f32 %v4249, %v4607
    %v4614 = vmul.f32 %v4250, %v4607
    %v4615 = vmul.f32 %v4251, %v4607
    %v4616 = vmul.f32 %v4252, %v4607
    %v4617 = vmul.f32 %v4253, %v4611
    %v4618 = vmul.f32 %v4254, %v4611
    %v4619 = vmul.f32 %v4255, %v4611
    %v4620 = vmul.f32 %v4256, %v4611
    %v4621 = vadd.f32 %v4597, %v4613
    %v4622 = vadd.f32 %v4598, %v4614
    %v4623 = vadd.f32 %v4599, %v4615
    %v4624 = vadd.f32 %v4600, %v4616
    %v4625 = vadd.f32 %v4601, %v4617
    %v4626 = vadd.f32 %v4602, %v4618
    %v4627 = vadd.f32 %v4603, %v4619
    %v4628 = vadd.f32 %v4604, %v4620
    %4629 = vrot.lane.b32.xlu0 %v4621, 80
    %v4630 = vpop.permute.xlu0 %4629
    %4631 = vrot.lane.b32.xlu0 %v4625, 80
    %v4632 = vpop.permute.xlu0 %4631
    %4633 = vrot.lane.b32.xlu0 %v4622, 80
    %v4634 = vpop.permute.xlu0 %4633
    %4635 = vrot.lane.b32.xlu0 %v4626, 80
    %v4636 = vpop.permute.xlu0 %4635
    %4637 = vrot.lane.b32.xlu0 %v4623, 80
    %v4638 = vpop.permute.xlu0 %4637
    %4639 = vrot.lane.b32.xlu0 %v4627, 80
    %v4640 = vpop.permute.xlu0 %4639
    %4641 = vrot.lane.b32.xlu0 %v4624, 80
    %v4642 = vpop.permute.xlu0 %4641
    %4643 = vrot.lane.b32.xlu0 %v4628, 80
    %v4644 = vpop.permute.xlu0 %4643
    %vm4645 = vcmp.lt.s32.totalorder %v109, 80
    %v4646 = vsel %vm4645, %v4638, %v4642
    %v4647 = vsel %vm4645, %v4640, %v4644
    %v4648 = vsel %vm4645, %v4634, %v4638
    %v4649 = vsel %vm4645, %v4636, %v4640
    %v4650 = vsel %vm4645, %v4630, %v4634
    %v4651 = vsel %vm4645, %v4632, %v4636
    %v4652 = vsel %vm4645, %v4642, %v4630
    %v4653 = vsel %vm4645, %v4644, %v4632
    %vm4654 = vcmp.ge.s32.totalorder %v113, 80
    %vm4655 = vcmp.ge.s32.totalorder %v114, 80
    %vm4656 = vcmp.ge.s32.totalorder %v115, 80
    %vm4657 = vcmp.ge.s32.totalorder %v116, 80
    %v4658 = vsel %vm4654, 1, 0
    %v4659 = vsel %vm4655, 1, 0
    %v4660 = vsel %vm4656, 1, 0
    %v4661 = vsel %vm4657, 1, 0
    %v4662 = vcvt.s32.f32 %v4658
    %v4663 = vcvt.s32.f32 %v4659
    %v4664 = vcvt.s32.f32 %v4660
    %v4665 = vcvt.s32.f32 %v4661
    %v4666 = vmul.f32 %v4652, %v4662
    %v4667 = vmul.f32 %v4650, %v4663
    %v4668 = vmul.f32 %v4648, %v4664
    %v4669 = vmul.f32 %v4646, %v4665
    %v4670 = vmul.f32 %v4653, %v4662
    %v4671 = vmul.f32 %v4651, %v4663
    %v4672 = vmul.f32 %v4649, %v4664
    %v4673 = vmul.f32 %v4647, %v4665
    %v4674 = vadd.f32 %v4581, %v4666
    %v4675 = vadd.f32 %v4582, %v4667
    %v4676 = vadd.f32 %v4583, %v4668
    %v4677 = vadd.f32 %v4584, %v4669
    %v4678 = vadd.f32 %v4585, %v4670
    %v4679 = vadd.f32 %v4586, %v4671
    %v4680 = vadd.f32 %v4587, %v4672
    %v4681 = vadd.f32 %v4588, %v4673
    %4682 = vset.pattern.permute.xlu0 88
    %4683 = vperm.xlu0 %4682, %v104
    %v4684 = vpop.permute.xlu0 %4683
    %4686 = vset.pattern.permute.xlu0 88
    %4687 = vperm.xlu0 %4686, %v105
    %v4688 = vpop.permute.xlu0 %4687
    %v4690 = vmul.f32 %v4265, %v4684
    %v4691 = vmul.f32 %v4266, %v4684
    %v4692 = vmul.f32 %v4267, %v4684
    %v4693 = vmul.f32 %v4268, %v4684
    %v4694 = vmul.f32 %v4269, %v4688
    %v4695 = vmul.f32 %v4270, %v4688
    %v4696 = vmul.f32 %v4271, %v4688
    %v4697 = vmul.f32 %v4272, %v4688
    %4698 = vset.pattern.permute.xlu0 51
    %4699 = vperm.xlu0 %4698, %v104
    %v4700 = vpop.permute.xlu0 %4699
    %4702 = vset.pattern.permute.xlu0 51
    %4703 = vperm.xlu0 %4702, %v105
    %v4704 = vpop.permute.xlu0 %4703
    %v4706 = vmul.f32 %v4249, %v4700
    %v4707 = vmul.f32 %v4250, %v4700
    %v4708 = vmul.f32 %v4251, %v4700
    %v4709 = vmul.f32 %v4252, %v4700
    %v4710 = vmul.f32 %v4253, %v4704
    %v4711 = vmul.f32 %v4254, %v4704
    %v4712 = vmul.f32 %v4255, %v4704
    %v4713 = vmul.f32 %v4256, %v4704
    %v4714 = vadd.f32 %v4690, %v4706
    %v4715 = vadd.f32 %v4691, %v4707
    %v4716 = vadd.f32 %v4692, %v4708
    %v4717 = vadd.f32 %v4693, %v4709
    %v4718 = vadd.f32 %v4694, %v4710
    %v4719 = vadd.f32 %v4695, %v4711
    %v4720 = vadd.f32 %v4696, %v4712
    %v4721 = vadd.f32 %v4697, %v4713
    %4722 = vrot.lane.b32.xlu0 %v4714, 64
    %v4723 = vpop.permute.xlu0 %4722
    %4724 = vrot.lane.b32.xlu0 %v4718, 64
    %v4725 = vpop.permute.xlu0 %4724
    %4726 = vrot.lane.b32.xlu0 %v4715, 64
    %v4727 = vpop.permute.xlu0 %4726
    %4728 = vrot.lane.b32.xlu0 %v4719, 64
    %v4729 = vpop.permute.xlu0 %4728
    %4730 = vrot.lane.b32.xlu0 %v4716, 64
    %v4731 = vpop.permute.xlu0 %4730
    %4732 = vrot.lane.b32.xlu0 %v4720, 64
    %v4733 = vpop.permute.xlu0 %4732
    %4734 = vrot.lane.b32.xlu0 %v4717, 64
    %v4735 = vpop.permute.xlu0 %4734
    %4736 = vrot.lane.b32.xlu0 %v4721, 64
    %v4737 = vpop.permute.xlu0 %4736
    %vm4738 = vcmp.lt.s32.totalorder %v109, 64
    %v4739 = vsel %vm4738, %v4731, %v4735
    %v4740 = vsel %vm4738, %v4733, %v4737
    %v4741 = vsel %vm4738, %v4727, %v4731
    %v4742 = vsel %vm4738, %v4729, %v4733
    %v4743 = vsel %vm4738, %v4723, %v4727
    %v4744 = vsel %vm4738, %v4725, %v4729
    %v4745 = vsel %vm4738, %v4735, %v4723
    %v4746 = vsel %vm4738, %v4737, %v4725
    %vm4747 = vcmp.ge.s32.totalorder %v113, 64
    %vm4748 = vcmp.ge.s32.totalorder %v114, 64
    %vm4749 = vcmp.ge.s32.totalorder %v115, 64
    %vm4750 = vcmp.ge.s32.totalorder %v116, 64
    %v4751 = vsel %vm4747, 1, 0
    %v4752 = vsel %vm4748, 1, 0
    %v4753 = vsel %vm4749, 1, 0
    %v4754 = vsel %vm4750, 1, 0
    %v4755 = vcvt.s32.f32 %v4751
    %v4756 = vcvt.s32.f32 %v4752
    %v4757 = vcvt.s32.f32 %v4753
    %v4758 = vcvt.s32.f32 %v4754
    %v4759 = vmul.f32 %v4745, %v4755
    %v4760 = vmul.f32 %v4743, %v4756
    %v4761 = vmul.f32 %v4741, %v4757
    %v4762 = vmul.f32 %v4739, %v4758
    %v4763 = vmul.f32 %v4746, %v4755
    %v4764 = vmul.f32 %v4744, %v4756
    %v4765 = vmul.f32 %v4742, %v4757
    %v4766 = vmul.f32 %v4740, %v4758
    %v4767 = vadd.f32 %v4674, %v4759
    %v4768 = vadd.f32 %v4675, %v4760
    %v4769 = vadd.f32 %v4676, %v4761
    %v4770 = vadd.f32 %v4677, %v4762
    %v4771 = vadd.f32 %v4678, %v4763
    %v4772 = vadd.f32 %v4679, %v4764
    %v4773 = vadd.f32 %v4680, %v4765
    %v4774 = vadd.f32 %v4681, %v4766
    %4775 = vset.pattern.permute.xlu0 89
    %4776 = vperm.xlu0 %4775, %v104
    %v4777 = vpop.permute.xlu0 %4776
    %4779 = vset.pattern.permute.xlu0 89
    %4780 = vperm.xlu0 %4779, %v105
    %v4781 = vpop.permute.xlu0 %4780
    %v4783 = vmul.f32 %v4265, %v4777
    %v4784 = vmul.f32 %v4266, %v4777
    %v4785 = vmul.f32 %v4267, %v4777
    %v4786 = vmul.f32 %v4268, %v4777
    %v4787 = vmul.f32 %v4269, %v4781
    %v4788 = vmul.f32 %v4270, %v4781
    %v4789 = vmul.f32 %v4271, %v4781
    %v4790 = vmul.f32 %v4272, %v4781
    %4791 = vset.pattern.permute.xlu0 52
    %4792 = vperm.xlu0 %4791, %v104
    %v4793 = vpop.permute.xlu0 %4792
    %4795 = vset.pattern.permute.xlu0 52
    %4796 = vperm.xlu0 %4795, %v105
    %v4797 = vpop.permute.xlu0 %4796
    %v4799 = vmul.f32 %v4249, %v4793
    %v4800 = vmul.f32 %v4250, %v4793
    %v4801 = vmul.f32 %v4251, %v4793
    %v4802 = vmul.f32 %v4252, %v4793
    %v4803 = vmul.f32 %v4253, %v4797
    %v4804 = vmul.f32 %v4254, %v4797
    %v4805 = vmul.f32 %v4255, %v4797
    %v4806 = vmul.f32 %v4256, %v4797
    %v4807 = vadd.f32 %v4783, %v4799
    %v4808 = vadd.f32 %v4784, %v4800
    %v4809 = vadd.f32 %v4785, %v4801
    %v4810 = vadd.f32 %v4786, %v4802
    %v4811 = vadd.f32 %v4787, %v4803
    %v4812 = vadd.f32 %v4788, %v4804
    %v4813 = vadd.f32 %v4789, %v4805
    %v4814 = vadd.f32 %v4790, %v4806
    %4815 = vset.pattern.permute.xlu0 32
    %4816 = vperm.xlu0 %4815, %v104
    %v4817 = vpop.permute.xlu0 %4816
    %4819 = vset.pattern.permute.xlu0 32
    %4820 = vperm.xlu0 %4819, %v105
    %v4821 = vpop.permute.xlu0 %4820
    %v4823 = vmul.f32 %v4233, %v4817
    %v4824 = vmul.f32 %v4234, %v4817
    %v4825 = vmul.f32 %v4235, %v4817
    %v4826 = vmul.f32 %v4236, %v4817
    %v4827 = vmul.f32 %v4237, %v4821
    %v4828 = vmul.f32 %v4238, %v4821
    %v4829 = vmul.f32 %v4239, %v4821
    %v4830 = vmul.f32 %v4240, %v4821
    %v4831 = vadd.f32 %v4807, %v4823
    %v4832 = vadd.f32 %v4808, %v4824
    %v4833 = vadd.f32 %v4809, %v4825
    %v4834 = vadd.f32 %v4810, %v4826
    %v4835 = vadd.f32 %v4811, %v4827
    %v4836 = vadd.f32 %v4812, %v4828
    %v4837 = vadd.f32 %v4813, %v4829
    %v4838 = vadd.f32 %v4814, %v4830
    %4839 = vrot.lane.b32.xlu0 %v4831, 48
    %v4840 = vpop.permute.xlu0 %4839
    %4841 = vrot.lane.b32.xlu0 %v4835, 48
    %v4842 = vpop.permute.xlu0 %4841
    %4843 = vrot.lane.b32.xlu0 %v4832, 48
    %v4844 = vpop.permute.xlu0 %4843
    %4845 = vrot.lane.b32.xlu0 %v4836, 48
    %v4846 = vpop.permute.xlu0 %4845
    %4847 = vrot.lane.b32.xlu0 %v4833, 48
    %v4848 = vpop.permute.xlu0 %4847
    %4849 = vrot.lane.b32.xlu0 %v4837, 48
    %v4850 = vpop.permute.xlu0 %4849
    %4851 = vrot.lane.b32.xlu0 %v4834, 48
    %v4852 = vpop.permute.xlu0 %4851
    %4853 = vrot.lane.b32.xlu0 %v4838, 48
    %v4854 = vpop.permute.xlu0 %4853
    %vm4855 = vcmp.lt.s32.totalorder %v109, 48
    %v4856 = vsel %vm4855, %v4848, %v4852
    %v4857 = vsel %vm4855, %v4850, %v4854
    %v4858 = vsel %vm4855, %v4844, %v4848
    %v4859 = vsel %vm4855, %v4846, %v4850
    %v4860 = vsel %vm4855, %v4840, %v4844
    %v4861 = vsel %vm4855, %v4842, %v4846
    %v4862 = vsel %vm4855, %v4852, %v4840
    %v4863 = vsel %vm4855, %v4854, %v4842
    %vm4864 = vcmp.ge.s32.totalorder %v113, 48
    %vm4865 = vcmp.ge.s32.totalorder %v114, 48
    %vm4866 = vcmp.ge.s32.totalorder %v115, 48
    %vm4867 = vcmp.ge.s32.totalorder %v116, 48
    %v4868 = vsel %vm4864, 1, 0
    %v4869 = vsel %vm4865, 1, 0
    %v4870 = vsel %vm4866, 1, 0
    %v4871 = vsel %vm4867, 1, 0
    %v4872 = vcvt.s32.f32 %v4868
    %v4873 = vcvt.s32.f32 %v4869
    %v4874 = vcvt.s32.f32 %v4870
    %v4875 = vcvt.s32.f32 %v4871
    %v4876 = vmul.f32 %v4862, %v4872
    %v4877 = vmul.f32 %v4860, %v4873
    %v4878 = vmul.f32 %v4858, %v4874
    %v4879 = vmul.f32 %v4856, %v4875
    %v4880 = vmul.f32 %v4863, %v4872
    %v4881 = vmul.f32 %v4861, %v4873
    %v4882 = vmul.f32 %v4859, %v4874
    %v4883 = vmul.f32 %v4857, %v4875
    %v4884 = vadd.f32 %v4767, %v4876
    %v4885 = vadd.f32 %v4768, %v4877
    %v4886 = vadd.f32 %v4769, %v4878
    %v4887 = vadd.f32 %v4770, %v4879
    %v4888 = vadd.f32 %v4771, %v4880
    %v4889 = vadd.f32 %v4772, %v4881
    %v4890 = vadd.f32 %v4773, %v4882
    %v4891 = vadd.f32 %v4774, %v4883
    %4892 = vset.pattern.permute.xlu0 90
    %4893 = vperm.xlu0 %4892, %v104
    %v4894 = vpop.permute.xlu0 %4893
    %4896 = vset.pattern.permute.xlu0 90
    %4897 = vperm.xlu0 %4896, %v105
    %v4898 = vpop.permute.xlu0 %4897
    %v4900 = vmul.f32 %v4265, %v4894
    %v4901 = vmul.f32 %v4266, %v4894
    %v4902 = vmul.f32 %v4267, %v4894
    %v4903 = vmul.f32 %v4268, %v4894
    %v4904 = vmul.f32 %v4269, %v4898
    %v4905 = vmul.f32 %v4270, %v4898
    %v4906 = vmul.f32 %v4271, %v4898
    %v4907 = vmul.f32 %v4272, %v4898
    %4908 = vset.pattern.permute.xlu0 53
    %4909 = vperm.xlu0 %4908, %v104
    %v4910 = vpop.permute.xlu0 %4909
    %4912 = vset.pattern.permute.xlu0 53
    %4913 = vperm.xlu0 %4912, %v105
    %v4914 = vpop.permute.xlu0 %4913
    %v4916 = vmul.f32 %v4249, %v4910
    %v4917 = vmul.f32 %v4250, %v4910
    %v4918 = vmul.f32 %v4251, %v4910
    %v4919 = vmul.f32 %v4252, %v4910
    %v4920 = vmul.f32 %v4253, %v4914
    %v4921 = vmul.f32 %v4254, %v4914
    %v4922 = vmul.f32 %v4255, %v4914
    %v4923 = vmul.f32 %v4256, %v4914
    %v4924 = vadd.f32 %v4900, %v4916
    %v4925 = vadd.f32 %v4901, %v4917
    %v4926 = vadd.f32 %v4902, %v4918
    %v4927 = vadd.f32 %v4903, %v4919
    %v4928 = vadd.f32 %v4904, %v4920
    %v4929 = vadd.f32 %v4905, %v4921
    %v4930 = vadd.f32 %v4906, %v4922
    %v4931 = vadd.f32 %v4907, %v4923
    %4932 = vset.pattern.permute.xlu0 33
    %4933 = vperm.xlu0 %4932, %v104
    %v4934 = vpop.permute.xlu0 %4933
    %4936 = vset.pattern.permute.xlu0 33
    %4937 = vperm.xlu0 %4936, %v105
    %v4938 = vpop.permute.xlu0 %4937
    %v4940 = vmul.f32 %v4233, %v4934
    %v4941 = vmul.f32 %v4234, %v4934
    %v4942 = vmul.f32 %v4235, %v4934
    %v4943 = vmul.f32 %v4236, %v4934
    %v4944 = vmul.f32 %v4237, %v4938
    %v4945 = vmul.f32 %v4238, %v4938
    %v4946 = vmul.f32 %v4239, %v4938
    %v4947 = vmul.f32 %v4240, %v4938
    %v4948 = vadd.f32 %v4924, %v4940
    %v4949 = vadd.f32 %v4925, %v4941
    %v4950 = vadd.f32 %v4926, %v4942
    %v4951 = vadd.f32 %v4927, %v4943
    %v4952 = vadd.f32 %v4928, %v4944
    %v4953 = vadd.f32 %v4929, %v4945
    %v4954 = vadd.f32 %v4930, %v4946
    %v4955 = vadd.f32 %v4931, %v4947
    %4956 = vrot.lane.b32.xlu0 %v4948, 32
    %v4957 = vpop.permute.xlu0 %4956
    %4958 = vrot.lane.b32.xlu0 %v4952, 32
    %v4959 = vpop.permute.xlu0 %4958
    %4960 = vrot.lane.b32.xlu0 %v4949, 32
    %v4961 = vpop.permute.xlu0 %4960
    %4962 = vrot.lane.b32.xlu0 %v4953, 32
    %v4963 = vpop.permute.xlu0 %4962
    %4964 = vrot.lane.b32.xlu0 %v4950, 32
    %v4965 = vpop.permute.xlu0 %4964
    %4966 = vrot.lane.b32.xlu0 %v4954, 32
    %v4967 = vpop.permute.xlu0 %4966
    %4968 = vrot.lane.b32.xlu0 %v4951, 32
    %v4969 = vpop.permute.xlu0 %4968
    %4970 = vrot.lane.b32.xlu0 %v4955, 32
    %v4971 = vpop.permute.xlu0 %4970
    %v4972 = vsel %vm935, %v4965, %v4969
    %v4973 = vsel %vm935, %v4967, %v4971
    %v4974 = vsel %vm935, %v4961, %v4965
    %v4975 = vsel %vm935, %v4963, %v4967
    %v4976 = vsel %vm935, %v4957, %v4961
    %v4977 = vsel %vm935, %v4959, %v4963
    %v4978 = vsel %vm935, %v4969, %v4957
    %v4979 = vsel %vm935, %v4971, %v4959
    %v4980 = vmul.f32 %v4978, %v948
    %v4981 = vmul.f32 %v4976, %v949
    %v4982 = vmul.f32 %v4974, %v950
    %v4983 = vmul.f32 %v4972, %v951
    %v4984 = vmul.f32 %v4979, %v948
    %v4985 = vmul.f32 %v4977, %v949
    %v4986 = vmul.f32 %v4975, %v950
    %v4987 = vmul.f32 %v4973, %v951
    %v4988 = vadd.f32 %v4884, %v4980
    %v4989 = vadd.f32 %v4885, %v4981
    %v4990 = vadd.f32 %v4886, %v4982
    %v4991 = vadd.f32 %v4887, %v4983
    %v4992 = vadd.f32 %v4888, %v4984
    %v4993 = vadd.f32 %v4889, %v4985
    %v4994 = vadd.f32 %v4890, %v4986
    %v4995 = vadd.f32 %v4891, %v4987
    %4996 = vset.pattern.permute.xlu0 91
    %4997 = vperm.xlu0 %4996, %v104
    %v4998 = vpop.permute.xlu0 %4997
    %5000 = vset.pattern.permute.xlu0 91
    %5001 = vperm.xlu0 %5000, %v105
    %v5002 = vpop.permute.xlu0 %5001
    %v5004 = vmul.f32 %v4265, %v4998
    %v5005 = vmul.f32 %v4266, %v4998
    %v5006 = vmul.f32 %v4267, %v4998
    %v5007 = vmul.f32 %v4268, %v4998
    %v5008 = vmul.f32 %v4269, %v5002
    %v5009 = vmul.f32 %v4270, %v5002
    %v5010 = vmul.f32 %v4271, %v5002
    %v5011 = vmul.f32 %v4272, %v5002
    %5012 = vset.pattern.permute.xlu0 54
    %5013 = vperm.xlu0 %5012, %v104
    %v5014 = vpop.permute.xlu0 %5013
    %5016 = vset.pattern.permute.xlu0 54
    %5017 = vperm.xlu0 %5016, %v105
    %v5018 = vpop.permute.xlu0 %5017
    %v5020 = vmul.f32 %v4249, %v5014
    %v5021 = vmul.f32 %v4250, %v5014
    %v5022 = vmul.f32 %v4251, %v5014
    %v5023 = vmul.f32 %v4252, %v5014
    %v5024 = vmul.f32 %v4253, %v5018
    %v5025 = vmul.f32 %v4254, %v5018
    %v5026 = vmul.f32 %v4255, %v5018
    %v5027 = vmul.f32 %v4256, %v5018
    %v5028 = vadd.f32 %v5004, %v5020
    %v5029 = vadd.f32 %v5005, %v5021
    %v5030 = vadd.f32 %v5006, %v5022
    %v5031 = vadd.f32 %v5007, %v5023
    %v5032 = vadd.f32 %v5008, %v5024
    %v5033 = vadd.f32 %v5009, %v5025
    %v5034 = vadd.f32 %v5010, %v5026
    %v5035 = vadd.f32 %v5011, %v5027
    %5036 = vset.pattern.permute.xlu0 34
    %5037 = vperm.xlu0 %5036, %v104
    %v5038 = vpop.permute.xlu0 %5037
    %5040 = vset.pattern.permute.xlu0 34
    %5041 = vperm.xlu0 %5040, %v105
    %v5042 = vpop.permute.xlu0 %5041
    %v5044 = vmul.f32 %v4233, %v5038
    %v5045 = vmul.f32 %v4234, %v5038
    %v5046 = vmul.f32 %v4235, %v5038
    %v5047 = vmul.f32 %v4236, %v5038
    %v5048 = vmul.f32 %v4237, %v5042
    %v5049 = vmul.f32 %v4238, %v5042
    %v5050 = vmul.f32 %v4239, %v5042
    %v5051 = vmul.f32 %v4240, %v5042
    %v5052 = vadd.f32 %v5028, %v5044
    %v5053 = vadd.f32 %v5029, %v5045
    %v5054 = vadd.f32 %v5030, %v5046
    %v5055 = vadd.f32 %v5031, %v5047
    %v5056 = vadd.f32 %v5032, %v5048
    %v5057 = vadd.f32 %v5033, %v5049
    %v5058 = vadd.f32 %v5034, %v5050
    %v5059 = vadd.f32 %v5035, %v5051
    %5060 = vrot.lane.b32.xlu0 %v5052, 16
    %v5061 = vpop.permute.xlu0 %5060
    %5062 = vrot.lane.b32.xlu0 %v5056, 16
    %v5063 = vpop.permute.xlu0 %5062
    %5064 = vrot.lane.b32.xlu0 %v5053, 16
    %v5065 = vpop.permute.xlu0 %5064
    %5066 = vrot.lane.b32.xlu0 %v5057, 16
    %v5067 = vpop.permute.xlu0 %5066
    %5068 = vrot.lane.b32.xlu0 %v5054, 16
    %v5069 = vpop.permute.xlu0 %5068
    %5070 = vrot.lane.b32.xlu0 %v5058, 16
    %v5071 = vpop.permute.xlu0 %5070
    %5072 = vrot.lane.b32.xlu0 %v5055, 16
    %v5073 = vpop.permute.xlu0 %5072
    %5074 = vrot.lane.b32.xlu0 %v5059, 16
    %v5075 = vpop.permute.xlu0 %5074
    %v5076 = vsel %vm1288, %v5069, %v5073
    %v5077 = vsel %vm1288, %v5071, %v5075
    %v5078 = vsel %vm1288, %v5065, %v5069
    %v5079 = vsel %vm1288, %v5067, %v5071
    %v5080 = vsel %vm1288, %v5061, %v5065
    %v5081 = vsel %vm1288, %v5063, %v5067
    %v5082 = vsel %vm1288, %v5073, %v5061
    %v5083 = vsel %vm1288, %v5075, %v5063
    %v5084 = vmul.f32 %v5082, %v1301
    %v5085 = vmul.f32 %v5080, %v1302
    %v5086 = vmul.f32 %v5078, %v1303
    %v5087 = vmul.f32 %v5076, %v1304
    %v5088 = vmul.f32 %v5083, %v1301
    %v5089 = vmul.f32 %v5081, %v1302
    %v5090 = vmul.f32 %v5079, %v1303
    %v5091 = vmul.f32 %v5077, %v1304
    %v5092 = vadd.f32 %v4988, %v5084
    %v5093 = vadd.f32 %v4989, %v5085
    %v5094 = vadd.f32 %v4990, %v5086
    %v5095 = vadd.f32 %v4991, %v5087
    %v5096 = vadd.f32 %v4992, %v5088
    %v5097 = vadd.f32 %v4993, %v5089
    %v5098 = vadd.f32 %v4994, %v5090
    %v5099 = vadd.f32 %v4995, %v5091
    %5100 = vset.pattern.permute.xlu0 92
    %5101 = vperm.xlu0 %5100, %v104
    %v5102 = vpop.permute.xlu0 %5101
    %5104 = vset.pattern.permute.xlu0 92
    %5105 = vperm.xlu0 %5104, %v105
    %v5106 = vpop.permute.xlu0 %5105
    %v5108 = vmul.f32 %v4265, %v5102
    %v5109 = vmul.f32 %v4266, %v5102
    %v5110 = vmul.f32 %v4267, %v5102
    %v5111 = vmul.f32 %v4268, %v5102
    %v5112 = vmul.f32 %v4269, %v5106
    %v5113 = vmul.f32 %v4270, %v5106
    %v5114 = vmul.f32 %v4271, %v5106
    %v5115 = vmul.f32 %v4272, %v5106
    %5116 = vset.pattern.permute.xlu0 55
    %5117 = vperm.xlu0 %5116, %v104
    %v5118 = vpop.permute.xlu0 %5117
    %5120 = vset.pattern.permute.xlu0 55
    %5121 = vperm.xlu0 %5120, %v105
    %v5122 = vpop.permute.xlu0 %5121
    %v5124 = vmul.f32 %v4249, %v5118
    %v5125 = vmul.f32 %v4250, %v5118
    %v5126 = vmul.f32 %v4251, %v5118
    %v5127 = vmul.f32 %v4252, %v5118
    %v5128 = vmul.f32 %v4253, %v5122
    %v5129 = vmul.f32 %v4254, %v5122
    %v5130 = vmul.f32 %v4255, %v5122
    %v5131 = vmul.f32 %v4256, %v5122
    %v5132 = vadd.f32 %v5108, %v5124
    %v5133 = vadd.f32 %v5109, %v5125
    %v5134 = vadd.f32 %v5110, %v5126
    %v5135 = vadd.f32 %v5111, %v5127
    %v5136 = vadd.f32 %v5112, %v5128
    %v5137 = vadd.f32 %v5113, %v5129
    %v5138 = vadd.f32 %v5114, %v5130
    %v5139 = vadd.f32 %v5115, %v5131
    %5140 = vset.pattern.permute.xlu0 35
    %5141 = vperm.xlu0 %5140, %v104
    %v5142 = vpop.permute.xlu0 %5141
    %5144 = vset.pattern.permute.xlu0 35
    %5145 = vperm.xlu0 %5144, %v105
    %v5146 = vpop.permute.xlu0 %5145
    %v5148 = vmul.f32 %v4233, %v5142
    %v5149 = vmul.f32 %v4234, %v5142
    %v5150 = vmul.f32 %v4235, %v5142
    %v5151 = vmul.f32 %v4236, %v5142
    %v5152 = vmul.f32 %v4237, %v5146
    %v5153 = vmul.f32 %v4238, %v5146
    %v5154 = vmul.f32 %v4239, %v5146
    %v5155 = vmul.f32 %v4240, %v5146
    %v5156 = vadd.f32 %v5132, %v5148
    %v5157 = vadd.f32 %v5133, %v5149
    %v5158 = vadd.f32 %v5134, %v5150
    %v5159 = vadd.f32 %v5135, %v5151
    %v5160 = vadd.f32 %v5136, %v5152
    %v5161 = vadd.f32 %v5137, %v5153
    %v5162 = vadd.f32 %v5138, %v5154
    %v5163 = vadd.f32 %v5139, %v5155
    %v5164 = vadd.f32 %v5092, %v5156
    %v5165 = vadd.f32 %v5093, %v5157
    %v5166 = vadd.f32 %v5094, %v5158
    %v5167 = vadd.f32 %v5095, %v5159
    %v5168 = vadd.f32 %v5096, %v5160
    %v5169 = vadd.f32 %v5097, %v5161
    %v5170 = vadd.f32 %v5098, %v5162
    %v5171 = vadd.f32 %v5099, %v5163
    %5172 = vset.pattern.permute.xlu0 93
    %5173 = vperm.xlu0 %5172, %v104
    %v5174 = vpop.permute.xlu0 %5173
    %5176 = vset.pattern.permute.xlu0 93
    %5177 = vperm.xlu0 %5176, %v105
    %v5178 = vpop.permute.xlu0 %5177
    %v5180 = vmul.f32 %v4265, %v5174
    %v5181 = vmul.f32 %v4266, %v5174
    %v5182 = vmul.f32 %v4267, %v5174
    %v5183 = vmul.f32 %v4268, %v5174
    %v5184 = vmul.f32 %v4269, %v5178
    %v5185 = vmul.f32 %v4270, %v5178
    %v5186 = vmul.f32 %v4271, %v5178
    %v5187 = vmul.f32 %v4272, %v5178
    %5188 = vset.pattern.permute.xlu0 56
    %5189 = vperm.xlu0 %5188, %v104
    %v5190 = vpop.permute.xlu0 %5189
    %5192 = vset.pattern.permute.xlu0 56
    %5193 = vperm.xlu0 %5192, %v105
    %v5194 = vpop.permute.xlu0 %5193
    %v5196 = vmul.f32 %v4249, %v5190
    %v5197 = vmul.f32 %v4250, %v5190
    %v5198 = vmul.f32 %v4251, %v5190
    %v5199 = vmul.f32 %v4252, %v5190
    %v5200 = vmul.f32 %v4253, %v5194
    %v5201 = vmul.f32 %v4254, %v5194
    %v5202 = vmul.f32 %v4255, %v5194
    %v5203 = vmul.f32 %v4256, %v5194
    %v5204 = vadd.f32 %v5180, %v5196
    %v5205 = vadd.f32 %v5181, %v5197
    %v5206 = vadd.f32 %v5182, %v5198
    %v5207 = vadd.f32 %v5183, %v5199
    %v5208 = vadd.f32 %v5184, %v5200
    %v5209 = vadd.f32 %v5185, %v5201
    %v5210 = vadd.f32 %v5186, %v5202
    %v5211 = vadd.f32 %v5187, %v5203
    %5212 = vset.pattern.permute.xlu0 36
    %5213 = vperm.xlu0 %5212, %v104
    %v5214 = vpop.permute.xlu0 %5213
    %5216 = vset.pattern.permute.xlu0 36
    %5217 = vperm.xlu0 %5216, %v105
    %v5218 = vpop.permute.xlu0 %5217
    %v5220 = vmul.f32 %v4233, %v5214
    %v5221 = vmul.f32 %v4234, %v5214
    %v5222 = vmul.f32 %v4235, %v5214
    %v5223 = vmul.f32 %v4236, %v5214
    %v5224 = vmul.f32 %v4237, %v5218
    %v5225 = vmul.f32 %v4238, %v5218
    %v5226 = vmul.f32 %v4239, %v5218
    %v5227 = vmul.f32 %v4240, %v5218
    %v5228 = vadd.f32 %v5204, %v5220
    %v5229 = vadd.f32 %v5205, %v5221
    %v5230 = vadd.f32 %v5206, %v5222
    %v5231 = vadd.f32 %v5207, %v5223
    %v5232 = vadd.f32 %v5208, %v5224
    %v5233 = vadd.f32 %v5209, %v5225
    %v5234 = vadd.f32 %v5210, %v5226
    %v5235 = vadd.f32 %v5211, %v5227
    %5236 = vrot.lane.b32.xlu0 %v5228, 112
    %v5237 = vpop.permute.xlu0 %5236
    %5238 = vrot.lane.b32.xlu0 %v5232, 112
    %v5239 = vpop.permute.xlu0 %5238
    %5240 = vrot.lane.b32.xlu0 %v5229, 112
    %v5241 = vpop.permute.xlu0 %5240
    %5242 = vrot.lane.b32.xlu0 %v5233, 112
    %v5243 = vpop.permute.xlu0 %5242
    %5244 = vrot.lane.b32.xlu0 %v5230, 112
    %v5245 = vpop.permute.xlu0 %5244
    %5246 = vrot.lane.b32.xlu0 %v5234, 112
    %v5247 = vpop.permute.xlu0 %5246
    %5248 = vrot.lane.b32.xlu0 %v5231, 112
    %v5249 = vpop.permute.xlu0 %5248
    %5250 = vrot.lane.b32.xlu0 %v5235, 112
    %v5251 = vpop.permute.xlu0 %5250
    %v5252 = vsel %vm1917, %v5245, %v5249
    %v5253 = vsel %vm1917, %v5247, %v5251
    %v5254 = vsel %vm1917, %v5241, %v5245
    %v5255 = vsel %vm1917, %v5243, %v5247
    %v5256 = vsel %vm1917, %v5237, %v5241
    %v5257 = vsel %vm1917, %v5239, %v5243
    %v5258 = vsel %vm1917, %v5249, %v5237
    %v5259 = vsel %vm1917, %v5251, %v5239
    %v5260 = vmul.f32 %v5256, %v1930
    %v5261 = vmul.f32 %v5254, %v1931
    %v5262 = vmul.f32 %v5252, %v1932
    %v5263 = vmul.f32 %v5258, %v1933
    %v5264 = vmul.f32 %v5257, %v1930
    %v5265 = vmul.f32 %v5255, %v1931
    %v5266 = vmul.f32 %v5253, %v1932
    %v5267 = vmul.f32 %v5259, %v1933
    %v5268 = vadd.f32 %v5164, %v5260
    %v5269 = vadd.f32 %v5165, %v5261
    %v5270 = vadd.f32 %v5166, %v5262
    %v5271 = vadd.f32 %v5167, %v5263
    %v5272 = vadd.f32 %v5168, %v5264
    %v5273 = vadd.f32 %v5169, %v5265
    %v5274 = vadd.f32 %v5170, %v5266
    %v5275 = vadd.f32 %v5171, %v5267
    %5276 = vset.pattern.permute.xlu0 94
    %5277 = vperm.xlu0 %5276, %v104
    %v5278 = vpop.permute.xlu0 %5277
    %5280 = vset.pattern.permute.xlu0 94
    %5281 = vperm.xlu0 %5280, %v105
    %v5282 = vpop.permute.xlu0 %5281
    %v5284 = vmul.f32 %v4265, %v5278
    %v5285 = vmul.f32 %v4266, %v5278
    %v5286 = vmul.f32 %v4267, %v5278
    %v5287 = vmul.f32 %v4268, %v5278
    %v5288 = vmul.f32 %v4269, %v5282
    %v5289 = vmul.f32 %v4270, %v5282
    %v5290 = vmul.f32 %v4271, %v5282
    %v5291 = vmul.f32 %v4272, %v5282
    %5292 = vset.pattern.permute.xlu0 57
    %5293 = vperm.xlu0 %5292, %v104
    %v5294 = vpop.permute.xlu0 %5293
    %5296 = vset.pattern.permute.xlu0 57
    %5297 = vperm.xlu0 %5296, %v105
    %v5298 = vpop.permute.xlu0 %5297
    %v5300 = vmul.f32 %v4249, %v5294
    %v5301 = vmul.f32 %v4250, %v5294
    %v5302 = vmul.f32 %v4251, %v5294
    %v5303 = vmul.f32 %v4252, %v5294
    %v5304 = vmul.f32 %v4253, %v5298
    %v5305 = vmul.f32 %v4254, %v5298
    %v5306 = vmul.f32 %v4255, %v5298
    %v5307 = vmul.f32 %v4256, %v5298
    %v5308 = vadd.f32 %v5284, %v5300
    %v5309 = vadd.f32 %v5285, %v5301
    %v5310 = vadd.f32 %v5286, %v5302
    %v5311 = vadd.f32 %v5287, %v5303
    %v5312 = vadd.f32 %v5288, %v5304
    %v5313 = vadd.f32 %v5289, %v5305
    %v5314 = vadd.f32 %v5290, %v5306
    %v5315 = vadd.f32 %v5291, %v5307
    %5316 = vset.pattern.permute.xlu0 37
    %5317 = vperm.xlu0 %5316, %v104
    %v5318 = vpop.permute.xlu0 %5317
    %5320 = vset.pattern.permute.xlu0 37
    %5321 = vperm.xlu0 %5320, %v105
    %v5322 = vpop.permute.xlu0 %5321
    %v5324 = vmul.f32 %v4233, %v5318
    %v5325 = vmul.f32 %v4234, %v5318
    %v5326 = vmul.f32 %v4235, %v5318
    %v5327 = vmul.f32 %v4236, %v5318
    %v5328 = vmul.f32 %v4237, %v5322
    %v5329 = vmul.f32 %v4238, %v5322
    %v5330 = vmul.f32 %v4239, %v5322
    %v5331 = vmul.f32 %v4240, %v5322
    %v5332 = vadd.f32 %v5308, %v5324
    %v5333 = vadd.f32 %v5309, %v5325
    %v5334 = vadd.f32 %v5310, %v5326
    %v5335 = vadd.f32 %v5311, %v5327
    %v5336 = vadd.f32 %v5312, %v5328
    %v5337 = vadd.f32 %v5313, %v5329
    %v5338 = vadd.f32 %v5314, %v5330
    %v5339 = vadd.f32 %v5315, %v5331
    %5340 = vrot.lane.b32.xlu0 %v5332, 96
    %v5341 = vpop.permute.xlu0 %5340
    %5342 = vrot.lane.b32.xlu0 %v5336, 96
    %v5343 = vpop.permute.xlu0 %5342
    %5344 = vrot.lane.b32.xlu0 %v5333, 96
    %v5345 = vpop.permute.xlu0 %5344
    %5346 = vrot.lane.b32.xlu0 %v5337, 96
    %v5347 = vpop.permute.xlu0 %5346
    %5348 = vrot.lane.b32.xlu0 %v5334, 96
    %v5349 = vpop.permute.xlu0 %5348
    %5350 = vrot.lane.b32.xlu0 %v5338, 96
    %v5351 = vpop.permute.xlu0 %5350
    %5352 = vrot.lane.b32.xlu0 %v5335, 96
    %v5353 = vpop.permute.xlu0 %5352
    %5354 = vrot.lane.b32.xlu0 %v5339, 96
    %v5355 = vpop.permute.xlu0 %5354
    %v5356 = vsel %vm2262, %v5349, %v5353
    %v5357 = vsel %vm2262, %v5351, %v5355
    %v5358 = vsel %vm2262, %v5345, %v5349
    %v5359 = vsel %vm2262, %v5347, %v5351
    %v5360 = vsel %vm2262, %v5341, %v5345
    %v5361 = vsel %vm2262, %v5343, %v5347
    %v5362 = vsel %vm2262, %v5353, %v5341
    %v5363 = vsel %vm2262, %v5355, %v5343
    %v5364 = vmul.f32 %v5360, %v2275
    %v5365 = vmul.f32 %v5358, %v2276
    %v5366 = vmul.f32 %v5356, %v2277
    %v5367 = vmul.f32 %v5362, %v2278
    %v5368 = vmul.f32 %v5361, %v2275
    %v5369 = vmul.f32 %v5359, %v2276
    %v5370 = vmul.f32 %v5357, %v2277
    %v5371 = vmul.f32 %v5363, %v2278
    %v5372 = vadd.f32 %v5268, %v5364
    %v5373 = vadd.f32 %v5269, %v5365
    %v5374 = vadd.f32 %v5270, %v5366
    %v5375 = vadd.f32 %v5271, %v5367
    %v5376 = vadd.f32 %v5272, %v5368
    %v5377 = vadd.f32 %v5273, %v5369
    %v5378 = vadd.f32 %v5274, %v5370
    %v5379 = vadd.f32 %v5275, %v5371
    %5380 = vset.pattern.permute.xlu0 95
    %5381 = vperm.xlu0 %5380, %v104
    %v5382 = vpop.permute.xlu0 %5381
    %5384 = vset.pattern.permute.xlu0 95
    %5385 = vperm.xlu0 %5384, %v105
    %v5386 = vpop.permute.xlu0 %5385
    %v5388 = vmul.f32 %v4265, %v5382
    %v5389 = vmul.f32 %v4266, %v5382
    %v5390 = vmul.f32 %v4267, %v5382
    %v5391 = vmul.f32 %v4268, %v5382
    %v5392 = vmul.f32 %v4269, %v5386
    %v5393 = vmul.f32 %v4270, %v5386
    %v5394 = vmul.f32 %v4271, %v5386
    %v5395 = vmul.f32 %v4272, %v5386
    %5396 = vset.pattern.permute.xlu0 58
    %5397 = vperm.xlu0 %5396, %v104
    %v5398 = vpop.permute.xlu0 %5397
    %5400 = vset.pattern.permute.xlu0 58
    %5401 = vperm.xlu0 %5400, %v105
    %v5402 = vpop.permute.xlu0 %5401
    %v5404 = vmul.f32 %v4249, %v5398
    %v5405 = vmul.f32 %v4250, %v5398
    %v5406 = vmul.f32 %v4251, %v5398
    %v5407 = vmul.f32 %v4252, %v5398
    %v5408 = vmul.f32 %v4253, %v5402
    %v5409 = vmul.f32 %v4254, %v5402
    %v5410 = vmul.f32 %v4255, %v5402
    %v5411 = vmul.f32 %v4256, %v5402
    %v5412 = vadd.f32 %v5388, %v5404
    %v5413 = vadd.f32 %v5389, %v5405
    %v5414 = vadd.f32 %v5390, %v5406
    %v5415 = vadd.f32 %v5391, %v5407
    %v5416 = vadd.f32 %v5392, %v5408
    %v5417 = vadd.f32 %v5393, %v5409
    %v5418 = vadd.f32 %v5394, %v5410
    %v5419 = vadd.f32 %v5395, %v5411
    %5420 = vset.pattern.permute.xlu0 38
    %5421 = vperm.xlu0 %5420, %v104
    %v5422 = vpop.permute.xlu0 %5421
    %5424 = vset.pattern.permute.xlu0 38
    %5425 = vperm.xlu0 %5424, %v105
    %v5426 = vpop.permute.xlu0 %5425
    %v5428 = vmul.f32 %v4233, %v5422
    %v5429 = vmul.f32 %v4234, %v5422
    %v5430 = vmul.f32 %v4235, %v5422
    %v5431 = vmul.f32 %v4236, %v5422
    %v5432 = vmul.f32 %v4237, %v5426
    %v5433 = vmul.f32 %v4238, %v5426
    %v5434 = vmul.f32 %v4239, %v5426
    %v5435 = vmul.f32 %v4240, %v5426
    %v5436 = vadd.f32 %v5412, %v5428
    %v5437 = vadd.f32 %v5413, %v5429
    %v5438 = vadd.f32 %v5414, %v5430
    %v5439 = vadd.f32 %v5415, %v5431
    %v5440 = vadd.f32 %v5416, %v5432
    %v5441 = vadd.f32 %v5417, %v5433
    %v5442 = vadd.f32 %v5418, %v5434
    %v5443 = vadd.f32 %v5419, %v5435
    %5444 = vrot.lane.b32.xlu0 %v5436, 80
    %v5445 = vpop.permute.xlu0 %5444
    %5446 = vrot.lane.b32.xlu0 %v5440, 80
    %v5447 = vpop.permute.xlu0 %5446
    %5448 = vrot.lane.b32.xlu0 %v5437, 80
    %v5449 = vpop.permute.xlu0 %5448
    %5450 = vrot.lane.b32.xlu0 %v5441, 80
    %v5451 = vpop.permute.xlu0 %5450
    %5452 = vrot.lane.b32.xlu0 %v5438, 80
    %v5453 = vpop.permute.xlu0 %5452
    %5454 = vrot.lane.b32.xlu0 %v5442, 80
    %v5455 = vpop.permute.xlu0 %5454
    %5456 = vrot.lane.b32.xlu0 %v5439, 80
    %v5457 = vpop.permute.xlu0 %5456
    %5458 = vrot.lane.b32.xlu0 %v5443, 80
    %v5459 = vpop.permute.xlu0 %5458
    %v5460 = vsel %vm4645, %v5453, %v5457
    %v5461 = vsel %vm4645, %v5455, %v5459
    %v5462 = vsel %vm4645, %v5449, %v5453
    %v5463 = vsel %vm4645, %v5451, %v5455
    %v5464 = vsel %vm4645, %v5445, %v5449
    %v5465 = vsel %vm4645, %v5447, %v5451
    %v5466 = vsel %vm4645, %v5457, %v5445
    %v5467 = vsel %vm4645, %v5459, %v5447
    %vm5468 = vcmp.lt.s32.totalorder %v113, 208
    %vm5469 = vcmp.lt.s32.totalorder %v114, 208
    %vm5470 = vcmp.lt.s32.totalorder %v115, 208
    %vm5471 = vcmp.lt.s32.totalorder %v116, 208
    %v5472 = vsel %vm5468, 1, 0
    %v5473 = vsel %vm5469, 1, 0
    %v5474 = vsel %vm5470, 1, 0
    %v5475 = vsel %vm5471, 1, 0
    %v5476 = vcvt.s32.f32 %v5472
    %v5477 = vcvt.s32.f32 %v5473
    %v5478 = vcvt.s32.f32 %v5474
    %v5479 = vcvt.s32.f32 %v5475
    %v5480 = vmul.f32 %v5464, %v5476
    %v5481 = vmul.f32 %v5462, %v5477
    %v5482 = vmul.f32 %v5460, %v5478
    %v5483 = vmul.f32 %v5466, %v5479
    %v5484 = vmul.f32 %v5465, %v5476
    %v5485 = vmul.f32 %v5463, %v5477
    %v5486 = vmul.f32 %v5461, %v5478
    %v5487 = vmul.f32 %v5467, %v5479
    %v5488 = vadd.f32 %v5372, %v5480
    %v5489 = vadd.f32 %v5373, %v5481
    %v5490 = vadd.f32 %v5374, %v5482
    %v5491 = vadd.f32 %v5375, %v5483
    %v5492 = vadd.f32 %v5376, %v5484
    %v5493 = vadd.f32 %v5377, %v5485
    %v5494 = vadd.f32 %v5378, %v5486
    %v5495 = vadd.f32 %v5379, %v5487
    %5496 = vset.pattern.permute.xlu0 96
    %5497 = vperm.xlu0 %5496, %v104
    %v5498 = vpop.permute.xlu0 %5497
    %5500 = vset.pattern.permute.xlu0 96
    %5501 = vperm.xlu0 %5500, %v105
    %v5502 = vpop.permute.xlu0 %5501
    %v5504 = vmul.f32 %v4265, %v5498
    %v5505 = vmul.f32 %v4266, %v5498
    %v5506 = vmul.f32 %v4267, %v5498
    %v5507 = vmul.f32 %v4268, %v5498
    %v5508 = vmul.f32 %v4269, %v5502
    %v5509 = vmul.f32 %v4270, %v5502
    %v5510 = vmul.f32 %v4271, %v5502
    %v5511 = vmul.f32 %v4272, %v5502
    %5512 = vset.pattern.permute.xlu0 59
    %5513 = vperm.xlu0 %5512, %v104
    %v5514 = vpop.permute.xlu0 %5513
    %5516 = vset.pattern.permute.xlu0 59
    %5517 = vperm.xlu0 %5516, %v105
    %v5518 = vpop.permute.xlu0 %5517
    %v5520 = vmul.f32 %v4249, %v5514
    %v5521 = vmul.f32 %v4250, %v5514
    %v5522 = vmul.f32 %v4251, %v5514
    %v5523 = vmul.f32 %v4252, %v5514
    %v5524 = vmul.f32 %v4253, %v5518
    %v5525 = vmul.f32 %v4254, %v5518
    %v5526 = vmul.f32 %v4255, %v5518
    %v5527 = vmul.f32 %v4256, %v5518
    %v5528 = vadd.f32 %v5504, %v5520
    %v5529 = vadd.f32 %v5505, %v5521
    %v5530 = vadd.f32 %v5506, %v5522
    %v5531 = vadd.f32 %v5507, %v5523
    %v5532 = vadd.f32 %v5508, %v5524
    %v5533 = vadd.f32 %v5509, %v5525
    %v5534 = vadd.f32 %v5510, %v5526
    %v5535 = vadd.f32 %v5511, %v5527
    %5536 = vrot.lane.b32.xlu0 %v5528, 64
    %v5537 = vpop.permute.xlu0 %5536
    %5538 = vrot.lane.b32.xlu0 %v5532, 64
    %v5539 = vpop.permute.xlu0 %5538
    %5540 = vrot.lane.b32.xlu0 %v5529, 64
    %v5541 = vpop.permute.xlu0 %5540
    %5542 = vrot.lane.b32.xlu0 %v5533, 64
    %v5543 = vpop.permute.xlu0 %5542
    %5544 = vrot.lane.b32.xlu0 %v5530, 64
    %v5545 = vpop.permute.xlu0 %5544
    %5546 = vrot.lane.b32.xlu0 %v5534, 64
    %v5547 = vpop.permute.xlu0 %5546
    %5548 = vrot.lane.b32.xlu0 %v5531, 64
    %v5549 = vpop.permute.xlu0 %5548
    %5550 = vrot.lane.b32.xlu0 %v5535, 64
    %v5551 = vpop.permute.xlu0 %5550
    %v5552 = vsel %vm4738, %v5545, %v5549
    %v5553 = vsel %vm4738, %v5547, %v5551
    %v5554 = vsel %vm4738, %v5541, %v5545
    %v5555 = vsel %vm4738, %v5543, %v5547
    %v5556 = vsel %vm4738, %v5537, %v5541
    %v5557 = vsel %vm4738, %v5539, %v5543
    %v5558 = vsel %vm4738, %v5549, %v5537
    %v5559 = vsel %vm4738, %v5551, %v5539
    %vm5560 = vcmp.lt.s32.totalorder %v113, 192
    %vm5561 = vcmp.lt.s32.totalorder %v114, 192
    %vm5562 = vcmp.lt.s32.totalorder %v115, 192
    %vm5563 = vcmp.lt.s32.totalorder %v116, 192
    %v5564 = vsel %vm5560, 1, 0
    %v5565 = vsel %vm5561, 1, 0
    %v5566 = vsel %vm5562, 1, 0
    %v5567 = vsel %vm5563, 1, 0
    %v5568 = vcvt.s32.f32 %v5564
    %v5569 = vcvt.s32.f32 %v5565
    %v5570 = vcvt.s32.f32 %v5566
    %v5571 = vcvt.s32.f32 %v5567
    %v5572 = vmul.f32 %v5556, %v5568
    %v5573 = vmul.f32 %v5554, %v5569
    %v5574 = vmul.f32 %v5552, %v5570
    %v5575 = vmul.f32 %v5558, %v5571
    %v5576 = vmul.f32 %v5557, %v5568
    %v5577 = vmul.f32 %v5555, %v5569
    %v5578 = vmul.f32 %v5553, %v5570
    %v5579 = vmul.f32 %v5559, %v5571
    %v5580 = vadd.f32 %v5488, %v5572
    %v5581 = vadd.f32 %v5489, %v5573
    %v5582 = vadd.f32 %v5490, %v5574
    %v5583 = vadd.f32 %v5491, %v5575
    %v5584 = vadd.f32 %v5492, %v5576
    %v5585 = vadd.f32 %v5493, %v5577
    %v5586 = vadd.f32 %v5494, %v5578
    %v5587 = vadd.f32 %v5495, %v5579
    %5588 = vset.pattern.permute.xlu0 97
    %5589 = vperm.xlu0 %5588, %v104
    %v5590 = vpop.permute.xlu0 %5589
    %5592 = vset.pattern.permute.xlu0 97
    %5593 = vperm.xlu0 %5592, %v105
    %v5594 = vpop.permute.xlu0 %5593
    %v5596 = vmul.f32 %v4265, %v5590
    %v5597 = vmul.f32 %v4266, %v5590
    %v5598 = vmul.f32 %v4267, %v5590
    %v5599 = vmul.f32 %v4268, %v5590
    %v5600 = vmul.f32 %v4269, %v5594
    %v5601 = vmul.f32 %v4270, %v5594
    %v5602 = vmul.f32 %v4271, %v5594
    %v5603 = vmul.f32 %v4272, %v5594
    %5604 = vset.pattern.permute.xlu0 60
    %5605 = vperm.xlu0 %5604, %v104
    %v5606 = vpop.permute.xlu0 %5605
    %5608 = vset.pattern.permute.xlu0 60
    %5609 = vperm.xlu0 %5608, %v105
    %v5610 = vpop.permute.xlu0 %5609
    %v5612 = vmul.f32 %v4249, %v5606
    %v5613 = vmul.f32 %v4250, %v5606
    %v5614 = vmul.f32 %v4251, %v5606
    %v5615 = vmul.f32 %v4252, %v5606
    %v5616 = vmul.f32 %v4253, %v5610
    %v5617 = vmul.f32 %v4254, %v5610
    %v5618 = vmul.f32 %v4255, %v5610
    %v5619 = vmul.f32 %v4256, %v5610
    %v5620 = vadd.f32 %v5596, %v5612
    %v5621 = vadd.f32 %v5597, %v5613
    %v5622 = vadd.f32 %v5598, %v5614
    %v5623 = vadd.f32 %v5599, %v5615
    %v5624 = vadd.f32 %v5600, %v5616
    %v5625 = vadd.f32 %v5601, %v5617
    %v5626 = vadd.f32 %v5602, %v5618
    %v5627 = vadd.f32 %v5603, %v5619
    %5628 = vrot.lane.b32.xlu0 %v5620, 48
    %v5629 = vpop.permute.xlu0 %5628
    %5630 = vrot.lane.b32.xlu0 %v5624, 48
    %v5631 = vpop.permute.xlu0 %5630
    %5632 = vrot.lane.b32.xlu0 %v5621, 48
    %v5633 = vpop.permute.xlu0 %5632
    %5634 = vrot.lane.b32.xlu0 %v5625, 48
    %v5635 = vpop.permute.xlu0 %5634
    %5636 = vrot.lane.b32.xlu0 %v5622, 48
    %v5637 = vpop.permute.xlu0 %5636
    %5638 = vrot.lane.b32.xlu0 %v5626, 48
    %v5639 = vpop.permute.xlu0 %5638
    %5640 = vrot.lane.b32.xlu0 %v5623, 48
    %v5641 = vpop.permute.xlu0 %5640
    %5642 = vrot.lane.b32.xlu0 %v5627, 48
    %v5643 = vpop.permute.xlu0 %5642
    %v5644 = vsel %vm4855, %v5637, %v5641
    %v5645 = vsel %vm4855, %v5639, %v5643
    %v5646 = vsel %vm4855, %v5633, %v5637
    %v5647 = vsel %vm4855, %v5635, %v5639
    %v5648 = vsel %vm4855, %v5629, %v5633
    %v5649 = vsel %vm4855, %v5631, %v5635
    %v5650 = vsel %vm4855, %v5641, %v5629
    %v5651 = vsel %vm4855, %v5643, %v5631
    %vm5652 = vcmp.lt.s32.totalorder %v113, 176
    %vm5653 = vcmp.lt.s32.totalorder %v114, 176
    %vm5654 = vcmp.lt.s32.totalorder %v115, 176
    %vm5655 = vcmp.lt.s32.totalorder %v116, 176
    %v5656 = vsel %vm5652, 1, 0
    %v5657 = vsel %vm5653, 1, 0
    %v5658 = vsel %vm5654, 1, 0
    %v5659 = vsel %vm5655, 1, 0
    %v5660 = vcvt.s32.f32 %v5656
    %v5661 = vcvt.s32.f32 %v5657
    %v5662 = vcvt.s32.f32 %v5658
    %v5663 = vcvt.s32.f32 %v5659
    %v5664 = vmul.f32 %v5648, %v5660
    %v5665 = vmul.f32 %v5646, %v5661
    %v5666 = vmul.f32 %v5644, %v5662
    %v5667 = vmul.f32 %v5650, %v5663
    %v5668 = vmul.f32 %v5649, %v5660
    %v5669 = vmul.f32 %v5647, %v5661
    %v5670 = vmul.f32 %v5645, %v5662
    %v5671 = vmul.f32 %v5651, %v5663
    %v5672 = vadd.f32 %v5580, %v5664
    %v5673 = vadd.f32 %v5581, %v5665
    %v5674 = vadd.f32 %v5582, %v5666
    %v5675 = vadd.f32 %v5583, %v5667
    %v5676 = vadd.f32 %v5584, %v5668
    %v5677 = vadd.f32 %v5585, %v5669
    %v5678 = vadd.f32 %v5586, %v5670
    %v5679 = vadd.f32 %v5587, %v5671
    %5680 = vset.pattern.permute.xlu0 98
    %5681 = vperm.xlu0 %5680, %v104
    %v5682 = vpop.permute.xlu0 %5681
    %5684 = vset.pattern.permute.xlu0 98
    %5685 = vperm.xlu0 %5684, %v105
    %v5686 = vpop.permute.xlu0 %5685
    %v5688 = vmul.f32 %v4265, %v5682
    %v5689 = vmul.f32 %v4266, %v5682
    %v5690 = vmul.f32 %v4267, %v5682
    %v5691 = vmul.f32 %v4268, %v5682
    %v5692 = vmul.f32 %v4269, %v5686
    %v5693 = vmul.f32 %v4270, %v5686
    %v5694 = vmul.f32 %v4271, %v5686
    %v5695 = vmul.f32 %v4272, %v5686
    %5696 = vrot.lane.b32.xlu0 %v5688, 32
    %v5697 = vpop.permute.xlu0 %5696
    %5698 = vrot.lane.b32.xlu0 %v5692, 32
    %v5699 = vpop.permute.xlu0 %5698
    %5700 = vrot.lane.b32.xlu0 %v5689, 32
    %v5701 = vpop.permute.xlu0 %5700
    %5702 = vrot.lane.b32.xlu0 %v5693, 32
    %v5703 = vpop.permute.xlu0 %5702
    %5704 = vrot.lane.b32.xlu0 %v5690, 32
    %v5705 = vpop.permute.xlu0 %5704
    %5706 = vrot.lane.b32.xlu0 %v5694, 32
    %v5707 = vpop.permute.xlu0 %5706
    %5708 = vrot.lane.b32.xlu0 %v5691, 32
    %v5709 = vpop.permute.xlu0 %5708
    %5710 = vrot.lane.b32.xlu0 %v5695, 32
    %v5711 = vpop.permute.xlu0 %5710
    %v5712 = vsel %vm935, %v5705, %v5709
    %v5713 = vsel %vm935, %v5707, %v5711
    %v5714 = vsel %vm935, %v5701, %v5705
    %v5715 = vsel %vm935, %v5703, %v5707
    %v5716 = vsel %vm935, %v5697, %v5701
    %v5717 = vsel %vm935, %v5699, %v5703
    %v5718 = vsel %vm935, %v5709, %v5697
    %v5719 = vsel %vm935, %v5711, %v5699
    %vm5720 = vcmp.lt.s32.totalorder %v113, 160
    %vm5721 = vcmp.lt.s32.totalorder %v114, 160
    %vm5722 = vcmp.lt.s32.totalorder %v115, 160
    %vm5723 = vcmp.lt.s32.totalorder %v116, 160
    %v5724 = vsel %vm5720, 1, 0
    %v5725 = vsel %vm5721, 1, 0
    %v5726 = vsel %vm5722, 1, 0
    %v5727 = vsel %vm5723, 1, 0
    %v5728 = vcvt.s32.f32 %v5724
    %v5729 = vcvt.s32.f32 %v5725
    %v5730 = vcvt.s32.f32 %v5726
    %v5731 = vcvt.s32.f32 %v5727
    %v5732 = vmul.f32 %v5716, %v5728
    %v5733 = vmul.f32 %v5714, %v5729
    %v5734 = vmul.f32 %v5712, %v5730
    %v5735 = vmul.f32 %v5718, %v5731
    %v5736 = vmul.f32 %v5717, %v5728
    %v5737 = vmul.f32 %v5715, %v5729
    %v5738 = vmul.f32 %v5713, %v5730
    %v5739 = vmul.f32 %v5719, %v5731
    %v5740 = vadd.f32 %v5672, %v5732
    %v5741 = vadd.f32 %v5673, %v5733
    %v5742 = vadd.f32 %v5674, %v5734
    %v5743 = vadd.f32 %v5675, %v5735
    %v5744 = vadd.f32 %v5676, %v5736
    %v5745 = vadd.f32 %v5677, %v5737
    %v5746 = vadd.f32 %v5678, %v5738
    %v5747 = vadd.f32 %v5679, %v5739
    %5748 = vset.pattern.permute.xlu0 99
    %5749 = vperm.xlu0 %5748, %v104
    %v5750 = vpop.permute.xlu0 %5749
    %5752 = vset.pattern.permute.xlu0 99
    %5753 = vperm.xlu0 %5752, %v105
    %v5754 = vpop.permute.xlu0 %5753
    %v5756 = vmul.f32 %v4265, %v5750
    %v5757 = vmul.f32 %v4266, %v5750
    %v5758 = vmul.f32 %v4267, %v5750
    %v5759 = vmul.f32 %v4268, %v5750
    %v5760 = vmul.f32 %v4269, %v5754
    %v5761 = vmul.f32 %v4270, %v5754
    %v5762 = vmul.f32 %v4271, %v5754
    %v5763 = vmul.f32 %v4272, %v5754
    %5764 = vrot.lane.b32.xlu0 %v5756, 16
    %v5765 = vpop.permute.xlu0 %5764
    %5766 = vrot.lane.b32.xlu0 %v5760, 16
    %v5767 = vpop.permute.xlu0 %5766
    %5768 = vrot.lane.b32.xlu0 %v5757, 16
    %v5769 = vpop.permute.xlu0 %5768
    %5770 = vrot.lane.b32.xlu0 %v5761, 16
    %v5771 = vpop.permute.xlu0 %5770
    %5772 = vrot.lane.b32.xlu0 %v5758, 16
    %v5773 = vpop.permute.xlu0 %5772
    %5774 = vrot.lane.b32.xlu0 %v5762, 16
    %v5775 = vpop.permute.xlu0 %5774
    %5776 = vrot.lane.b32.xlu0 %v5759, 16
    %v5777 = vpop.permute.xlu0 %5776
    %5778 = vrot.lane.b32.xlu0 %v5763, 16
    %v5779 = vpop.permute.xlu0 %5778
    %v5780 = vsel %vm1288, %v5773, %v5777
    %v5781 = vsel %vm1288, %v5775, %v5779
    %v5782 = vsel %vm1288, %v5769, %v5773
    %v5783 = vsel %vm1288, %v5771, %v5775
    %v5784 = vsel %vm1288, %v5765, %v5769
    %v5785 = vsel %vm1288, %v5767, %v5771
    %v5786 = vsel %vm1288, %v5777, %v5765
    %v5787 = vsel %vm1288, %v5779, %v5767
    %vm5788 = vcmp.lt.s32.totalorder %v113, 144
    %vm5789 = vcmp.lt.s32.totalorder %v114, 144
    %vm5790 = vcmp.lt.s32.totalorder %v115, 144
    %vm5791 = vcmp.lt.s32.totalorder %v116, 144
    %v5792 = vsel %vm5788, 1, 0
    %v5793 = vsel %vm5789, 1, 0
    %v5794 = vsel %vm5790, 1, 0
    %v5795 = vsel %vm5791, 1, 0
    %v5796 = vcvt.s32.f32 %v5792
    %v5797 = vcvt.s32.f32 %v5793
    %v5798 = vcvt.s32.f32 %v5794
    %v5799 = vcvt.s32.f32 %v5795
    %v5800 = vmul.f32 %v5784, %v5796
    %v5801 = vmul.f32 %v5782, %v5797
    %v5802 = vmul.f32 %v5780, %v5798
    %v5803 = vmul.f32 %v5786, %v5799
    %v5804 = vmul.f32 %v5785, %v5796
    %v5805 = vmul.f32 %v5783, %v5797
    %v5806 = vmul.f32 %v5781, %v5798
    %v5807 = vmul.f32 %v5787, %v5799
    %v5808 = vadd.f32 %v5740, %v5800
    %v5809 = vadd.f32 %v5741, %v5801
    %v5810 = vadd.f32 %v5742, %v5802
    %v5811 = vadd.f32 %v5743, %v5803
    %v5812 = vadd.f32 %v5744, %v5804
    %v5813 = vadd.f32 %v5745, %v5805
    %v5814 = vadd.f32 %v5746, %v5806
    %v5815 = vadd.f32 %v5747, %v5807
    %5816 = vset.pattern.permute.xlu0 100
    %5817 = vperm.xlu0 %5816, %v104
    %v5818 = vpop.permute.xlu0 %5817
    %5820 = vset.pattern.permute.xlu0 100
    %5821 = vperm.xlu0 %5820, %v105
    %v5822 = vpop.permute.xlu0 %5821
    %v5824 = vmul.f32 %v4265, %v5818
    %v5825 = vmul.f32 %v4266, %v5818
    %v5826 = vmul.f32 %v4267, %v5818
    %v5827 = vmul.f32 %v4268, %v5818
    %v5828 = vmul.f32 %v4269, %v5822
    %v5829 = vmul.f32 %v4270, %v5822
    %v5830 = vmul.f32 %v4271, %v5822
    %v5831 = vmul.f32 %v4272, %v5822
    %vm5832 = vcmp.lt.s32.totalorder %v113, 128
    %vm5833 = vcmp.lt.s32.totalorder %v114, 128
    %vm5834 = vcmp.lt.s32.totalorder %v115, 128
    %vm5835 = vcmp.lt.s32.totalorder %v116, 128
    %v5836 = vsel %vm5832, 1, 0
    %v5837 = vsel %vm5833, 1, 0
    %v5838 = vsel %vm5834, 1, 0
    %v5839 = vsel %vm5835, 1, 0
    %v5840 = vcvt.s32.f32 %v5836
    %v5841 = vcvt.s32.f32 %v5837
    %v5842 = vcvt.s32.f32 %v5838
    %v5843 = vcvt.s32.f32 %v5839
    %v5844 = vmul.f32 %v5825, %v5840
    %v5845 = vmul.f32 %v5826, %v5841
    %v5846 = vmul.f32 %v5827, %v5842
    %v5847 = vmul.f32 %v5824, %v5843
    %v5848 = vmul.f32 %v5829, %v5840
    %v5849 = vmul.f32 %v5830, %v5841
    %v5850 = vmul.f32 %v5831, %v5842
    %v5851 = vmul.f32 %v5828, %v5843
    %v5852 = vadd.f32 %v5808, %v5844
    %v5853 = vadd.f32 %v5809, %v5845
    %v5854 = vadd.f32 %v5810, %v5846
    %v5855 = vadd.f32 %v5811, %v5847
    %v5856 = vadd.f32 %v5812, %v5848
    %v5857 = vadd.f32 %v5813, %v5849
    %v5858 = vadd.f32 %v5814, %v5850
    %v5859 = vadd.f32 %v5815, %v5851
    %5860 = vset.pattern.permute.xlu0 101
    %5861 = vperm.xlu0 %5860, %v104
    %v5862 = vpop.permute.xlu0 %5861
    %5864 = vset.pattern.permute.xlu0 101
    %5865 = vperm.xlu0 %5864, %v105
    %v5866 = vpop.permute.xlu0 %5865
    %v5868 = vmul.f32 %v4265, %v5862
    %v5869 = vmul.f32 %v4266, %v5862
    %v5870 = vmul.f32 %v4267, %v5862
    %v5871 = vmul.f32 %v4268, %v5862
    %v5872 = vmul.f32 %v4269, %v5866
    %v5873 = vmul.f32 %v4270, %v5866
    %v5874 = vmul.f32 %v4271, %v5866
    %v5875 = vmul.f32 %v4272, %v5866
    %5876 = vrot.lane.b32.xlu0 %v5868, 112
    %v5877 = vpop.permute.xlu0 %5876
    %5878 = vrot.lane.b32.xlu0 %v5872, 112
    %v5879 = vpop.permute.xlu0 %5878
    %5880 = vrot.lane.b32.xlu0 %v5869, 112
    %v5881 = vpop.permute.xlu0 %5880
    %5882 = vrot.lane.b32.xlu0 %v5873, 112
    %v5883 = vpop.permute.xlu0 %5882
    %5884 = vrot.lane.b32.xlu0 %v5870, 112
    %v5885 = vpop.permute.xlu0 %5884
    %5886 = vrot.lane.b32.xlu0 %v5874, 112
    %v5887 = vpop.permute.xlu0 %5886
    %5888 = vrot.lane.b32.xlu0 %v5871, 112
    %v5889 = vpop.permute.xlu0 %5888
    %5890 = vrot.lane.b32.xlu0 %v5875, 112
    %v5891 = vpop.permute.xlu0 %5890
    %v5892 = vsel %vm1917, %v5885, %v5889
    %v5893 = vsel %vm1917, %v5887, %v5891
    %v5894 = vsel %vm1917, %v5881, %v5885
    %v5895 = vsel %vm1917, %v5883, %v5887
    %v5896 = vsel %vm1917, %v5877, %v5881
    %v5897 = vsel %vm1917, %v5879, %v5883
    %v5898 = vsel %vm1917, %v5889, %v5877
    %v5899 = vsel %vm1917, %v5891, %v5879
    %vm5900 = vcmp.lt.s32.totalorder %v113, 112
    %vm5901 = vcmp.lt.s32.totalorder %v114, 112
    %vm5902 = vcmp.lt.s32.totalorder %v115, 112
    %vm5903 = vcmp.lt.s32.totalorder %v116, 112
    %v5904 = vsel %vm5900, 1, 0
    %v5905 = vsel %vm5901, 1, 0
    %v5906 = vsel %vm5902, 1, 0
    %v5907 = vsel %vm5903, 1, 0
    %v5908 = vcvt.s32.f32 %v5904
    %v5909 = vcvt.s32.f32 %v5905
    %v5910 = vcvt.s32.f32 %v5906
    %v5911 = vcvt.s32.f32 %v5907
    %v5912 = vmul.f32 %v5894, %v5908
    %v5913 = vmul.f32 %v5892, %v5909
    %v5914 = vmul.f32 %v5898, %v5910
    %v5915 = vmul.f32 %v5896, %v5911
    %v5916 = vmul.f32 %v5895, %v5908
    %v5917 = vmul.f32 %v5893, %v5909
    %v5918 = vmul.f32 %v5899, %v5910
    %v5919 = vmul.f32 %v5897, %v5911
    %v5920 = vadd.f32 %v5852, %v5912
    %v5921 = vadd.f32 %v5853, %v5913
    %v5922 = vadd.f32 %v5854, %v5914
    %v5923 = vadd.f32 %v5855, %v5915
    %v5924 = vadd.f32 %v5856, %v5916
    %v5925 = vadd.f32 %v5857, %v5917
    %v5926 = vadd.f32 %v5858, %v5918
    %v5927 = vadd.f32 %v5859, %v5919
    %5928 = vset.pattern.permute.xlu0 102
    %5929 = vperm.xlu0 %5928, %v104
    %v5930 = vpop.permute.xlu0 %5929
    %5932 = vset.pattern.permute.xlu0 102
    %5933 = vperm.xlu0 %5932, %v105
    %v5934 = vpop.permute.xlu0 %5933
    %v5936 = vmul.f32 %v4265, %v5930
    %v5937 = vmul.f32 %v4266, %v5930
    %v5938 = vmul.f32 %v4267, %v5930
    %v5939 = vmul.f32 %v4268, %v5930
    %v5940 = vmul.f32 %v4269, %v5934
    %v5941 = vmul.f32 %v4270, %v5934
    %v5942 = vmul.f32 %v4271, %v5934
    %v5943 = vmul.f32 %v4272, %v5934
    %5944 = vrot.lane.b32.xlu0 %v5936, 96
    %v5945 = vpop.permute.xlu0 %5944
    %5946 = vrot.lane.b32.xlu0 %v5940, 96
    %v5947 = vpop.permute.xlu0 %5946
    %5948 = vrot.lane.b32.xlu0 %v5937, 96
    %v5949 = vpop.permute.xlu0 %5948
    %5950 = vrot.lane.b32.xlu0 %v5941, 96
    %v5951 = vpop.permute.xlu0 %5950
    %5952 = vrot.lane.b32.xlu0 %v5938, 96
    %v5953 = vpop.permute.xlu0 %5952
    %5954 = vrot.lane.b32.xlu0 %v5942, 96
    %v5955 = vpop.permute.xlu0 %5954
    %5956 = vrot.lane.b32.xlu0 %v5939, 96
    %v5957 = vpop.permute.xlu0 %5956
    %5958 = vrot.lane.b32.xlu0 %v5943, 96
    %v5959 = vpop.permute.xlu0 %5958
    %v5960 = vsel %vm2262, %v5953, %v5957
    %v5961 = vsel %vm2262, %v5955, %v5959
    %v5962 = vsel %vm2262, %v5949, %v5953
    %v5963 = vsel %vm2262, %v5951, %v5955
    %v5964 = vsel %vm2262, %v5945, %v5949
    %v5965 = vsel %vm2262, %v5947, %v5951
    %v5966 = vsel %vm2262, %v5957, %v5945
    %v5967 = vsel %vm2262, %v5959, %v5947
    %vm5968 = vcmp.lt.s32.totalorder %v113, 96
    %vm5969 = vcmp.lt.s32.totalorder %v114, 96
    %vm5970 = vcmp.lt.s32.totalorder %v115, 96
    %vm5971 = vcmp.lt.s32.totalorder %v116, 96
    %v5972 = vsel %vm5968, 1, 0
    %v5973 = vsel %vm5969, 1, 0
    %v5974 = vsel %vm5970, 1, 0
    %v5975 = vsel %vm5971, 1, 0
    %v5976 = vcvt.s32.f32 %v5972
    %v5977 = vcvt.s32.f32 %v5973
    %v5978 = vcvt.s32.f32 %v5974
    %v5979 = vcvt.s32.f32 %v5975
    %v5980 = vmul.f32 %v5962, %v5976
    %v5981 = vmul.f32 %v5960, %v5977
    %v5982 = vmul.f32 %v5966, %v5978
    %v5983 = vmul.f32 %v5964, %v5979
    %v5984 = vmul.f32 %v5963, %v5976
    %v5985 = vmul.f32 %v5961, %v5977
    %v5986 = vmul.f32 %v5967, %v5978
    %v5987 = vmul.f32 %v5965, %v5979
    %v5988 = vadd.f32 %v5920, %v5980
    %v5989 = vadd.f32 %v5921, %v5981
    %v5990 = vadd.f32 %v5922, %v5982
    %v5991 = vadd.f32 %v5923, %v5983
    %v5992 = vadd.f32 %v5924, %v5984
    %v5993 = vadd.f32 %v5925, %v5985
    %v5994 = vadd.f32 %v5926, %v5986
    %v5995 = vadd.f32 %v5927, %v5987
    %5996 = vset.pattern.permute.xlu0 8
    %5997 = vperm.xlu0 %5996, %v106
    %v5998 = vpop.permute.xlu0 %5997
    %6000 = vset.pattern.permute.xlu0 8
    %6001 = vperm.xlu0 %6000, %v107
    %v6002 = vpop.permute.xlu0 %6001
    %v6004 = vadd.f32 %v5988, %v5998
    %v6005 = vadd.f32 %v5989, %v5998
    %v6006 = vadd.f32 %v5990, %v5998
    %v6007 = vadd.f32 %v5991, %v5998
    %v6008 = vadd.f32 %v5992, %v6002
    %v6009 = vadd.f32 %v5993, %v6002
    %v6010 = vadd.f32 %v5994, %v6002
    %v6011 = vadd.f32 %v5995, %v6002
    %6012 = vset.pattern.permute.xlu0 10
    %6013 = vperm.xlu0 %6012, %v106
    %v6014 = vpop.permute.xlu0 %6013
    %6016 = vset.pattern.permute.xlu0 10
    %6017 = vperm.xlu0 %6016, %v107
    %v6018 = vpop.permute.xlu0 %6017
    %v6020 = vadd.f32 %v6004, %v6014
    %v6021 = vadd.f32 %v6005, %v6014
    %v6022 = vadd.f32 %v6006, %v6014
    %v6023 = vadd.f32 %v6007, %v6014
    %v6024 = vadd.f32 %v6008, %v6018
    %v6025 = vadd.f32 %v6009, %v6018
    %v6026 = vadd.f32 %v6010, %v6018
    %v6027 = vadd.f32 %v6011, %v6018
    %6028 = vset.pattern.permute.xlu0 12
    %6029 = vperm.xlu0 %6028, %v106
    %v6030 = vpop.permute.xlu0 %6029
    %6032 = vset.pattern.permute.xlu0 12
    %6033 = vperm.xlu0 %6032, %v107
    %v6034 = vpop.permute.xlu0 %6033
    %v6036 = vadd.f32 %v6020, %v6030
    %v6037 = vadd.f32 %v6021, %v6030
    %v6038 = vadd.f32 %v6022, %v6030
    %v6039 = vadd.f32 %v6023, %v6030
    %v6040 = vadd.f32 %v6024, %v6034
    %v6041 = vadd.f32 %v6025, %v6034
    %v6042 = vadd.f32 %v6026, %v6034
    %v6043 = vadd.f32 %v6027, %v6034
    %v6044 = vld [vmem:[%s5] sm:$0xff]
    %v6045 = vld [vmem:[%s5 + $0x8] sm:$0xff]
    %6046 = vset.pattern.permute.xlu0 13
    %6047 = vperm.xlu0 %6046, %v106
    %v6048 = vpop.permute.xlu0 %6047
    %6050 = vset.pattern.permute.xlu0 13
    %6051 = vperm.xlu0 %6050, %v107
    %v6052 = vpop.permute.xlu0 %6051
    %v6055 = vsel %vm566, %v6044, 0
    %v6058 = vsel %vm566, %v6045, 0
    %6060 = vmatprep.subr.mxu0 %v6037
    %6061 = vmatpush1.msra.mxu0 %v6036
    %6062 = vmatprep.subr.mxu0 %v6041
    %6063 = vmatpush1.msra.mxu0 %v6040
    %6064 = vmatprep.subr.mxu0 0.0
    %6065 = vmatpush1.msra.mxu0 0.0
    %6066 = vmatprep.subr.mxu0 0.0
    %6067 = vmatpush1.msra.mxu0 0.0
    %6068 = vmatprep.subr.mxu0 0.0
    %6069 = vmatpush1.msra.mxu0 0.0
    %6070 = vmatprep.subr.mxu0 0.0
    %6071 = vmatpush1.msra.mxu0 0.0
    %6072 = vmatprep.subr.mxu0 0.0
    %6073 = vmatpush1.msra.mxu0 0.0
    %6074 = vmatprep.subr.mxu0 0.0
    %6075 = vmatpush1.msra.mxu0 0.0
    %6076 = vmatprep.subr.mxu0 0.0
    %6077 = vmatpush1.msra.mxu0 0.0
    %6078 = vmatprep.subr.mxu0 0.0
    %6079 = vmatpush1.msra.mxu0 0.0
    %6080 = vmatprep.subr.mxu0 0.0
    %6081 = vmatpush1.msra.mxu0 0.0
    %6082 = vmatprep.subr.mxu0 0.0
    %6083 = vmatpush1.msra.mxu0 0.0
    %6084 = vmatprep.subr.mxu0 0.0
    %6085 = vmatpush1.msra.mxu0 0.0
    %6086 = vmatprep.subr.mxu0 0.0
    %6087 = vmatpush1.msra.mxu0 0.0
    %6088 = vmatprep.subr.mxu0 0.0
    %6089 = vmatpush1.msra.mxu0 0.0
    %6090 = vmatprep.subr.mxu0 0.0
    %6091 = vmatpush1.msra.mxu0 0.0
    %6092 = vmatprep.subr.mxu0 0.0
    %6093 = vmatpush1.msra.mxu0 0.0
    %6094 = vmatprep.subr.mxu0 0.0
    %6095 = vmatpush1.msra.mxu0 0.0
    %6096 = vmatprep.subr.mxu0 0.0
    %6097 = vmatpush1.msra.mxu0 0.0
    %6098 = vmatprep.subr.mxu0 0.0
    %6099 = vmatpush1.msra.mxu0 0.0
    %6100 = vmatprep.subr.mxu0 0.0
    %6101 = vmatpush1.msra.mxu0 0.0
    %6102 = vmatprep.subr.mxu0 0.0
    %6103 = vmatpush1.msra.mxu0 0.0
    %6104 = vmatprep.subr.mxu0 0.0
    %6105 = vmatpush1.msra.mxu0 0.0
    %6106 = vmatprep.subr.mxu0 0.0
    %6107 = vmatpush1.msra.mxu0 0.0
    %6108 = vmatprep.subr.mxu0 0.0
    %6109 = vmatpush1.msra.mxu0 0.0
    %6110 = vmatprep.subr.mxu0 0.0
    %6111 = vmatpush1.msra.mxu0 0.0
    %6112 = vmatprep.subr.mxu0 0.0
    %6113 = vmatpush1.msra.mxu0 0.0
    %6114 = vmatprep.subr.mxu0 0.0
    %6115 = vmatpush1.msra.mxu0 0.0
    %6116 = vmatprep.subr.mxu0 0.0
    %6117 = vmatpush1.msra.mxu0 0.0
    %6118 = vmatprep.subr.mxu0 0.0
    %6119 = vmatpush1.msra.mxu0 0.0
    %6120 = vmatprep.subr.mxu0 0.0
    %6121 = vmatpush1.msra.mxu0 0.0
    %6122 = vmatprep.subr.mxu0 0.0
    %6123 = vmatpush1.msra.mxu0 0.0
    %6124 = vmatprep.mubr.f32.mxu0 0.0
    %6125 = vmatmul.mubr.f32.gmra.mrb[0].mxu0 %v6055
    %v6126 = vpop.f32.mrb[0].mxu0
    %v6127 = vadd.f32 %v6048, %v6126
    %v6128 = vpop.f32.mrb[0].mxu0
    %v6129 = vadd.f32 %v6048, %v6128
    %6130 = vmatprep.mubr.f32.mxu0 0.0
    %6131 = vmatmul.mubr.f32.gmra.mrb[0].mxu0 %v6058
    %v6132 = vpop.f32.mrb[0].mxu0
    %v6133 = vadd.f32 %v6052, %v6132
    %v6134 = vpop.f32.mrb[0].mxu0
    %v6135 = vadd.f32 %v6052, %v6134
    %6136 = vdwg.mxu0
    %6137 = vmatprep.subr.mxu0 %v6039
    %6138 = vmatpush1.msra.mxu0 %v6038
    %6139 = vmatprep.subr.mxu0 %v6043
    %6140 = vmatpush1.msra.mxu0 %v6042
    %6141 = vmatprep.subr.mxu0 0.0
    %6142 = vmatpush1.msra.mxu0 0.0
    %6143 = vmatprep.subr.mxu0 0.0
    %6144 = vmatpush1.msra.mxu0 0.0
    %6145 = vmatprep.subr.mxu0 0.0
    %6146 = vmatpush1.msra.mxu0 0.0
    %6147 = vmatprep.subr.mxu0 0.0
    %6148 = vmatpush1.msra.mxu0 0.0
    %6149 = vmatprep.subr.mxu0 0.0
    %6150 = vmatpush1.msra.mxu0 0.0
    %6151 = vmatprep.subr.mxu0 0.0
    %6152 = vmatpush1.msra.mxu0 0.0
    %6153 = vmatprep.subr.mxu0 0.0
    %6154 = vmatpush1.msra.mxu0 0.0
    %6155 = vmatprep.subr.mxu0 0.0
    %6156 = vmatpush1.msra.mxu0 0.0
    %6157 = vmatprep.subr.mxu0 0.0
    %6158 = vmatpush1.msra.mxu0 0.0
    %6159 = vmatprep.subr.mxu0 0.0
    %6160 = vmatpush1.msra.mxu0 0.0
    %6161 = vmatprep.subr.mxu0 0.0
    %6162 = vmatpush1.msra.mxu0 0.0
    %6163 = vmatprep.subr.mxu0 0.0
    %6164 = vmatpush1.msra.mxu0 0.0
    %6165 = vmatprep.subr.mxu0 0.0
    %6166 = vmatpush1.msra.mxu0 0.0
    %6167 = vmatprep.subr.mxu0 0.0
    %6168 = vmatpush1.msra.mxu0 0.0
    %6169 = vmatprep.subr.mxu0 0.0
    %6170 = vmatpush1.msra.mxu0 0.0
    %6171 = vmatprep.subr.mxu0 0.0
    %6172 = vmatpush1.msra.mxu0 0.0
    %6173 = vmatprep.subr.mxu0 0.0
    %6174 = vmatpush1.msra.mxu0 0.0
    %6175 = vmatprep.subr.mxu0 0.0
    %6176 = vmatpush1.msra.mxu0 0.0
    %6177 = vmatprep.subr.mxu0 0.0
    %6178 = vmatpush1.msra.mxu0 0.0
    %6179 = vmatprep.subr.mxu0 0.0
    %6180 = vmatpush1.msra.mxu0 0.0
    %6181 = vmatprep.subr.mxu0 0.0
    %6182 = vmatpush1.msra.mxu0 0.0
    %6183 = vmatprep.subr.mxu0 0.0
    %6184 = vmatpush1.msra.mxu0 0.0
    %6185 = vmatprep.subr.mxu0 0.0
    %6186 = vmatpush1.msra.mxu0 0.0
    %6187 = vmatprep.subr.mxu0 0.0
    %6188 = vmatpush1.msra.mxu0 0.0
    %6189 = vmatprep.subr.mxu0 0.0
    %6190 = vmatpush1.msra.mxu0 0.0
    %6191 = vmatprep.subr.mxu0 0.0
    %6192 = vmatpush1.msra.mxu0 0.0
    %6193 = vmatprep.subr.mxu0 0.0
    %6194 = vmatpush1.msra.mxu0 0.0
    %6195 = vmatprep.subr.mxu0 0.0
    %6196 = vmatpush1.msra.mxu0 0.0
    %6197 = vmatprep.subr.mxu0 0.0
    %6198 = vmatpush1.msra.mxu0 0.0
    %6199 = vmatprep.subr.mxu0 0.0
    %6200 = vmatpush1.msra.mxu0 0.0
    %6201 = vmatprep.mubr.f32.mxu0 0.0
    %6202 = vmatmul.mubr.f32.gmra.mrb[0].mxu0 %v6055
    %v6203 = vpop.f32.mrb[0].mxu0
    %v6204 = vadd.f32 %v6048, %v6203
    %v6205 = vpop.f32.mrb[0].mxu0
    %v6206 = vadd.f32 %v6048, %v6205
    %6207 = vmatprep.mubr.f32.mxu0 0.0
    %6208 = vmatmul.mubr.f32.gmra.mrb[0].mxu0 %v6058
    %v6209 = vpop.f32.mrb[0].mxu0
    %v6210 = vadd.f32 %v6052, %v6209
    %v6211 = vpop.f32.mrb[0].mxu0
    %v6212 = vadd.f32 %v6052, %v6211
    %6213 = vdwg.mxu0
    %v6214 = vmul.f32 %v6127, %v760
    %v6215 = vmul.f32 %v6129, %v762
    %v6216 = vmul.f32 %v6204, %v764
    %v6217 = vmul.f32 %v6206, %v766
    %v6218 = vmul.f32 %v6133, %v768
    %v6219 = vmul.f32 %v6135, %v770
    %v6220 = vmul.f32 %v6210, %v772
    %v6221 = vmul.f32 %v6212, %v774
    %v6222 = vld [vmem:[#allocation7] sm:$0xff]
    %v6223 = vld [vmem:[#allocation7 + $0x8] sm:$0xff]
    %6224 = vset.pattern.permute.xlu0 14
    %6225 = vperm.xlu0 %6224, %v106
    %v6226 = vpop.permute.xlu0 %6225
    %6228 = vset.pattern.permute.xlu0 14
    %6229 = vperm.xlu0 %6228, %v107
    %v6230 = vpop.permute.xlu0 %6229
    %v6233 = vsel %vm566, %v6222, 0
    %v6236 = vsel %vm566, %v6223, 0
    %6238 = vmatprep.subr.mxu0 %v6215
    %6239 = vmatpush1.msra.mxu0 %v6214
    %6240 = vmatprep.subr.mxu0 %v6219
    %6241 = vmatpush1.msra.mxu0 %v6218
    %6242 = vmatprep.subr.mxu0 0.0
    %6243 = vmatpush1.msra.mxu0 0.0
    %6244 = vmatprep.subr.mxu0 0.0
    %6245 = vmatpush1.msra.mxu0 0.0
    %6246 = vmatprep.subr.mxu0 0.0
    %6247 = vmatpush1.msra.mxu0 0.0
    %6248 = vmatprep.subr.mxu0 0.0
    %6249 = vmatpush1.msra.mxu0 0.0
    %6250 = vmatprep.subr.mxu0 0.0
    %6251 = vmatpush1.msra.mxu0 0.0
    %6252 = vmatprep.subr.mxu0 0.0
    %6253 = vmatpush1.msra.mxu0 0.0
    %6254 = vmatprep.subr.mxu0 0.0
    %6255 = vmatpush1.msra.mxu0 0.0
    %6256 = vmatprep.subr.mxu0 0.0
    %6257 = vmatpush1.msra.mxu0 0.0
    %6258 = vmatprep.subr.mxu0 0.0
    %6259 = vmatpush1.msra.mxu0 0.0
    %6260 = vmatprep.subr.mxu0 0.0
    %6261 = vmatpush1.msra.mxu0 0.0
    %6262 = vmatprep.subr.mxu0 0.0
    %6263 = vmatpush1.msra.mxu0 0.0
    %6264 = vmatprep.subr.mxu0 0.0
    %6265 = vmatpush1.msra.mxu0 0.0
    %6266 = vmatprep.subr.mxu0 0.0
    %6267 = vmatpush1.msra.mxu0 0.0
    %6268 = vmatprep.subr.mxu0 0.0
    %6269 = vmatpush1.msra.mxu0 0.0
    %6270 = vmatprep.subr.mxu0 0.0
    %6271 = vmatpush1.msra.mxu0 0.0
    %6272 = vmatprep.subr.mxu0 0.0
    %6273 = vmatpush1.msra.mxu0 0.0
    %6274 = vmatprep.subr.mxu0 0.0
    %6275 = vmatpush1.msra.mxu0 0.0
    %6276 = vmatprep.subr.mxu0 0.0
    %6277 = vmatpush1.msra.mxu0 0.0
    %6278 = vmatprep.subr.mxu0 0.0
    %6279 = vmatpush1.msra.mxu0 0.0
    %6280 = vmatprep.subr.mxu0 0.0
    %6281 = vmatpush1.msra.mxu0 0.0
    %6282 = vmatprep.subr.mxu0 0.0
    %6283 = vmatpush1.msra.mxu0 0.0
    %6284 = vmatprep.subr.mxu0 0.0
    %6285 = vmatpush1.msra.mxu0 0.0
    %6286 = vmatprep.subr.mxu0 0.0
    %6287 = vmatpush1.msra.mxu0 0.0
    %6288 = vmatprep.subr.mxu0 0.0
    %6289 = vmatpush1.msra.mxu0 0.0
    %6290 = vmatprep.subr.mxu0 0.0
    %6291 = vmatpush1.msra.mxu0 0.0
    %6292 = vmatprep.subr.mxu0 0.0
    %6293 = vmatpush1.msra.mxu0 0.0
    %6294 = vmatprep.subr.mxu0 0.0
    %6295 = vmatpush1.msra.mxu0 0.0
    %6296 = vmatprep.subr.mxu0 0.0
    %6297 = vmatpush1.msra.mxu0 0.0
    %6298 = vmatprep.subr.mxu0 0.0
    %6299 = vmatpush1.msra.mxu0 0.0
    %6300 = vmatprep.subr.mxu0 0.0
    %6301 = vmatpush1.msra.mxu0 0.0
    %6302 = vmatprep.mubr.f32.mxu0 0.0
    %6303 = vmatmul.mubr.f32.gmra.mrb[0].mxu0 %v6233
    %v6304 = vpop.f32.mrb[0].mxu0
    %v6305 = vadd.f32 %v6226, %v6304
    %v6306 = vpop.f32.mrb[0].mxu0
    %v6307 = vadd.f32 %v6226, %v6306
    %6308 = vmatprep.mubr.f32.mxu0 0.0
    %6309 = vmatmul.mubr.f32.gmra.mrb[0].mxu0 %v6236
    %v6310 = vpop.f32.mrb[0].mxu0
    %v6311 = vadd.f32 %v6230, %v6310
    %v6312 = vpop.f32.mrb[0].mxu0
    %v6313 = vadd.f32 %v6230, %v6312
    %6314 = vdwg.mxu0
    %6315 = vmatprep.subr.mxu0 %v6217
    %6316 = vmatpush1.msra.mxu0 %v6216
    %6317 = vmatprep.subr.mxu0 %v6221
    %6318 = vmatpush1.msra.mxu0 %v6220
    %6319 = vmatprep.subr.mxu0 0.0
    %6320 = vmatpush1.msra.mxu0 0.0
    %6321 = vmatprep.subr.mxu0 0.0
    %6322 = vmatpush1.msra.mxu0 0.0
    %6323 = vmatprep.subr.mxu0 0.0
    %6324 = vmatpush1.msra.mxu0 0.0
    %6325 = vmatprep.subr.mxu0 0.0
    %6326 = vmatpush1.msra.mxu0 0.0
    %6327 = vmatprep.subr.mxu0 0.0
    %6328 = vmatpush1.msra.mxu0 0.0
    %6329 = vmatprep.subr.mxu0 0.0
    %6330 = vmatpush1.msra.mxu0 0.0
    %6331 = vmatprep.subr.mxu0 0.0
    %6332 = vmatpush1.msra.mxu0 0.0
    %6333 = vmatprep.subr.mxu0 0.0
    %6334 = vmatpush1.msra.mxu0 0.0
    %6335 = vmatprep.subr.mxu0 0.0
    %6336 = vmatpush1.msra.mxu0 0.0
    %6337 = vmatprep.subr.mxu0 0.0
    %6338 = vmatpush1.msra.mxu0 0.0
    %6339 = vmatprep.subr.mxu0 0.0
    %6340 = vmatpush1.msra.mxu0 0.0
    %6341 = vmatprep.subr.mxu0 0.0
    %6342 = vmatpush1.msra.mxu0 0.0
    %6343 = vmatprep.subr.mxu0 0.0
    %6344 = vmatpush1.msra.mxu0 0.0
    %6345 = vmatprep.subr.mxu0 0.0
    %6346 = vmatpush1.msra.mxu0 0.0
    %6347 = vmatprep.subr.mxu0 0.0
    %6348 = vmatpush1.msra.mxu0 0.0
    %6349 = vmatprep.subr.mxu0 0.0
    %6350 = vmatpush1.msra.mxu0 0.0
    %6351 = vmatprep.subr.mxu0 0.0
    %6352 = vmatpush1.msra.mxu0 0.0
    %6353 = vmatprep.subr.mxu0 0.0
    %6354 = vmatpush1.msra.mxu0 0.0
    %6355 = vmatprep.subr.mxu0 0.0
    %6356 = vmatpush1.msra.mxu0 0.0
    %6357 = vmatprep.subr.mxu0 0.0
    %6358 = vmatpush1.msra.mxu0 0.0
    %6359 = vmatprep.subr.mxu0 0.0
    %6360 = vmatpush1.msra.mxu0 0.0
    %6361 = vmatprep.subr.mxu0 0.0
    %6362 = vmatpush1.msra.mxu0 0.0
    %6363 = vmatprep.subr.mxu0 0.0
    %6364 = vmatpush1.msra.mxu0 0.0
    %6365 = vmatprep.subr.mxu0 0.0
    %6366 = vmatpush1.msra.mxu0 0.0
    %6367 = vmatprep.subr.mxu0 0.0
    %6368 = vmatpush1.msra.mxu0 0.0
    %6369 = vmatprep.subr.mxu0 0.0
    %6370 = vmatpush1.msra.mxu0 0.0
    %6371 = vmatprep.subr.mxu0 0.0
    %6372 = vmatpush1.msra.mxu0 0.0
    %6373 = vmatprep.subr.mxu0 0.0
    %6374 = vmatpush1.msra.mxu0 0.0
    %6375 = vmatprep.subr.mxu0 0.0
    %6376 = vmatpush1.msra.mxu0 0.0
    %6377 = vmatprep.subr.mxu0 0.0
    %6378 = vmatpush1.msra.mxu0 0.0
    %6379 = vmatprep.mubr.f32.mxu0 0.0
    %6380 = vmatmul.mubr.f32.gmra.mrb[0].mxu0 %v6233
    %v6381 = vpop.f32.mrb[0].mxu0
    %v6382 = vadd.f32 %v6226, %v6381
    %v6383 = vpop.f32.mrb[0].mxu0
    %v6384 = vadd.f32 %v6226, %v6383
    %6385 = vmatprep.mubr.f32.mxu0 0.0
    %6386 = vmatmul.mubr.f32.gmra.mrb[0].mxu0 %v6236
    %v6387 = vpop.f32.mrb[0].mxu0
    %v6388 = vadd.f32 %v6230, %v6387
    %v6389 = vpop.f32.mrb[0].mxu0
    %v6390 = vadd.f32 %v6230, %v6389
    %6391 = vdwg.mxu0
    %v6392 = vadd.f32 %v6305, %v211
    %v6393 = vadd.f32 %v6307, %v213
    %v6394 = vadd.f32 %v6382, %v288
    %v6395 = vadd.f32 %v6384, %v290
    %v6396 = vadd.f32 %v6311, %v217
    %v6397 = vadd.f32 %v6313, %v219
    %v6398 = vadd.f32 %v6388, %v294
    %v6399 = vadd.f32 %v6390, %v296
    %6400 = vset.pattern.permute.xlu0 2
    %6401 = vperm.xlu0 %6400, %v106
    %v6402 = vpop.permute.xlu0 %6401
    %6404 = vset.pattern.permute.xlu0 2
    %6405 = vperm.xlu0 %6404, %v107
    %v6406 = vpop.permute.xlu0 %6405
    %v6408 = vmul.f32 %v6392, %v6402
    %v6409 = vmul.f32 %v6393, %v6402
    %v6410 = vmul.f32 %v6394, %v6402
    %v6411 = vmul.f32 %v6395, %v6402
    %v6412 = vmul.f32 %v6396, %v6406
    %v6413 = vmul.f32 %v6397, %v6406
    %v6414 = vmul.f32 %v6398, %v6406
    %v6415 = vmul.f32 %v6399, %v6406
    %6416 = vset.pattern.permute.xlu0 3
    %6417 = vperm.xlu0 %6416, %v106
    %v6418 = vpop.permute.xlu0 %6417
    %6420 = vset.pattern.permute.xlu0 3
    %6421 = vperm.xlu0 %6420, %v107
    %v6422 = vpop.permute.xlu0 %6421
    %v6424 = vadd.f32 %v6408, %v6418
    %v6425 = vadd.f32 %v6409, %v6418
    %v6426 = vadd.f32 %v6410, %v6418
    %v6427 = vadd.f32 %v6411, %v6418
    %v6428 = vadd.f32 %v6412, %v6422
    %v6429 = vadd.f32 %v6413, %v6422
    %v6430 = vadd.f32 %v6414, %v6422
    %v6431 = vadd.f32 %v6415, %v6422
    %v6432 = vld [vmem:[#allocation8] sm:$0xff]
    %v6433 = vld [vmem:[#allocation8 + $0x8] sm:$0xff]
    %6434 = vset.pattern.permute.xlu0 15
    %6435 = vperm.xlu0 %6434, %v106
    %v6436 = vpop.permute.xlu0 %6435
    %6438 = vset.pattern.permute.xlu0 15
    %6439 = vperm.xlu0 %6438, %v107
    %v6440 = vpop.permute.xlu0 %6439
    %v6443 = vsel %vm566, %v6432, 0
    %v6446 = vsel %vm566, %v6433, 0
    %6448 = vmatprep.subr.mxu0 %v6425
    %6449 = vmatpush1.msra.mxu0 %v6424
    %6450 = vmatprep.subr.mxu0 %v6429
    %6451 = vmatpush1.msra.mxu0 %v6428
    %6452 = vmatprep.subr.mxu0 0.0
    %6453 = vmatpush1.msra.mxu0 0.0
    %6454 = vmatprep.subr.mxu0 0.0
    %6455 = vmatpush1.msra.mxu0 0.0
    %6456 = vmatprep.subr.mxu0 0.0
    %6457 = vmatpush1.msra.mxu0 0.0
    %6458 = vmatprep.subr.mxu0 0.0
    %6459 = vmatpush1.msra.mxu0 0.0
    %6460 = vmatprep.subr.mxu0 0.0
    %6461 = vmatpush1.msra.mxu0 0.0
    %6462 = vmatprep.subr.mxu0 0.0
    %6463 = vmatpush1.msra.mxu0 0.0
    %6464 = vmatprep.subr.mxu0 0.0
    %6465 = vmatpush1.msra.mxu0 0.0
    %6466 = vmatprep.subr.mxu0 0.0
    %6467 = vmatpush1.msra.mxu0 0.0
    %6468 = vmatprep.subr.mxu0 0.0
    %6469 = vmatpush1.msra.mxu0 0.0
    %6470 = vmatprep.subr.mxu0 0.0
    %6471 = vmatpush1.msra.mxu0 0.0
    %6472 = vmatprep.subr.mxu0 0.0
    %6473 = vmatpush1.msra.mxu0 0.0
    %6474 = vmatprep.subr.mxu0 0.0
    %6475 = vmatpush1.msra.mxu0 0.0
    %6476 = vmatprep.subr.mxu0 0.0
    %6477 = vmatpush1.msra.mxu0 0.0
    %6478 = vmatprep.subr.mxu0 0.0
    %6479 = vmatpush1.msra.mxu0 0.0
    %6480 = vmatprep.subr.mxu0 0.0
    %6481 = vmatpush1.msra.mxu0 0.0
    %6482 = vmatprep.subr.mxu0 0.0
    %6483 = vmatpush1.msra.mxu0 0.0
    %6484 = vmatprep.subr.mxu0 0.0
    %6485 = vmatpush1.msra.mxu0 0.0
    %6486 = vmatprep.subr.mxu0 0.0
    %6487 = vmatpush1.msra.mxu0 0.0
    %6488 = vmatprep.subr.mxu0 0.0
    %6489 = vmatpush1.msra.mxu0 0.0
    %6490 = vmatprep.subr.mxu0 0.0
    %6491 = vmatpush1.msra.mxu0 0.0
    %6492 = vmatprep.subr.mxu0 0.0
    %6493 = vmatpush1.msra.mxu0 0.0
    %6494 = vmatprep.subr.mxu0 0.0
    %6495 = vmatpush1.msra.mxu0 0.0
    %6496 = vmatprep.subr.mxu0 0.0
    %6497 = vmatpush1.msra.mxu0 0.0
    %6498 = vmatprep.subr.mxu0 0.0
    %6499 = vmatpush1.msra.mxu0 0.0
    %6500 = vmatprep.subr.mxu0 0.0
    %6501 = vmatpush1.msra.mxu0 0.0
    %6502 = vmatprep.subr.mxu0 0.0
    %6503 = vmatpush1.msra.mxu0 0.0
    %6504 = vmatprep.subr.mxu0 0.0
    %6505 = vmatpush1.msra.mxu0 0.0
    %6506 = vmatprep.subr.mxu0 0.0
    %6507 = vmatpush1.msra.mxu0 0.0
    %6508 = vmatprep.subr.mxu0 0.0
    %6509 = vmatpush1.msra.mxu0 0.0
    %6510 = vmatprep.subr.mxu0 0.0
    %6511 = vmatpush1.msra.mxu0 0.0
    %6512 = vmatprep.mubr.f32.mxu0 0.0
    %6513 = vmatmul.mubr.f32.gmra.mrb[0].mxu0 %v6443
    %v6514 = vpop.f32.mrb[0].mxu0
    %v6515 = vadd.f32 %v6436, %v6514
    %v6516 = vpop.f32.mrb[0].mxu0
    %v6517 = vadd.f32 %v6436, %v6516
    %6518 = vmatprep.mubr.f32.mxu0 0.0
    %6519 = vmatmul.mubr.f32.gmra.mrb[0].mxu0 %v6446
    %v6520 = vpop.f32.mrb[0].mxu0
    %v6521 = vadd.f32 %v6440, %v6520
    %v6522 = vpop.f32.mrb[0].mxu0
    %v6523 = vadd.f32 %v6440, %v6522
    %6524 = vdwg.mxu0
    %6525 = vmatprep.subr.mxu0 %v6427
    %6526 = vmatpush1.msra.mxu0 %v6426
    %6527 = vmatprep.subr.mxu0 %v6431
    %6528 = vmatpush1.msra.mxu0 %v6430
    %6529 = vmatprep.subr.mxu0 0.0
    %6530 = vmatpush1.msra.mxu0 0.0
    %6531 = vmatprep.subr.mxu0 0.0
    %6532 = vmatpush1.msra.mxu0 0.0
    %6533 = vmatprep.subr.mxu0 0.0
    %6534 = vmatpush1.msra.mxu0 0.0
    %6535 = vmatprep.subr.mxu0 0.0
    %6536 = vmatpush1.msra.mxu0 0.0
    %6537 = vmatprep.subr.mxu0 0.0
    %6538 = vmatpush1.msra.mxu0 0.0
    %6539 = vmatprep.subr.mxu0 0.0
    %6540 = vmatpush1.msra.mxu0 0.0
    %6541 = vmatprep.subr.mxu0 0.0
    %6542 = vmatpush1.msra.mxu0 0.0
    %6543 = vmatprep.subr.mxu0 0.0
    %6544 = vmatpush1.msra.mxu0 0.0
    %6545 = vmatprep.subr.mxu0 0.0
    %6546 = vmatpush1.msra.mxu0 0.0
    %6547 = vmatprep.subr.mxu0 0.0
    %6548 = vmatpush1.msra.mxu0 0.0
    %6549 = vmatprep.subr.mxu0 0.0
    %6550 = vmatpush1.msra.mxu0 0.0
    %6551 = vmatprep.subr.mxu0 0.0
    %6552 = vmatpush1.msra.mxu0 0.0
    %6553 = vmatprep.subr.mxu0 0.0
    %6554 = vmatpush1.msra.mxu0 0.0
    %6555 = vmatprep.subr.mxu0 0.0
    %6556 = vmatpush1.msra.mxu0 0.0
    %6557 = vmatprep.subr.mxu0 0.0
    %6558 = vmatpush1.msra.mxu0 0.0
    %6559 = vmatprep.subr.mxu0 0.0
    %6560 = vmatpush1.msra.mxu0 0.0
    %6561 = vmatprep.subr.mxu0 0.0
    %6562 = vmatpush1.msra.mxu0 0.0
    %6563 = vmatprep.subr.mxu0 0.0
    %6564 = vmatpush1.msra.mxu0 0.0
    %6565 = vmatprep.subr.mxu0 0.0
    %6566 = vmatpush1.msra.mxu0 0.0
    %6567 = vmatprep.subr.mxu0 0.0
    %6568 = vmatpush1.msra.mxu0 0.0
    %6569 = vmatprep.subr.mxu0 0.0
    %6570 = vmatpush1.msra.mxu0 0.0
    %6571 = vmatprep.subr.mxu0 0.0
    %6572 = vmatpush1.msra.mxu0 0.0
    %6573 = vmatprep.subr.mxu0 0.0
    %6574 = vmatpush1.msra.mxu0 0.0
    %6575 = vmatprep.subr.mxu0 0.0
    %6576 = vmatpush1.msra.mxu0 0.0
    %6577 = vmatprep.subr.mxu0 0.0
    %6578 = vmatpush1.msra.mxu0 0.0
    %6579 = vmatprep.subr.mxu0 0.0
    %6580 = vmatpush1.msra.mxu0 0.0
    %6581 = vmatprep.subr.mxu0 0.0
    %6582 = vmatpush1.msra.mxu0 0.0
    %6583 = vmatprep.subr.mxu0 0.0
    %6584 = vmatpush1.msra.mxu0 0.0
    %6585 = vmatprep.subr.mxu0 0.0
    %6586 = vmatpush1.msra.mxu0 0.0
    %6587 = vmatprep.subr.mxu0 0.0
    %6588 = vmatpush1.msra.mxu0 0.0
    %6589 = vmatprep.mubr.f32.mxu0 0.0
    %6590 = vmatmul.mubr.f32.gmra.mrb[0].mxu0 %v6443
    %v6591 = vpop.f32.mrb[0].mxu0
    %v6592 = vadd.f32 %v6436, %v6591
    %v6593 = vpop.f32.mrb[0].mxu0
    %v6594 = vadd.f32 %v6436, %v6593
    %6595 = vmatprep.mubr.f32.mxu0 0.0
    %6596 = vmatmul.mubr.f32.gmra.mrb[0].mxu0 %v6446
    %v6597 = vpop.f32.mrb[0].mxu0
    %v6598 = vadd.f32 %v6440, %v6597
    %v6599 = vpop.f32.mrb[0].mxu0
    %v6600 = vadd.f32 %v6440, %v6599
    %6601 = vdwg.mxu0
    %6602 = vrot.lane.b32.xlu0 %v6515, 17
    %v6603 = vpop.permute.xlu0 %6602
    %6604 = vrot.lane.b32.xlu0 %v6521, 17
    %v6605 = vpop.permute.xlu0 %6604
    %6606 = vrot.lane.b32.xlu0 %v6517, 17
    %v6607 = vpop.permute.xlu0 %6606
    %6608 = vrot.lane.b32.xlu0 %v6523, 17
    %v6609 = vpop.permute.xlu0 %6608
    %6610 = vrot.lane.b32.xlu0 %v6592, 17
    %v6611 = vpop.permute.xlu0 %6610
    %6612 = vrot.lane.b32.xlu0 %v6598, 17
    %v6613 = vpop.permute.xlu0 %6612
    %6614 = vrot.lane.b32.xlu0 %v6594, 17
    %v6615 = vpop.permute.xlu0 %6614
    %6616 = vrot.lane.b32.xlu0 %v6600, 17
    %v6617 = vpop.permute.xlu0 %6616
    %v6618 = vsel %vm1219, %v6611, %v6615
    %v6619 = vsel %vm1219, %v6613, %v6617
    %v6620 = vsel %vm1219, %v6607, %v6611
    %v6621 = vsel %vm1219, %v6609, %v6613
    %v6622 = vsel %vm1219, %v6603, %v6607
    %v6623 = vsel %vm1219, %v6605, %v6609
    %v6624 = vsel %vm1219, %v6615, %v6603
    %v6625 = vsel %vm1219, %v6617, %v6605
    %v6626 = vmul.f32 %v6624, %v1236
    %v6627 = vmul.f32 %v6622, %v1237
    %v6628 = vmul.f32 %v6620, %v1238
    %v6629 = vmul.f32 %v6618, %v1239
    %v6630 = vmul.f32 %v6625, %v1236
    %v6631 = vmul.f32 %v6623, %v1237
    %v6632 = vmul.f32 %v6621, %v1238
    %v6633 = vmul.f32 %v6619, %v1239
    %6634 = vset.pattern.permute.xlu0 103
    %6635 = vperm.xlu0 %6634, %v104
    %v6636 = vpop.permute.xlu0 %6635
    %6638 = vset.pattern.permute.xlu0 103
    %6639 = vperm.xlu0 %6638, %v105
    %v6640 = vpop.permute.xlu0 %6639
    %v6642 = vmul.f32 %v6626, %v6636
    %v6643 = vmul.f32 %v6627, %v6636
    %v6644 = vmul.f32 %v6628, %v6636
    %v6645 = vmul.f32 %v6629, %v6636
    %v6646 = vmul.f32 %v6630, %v6640
    %v6647 = vmul.f32 %v6631, %v6640
    %v6648 = vmul.f32 %v6632, %v6640
    %v6649 = vmul.f32 %v6633, %v6640
    %6650 = vrot.lane.b32.xlu0 %v6515, 16
    %v6651 = vpop.permute.xlu0 %6650
    %6652 = vrot.lane.b32.xlu0 %v6521, 16
    %v6653 = vpop.permute.xlu0 %6652
    %6654 = vrot.lane.b32.xlu0 %v6517, 16
    %v6655 = vpop.permute.xlu0 %6654
    %6656 = vrot.lane.b32.xlu0 %v6523, 16
    %v6657 = vpop.permute.xlu0 %6656
    %6658 = vrot.lane.b32.xlu0 %v6592, 16
    %v6659 = vpop.permute.xlu0 %6658
    %6660 = vrot.lane.b32.xlu0 %v6598, 16
    %v6661 = vpop.permute.xlu0 %6660
    %6662 = vrot.lane.b32.xlu0 %v6594, 16
    %v6663 = vpop.permute.xlu0 %6662
    %6664 = vrot.lane.b32.xlu0 %v6600, 16
    %v6665 = vpop.permute.xlu0 %6664
    %v6666 = vsel %vm1288, %v6659, %v6663
    %v6667 = vsel %vm1288, %v6661, %v6665
    %v6668 = vsel %vm1288, %v6655, %v6659
    %v6669 = vsel %vm1288, %v6657, %v6661
    %v6670 = vsel %vm1288, %v6651, %v6655
    %v6671 = vsel %vm1288, %v6653, %v6657
    %v6672 = vsel %vm1288, %v6663, %v6651
    %v6673 = vsel %vm1288, %v6665, %v6653
    %v6674 = vmul.f32 %v6672, %v1301
    %v6675 = vmul.f32 %v6670, %v1302
    %v6676 = vmul.f32 %v6668, %v1303
    %v6677 = vmul.f32 %v6666, %v1304
    %v6678 = vmul.f32 %v6673, %v1301
    %v6679 = vmul.f32 %v6671, %v1302
    %v6680 = vmul.f32 %v6669, %v1303
    %v6681 = vmul.f32 %v6667, %v1304
    %6682 = vset.pattern.permute.xlu0 104
    %6683 = vperm.xlu0 %6682, %v104
    %v6684 = vpop.permute.xlu0 %6683
    %6686 = vset.pattern.permute.xlu0 104
    %6687 = vperm.xlu0 %6686, %v105
    %v6688 = vpop.permute.xlu0 %6687
    %v6690 = vmul.f32 %v6674, %v6684
    %v6691 = vmul.f32 %v6675, %v6684
    %v6692 = vmul.f32 %v6676, %v6684
    %v6693 = vmul.f32 %v6677, %v6684
    %v6694 = vmul.f32 %v6678, %v6688
    %v6695 = vmul.f32 %v6679, %v6688
    %v6696 = vmul.f32 %v6680, %v6688
    %v6697 = vmul.f32 %v6681, %v6688
    %v6698 = vadd.f32 %v6642, %v6690
    %v6699 = vadd.f32 %v6643, %v6691
    %v6700 = vadd.f32 %v6644, %v6692
    %v6701 = vadd.f32 %v6645, %v6693
    %v6702 = vadd.f32 %v6646, %v6694
    %v6703 = vadd.f32 %v6647, %v6695
    %v6704 = vadd.f32 %v6648, %v6696
    %v6705 = vadd.f32 %v6649, %v6697
    %6706 = vrot.lane.b32.xlu0 %v6515, 15
    %v6707 = vpop.permute.xlu0 %6706
    %6708 = vrot.lane.b32.xlu0 %v6521, 15
    %v6709 = vpop.permute.xlu0 %6708
    %6710 = vrot.lane.b32.xlu0 %v6517, 15
    %v6711 = vpop.permute.xlu0 %6710
    %6712 = vrot.lane.b32.xlu0 %v6523, 15
    %v6713 = vpop.permute.xlu0 %6712
    %6714 = vrot.lane.b32.xlu0 %v6592, 15
    %v6715 = vpop.permute.xlu0 %6714
    %6716 = vrot.lane.b32.xlu0 %v6598, 15
    %v6717 = vpop.permute.xlu0 %6716
    %6718 = vrot.lane.b32.xlu0 %v6594, 15
    %v6719 = vpop.permute.xlu0 %6718
    %6720 = vrot.lane.b32.xlu0 %v6600, 15
    %v6721 = vpop.permute.xlu0 %6720
    %v6722 = vsel %vm1353, %v6715, %v6719
    %v6723 = vsel %vm1353, %v6717, %v6721
    %v6724 = vsel %vm1353, %v6711, %v6715
    %v6725 = vsel %vm1353, %v6713, %v6717
    %v6726 = vsel %vm1353, %v6707, %v6711
    %v6727 = vsel %vm1353, %v6709, %v6713
    %v6728 = vsel %vm1353, %v6719, %v6707
    %v6729 = vsel %vm1353, %v6721, %v6709
    %v6730 = vmul.f32 %v6728, %v1370
    %v6731 = vmul.f32 %v6726, %v1371
    %v6732 = vmul.f32 %v6724, %v1372
    %v6733 = vmul.f32 %v6722, %v1373
    %v6734 = vmul.f32 %v6729, %v1370
    %v6735 = vmul.f32 %v6727, %v1371
    %v6736 = vmul.f32 %v6725, %v1372
    %v6737 = vmul.f32 %v6723, %v1373
    %6738 = vset.pattern.permute.xlu0 105
    %6739 = vperm.xlu0 %6738, %v104
    %v6740 = vpop.permute.xlu0 %6739
    %6742 = vset.pattern.permute.xlu0 105
    %6743 = vperm.xlu0 %6742, %v105
    %v6744 = vpop.permute.xlu0 %6743
    %v6746 = vmul.f32 %v6730, %v6740
    %v6747 = vmul.f32 %v6731, %v6740
    %v6748 = vmul.f32 %v6732, %v6740
    %v6749 = vmul.f32 %v6733, %v6740
    %v6750 = vmul.f32 %v6734, %v6744
    %v6751 = vmul.f32 %v6735, %v6744
    %v6752 = vmul.f32 %v6736, %v6744
    %v6753 = vmul.f32 %v6737, %v6744
    %v6754 = vadd.f32 %v6698, %v6746
    %v6755 = vadd.f32 %v6699, %v6747
    %v6756 = vadd.f32 %v6700, %v6748
    %v6757 = vadd.f32 %v6701, %v6749
    %v6758 = vadd.f32 %v6702, %v6750
    %v6759 = vadd.f32 %v6703, %v6751
    %v6760 = vadd.f32 %v6704, %v6752
    %v6761 = vadd.f32 %v6705, %v6753
    %6762 = vrot.lane.b32.xlu0 %v6515, 1
    %v6763 = vpop.permute.xlu0 %6762
    %6764 = vrot.lane.b32.xlu0 %v6521, 1
    %v6765 = vpop.permute.xlu0 %6764
    %6766 = vrot.lane.b32.xlu0 %v6517, 1
    %v6767 = vpop.permute.xlu0 %6766
    %6768 = vrot.lane.b32.xlu0 %v6523, 1
    %v6769 = vpop.permute.xlu0 %6768
    %6770 = vrot.lane.b32.xlu0 %v6592, 1
    %v6771 = vpop.permute.xlu0 %6770
    %6772 = vrot.lane.b32.xlu0 %v6598, 1
    %v6773 = vpop.permute.xlu0 %6772
    %6774 = vrot.lane.b32.xlu0 %v6594, 1
    %v6775 = vpop.permute.xlu0 %6774
    %6776 = vrot.lane.b32.xlu0 %v6600, 1
    %v6777 = vpop.permute.xlu0 %6776
    %v6778 = vsel %vm1556, %v6771, %v6775
    %v6779 = vsel %vm1556, %v6773, %v6777
    %v6780 = vsel %vm1556, %v6767, %v6771
    %v6781 = vsel %vm1556, %v6769, %v6773
    %v6782 = vsel %vm1556, %v6763, %v6767
    %v6783 = vsel %vm1556, %v6765, %v6769
    %v6784 = vsel %vm1556, %v6775, %v6763
    %v6785 = vsel %vm1556, %v6777, %v6765
    %v6786 = vmul.f32 %v6784, %v1569
    %v6787 = vmul.f32 %v6782, %v1570
    %v6788 = vmul.f32 %v6780, %v1571
    %v6789 = vmul.f32 %v6778, %v1572
    %v6790 = vmul.f32 %v6785, %v1569
    %v6791 = vmul.f32 %v6783, %v1570
    %v6792 = vmul.f32 %v6781, %v1571
    %v6793 = vmul.f32 %v6779, %v1572
    %6794 = vset.pattern.permute.xlu0 106
    %6795 = vperm.xlu0 %6794, %v104
    %v6796 = vpop.permute.xlu0 %6795
    %6798 = vset.pattern.permute.xlu0 106
    %6799 = vperm.xlu0 %6798, %v105
    %v6800 = vpop.permute.xlu0 %6799
    %v6802 = vmul.f32 %v6786, %v6796
    %v6803 = vmul.f32 %v6787, %v6796
    %v6804 = vmul.f32 %v6788, %v6796
    %v6805 = vmul.f32 %v6789, %v6796
    %v6806 = vmul.f32 %v6790, %v6800
    %v6807 = vmul.f32 %v6791, %v6800
    %v6808 = vmul.f32 %v6792, %v6800
    %v6809 = vmul.f32 %v6793, %v6800
    %v6810 = vadd.f32 %v6754, %v6802
    %v6811 = vadd.f32 %v6755, %v6803
    %v6812 = vadd.f32 %v6756, %v6804
    %v6813 = vadd.f32 %v6757, %v6805
    %v6814 = vadd.f32 %v6758, %v6806
    %v6815 = vadd.f32 %v6759, %v6807
    %v6816 = vadd.f32 %v6760, %v6808
    %v6817 = vadd.f32 %v6761, %v6809
    %6818 = vset.pattern.permute.xlu0 107
    %6819 = vperm.xlu0 %6818, %v104
    %v6820 = vpop.permute.xlu0 %6819
    %6822 = vset.pattern.permute.xlu0 107
    %6823 = vperm.xlu0 %6822, %v105
    %v6824 = vpop.permute.xlu0 %6823
    %v6826 = vmul.f32 %v6515, %v6820
    %v6827 = vmul.f32 %v6517, %v6820
    %v6828 = vmul.f32 %v6592, %v6820
    %v6829 = vmul.f32 %v6594, %v6820
    %v6830 = vmul.f32 %v6521, %v6824
    %v6831 = vmul.f32 %v6523, %v6824
    %v6832 = vmul.f32 %v6598, %v6824
    %v6833 = vmul.f32 %v6600, %v6824
    %v6834 = vadd.f32 %v6810, %v6826
    %v6835 = vadd.f32 %v6811, %v6827
    %v6836 = vadd.f32 %v6812, %v6828
    %v6837 = vadd.f32 %v6813, %v6829
    %v6838 = vadd.f32 %v6814, %v6830
    %v6839 = vadd.f32 %v6815, %v6831
    %v6840 = vadd.f32 %v6816, %v6832
    %v6841 = vadd.f32 %v6817, %v6833
    %6842 = vrot.lane.b32.xlu0 %v6515, 127
    %v6843 = vpop.permute.xlu0 %6842
    %6844 = vrot.lane.b32.xlu0 %v6521, 127
    %v6845 = vpop.permute.xlu0 %6844
    %6846 = vrot.lane.b32.xlu0 %v6517, 127
    %v6847 = vpop.permute.xlu0 %6846
    %6848 = vrot.lane.b32.xlu0 %v6523, 127
    %v6849 = vpop.permute.xlu0 %6848
    %6850 = vrot.lane.b32.xlu0 %v6592, 127
    %v6851 = vpop.permute.xlu0 %6850
    %6852 = vrot.lane.b32.xlu0 %v6598, 127
    %v6853 = vpop.permute.xlu0 %6852
    %6854 = vrot.lane.b32.xlu0 %v6594, 127
    %v6855 = vpop.permute.xlu0 %6854
    %6856 = vrot.lane.b32.xlu0 %v6600, 127
    %v6857 = vpop.permute.xlu0 %6856
    %v6858 = vsel %vm1645, %v6851, %v6855
    %v6859 = vsel %vm1645, %v6853, %v6857
    %v6860 = vsel %vm1645, %v6847, %v6851
    %v6861 = vsel %vm1645, %v6849, %v6853
    %v6862 = vsel %vm1645, %v6843, %v6847
    %v6863 = vsel %vm1645, %v6845, %v6849
    %v6864 = vsel %vm1645, %v6855, %v6843
    %v6865 = vsel %vm1645, %v6857, %v6845
    %v6866 = vmul.f32 %v6862, %v1658
    %v6867 = vmul.f32 %v6860, %v1659
    %v6868 = vmul.f32 %v6858, %v1660
    %v6869 = vmul.f32 %v6864, %v1661
    %v6870 = vmul.f32 %v6863, %v1658
    %v6871 = vmul.f32 %v6861, %v1659
    %v6872 = vmul.f32 %v6859, %v1660
    %v6873 = vmul.f32 %v6865, %v1661
    %6874 = vset.pattern.permute.xlu0 108
    %6875 = vperm.xlu0 %6874, %v104
    %v6876 = vpop.permute.xlu0 %6875
    %6878 = vset.pattern.permute.xlu0 108
    %6879 = vperm.xlu0 %6878, %v105
    %v6880 = vpop.permute.xlu0 %6879
    %v6882 = vmul.f32 %v6866, %v6876
    %v6883 = vmul.f32 %v6867, %v6876
    %v6884 = vmul.f32 %v6868, %v6876
    %v6885 = vmul.f32 %v6869, %v6876
    %v6886 = vmul.f32 %v6870, %v6880
    %v6887 = vmul.f32 %v6871, %v6880
    %v6888 = vmul.f32 %v6872, %v6880
    %v6889 = vmul.f32 %v6873, %v6880
    %v6890 = vadd.f32 %v6834, %v6882
    %v6891 = vadd.f32 %v6835, %v6883
    %v6892 = vadd.f32 %v6836, %v6884
    %v6893 = vadd.f32 %v6837, %v6885
    %v6894 = vadd.f32 %v6838, %v6886
    %v6895 = vadd.f32 %v6839, %v6887
    %v6896 = vadd.f32 %v6840, %v6888
    %v6897 = vadd.f32 %v6841, %v6889
    %6898 = vrot.lane.b32.xlu0 %v6515, 113
    %v6899 = vpop.permute.xlu0 %6898
    %6900 = vrot.lane.b32.xlu0 %v6521, 113
    %v6901 = vpop.permute.xlu0 %6900
    %6902 = vrot.lane.b32.xlu0 %v6517, 113
    %v6903 = vpop.permute.xlu0 %6902
    %6904 = vrot.lane.b32.xlu0 %v6523, 113
    %v6905 = vpop.permute.xlu0 %6904
    %6906 = vrot.lane.b32.xlu0 %v6592, 113
    %v6907 = vpop.permute.xlu0 %6906
    %6908 = vrot.lane.b32.xlu0 %v6598, 113
    %v6909 = vpop.permute.xlu0 %6908
    %6910 = vrot.lane.b32.xlu0 %v6594, 113
    %v6911 = vpop.permute.xlu0 %6910
    %6912 = vrot.lane.b32.xlu0 %v6600, 113
    %v6913 = vpop.permute.xlu0 %6912
    %v6914 = vsel %vm1848, %v6907, %v6911
    %v6915 = vsel %vm1848, %v6909, %v6913
    %v6916 = vsel %vm1848, %v6903, %v6907
    %v6917 = vsel %vm1848, %v6905, %v6909
    %v6918 = vsel %vm1848, %v6899, %v6903
    %v6919 = vsel %vm1848, %v6901, %v6905
    %v6920 = vsel %vm1848, %v6911, %v6899
    %v6921 = vsel %vm1848, %v6913, %v6901
    %v6922 = vmul.f32 %v6918, %v1865
    %v6923 = vmul.f32 %v6916, %v1866
    %v6924 = vmul.f32 %v6914, %v1867
    %v6925 = vmul.f32 %v6920, %v1868
    %v6926 = vmul.f32 %v6919, %v1865
    %v6927 = vmul.f32 %v6917, %v1866
    %v6928 = vmul.f32 %v6915, %v1867
    %v6929 = vmul.f32 %v6921, %v1868
    %6930 = vset.pattern.permute.xlu0 109
    %6931 = vperm.xlu0 %6930, %v104
    %v6932 = vpop.permute.xlu0 %6931
    %6934 = vset.pattern.permute.xlu0 109
    %6935 = vperm.xlu0 %6934, %v105
    %v6936 = vpop.permute.xlu0 %6935
    %v6938 = vmul.f32 %v6922, %v6932
    %v6939 = vmul.f32 %v6923, %v6932
    %v6940 = vmul.f32 %v6924, %v6932
    %v6941 = vmul.f32 %v6925, %v6932
    %v6942 = vmul.f32 %v6926, %v6936
    %v6943 = vmul.f32 %v6927, %v6936
    %v6944 = vmul.f32 %v6928, %v6936
    %v6945 = vmul.f32 %v6929, %v6936
    %v6946 = vadd.f32 %v6890, %v6938
    %v6947 = vadd.f32 %v6891, %v6939
    %v6948 = vadd.f32 %v6892, %v6940
    %v6949 = vadd.f32 %v6893, %v6941
    %v6950 = vadd.f32 %v6894, %v6942
    %v6951 = vadd.f32 %v6895, %v6943
    %v6952 = vadd.f32 %v6896, %v6944
    %v6953 = vadd.f32 %v6897, %v6945
    %6954 = vrot.lane.b32.xlu0 %v6515, 112
    %v6955 = vpop.permute.xlu0 %6954
    %6956 = vrot.lane.b32.xlu0 %v6521, 112
    %v6957 = vpop.permute.xlu0 %6956
    %6958 = vrot.lane.b32.xlu0 %v6517, 112
    %v6959 = vpop.permute.xlu0 %6958
    %6960 = vrot.lane.b32.xlu0 %v6523, 112
    %v6961 = vpop.permute.xlu0 %6960
    %6962 = vrot.lane.b32.xlu0 %v6592, 112
    %v6963 = vpop.permute.xlu0 %6962
    %6964 = vrot.lane.b32.xlu0 %v6598, 112
    %v6965 = vpop.permute.xlu0 %6964
    %6966 = vrot.lane.b32.xlu0 %v6594, 112
    %v6967 = vpop.permute.xlu0 %6966
    %6968 = vrot.lane.b32.xlu0 %v6600, 112
    %v6969 = vpop.permute.xlu0 %6968
    %v6970 = vsel %vm1917, %v6963, %v6967
    %v6971 = vsel %vm1917, %v6965, %v6969
    %v6972 = vsel %vm1917, %v6959, %v6963
    %v6973 = vsel %vm1917, %v6961, %v6965
    %v6974 = vsel %vm1917, %v6955, %v6959
    %v6975 = vsel %vm1917, %v6957, %v6961
    %v6976 = vsel %vm1917, %v6967, %v6955
    %v6977 = vsel %vm1917, %v6969, %v6957
    %v6978 = vmul.f32 %v6974, %v1930
    %v6979 = vmul.f32 %v6972, %v1931
    %v6980 = vmul.f32 %v6970, %v1932
    %v6981 = vmul.f32 %v6976, %v1933
    %v6982 = vmul.f32 %v6975, %v1930
    %v6983 = vmul.f32 %v6973, %v1931
    %v6984 = vmul.f32 %v6971, %v1932
    %v6985 = vmul.f32 %v6977, %v1933
    %6986 = vset.pattern.permute.xlu0 110
    %6987 = vperm.xlu0 %6986, %v104
    %v6988 = vpop.permute.xlu0 %6987
    %6990 = vset.pattern.permute.xlu0 110
    %6991 = vperm.xlu0 %6990, %v105
    %v6992 = vpop.permute.xlu0 %6991
    %v6994 = vmul.f32 %v6978, %v6988
    %v6995 = vmul.f32 %v6979, %v6988
    %v6996 = vmul.f32 %v6980, %v6988
    %v6997 = vmul.f32 %v6981, %v6988
    %v6998 = vmul.f32 %v6982, %v6992
    %v6999 = vmul.f32 %v6983, %v6992
    %v7000 = vmul.f32 %v6984, %v6992
    %v7001 = vmul.f32 %v6985, %v6992
    %v7002 = vadd.f32 %v6946, %v6994
    %v7003 = vadd.f32 %v6947, %v6995
    %v7004 = vadd.f32 %v6948, %v6996
    %v7005 = vadd.f32 %v6949, %v6997
    %v7006 = vadd.f32 %v6950, %v6998
    %v7007 = vadd.f32 %v6951, %v6999
    %v7008 = vadd.f32 %v6952, %v7000
    %v7009 = vadd.f32 %v6953, %v7001
    %7010 = vrot.lane.b32.xlu0 %v6515, 111
    %v7011 = vpop.permute.xlu0 %7010
    %7012 = vrot.lane.b32.xlu0 %v6521, 111
    %v7013 = vpop.permute.xlu0 %7012
    %7014 = vrot.lane.b32.xlu0 %v6517, 111
    %v7015 = vpop.permute.xlu0 %7014
    %7016 = vrot.lane.b32.xlu0 %v6523, 111
    %v7017 = vpop.permute.xlu0 %7016
    %7018 = vrot.lane.b32.xlu0 %v6592, 111
    %v7019 = vpop.permute.xlu0 %7018
    %7020 = vrot.lane.b32.xlu0 %v6598, 111
    %v7021 = vpop.permute.xlu0 %7020
    %7022 = vrot.lane.b32.xlu0 %v6594, 111
    %v7023 = vpop.permute.xlu0 %7022
    %7024 = vrot.lane.b32.xlu0 %v6600, 111
    %v7025 = vpop.permute.xlu0 %7024
    %v7026 = vsel %vm1982, %v7019, %v7023
    %v7027 = vsel %vm1982, %v7021, %v7025
    %v7028 = vsel %vm1982, %v7015, %v7019
    %v7029 = vsel %vm1982, %v7017, %v7021
    %v7030 = vsel %vm1982, %v7011, %v7015
    %v7031 = vsel %vm1982, %v7013, %v7017
    %v7032 = vsel %vm1982, %v7023, %v7011
    %v7033 = vsel %vm1982, %v7025, %v7013
    %v7034 = vmul.f32 %v7030, %v1999
    %v7035 = vmul.f32 %v7028, %v2000
    %v7036 = vmul.f32 %v7026, %v2001
    %v7037 = vmul.f32 %v7032, %v2002
    %v7038 = vmul.f32 %v7031, %v1999
    %v7039 = vmul.f32 %v7029, %v2000
    %v7040 = vmul.f32 %v7027, %v2001
    %v7041 = vmul.f32 %v7033, %v2002
    %7042 = vset.pattern.permute.xlu0 111
    %7043 = vperm.xlu0 %7042, %v104
    %v7044 = vpop.permute.xlu0 %7043
    %7046 = vset.pattern.permute.xlu0 111
    %7047 = vperm.xlu0 %7046, %v105
    %v7048 = vpop.permute.xlu0 %7047
    %v7050 = vmul.f32 %v7034, %v7044
    %v7051 = vmul.f32 %v7035, %v7044
    %v7052 = vmul.f32 %v7036, %v7044
    %v7053 = vmul.f32 %v7037, %v7044
    %v7054 = vmul.f32 %v7038, %v7048
    %v7055 = vmul.f32 %v7039, %v7048
    %v7056 = vmul.f32 %v7040, %v7048
    %v7057 = vmul.f32 %v7041, %v7048
    %v7058 = vadd.f32 %v7002, %v7050
    %v7059 = vadd.f32 %v7003, %v7051
    %v7060 = vadd.f32 %v7004, %v7052
    %v7061 = vadd.f32 %v7005, %v7053
    %v7062 = vadd.f32 %v7006, %v7054
    %v7063 = vadd.f32 %v7007, %v7055
    %v7064 = vadd.f32 %v7008, %v7056
    %v7065 = vadd.f32 %v7009, %v7057
    %7066 = vset.pattern.permute.xlu0 16
    %7067 = vperm.xlu0 %7066, %v106
    %v7068 = vpop.permute.xlu0 %7067
    %7070 = vset.pattern.permute.xlu0 16
    %7071 = vperm.xlu0 %7070, %v107
    %v7072 = vpop.permute.xlu0 %7071
    %v7074 = vadd.f32 %v7058, %v7068
    %v7075 = vadd.f32 %v7059, %v7068
    %v7076 = vadd.f32 %v7060, %v7068
    %v7077 = vadd.f32 %v7061, %v7068
    %v7078 = vadd.f32 %v7062, %v7072
    %v7079 = vadd.f32 %v7063, %v7072
    %v7080 = vadd.f32 %v7064, %v7072
    %v7081 = vadd.f32 %v7065, %v7072
    %v7082 = vmul.f32 %v7074, 0.5
    %v7083 = vmul.f32 %v7075, 0.5
    %v7084 = vmul.f32 %v7076, 0.5
    %v7085 = vmul.f32 %v7077, 0.5
    %v7086 = vmul.f32 %v7078, 0.5
    %v7087 = vmul.f32 %v7079, 0.5
    %v7088 = vmul.f32 %v7080, 0.5
    %v7089 = vmul.f32 %v7081, 0.5
    %v7090 = vmul.f32 %v7074, 0.044715
    %v7091 = vmul.f32 %v7075, 0.044715
    %v7092 = vmul.f32 %v7076, 0.044715
    %v7093 = vmul.f32 %v7077, 0.044715
    %v7094 = vmul.f32 %v7078, 0.044715
    %v7095 = vmul.f32 %v7079, 0.044715
    %v7096 = vmul.f32 %v7080, 0.044715
    %v7097 = vmul.f32 %v7081, 0.044715
    %v7098 = vmul.f32 %v7090, %v7074
    %v7099 = vmul.f32 %v7091, %v7075
    %v7100 = vmul.f32 %v7092, %v7076
    %v7101 = vmul.f32 %v7093, %v7077
    %v7102 = vmul.f32 %v7094, %v7078
    %v7103 = vmul.f32 %v7095, %v7079
    %v7104 = vmul.f32 %v7096, %v7080
    %v7105 = vmul.f32 %v7097, %v7081
    %v7106 = vmul.f32 %v7098, %v7074
    %v7107 = vmul.f32 %v7099, %v7075
    %v7108 = vmul.f32 %v7100, %v7076
    %v7109 = vmul.f32 %v7101, %v7077
    %v7110 = vmul.f32 %v7102, %v7078
    %v7111 = vmul.f32 %v7103, %v7079
    %v7112 = vmul.f32 %v7104, %v7080
    %v7113 = vmul.f32 %v7105, %v7081
    %v7114 = vadd.f32 %v7074, %v7106
    %v7115 = vadd.f32 %v7075, %v7107
    %v7116 = vadd.f32 %v7076, %v7108
    %v7117 = vadd.f32 %v7077, %v7109
    %v7118 = vadd.f32 %v7078, %v7110
    %v7119 = vadd.f32 %v7079, %v7111
    %v7120 = vadd.f32 %v7080, %v7112
    %v7121 = vadd.f32 %v7081, %v7113
    %v7122 = vmul.f32 %v7114, 0.7978846
    %v7123 = vmul.f32 %v7115, 0.7978846
    %v7124 = vmul.f32 %v7116, 0.7978846
    %v7125 = vmul.f32 %v7117, 0.7978846
    %v7126 = vmul.f32 %v7118, 0.7978846
    %v7127 = vmul.f32 %v7119, 0.7978846
    %v7128 = vmul.f32 %v7120, 0.7978846
    %v7129 = vmul.f32 %v7121, 0.7978846
    %v7130 = vtanh.pop %v7122
    %v7131 = vtanh.pop %v7123
    %v7132 = vtanh.pop %v7124
    %v7133 = vtanh.pop %v7125
    %v7134 = vtanh.pop %v7126
    %v7135 = vtanh.pop %v7127
    %v7136 = vtanh.pop %v7128
    %v7137 = vtanh.pop %v7129
    %v7138 = vadd.f32 %v7130, 1.0
    %v7139 = vadd.f32 %v7131, 1.0
    %v7140 = vadd.f32 %v7132, 1.0
    %v7141 = vadd.f32 %v7133, 1.0
    %v7142 = vadd.f32 %v7134, 1.0
    %v7143 = vadd.f32 %v7135, 1.0
    %v7144 = vadd.f32 %v7136, 1.0
    %v7145 = vadd.f32 %v7137, 1.0
    %v7146 = vmul.f32 %v7082, %v7138
    %v7147 = vmul.f32 %v7083, %v7139
    %v7148 = vmul.f32 %v7084, %v7140
    %v7149 = vmul.f32 %v7085, %v7141
    %v7150 = vmul.f32 %v7086, %v7142
    %v7151 = vmul.f32 %v7087, %v7143
    %v7152 = vmul.f32 %v7088, %v7144
    %v7153 = vmul.f32 %v7089, %v7145
    %v7154 = vld [vmem:[#allocation10] sm:$0xff]
    %v7155 = vld [vmem:[#allocation10 + $0x8] sm:$0xff]
    %7156 = vset.pattern.permute.xlu0 17
    %7157 = vperm.xlu0 %7156, %v106
    %v7158 = vpop.permute.xlu0 %7157
    %7160 = vset.pattern.permute.xlu0 17
    %7161 = vperm.xlu0 %7160, %v107
    %v7162 = vpop.permute.xlu0 %7161
    %v7165 = vsel %vm566, %v7154, 0
    %v7168 = vsel %vm566, %v7155, 0
    %7170 = vmatprep.subr.mxu0 %v7147
    %7171 = vmatpush1.msra.mxu0 %v7146
    %7172 = vmatprep.subr.mxu0 %v7151
    %7173 = vmatpush1.msra.mxu0 %v7150
    %7174 = vmatprep.subr.mxu0 0.0
    %7175 = vmatpush1.msra.mxu0 0.0
    %7176 = vmatprep.subr.mxu0 0.0
    %7177 = vmatpush1.msra.mxu0 0.0
    %7178 = vmatprep.subr.mxu0 0.0
    %7179 = vmatpush1.msra.mxu0 0.0
    %7180 = vmatprep.subr.mxu0 0.0
    %7181 = vmatpush1.msra.mxu0 0.0
    %7182 = vmatprep.subr.mxu0 0.0
    %7183 = vmatpush1.msra.mxu0 0.0
    %7184 = vmatprep.subr.mxu0 0.0
    %7185 = vmatpush1.msra.mxu0 0.0
    %7186 = vmatprep.subr.mxu0 0.0
    %7187 = vmatpush1.msra.mxu0 0.0
    %7188 = vmatprep.subr.mxu0 0.0
    %7189 = vmatpush1.msra.mxu0 0.0
    %7190 = vmatprep.subr.mxu0 0.0
    %7191 = vmatpush1.msra.mxu0 0.0
    %7192 = vmatprep.subr.mxu0 0.0
    %7193 = vmatpush1.msra.mxu0 0.0
    %7194 = vmatprep.subr.mxu0 0.0
    %7195 = vmatpush1.msra.mxu0 0.0
    %7196 = vmatprep.subr.mxu0 0.0
    %7197 = vmatpush1.msra.mxu0 0.0
    %7198 = vmatprep.subr.mxu0 0.0
    %7199 = vmatpush1.msra.mxu0 0.0
    %7200 = vmatprep.subr.mxu0 0.0
    %7201 = vmatpush1.msra.mxu0 0.0
    %7202 = vmatprep.subr.mxu0 0.0
    %7203 = vmatpush1.msra.mxu0 0.0
    %7204 = vmatprep.subr.mxu0 0.0
    %7205 = vmatpush1.msra.mxu0 0.0
    %7206 = vmatprep.subr.mxu0 0.0
    %7207 = vmatpush1.msra.mxu0 0.0
    %7208 = vmatprep.subr.mxu0 0.0
    %7209 = vmatpush1.msra.mxu0 0.0
    %7210 = vmatprep.subr.mxu0 0.0
    %7211 = vmatpush1.msra.mxu0 0.0
    %7212 = vmatprep.subr.mxu0 0.0
    %7213 = vmatpush1.msra.mxu0 0.0
    %7214 = vmatprep.subr.mxu0 0.0
    %7215 = vmatpush1.msra.mxu0 0.0
    %7216 = vmatprep.subr.mxu0 0.0
    %7217 = vmatpush1.msra.mxu0 0.0
    %7218 = vmatprep.subr.mxu0 0.0
    %7219 = vmatpush1.msra.mxu0 0.0
    %7220 = vmatprep.subr.mxu0 0.0
    %7221 = vmatpush1.msra.mxu0 0.0
    %7222 = vmatprep.subr.mxu0 0.0
    %7223 = vmatpush1.msra.mxu0 0.0
    %7224 = vmatprep.subr.mxu0 0.0
    %7225 = vmatpush1.msra.mxu0 0.0
    %7226 = vmatprep.subr.mxu0 0.0
    %7227 = vmatpush1.msra.mxu0 0.0
    %7228 = vmatprep.subr.mxu0 0.0
    %7229 = vmatpush1.msra.mxu0 0.0
    %7230 = vmatprep.subr.mxu0 0.0
    %7231 = vmatpush1.msra.mxu0 0.0
    %7232 = vmatprep.subr.mxu0 0.0
    %7233 = vmatpush1.msra.mxu0 0.0
    %7234 = vmatprep.mubr.f32.mxu0 0.0
    %7235 = vmatmul.mubr.f32.gmra.mrb[0].mxu0 %v7165
    %v7236 = vpop.f32.mrb[0].mxu0
    %v7237 = vadd.f32 %v7158, %v7236
    %v7238 = vpop.f32.mrb[0].mxu0
    %v7239 = vadd.f32 %v7158, %v7238
    %7240 = vmatprep.mubr.f32.mxu0 0.0
    %7241 = vmatmul.mubr.f32.gmra.mrb[0].mxu0 %v7168
    %v7242 = vpop.f32.mrb[0].mxu0
    %v7243 = vadd.f32 %v7162, %v7242
    %v7244 = vpop.f32.mrb[0].mxu0
    %v7245 = vadd.f32 %v7162, %v7244
    %7246 = vdwg.mxu0
    %7247 = vmatprep.subr.mxu0 %v7149
    %7248 = vmatpush1.msra.mxu0 %v7148
    %7249 = vmatprep.subr.mxu0 %v7153
    %7250 = vmatpush1.msra.mxu0 %v7152
    %7251 = vmatprep.subr.mxu0 0.0
    %7252 = vmatpush1.msra.mxu0 0.0
    %7253 = vmatprep.subr.mxu0 0.0
    %7254 = vmatpush1.msra.mxu0 0.0
    %7255 = vmatprep.subr.mxu0 0.0
    %7256 = vmatpush1.msra.mxu0 0.0
    %7257 = vmatprep.subr.mxu0 0.0
    %7258 = vmatpush1.msra.mxu0 0.0
    %7259 = vmatprep.subr.mxu0 0.0
    %7260 = vmatpush1.msra.mxu0 0.0
    %7261 = vmatprep.subr.mxu0 0.0
    %7262 = vmatpush1.msra.mxu0 0.0
    %7263 = vmatprep.subr.mxu0 0.0
    %7264 = vmatpush1.msra.mxu0 0.0
    %7265 = vmatprep.subr.mxu0 0.0
    %7266 = vmatpush1.msra.mxu0 0.0
    %7267 = vmatprep.subr.mxu0 0.0
    %7268 = vmatpush1.msra.mxu0 0.0
    %7269 = vmatprep.subr.mxu0 0.0
    %7270 = vmatpush1.msra.mxu0 0.0
    %7271 = vmatprep.subr.mxu0 0.0
    %7272 = vmatpush1.msra.mxu0 0.0
    %7273 = vmatprep.subr.mxu0 0.0
    %7274 = vmatpush1.msra.mxu0 0.0
    %7275 = vmatprep.subr.mxu0 0.0
    %7276 = vmatpush1.msra.mxu0 0.0
    %7277 = vmatprep.subr.mxu0 0.0
    %7278 = vmatpush1.msra.mxu0 0.0
    %7279 = vmatprep.subr.mxu0 0.0
    %7280 = vmatpush1.msra.mxu0 0.0
    %7281 = vmatprep.subr.mxu0 0.0
    %7282 = vmatpush1.msra.mxu0 0.0
    %7283 = vmatprep.subr.mxu0 0.0
    %7284 = vmatpush1.msra.mxu0 0.0
    %7285 = vmatprep.subr.mxu0 0.0
    %7286 = vmatpush1.msra.mxu0 0.0
    %7287 = vmatprep.subr.mxu0 0.0
    %7288 = vmatpush1.msra.mxu0 0.0
    %7289 = vmatprep.subr.mxu0 0.0
    %7290 = vmatpush1.msra.mxu0 0.0
    %7291 = vmatprep.subr.mxu0 0.0
    %7292 = vmatpush1.msra.mxu0 0.0
    %7293 = vmatprep.subr.mxu0 0.0
    %7294 = vmatpush1.msra.mxu0 0.0
    %7295 = vmatprep.subr.mxu0 0.0
    %7296 = vmatpush1.msra.mxu0 0.0
    %7297 = vmatprep.subr.mxu0 0.0
    %7298 = vmatpush1.msra.mxu0 0.0
    %7299 = vmatprep.subr.mxu0 0.0
    %7300 = vmatpush1.msra.mxu0 0.0
    %7301 = vmatprep.subr.mxu0 0.0
    %7302 = vmatpush1.msra.mxu0 0.0
    %7303 = vmatprep.subr.mxu0 0.0
    %7304 = vmatpush1.msra.mxu0 0.0
    %7305 = vmatprep.subr.mxu0 0.0
    %7306 = vmatpush1.msra.mxu0 0.0
    %7307 = vmatprep.subr.mxu0 0.0
    %7308 = vmatpush1.msra.mxu0 0.0
    %7309 = vmatprep.subr.mxu0 0.0
    %7310 = vmatpush1.msra.mxu0 0.0
    %7311 = vmatprep.mubr.f32.mxu0 0.0
    %7312 = vmatmul.mubr.f32.gmra.mrb[0].mxu0 %v7165
    %v7313 = vpop.f32.mrb[0].mxu0
    %v7314 = vadd.f32 %v7158, %v7313
    %v7315 = vpop.f32.mrb[0].mxu0
    %v7316 = vadd.f32 %v7158, %v7315
    %7317 = vmatprep.mubr.f32.mxu0 0.0
    %7318 = vmatmul.mubr.f32.gmra.mrb[0].mxu0 %v7168
    %v7319 = vpop.f32.mrb[0].mxu0
    %v7320 = vadd.f32 %v7162, %v7319
    %v7321 = vpop.f32.mrb[0].mxu0
    %v7322 = vadd.f32 %v7162, %v7321
    %7323 = vdwg.mxu0
    %v7324 = vadd.f32 %v7237, %v6392
    %v7325 = vadd.f32 %v7239, %v6393
    %v7326 = vadd.f32 %v7314, %v6394
    %v7327 = vadd.f32 %v7316, %v6395
    %v7328 = vadd.f32 %v7243, %v6396
    %v7329 = vadd.f32 %v7245, %v6397
    %v7330 = vadd.f32 %v7320, %v6398
    %v7331 = vadd.f32 %v7322, %v6399
    %7332 = vst [vmem:[#allocation11] sm:$0xff] %v7324
    %7333 = vst [vmem:[#allocation11 + $0x8] sm:$0xff] %v7325
    %7334 = vst [vmem:[#allocation11 + $0x10] sm:$0xff] %v7326
    %7335 = vst [vmem:[#allocation11 + $0x18] sm:$0xff] %v7327
    %7336 = vst [vmem:[#allocation11 + $0x20] sm:$0xff] %v7328
    %7337 = vst [vmem:[#allocation11 + $0x28] sm:$0xff] %v7329
    %7338 = vst [vmem:[#allocation11 + $0x30] sm:$0xff] %v7330
    %7339 = vst [vmem:[#allocation11 + $0x38] sm:$0xff] %v7331
    // Predicated region
    $region62: #{tpu_custom_call.1} parent=1 // pred_check
      _
    $region63: #{tpu_custom_call.1} parent=1 // pred_check_branch
      %7341 = sbr.rel (0) target = $region65
    $region64: #{tpu_custom_call.1} parent=1 // pred_region
      %s7343 = ssub.s32 1024, 1024
      %7344 = vsyncadd [#allocation4], %s7343
      %s7345 = sshll.u32 [#allocation11], 4
      %s7346 = int_to_ptr.vmem [resolvable:$true] %s7345
      %7351 = dma.vmem_to_hbm [thread:$0]  %s7346, 1024, %s10, [#allocation4], 512, 512, 32
    $region65: #{tpu_custom_call.1} parent=1 // pred_fallthru
      _
    // Predicated region
    $region66: #{tpu_custom_call.1} parent=1 // pred_check
      _
    $region67: #{tpu_custom_call.1} parent=1 // pred_check_branch
      %7353 = sbr.rel (0) target = $region69
    $region68: #{tpu_custom_call.1} parent=1 // pred_region
      %7354 = dma.done [#allocation4], 1024
    $region69: #{tpu_custom_call.1} parent=1 // pred_fallthru
      _
    %7355 = vsyncpa [#allocation3], 1
    %7356 = vsyncpa [#allocation6], 1
    %7357 = vsyncpa [#allocation9], 1
    %7358 = vsyncpa [#allocation4], 1

</llo_original>
